<compile_context>
chip_gen: v7x
topology: tpu7x:2x2x1
jax: 0.10.0
libtpu: 0.0.40
codegen_flags: <defaults>
</compile_context>

<pallas_src>
import math
import functools

import jax
import jax.numpy as jnp
from jax import lax
from jax.experimental import pallas as pl
from jax.experimental.pallas import tpu as pltpu


def get_rel_pos_jax(q_size, k_size, rel_pos):
    """JAX port of get_rel_pos (q_size == k_size path)."""
    max_rel_dist = int(2 * max(q_size, k_size) - 1)
    # TODO(synk): F.interpolate(mode='linear') resize branch not implemented;
    # parameters are constructed with exactly 2*size-1 rows so it never runs.
    assert rel_pos.shape[0] == max_rel_dist
    q_coords = jnp.arange(q_size)[:, None] * max(k_size / q_size, 1.0)
    k_coords = jnp.arange(k_size)[None, :] * max(q_size / k_size, 1.0)
    rel = (q_coords - k_coords + (k_size - 1) * max(q_size / k_size, 1.0)).astype(jnp.int32)
    return rel_pos[rel]  # (q_size, k_size, head_dim)


def _attention_kernel(*refs, H, W, num_heads, head_dim, use_rel_pos):
    if use_rel_pos:
        (x_ref, wqkv_ref, bqkv_ref, wp_ref, bp_ref,
         rh_ref, rw_ref, eh_ref, ew_ref, out_ref) = refs
    else:
        x_ref, wqkv_ref, bqkv_ref, wp_ref, bp_ref, out_ref = refs
        rh_ref = rw_ref = eh_ref = ew_ref = None

    N = H * W
    C = num_heads * head_dim

    x = x_ref[0]                                                   # (N, C) bf16

    # One fused, lane-dense qkv projection (scale already folded into q cols).
    qkv = jnp.dot(x, wqkv_ref[...], preferred_element_type=jnp.float32)
    qkv = qkv + bqkv_ref[...]                                      # (N, 3C) f32

    ctx_parts = []
    for h in range(num_heads):                                     # static unroll
        q = qkv[:, h * head_dim:(h + 1) * head_dim]                # scaled q
        k = qkv[:, C + h * head_dim:C + (h + 1) * head_dim]
        v = qkv[:, 2 * C + h * head_dim:2 * C + (h + 1) * head_dim]

        qb = q.astype(jnp.bfloat16)
        # scores = (q * scale) @ k^T   (scale folded into weights)
        s = lax.dot_general(qb, k.astype(jnp.bfloat16),
                            (((1,), (1,)), ((), ())),
                            preferred_element_type=jnp.float32)    # (N, N) f32

        if use_rel_pos:
            # Decomposed relative position bias (mvitv2 style).  Rh/Rw were
            # pre-multiplied by 1/scale so qb (scaled) gives the unscaled bias.
            rq = qb.reshape(H, W, head_dim)
            rel_h = jnp.einsum('hwc,hkc->hwk', rq, rh_ref[...],
                               preferred_element_type=jnp.float32).reshape(N, H)
            rel_w = jnp.einsum('hwc,wkc->hwk', rq, rw_ref[...],
                               preferred_element_type=jnp.float32).reshape(N, W)
            # Expand (N,H)/(N,W) biases to the flattened (N, N) key axis via
            # precomputed 0/1 expansion matrices (MXU-friendly, no 4-D views).
            s = (s
                 + jnp.dot(rel_h.astype(jnp.bfloat16), eh_ref[...],
                           preferred_element_type=jnp.float32)
                 + jnp.dot(rel_w.astype(jnp.bfloat16), ew_ref[...],
                           preferred_element_type=jnp.float32))

        # Softmax in f32; the divide goes to the EUP reciprocal.
        s_max = jnp.max(s, axis=-1, keepdims=True)
        p = jnp.exp(s - s_max)
        denom = jnp.sum(p, axis=-1, keepdims=True)
        p = p * pl.reciprocal(denom, approx=True)

        ctx = jnp.dot(p.astype(jnp.bfloat16), v.astype(jnp.bfloat16),
                      preferred_element_type=jnp.float32)          # (N, hd)
        ctx_parts.append(ctx.astype(jnp.bfloat16))

    # Single full-K output projection + bias.
    ctx_all = jnp.concatenate(ctx_parts, axis=-1)                  # (N, C) bf16
    out = jnp.dot(ctx_all, wp_ref[...], preferred_element_type=jnp.float32)
    out_ref[0] = (out + bp_ref[...]).astype(out_ref.dtype)


def attention_pallas(x, params, *, num_heads, use_rel_pos):
    B, H, W, C = x.shape
    N = H * W
    hd = C // num_heads
    scale = hd ** (-0.5)

    w_qkv = params["w_qkv"].astype(jnp.float32)      # (3C, C)
    b_qkv = params["b_qkv"].astype(jnp.float32)      # (3C,)
    w_proj = params["w_proj"].astype(jnp.float32)    # (C, C)
    b_proj = params["b_proj"].astype(jnp.float32)    # (C,)

    # Fold the attention scale into the q slice of the fused qkv projection
    # (weight AND bias) so the kernel never multiplies q by scale.
    # torch qkv layout: output axis ordered [3, num_heads, head_dim].
    scale_vec = jnp.concatenate([jnp.full((C,), scale, jnp.float32),
                                 jnp.ones((2 * C,), jnp.float32)])
    wqkv_t = (w_qkv.T * scale_vec[None, :]).astype(jnp.bfloat16)   # (C, 3C)
    bqkv = (b_qkv * scale_vec).reshape(1, 3 * C)                   # (1, 3C) f32
    wp_t = w_proj.T.astype(jnp.bfloat16)                           # (C, C)
    bp = b_proj.reshape(1, C)                                      # (1, C) f32

    inputs = [x.reshape(B, N, C).astype(jnp.bfloat16), wqkv_t, bqkv, wp_t, bp]
    in_specs = [
        pl.BlockSpec((1, N, C), lambda b: (b, 0, 0)),      # x
        pl.BlockSpec((C, 3 * C), lambda b: (0, 0)),        # fused qkv weight
        pl.BlockSpec((1, 3 * C), lambda b: (0, 0)),        # fused qkv bias
        pl.BlockSpec((C, C), lambda b: (0, 0)),            # proj weight
        pl.BlockSpec((1, C), lambda b: (0, 0)),            # proj bias
    ]

    if use_rel_pos:
        inv_scale = 1.0 / scale
        Rh = (get_rel_pos_jax(H, H, params["rel_pos_h"].astype(jnp.float32))
              * inv_scale).astype(jnp.bfloat16)             # (H, H, hd)
        Rw = (get_rel_pos_jax(W, W, params["rel_pos_w"].astype(jnp.float32))
              * inv_scale).astype(jnp.bfloat16)             # (W, W, hd)
        # Expansion matrices: Eh[kh, kh*W + kw] = 1, Ew[kw, kh*W + kw] = 1.
        Eh = jnp.repeat(jnp.eye(H, dtype=jnp.bfloat16), W, axis=1)   # (H, N)
        Ew = jnp.tile(jnp.eye(W, dtype=jnp.bfloat16), (1, H))        # (W, N)
        inputs += [Rh, Rw, Eh, Ew]
        in_specs += [
            pl.BlockSpec((H, H, hd), lambda b: (0, 0, 0)),
            pl.BlockSpec((W, W, hd), lambda b: (0, 0, 0)),
            pl.BlockSpec((H, N), lambda b: (0, 0)),
            pl.BlockSpec((W, N), lambda b: (0, 0)),
        ]

    kernel = functools.partial(_attention_kernel, H=H, W=W,
                               num_heads=num_heads, head_dim=hd,
                               use_rel_pos=use_rel_pos)

    # Explicit VMEM budget from the actual tile footprint (x/out double
    # buffered, weights, rel tables, f32 qkv + per-head score temporaries).
    bf16_b, f32_b = 2, 4
    est = (2 * N * C * bf16_b                       # x tile (double buffered)
           + 2 * N * C * f32_b                      # out tile (double buffered)
           + C * 3 * C * bf16_b + 3 * C * f32_b     # qkv weight + bias
           + C * C * bf16_b + C * f32_b             # proj weight + bias
           + (H * H * hd + W * W * hd + H * N + W * N) * bf16_b
           + N * 3 * C * f32_b                      # fused qkv activations
           + 4 * N * N * f32_b                      # score / softmax temps
           + 2 * N * C * f32_b)                     # ctx temporaries
    vmem_limit = int(min(max(2 * est, 8 << 20), 48 << 20))

    out = pl.pallas_call(
        kernel,
        out_shape=jax.ShapeDtypeStruct((B, N, C), jnp.float32),
        grid_spec=pltpu.PrefetchScalarGridSpec(
            num_scalar_prefetch=0,
            grid=(B,),
            in_specs=in_specs,
            out_specs=pl.BlockSpec((1, N, C), lambda b: (b, 0, 0)),
        ),
        compiler_params=pltpu.CompilerParams(
            dimension_semantics=("parallel",),
            vmem_limit_bytes=vmem_limit),
    )(*inputs)

    return out.reshape(B, H, W, C)


def attention_reference(x, params, *, num_heads, use_rel_pos):
    """Pure-JAX f32 transcription of the PyTorch forward (for verification)."""
    B, H, W, C = x.shape
    N = H * W
    hd = C // num_heads
    scale = hd ** (-0.5)
    qkv = x.reshape(B, N, C) @ params["w_qkv"].T + params["b_qkv"]
    qkv = qkv.reshape(B, N, 3, num_heads, hd).transpose(2, 0, 3, 1, 4)
    q, k, v = [t.reshape(B * num_heads, N, hd) for t in (qkv[0], qkv[1], qkv[2])]
    attn = (q * scale) @ jnp.swapaxes(k, -2, -1)
    if use_rel_pos:
        Rh = get_rel_pos_jax(H, H, params["rel_pos_h"])
        Rw = get_rel_pos_jax(W, W, params["rel_pos_w"])
        r_q = q.reshape(B * num_heads, H, W, hd)
        rel_h = jnp.einsum('bhwc,hkc->bhwk', r_q, Rh)
        rel_w = jnp.einsum('bhwc,wkc->bhwk', r_q, Rw)
        attn = (attn.reshape(B * num_heads, H, W, H, W)
                + rel_h[:, :, :, :, None]
                + rel_w[:, :, :, None, :]).reshape(B * num_heads, N, N)
    attn = jax.nn.softmax(attn, axis=-1)
    y = (attn @ v).reshape(B, num_heads, H, W, hd).transpose(0, 2, 3, 1, 4)
    y = y.reshape(B, H, W, C)
    return y @ params["w_proj"].T + params["b_proj"]


if __name__ == "__main__":
    B, H, W, C = 2, 8, 8, 32
    num_heads = 4
    hd = C // num_heads
    use_rel_pos = True

    key = jax.random.PRNGKey(0)
    keys = jax.random.split(key, 7)
    params = {
        "w_qkv": 0.05 * jax.random.normal(keys[0], (3 * C, C), jnp.float32),
        "b_qkv": 0.02 * jax.random.normal(keys[1], (3 * C,), jnp.float32),
        "w_proj": 0.05 * jax.random.normal(keys[2], (C, C), jnp.float32),
        "b_proj": 0.02 * jax.random.normal(keys[3], (C,), jnp.float32),
        # rel_pos params (2*size - 1, head_dim); non-zero so the branch runs.
        "rel_pos_h": 0.02 * jax.random.normal(keys[4], (2 * H - 1, hd), jnp.float32),
        "rel_pos_w": 0.02 * jax.random.normal(keys[5], (2 * W - 1, hd), jnp.float32),
    }
    x = jax.random.normal(keys[6], (B, H, W, C), jnp.float32)

    out = attention_pallas(x, params, num_heads=num_heads, use_rel_pos=use_rel_pos)
    out = jax.block_until_ready(out)

    ref = attention_reference(x, params, num_heads=num_heads, use_rel_pos=use_rel_pos)
    max_err = float(jnp.max(jnp.abs(out - ref)))
    assert out.shape == (B, H, W, C)
    # bf16 MXU inputs + approx reciprocal -> slightly looser tolerance than f32.
    assert max_err < 2e-2, f"max abs error too large: {max_err}"
    print("KERNEL_OK")
</pallas_src>

<mosaic_0001>
module attributes {stable_mosaic.version = 11 : i64} {
  func.func @_attention_kernel(%arg0: i32, %arg1: memref<1x64x32xbf16, #tpu.memory_space<vmem>>, %arg2: memref<32x96xbf16, #tpu.memory_space<vmem>>, %arg3: memref<1x96xf32, #tpu.memory_space<vmem>>, %arg4: memref<32x32xbf16, #tpu.memory_space<vmem>>, %arg5: memref<1x32xf32, #tpu.memory_space<vmem>>, %arg6: memref<8x8x8xbf16, #tpu.memory_space<vmem>>, %arg7: memref<8x8x8xbf16, #tpu.memory_space<vmem>>, %arg8: memref<8x64xbf16, #tpu.memory_space<vmem>>, %arg9: memref<8x64xbf16, #tpu.memory_space<vmem>>, %arg10: memref<1x64x32xf32, #tpu.memory_space<vmem>>) attributes {dimension_semantics = [#tpu.dimension_semantics<parallel>], iteration_bounds = array<i64: 2>, scalar_prefetch = 0 : i64, scratch_operands = 0 : i64, tpu.core_type = #tpu.core_type<tc>, window_params = [{transform_indices = @transform_0, window_bounds = array<i64: 1, 64, 32>}, {pipeline_mode = #tpu.pipeline_mode<synchronous>, transform_indices = @transform_1, window_bounds = array<i64: 32, 96>}, {pipeline_mode = #tpu.pipeline_mode<synchronous>, transform_indices = @transform_2, window_bounds = array<i64: 1, 96>}, {pipeline_mode = #tpu.pipeline_mode<synchronous>, transform_indices = @transform_3, window_bounds = array<i64: 32, 32>}, {pipeline_mode = #tpu.pipeline_mode<synchronous>, transform_indices = @transform_4, window_bounds = array<i64: 1, 32>}, {pipeline_mode = #tpu.pipeline_mode<synchronous>, transform_indices = @transform_5, window_bounds = array<i64: 8, 8, 8>}, {pipeline_mode = #tpu.pipeline_mode<synchronous>, transform_indices = @transform_6, window_bounds = array<i64: 8, 8, 8>}, {pipeline_mode = #tpu.pipeline_mode<synchronous>, transform_indices = @transform_7, window_bounds = array<i64: 8, 64>}, {pipeline_mode = #tpu.pipeline_mode<synchronous>, transform_indices = @transform_8, window_bounds = array<i64: 8, 64>}, {transform_indices = @transform_9, window_bounds = array<i64: 1, 64, 32>}]} {
    %c0 = arith.constant 0 : index
    %c0_0 = arith.constant 0 : index
    %c0_1 = arith.constant 0 : index
    %0 = vector.load %arg1[%c0, %c0_0, %c0_1] : memref<1x64x32xbf16, #tpu.memory_space<vmem>>, vector<1x64x32xbf16>
    %1 = vector.shape_cast %0 : vector<1x64x32xbf16> to vector<64x32xbf16>
    %c0_2 = arith.constant 0 : index
    %c0_3 = arith.constant 0 : index
    %2 = vector.load %arg2[%c0_2, %c0_3] : memref<32x96xbf16, #tpu.memory_space<vmem>>, vector<32x96xbf16>
    %cst = arith.constant dense<0.000000e+00> : vector<64x96xf32>
    %3 = tpu.matmul %1, %2, %cst {dimension_numbers = #tpu.dot_dimension_numbers<[1], [0], [0], [1], [0, 0, 1, 1], [], []>} : vector<64x32xbf16>, vector<32x96xbf16>, vector<64x96xf32> -> vector<64x96xf32>
    %c0_4 = arith.constant 0 : index
    %c0_5 = arith.constant 0 : index
    %4 = vector.load %arg3[%c0_4, %c0_5] : memref<1x96xf32, #tpu.memory_space<vmem>>, vector<1x96xf32>
    %5 = vector.broadcast %4 : vector<1x96xf32> to vector<64x96xf32>
    %6 = arith.addf %3, %5 : vector<64x96xf32>
    %7 = vector.extract_strided_slice %6 {offsets = [0, 0], sizes = [64, 8], strides = [1, 1]} : vector<64x96xf32> to vector<64x8xf32>
    %8 = vector.extract_strided_slice %6 {offsets = [0, 32], sizes = [64, 8], strides = [1, 1]} : vector<64x96xf32> to vector<64x8xf32>
    %9 = vector.extract_strided_slice %6 {offsets = [0, 64], sizes = [64, 8], strides = [1, 1]} : vector<64x96xf32> to vector<64x8xf32>
    %10 = arith.truncf %7 : vector<64x8xf32> to vector<64x8xbf16>
    %11 = arith.truncf %8 : vector<64x8xf32> to vector<64x8xbf16>
    %cst_6 = arith.constant dense<0.000000e+00> : vector<64x64xf32>
    %12 = tpu.matmul %10, %11, %cst_6 {dimension_numbers = #tpu.dot_dimension_numbers<[1], [1], [0], [0], [0, 0, 1, 0], [], []>} : vector<64x8xbf16>, vector<64x8xbf16>, vector<64x64xf32> -> vector<64x64xf32>
    %13 = vector.shape_cast %10 : vector<64x8xbf16> to vector<8x8x8xbf16>
    %c0_7 = arith.constant 0 : index
    %c0_8 = arith.constant 0 : index
    %c0_9 = arith.constant 0 : index
    %14 = vector.load %arg6[%c0_7, %c0_8, %c0_9] : memref<8x8x8xbf16, #tpu.memory_space<vmem>>, vector<8x8x8xbf16>
    "tpu.trace_start"() <{level = 10 : i32, message = "hwc,hkc->hwk"}> : () -> ()
    %cst_10 = arith.constant dense<0.000000e+00> : vector<8x8x8xf32>
    %15 = tpu.matmul %13, %14, %cst_10 {dimension_numbers = #tpu.dot_dimension_numbers<[2], [2], [1], [1], [0, 0, 0, 1, 1, 1], [0], [0]>} : vector<8x8x8xbf16>, vector<8x8x8xbf16>, vector<8x8x8xf32> -> vector<8x8x8xf32>
    "tpu.trace_stop"() : () -> ()
    %16 = vector.shape_cast %15 : vector<8x8x8xf32> to vector<64x8xf32>
    %c0_11 = arith.constant 0 : index
    %c0_12 = arith.constant 0 : index
    %c0_13 = arith.constant 0 : index
    %17 = vector.load %arg7[%c0_11, %c0_12, %c0_13] : memref<8x8x8xbf16, #tpu.memory_space<vmem>>, vector<8x8x8xbf16>
    "tpu.trace_start"() <{level = 10 : i32, message = "hwc,wkc->hwk"}> : () -> ()
    %cst_14 = arith.constant dense<0.000000e+00> : vector<8x8x8xf32>
    %18 = tpu.matmul %17, %13, %cst_14 {dimension_numbers = #tpu.dot_dimension_numbers<[2], [2], [1], [0], [0, 0, 0, 1, 1, 0], [0], [1]>} : vector<8x8x8xbf16>, vector<8x8x8xbf16>, vector<8x8x8xf32> -> vector<8x8x8xf32>
    %19 = tpu.transpose %18, [2, 0, 1] : vector<8x8x8xf32> -> vector<8x8x8xf32>
    "tpu.trace_stop"() : () -> ()
    %20 = vector.shape_cast %19 : vector<8x8x8xf32> to vector<64x8xf32>
    %21 = arith.truncf %16 : vector<64x8xf32> to vector<64x8xbf16>
    %c0_15 = arith.constant 0 : index
    %c0_16 = arith.constant 0 : index
    %22 = vector.load %arg8[%c0_15, %c0_16] : memref<8x64xbf16, #tpu.memory_space<vmem>>, vector<8x64xbf16>
    %cst_17 = arith.constant dense<0.000000e+00> : vector<64x64xf32>
    %23 = tpu.matmul %21, %22, %cst_17 {dimension_numbers = #tpu.dot_dimension_numbers<[1], [0], [0], [1], [0, 0, 1, 1], [], []>} : vector<64x8xbf16>, vector<8x64xbf16>, vector<64x64xf32> -> vector<64x64xf32>
    %24 = arith.addf %12, %23 : vector<64x64xf32>
    %25 = arith.truncf %20 : vector<64x8xf32> to vector<64x8xbf16>
    %c0_18 = arith.constant 0 : index
    %c0_19 = arith.constant 0 : index
    %26 = vector.load %arg9[%c0_18, %c0_19] : memref<8x64xbf16, #tpu.memory_space<vmem>>, vector<8x64xbf16>
    %cst_20 = arith.constant dense<0.000000e+00> : vector<64x64xf32>
    %27 = tpu.matmul %25, %26, %cst_20 {dimension_numbers = #tpu.dot_dimension_numbers<[1], [0], [0], [1], [0, 0, 1, 1], [], []>} : vector<64x8xbf16>, vector<8x64xbf16>, vector<64x64xf32> -> vector<64x64xf32>
    %28 = arith.addf %24, %27 : vector<64x64xf32>
    %cst_21 = arith.constant dense<0xFF800000> : vector<64xf32>
    %29 = vector.multi_reduction <maximumf>, %28, %cst_21 [1] : vector<64x64xf32> to vector<64xf32>
    %30 = vector.shape_cast %29 : vector<64xf32> to vector<64x1xf32>
    %31 = vector.broadcast %30 : vector<64x1xf32> to vector<64x64xf32>
    %32 = arith.subf %28, %31 : vector<64x64xf32>
    %33 = math.exp %32 : vector<64x64xf32>
    %cst_22 = arith.constant dense<0.000000e+00> : vector<64xf32>
    %34 = vector.multi_reduction <add>, %33, %cst_22 [1] : vector<64x64xf32> to vector<64xf32>
    %35 = vector.shape_cast %34 : vector<64xf32> to vector<64x1xf32>
    %36 = tpu.reciprocal %35 {approx = true} : vector<64x1xf32> -> vector<64x1xf32>
    %37 = vector.broadcast %36 : vector<64x1xf32> to vector<64x64xf32>
    %38 = arith.mulf %33, %37 : vector<64x64xf32>
    %39 = arith.truncf %38 : vector<64x64xf32> to vector<64x64xbf16>
    %40 = arith.truncf %9 : vector<64x8xf32> to vector<64x8xbf16>
    %cst_23 = arith.constant dense<0.000000e+00> : vector<64x8xf32>
    %41 = tpu.matmul %39, %40, %cst_23 {dimension_numbers = #tpu.dot_dimension_numbers<[1], [0], [0], [1], [0, 0, 1, 1], [], []>} : vector<64x64xbf16>, vector<64x8xbf16>, vector<64x8xf32> -> vector<64x8xf32>
    %42 = arith.truncf %41 : vector<64x8xf32> to vector<64x8xbf16>
    %43 = vector.extract_strided_slice %6 {offsets = [0, 8], sizes = [64, 8], strides = [1, 1]} : vector<64x96xf32> to vector<64x8xf32>
    %44 = vector.extract_strided_slice %6 {offsets = [0, 40], sizes = [64, 8], strides = [1, 1]} : vector<64x96xf32> to vector<64x8xf32>
    %45 = vector.extract_strided_slice %6 {offsets = [0, 72], sizes = [64, 8], strides = [1, 1]} : vector<64x96xf32> to vector<64x8xf32>
    %46 = arith.truncf %43 : vector<64x8xf32> to vector<64x8xbf16>
    %47 = arith.truncf %44 : vector<64x8xf32> to vector<64x8xbf16>
    %cst_24 = arith.constant dense<0.000000e+00> : vector<64x64xf32>
    %48 = tpu.matmul %46, %47, %cst_24 {dimension_numbers = #tpu.dot_dimension_numbers<[1], [1], [0], [0], [0, 0, 1, 0], [], []>} : vector<64x8xbf16>, vector<64x8xbf16>, vector<64x64xf32> -> vector<64x64xf32>
    %49 = vector.shape_cast %46 : vector<64x8xbf16> to vector<8x8x8xbf16>
    %c0_25 = arith.constant 0 : index
    %c0_26 = arith.constant 0 : index
    %c0_27 = arith.constant 0 : index
    %50 = vector.load %arg6[%c0_25, %c0_26, %c0_27] : memref<8x8x8xbf16, #tpu.memory_space<vmem>>, vector<8x8x8xbf16>
    "tpu.trace_start"() <{level = 10 : i32, message = "hwc,hkc->hwk"}> : () -> ()
    %cst_28 = arith.constant dense<0.000000e+00> : vector<8x8x8xf32>
    %51 = tpu.matmul %49, %50, %cst_28 {dimension_numbers = #tpu.dot_dimension_numbers<[2], [2], [1], [1], [0, 0, 0, 1, 1, 1], [0], [0]>} : vector<8x8x8xbf16>, vector<8x8x8xbf16>, vector<8x8x8xf32> -> vector<8x8x8xf32>
    "tpu.trace_stop"() : () -> ()
    %52 = vector.shape_cast %51 : vector<8x8x8xf32> to vector<64x8xf32>
    %c0_29 = arith.constant 0 : index
    %c0_30 = arith.constant 0 : index
    %c0_31 = arith.constant 0 : index
    %53 = vector.load %arg7[%c0_29, %c0_30, %c0_31] : memref<8x8x8xbf16, #tpu.memory_space<vmem>>, vector<8x8x8xbf16>
    "tpu.trace_start"() <{level = 10 : i32, message = "hwc,wkc->hwk"}> : () -> ()
    %cst_32 = arith.constant dense<0.000000e+00> : vector<8x8x8xf32>
    %54 = tpu.matmul %53, %49, %cst_32 {dimension_numbers = #tpu.dot_dimension_numbers<[2], [2], [1], [0], [0, 0, 0, 1, 1, 0], [0], [1]>} : vector<8x8x8xbf16>, vector<8x8x8xbf16>, vector<8x8x8xf32> -> vector<8x8x8xf32>
    %55 = tpu.transpose %54, [2, 0, 1] : vector<8x8x8xf32> -> vector<8x8x8xf32>
    "tpu.trace_stop"() : () -> ()
    %56 = vector.shape_cast %55 : vector<8x8x8xf32> to vector<64x8xf32>
    %57 = arith.truncf %52 : vector<64x8xf32> to vector<64x8xbf16>
    %c0_33 = arith.constant 0 : index
    %c0_34 = arith.constant 0 : index
    %58 = vector.load %arg8[%c0_33, %c0_34] : memref<8x64xbf16, #tpu.memory_space<vmem>>, vector<8x64xbf16>
    %cst_35 = arith.constant dense<0.000000e+00> : vector<64x64xf32>
    %59 = tpu.matmul %57, %58, %cst_35 {dimension_numbers = #tpu.dot_dimension_numbers<[1], [0], [0], [1], [0, 0, 1, 1], [], []>} : vector<64x8xbf16>, vector<8x64xbf16>, vector<64x64xf32> -> vector<64x64xf32>
    %60 = arith.addf %48, %59 : vector<64x64xf32>
    %61 = arith.truncf %56 : vector<64x8xf32> to vector<64x8xbf16>
    %c0_36 = arith.constant 0 : index
    %c0_37 = arith.constant 0 : index
    %62 = vector.load %arg9[%c0_36, %c0_37] : memref<8x64xbf16, #tpu.memory_space<vmem>>, vector<8x64xbf16>
    %cst_38 = arith.constant dense<0.000000e+00> : vector<64x64xf32>
    %63 = tpu.matmul %61, %62, %cst_38 {dimension_numbers = #tpu.dot_dimension_numbers<[1], [0], [0], [1], [0, 0, 1, 1], [], []>} : vector<64x8xbf16>, vector<8x64xbf16>, vector<64x64xf32> -> vector<64x64xf32>
    %64 = arith.addf %60, %63 : vector<64x64xf32>
    %cst_39 = arith.constant dense<0xFF800000> : vector<64xf32>
    %65 = vector.multi_reduction <maximumf>, %64, %cst_39 [1] : vector<64x64xf32> to vector<64xf32>
    %66 = vector.shape_cast %65 : vector<64xf32> to vector<64x1xf32>
    %67 = vector.broadcast %66 : vector<64x1xf32> to vector<64x64xf32>
    %68 = arith.subf %64, %67 : vector<64x64xf32>
    %69 = math.exp %68 : vector<64x64xf32>
    %cst_40 = arith.constant dense<0.000000e+00> : vector<64xf32>
    %70 = vector.multi_reduction <add>, %69, %cst_40 [1] : vector<64x64xf32> to vector<64xf32>
    %71 = vector.shape_cast %70 : vector<64xf32> to vector<64x1xf32>
    %72 = tpu.reciprocal %71 {approx = true} : vector<64x1xf32> -> vector<64x1xf32>
    %73 = vector.broadcast %72 : vector<64x1xf32> to vector<64x64xf32>
    %74 = arith.mulf %69, %73 : vector<64x64xf32>
    %75 = arith.truncf %74 : vector<64x64xf32> to vector<64x64xbf16>
    %76 = arith.truncf %45 : vector<64x8xf32> to vector<64x8xbf16>
    %cst_41 = arith.constant dense<0.000000e+00> : vector<64x8xf32>
    %77 = tpu.matmul %75, %76, %cst_41 {dimension_numbers = #tpu.dot_dimension_numbers<[1], [0], [0], [1], [0, 0, 1, 1], [], []>} : vector<64x64xbf16>, vector<64x8xbf16>, vector<64x8xf32> -> vector<64x8xf32>
    %78 = arith.truncf %77 : vector<64x8xf32> to vector<64x8xbf16>
    %79 = vector.extract_strided_slice %6 {offsets = [0, 16], sizes = [64, 8], strides = [1, 1]} : vector<64x96xf32> to vector<64x8xf32>
    %80 = vector.extract_strided_slice %6 {offsets = [0, 48], sizes = [64, 8], strides = [1, 1]} : vector<64x96xf32> to vector<64x8xf32>
    %81 = vector.extract_strided_slice %6 {offsets = [0, 80], sizes = [64, 8], strides = [1, 1]} : vector<64x96xf32> to vector<64x8xf32>
    %82 = arith.truncf %79 : vector<64x8xf32> to vector<64x8xbf16>
    %83 = arith.truncf %80 : vector<64x8xf32> to vector<64x8xbf16>
    %cst_42 = arith.constant dense<0.000000e+00> : vector<64x64xf32>
    %84 = tpu.matmul %82, %83, %cst_42 {dimension_numbers = #tpu.dot_dimension_numbers<[1], [1], [0], [0], [0, 0, 1, 0], [], []>} : vector<64x8xbf16>, vector<64x8xbf16>, vector<64x64xf32> -> vector<64x64xf32>
    %85 = vector.shape_cast %82 : vector<64x8xbf16> to vector<8x8x8xbf16>
    %c0_43 = arith.constant 0 : index
    %c0_44 = arith.constant 0 : index
    %c0_45 = arith.constant 0 : index
    %86 = vector.load %arg6[%c0_43, %c0_44, %c0_45] : memref<8x8x8xbf16, #tpu.memory_space<vmem>>, vector<8x8x8xbf16>
    "tpu.trace_start"() <{level = 10 : i32, message = "hwc,hkc->hwk"}> : () -> ()
    %cst_46 = arith.constant dense<0.000000e+00> : vector<8x8x8xf32>
    %87 = tpu.matmul %85, %86, %cst_46 {dimension_numbers = #tpu.dot_dimension_numbers<[2], [2], [1], [1], [0, 0, 0, 1, 1, 1], [0], [0]>} : vector<8x8x8xbf16>, vector<8x8x8xbf16>, vector<8x8x8xf32> -> vector<8x8x8xf32>
    "tpu.trace_stop"() : () -> ()
    %88 = vector.shape_cast %87 : vector<8x8x8xf32> to vector<64x8xf32>
    %c0_47 = arith.constant 0 : index
    %c0_48 = arith.constant 0 : index
    %c0_49 = arith.constant 0 : index
    %89 = vector.load %arg7[%c0_47, %c0_48, %c0_49] : memref<8x8x8xbf16, #tpu.memory_space<vmem>>, vector<8x8x8xbf16>
    "tpu.trace_start"() <{level = 10 : i32, message = "hwc,wkc->hwk"}> : () -> ()
    %cst_50 = arith.constant dense<0.000000e+00> : vector<8x8x8xf32>
    %90 = tpu.matmul %89, %85, %cst_50 {dimension_numbers = #tpu.dot_dimension_numbers<[2], [2], [1], [0], [0, 0, 0, 1, 1, 0], [0], [1]>} : vector<8x8x8xbf16>, vector<8x8x8xbf16>, vector<8x8x8xf32> -> vector<8x8x8xf32>
    %91 = tpu.transpose %90, [2, 0, 1] : vector<8x8x8xf32> -> vector<8x8x8xf32>
    "tpu.trace_stop"() : () -> ()
    %92 = vector.shape_cast %91 : vector<8x8x8xf32> to vector<64x8xf32>
    %93 = arith.truncf %88 : vector<64x8xf32> to vector<64x8xbf16>
    %c0_51 = arith.constant 0 : index
    %c0_52 = arith.constant 0 : index
    %94 = vector.load %arg8[%c0_51, %c0_52] : memref<8x64xbf16, #tpu.memory_space<vmem>>, vector<8x64xbf16>
    %cst_53 = arith.constant dense<0.000000e+00> : vector<64x64xf32>
    %95 = tpu.matmul %93, %94, %cst_53 {dimension_numbers = #tpu.dot_dimension_numbers<[1], [0], [0], [1], [0, 0, 1, 1], [], []>} : vector<64x8xbf16>, vector<8x64xbf16>, vector<64x64xf32> -> vector<64x64xf32>
    %96 = arith.addf %84, %95 : vector<64x64xf32>
    %97 = arith.truncf %92 : vector<64x8xf32> to vector<64x8xbf16>
    %c0_54 = arith.constant 0 : index
    %c0_55 = arith.constant 0 : index
    %98 = vector.load %arg9[%c0_54, %c0_55] : memref<8x64xbf16, #tpu.memory_space<vmem>>, vector<8x64xbf16>
    %cst_56 = arith.constant dense<0.000000e+00> : vector<64x64xf32>
    %99 = tpu.matmul %97, %98, %cst_56 {dimension_numbers = #tpu.dot_dimension_numbers<[1], [0], [0], [1], [0, 0, 1, 1], [], []>} : vector<64x8xbf16>, vector<8x64xbf16>, vector<64x64xf32> -> vector<64x64xf32>
    %100 = arith.addf %96, %99 : vector<64x64xf32>
    %cst_57 = arith.constant dense<0xFF800000> : vector<64xf32>
    %101 = vector.multi_reduction <maximumf>, %100, %cst_57 [1] : vector<64x64xf32> to vector<64xf32>
    %102 = vector.shape_cast %101 : vector<64xf32> to vector<64x1xf32>
    %103 = vector.broadcast %102 : vector<64x1xf32> to vector<64x64xf32>
    %104 = arith.subf %100, %103 : vector<64x64xf32>
    %105 = math.exp %104 : vector<64x64xf32>
    %cst_58 = arith.constant dense<0.000000e+00> : vector<64xf32>
    %106 = vector.multi_reduction <add>, %105, %cst_58 [1] : vector<64x64xf32> to vector<64xf32>
    %107 = vector.shape_cast %106 : vector<64xf32> to vector<64x1xf32>
    %108 = tpu.reciprocal %107 {approx = true} : vector<64x1xf32> -> vector<64x1xf32>
    %109 = vector.broadcast %108 : vector<64x1xf32> to vector<64x64xf32>
    %110 = arith.mulf %105, %109 : vector<64x64xf32>
    %111 = arith.truncf %110 : vector<64x64xf32> to vector<64x64xbf16>
    %112 = arith.truncf %81 : vector<64x8xf32> to vector<64x8xbf16>
    %cst_59 = arith.constant dense<0.000000e+00> : vector<64x8xf32>
    %113 = tpu.matmul %111, %112, %cst_59 {dimension_numbers = #tpu.dot_dimension_numbers<[1], [0], [0], [1], [0, 0, 1, 1], [], []>} : vector<64x64xbf16>, vector<64x8xbf16>, vector<64x8xf32> -> vector<64x8xf32>
    %114 = arith.truncf %113 : vector<64x8xf32> to vector<64x8xbf16>
    %115 = vector.extract_strided_slice %6 {offsets = [0, 24], sizes = [64, 8], strides = [1, 1]} : vector<64x96xf32> to vector<64x8xf32>
    %116 = vector.extract_strided_slice %6 {offsets = [0, 56], sizes = [64, 8], strides = [1, 1]} : vector<64x96xf32> to vector<64x8xf32>
    %117 = vector.extract_strided_slice %6 {offsets = [0, 88], sizes = [64, 8], strides = [1, 1]} : vector<64x96xf32> to vector<64x8xf32>
    %118 = arith.truncf %115 : vector<64x8xf32> to vector<64x8xbf16>
    %119 = arith.truncf %116 : vector<64x8xf32> to vector<64x8xbf16>
    %cst_60 = arith.constant dense<0.000000e+00> : vector<64x64xf32>
    %120 = tpu.matmul %118, %119, %cst_60 {dimension_numbers = #tpu.dot_dimension_numbers<[1], [1], [0], [0], [0, 0, 1, 0], [], []>} : vector<64x8xbf16>, vector<64x8xbf16>, vector<64x64xf32> -> vector<64x64xf32>
    %121 = vector.shape_cast %118 : vector<64x8xbf16> to vector<8x8x8xbf16>
    %c0_61 = arith.constant 0 : index
    %c0_62 = arith.constant 0 : index
    %c0_63 = arith.constant 0 : index
    %122 = vector.load %arg6[%c0_61, %c0_62, %c0_63] : memref<8x8x8xbf16, #tpu.memory_space<vmem>>, vector<8x8x8xbf16>
    "tpu.trace_start"() <{level = 10 : i32, message = "hwc,hkc->hwk"}> : () -> ()
    %cst_64 = arith.constant dense<0.000000e+00> : vector<8x8x8xf32>
    %123 = tpu.matmul %121, %122, %cst_64 {dimension_numbers = #tpu.dot_dimension_numbers<[2], [2], [1], [1], [0, 0, 0, 1, 1, 1], [0], [0]>} : vector<8x8x8xbf16>, vector<8x8x8xbf16>, vector<8x8x8xf32> -> vector<8x8x8xf32>
    "tpu.trace_stop"() : () -> ()
    %124 = vector.shape_cast %123 : vector<8x8x8xf32> to vector<64x8xf32>
    %c0_65 = arith.constant 0 : index
    %c0_66 = arith.constant 0 : index
    %c0_67 = arith.constant 0 : index
    %125 = vector.load %arg7[%c0_65, %c0_66, %c0_67] : memref<8x8x8xbf16, #tpu.memory_space<vmem>>, vector<8x8x8xbf16>
    "tpu.trace_start"() <{level = 10 : i32, message = "hwc,wkc->hwk"}> : () -> ()
    %cst_68 = arith.constant dense<0.000000e+00> : vector<8x8x8xf32>
    %126 = tpu.matmul %125, %121, %cst_68 {dimension_numbers = #tpu.dot_dimension_numbers<[2], [2], [1], [0], [0, 0, 0, 1, 1, 0], [0], [1]>} : vector<8x8x8xbf16>, vector<8x8x8xbf16>, vector<8x8x8xf32> -> vector<8x8x8xf32>
    %127 = tpu.transpose %126, [2, 0, 1] : vector<8x8x8xf32> -> vector<8x8x8xf32>
    "tpu.trace_stop"() : () -> ()
    %128 = vector.shape_cast %127 : vector<8x8x8xf32> to vector<64x8xf32>
    %129 = arith.truncf %124 : vector<64x8xf32> to vector<64x8xbf16>
    %c0_69 = arith.constant 0 : index
    %c0_70 = arith.constant 0 : index
    %130 = vector.load %arg8[%c0_69, %c0_70] : memref<8x64xbf16, #tpu.memory_space<vmem>>, vector<8x64xbf16>
    %cst_71 = arith.constant dense<0.000000e+00> : vector<64x64xf32>
    %131 = tpu.matmul %129, %130, %cst_71 {dimension_numbers = #tpu.dot_dimension_numbers<[1], [0], [0], [1], [0, 0, 1, 1], [], []>} : vector<64x8xbf16>, vector<8x64xbf16>, vector<64x64xf32> -> vector<64x64xf32>
    %132 = arith.addf %120, %131 : vector<64x64xf32>
    %133 = arith.truncf %128 : vector<64x8xf32> to vector<64x8xbf16>
    %c0_72 = arith.constant 0 : index
    %c0_73 = arith.constant 0 : index
    %134 = vector.load %arg9[%c0_72, %c0_73] : memref<8x64xbf16, #tpu.memory_space<vmem>>, vector<8x64xbf16>
    %cst_74 = arith.constant dense<0.000000e+00> : vector<64x64xf32>
    %135 = tpu.matmul %133, %134, %cst_74 {dimension_numbers = #tpu.dot_dimension_numbers<[1], [0], [0], [1], [0, 0, 1, 1], [], []>} : vector<64x8xbf16>, vector<8x64xbf16>, vector<64x64xf32> -> vector<64x64xf32>
    %136 = arith.addf %132, %135 : vector<64x64xf32>
    %cst_75 = arith.constant dense<0xFF800000> : vector<64xf32>
    %137 = vector.multi_reduction <maximumf>, %136, %cst_75 [1] : vector<64x64xf32> to vector<64xf32>
    %138 = vector.shape_cast %137 : vector<64xf32> to vector<64x1xf32>
    %139 = vector.broadcast %138 : vector<64x1xf32> to vector<64x64xf32>
    %140 = arith.subf %136, %139 : vector<64x64xf32>
    %141 = math.exp %140 : vector<64x64xf32>
    %cst_76 = arith.constant dense<0.000000e+00> : vector<64xf32>
    %142 = vector.multi_reduction <add>, %141, %cst_76 [1] : vector<64x64xf32> to vector<64xf32>
    %143 = vector.shape_cast %142 : vector<64xf32> to vector<64x1xf32>
    %144 = tpu.reciprocal %143 {approx = true} : vector<64x1xf32> -> vector<64x1xf32>
    %145 = vector.broadcast %144 : vector<64x1xf32> to vector<64x64xf32>
    %146 = arith.mulf %141, %145 : vector<64x64xf32>
    %147 = arith.truncf %146 : vector<64x64xf32> to vector<64x64xbf16>
    %148 = arith.truncf %117 : vector<64x8xf32> to vector<64x8xbf16>
    %cst_77 = arith.constant dense<0.000000e+00> : vector<64x8xf32>
    %149 = tpu.matmul %147, %148, %cst_77 {dimension_numbers = #tpu.dot_dimension_numbers<[1], [0], [0], [1], [0, 0, 1, 1], [], []>} : vector<64x64xbf16>, vector<64x8xbf16>, vector<64x8xf32> -> vector<64x8xf32>
    %150 = arith.truncf %149 : vector<64x8xf32> to vector<64x8xbf16>
    %151 = tpu.concatenate %42, %78, %114, %150 in 1 : vector<64x8xbf16>, vector<64x8xbf16>, vector<64x8xbf16>, vector<64x8xbf16> -> vector<64x32xbf16>
    %c0_78 = arith.constant 0 : index
    %c0_79 = arith.constant 0 : index
    %152 = vector.load %arg4[%c0_78, %c0_79] : memref<32x32xbf16, #tpu.memory_space<vmem>>, vector<32x32xbf16>
    %cst_80 = arith.constant dense<0.000000e+00> : vector<64x32xf32>
    %153 = tpu.matmul %151, %152, %cst_80 {dimension_numbers = #tpu.dot_dimension_numbers<[1], [0], [0], [1], [0, 0, 1, 1], [], []>} : vector<64x32xbf16>, vector<32x32xbf16>, vector<64x32xf32> -> vector<64x32xf32>
    %c0_81 = arith.constant 0 : index
    %c0_82 = arith.constant 0 : index
    %154 = vector.load %arg5[%c0_81, %c0_82] : memref<1x32xf32, #tpu.memory_space<vmem>>, vector<1x32xf32>
    %155 = vector.broadcast %154 : vector<1x32xf32> to vector<64x32xf32>
    %156 = arith.addf %153, %155 : vector<64x32xf32>
    %c0_83 = arith.constant 0 : index
    %c0_84 = arith.constant 0 : index
    %c0_85 = arith.constant 0 : index
    %157 = vector.load %arg10[%c0_83, %c0_84, %c0_85] : memref<1x64x32xf32, #tpu.memory_space<vmem>>, vector<1x64x32xf32>
    %158 = vector.shape_cast %157 : vector<1x64x32xf32> to vector<64x32xf32>
    %159 = vector.shape_cast %156 : vector<64x32xf32> to vector<1x64x32xf32>
    tpu.vector_store %arg10[%c0_83, %c0_84, %c0_85], %159 {strides = array<i32>} : memref<1x64x32xf32, #tpu.memory_space<vmem>>, vector<1x64x32xf32>,
    return
  }
  func.func @transform_0(%arg0: i32) -> (i32, i32, i32) {
    %c0_i32 = arith.constant 0 : i32
    %c0_i32_0 = arith.constant 0 : i32
    %c0_i32_1 = arith.constant 0 : i32
    return %arg0, %c0_i32, %c0_i32_0 : i32, i32, i32
  }
  func.func @transform_1(%arg0: i32) -> (i32, i32) {
    %c0_i32 = arith.constant 0 : i32
    %c0_i32_0 = arith.constant 0 : i32
    %c0_i32_1 = arith.constant 0 : i32
    return %c0_i32, %c0_i32_0 : i32, i32
  }
  func.func @transform_2(%arg0: i32) -> (i32, i32) {
    %c0_i32 = arith.constant 0 : i32
    %c0_i32_0 = arith.constant 0 : i32
    %c0_i32_1 = arith.constant 0 : i32
    return %c0_i32, %c0_i32_0 : i32, i32
  }
  func.func @transform_3(%arg0: i32) -> (i32, i32) {
    %c0_i32 = arith.constant 0 : i32
    %c0_i32_0 = arith.constant 0 : i32
    %c0_i32_1 = arith.constant 0 : i32
    return %c0_i32, %c0_i32_0 : i32, i32
  }
  func.func @transform_4(%arg0: i32) -> (i32, i32) {
    %c0_i32 = arith.constant 0 : i32
    %c0_i32_0 = arith.constant 0 : i32
    %c0_i32_1 = arith.constant 0 : i32
    return %c0_i32, %c0_i32_0 : i32, i32
  }
  func.func @transform_5(%arg0: i32) -> (i32, i32, i32) {
    %c0_i32 = arith.constant 0 : i32
    %c0_i32_0 = arith.constant 0 : i32
    %c0_i32_1 = arith.constant 0 : i32
    %c0_i32_2 = arith.constant 0 : i32
    return %c0_i32, %c0_i32_0, %c0_i32_1 : i32, i32, i32
  }
  func.func @transform_6(%arg0: i32) -> (i32, i32, i32) {
    %c0_i32 = arith.constant 0 : i32
    %c0_i32_0 = arith.constant 0 : i32
    %c0_i32_1 = arith.constant 0 : i32
    %c0_i32_2 = arith.constant 0 : i32
    return %c0_i32, %c0_i32_0, %c0_i32_1 : i32, i32, i32
  }
  func.func @transform_7(%arg0: i32) -> (i32, i32) {
    %c0_i32 = arith.constant 0 : i32
    %c0_i32_0 = arith.constant 0 : i32
    %c0_i32_1 = arith.constant 0 : i32
    return %c0_i32, %c0_i32_0 : i32, i32
  }
  func.func @transform_8(%arg0: i32) -> (i32, i32) {
    %c0_i32 = arith.constant 0 : i32
    %c0_i32_0 = arith.constant 0 : i32
    %c0_i32_1 = arith.constant 0 : i32
    return %c0_i32, %c0_i32_0 : i32, i32
  }
  func.func @transform_9(%arg0: i32) -> (i32, i32, i32) {
    %c0_i32 = arith.constant 0 : i32
    %c0_i32_0 = arith.constant 0 : i32
    %c0_i32_1 = arith.constant 0 : i32
    return %arg0, %c0_i32, %c0_i32_0 : i32, i32, i32
  }
}

</mosaic_0001>

<llo_original>
// kernel: tpu_custom_call.1
$region0: #{tpu_custom_call.1}
  #allocation0 [shape = 'u32[]', space=smem, size = 0x4, offset = 0x4, fixed_abs, tag = 'smem constant byte address 0x4 - core index']
  #allocation1 [shape = 'u32[144,128]{1,0:T(1,128)}', space=vmem, size = 0x12000, scoped, tag = 'internal scratch']
  %s0 = inlined_call_operand.vmem [shape: bf16[2,64,32], index: 0, kind: input, shape index: {}]
  %s1 = inlined_call_operand.vmem [shape: bf16[32,96], index: 1, kind: input, shape index: {}]
  %s2 = inlined_call_operand.vmem [shape: f32[1,96], index: 2, kind: input, shape index: {}]
  %s3 = inlined_call_operand.vmem [shape: bf16[32,32], index: 3, kind: input, shape index: {}]
  %s4 = inlined_call_operand.vmem [shape: f32[1,32], index: 4, kind: input, shape index: {}]
  %s5 = inlined_call_operand.vmem [shape: bf16[8,8,8], index: 5, kind: input, shape index: {}]
  %s6 = inlined_call_operand.vmem [shape: bf16[8,8,8], index: 6, kind: input, shape index: {}]
  %s7 = inlined_call_operand.vmem [shape: bf16[8,64], index: 7, kind: input, shape index: {}]
  %s8 = inlined_call_operand.vmem [shape: bf16[8,64], index: 8, kind: input, shape index: {}]
  %s9 = inlined_call_operand.vmem [shape: f32[2,64,32], index: 9, kind: output, shape index: {}]
  %s10 = sld [smem:[#allocation0]]
  $region69: #{tpu_custom_call.1} parent=0
    _
  %s12 = ssub.s32 1, %s10
  %s13 = scalar_select 0, %s12, %s10
  loop: start=0, step=1, limit=4
  $region2: #{tpu_custom_call.1} parent=0 // loop_pre_header
    _
  $region3: #{tpu_custom_call.1} parent=0 // loop_header
    %s15 = sphi 0, %s19
    %p16 = scmp.ge.s32.totalorder %s15, 4
    %s25 = sphi 0, %s27
    %s28 = sphi 0, %s25
    %s29 = sphi 0, %s28
    %s45 = sphi 0, %s29
    %s49 = sphi 0, %s49
    %s51 = sphi 0, %s49
    %s52 = sphi 0, %s51
    %s66 = sphi 0, %s52
    %s70 = sphi 0, %s70
    %s72 = sphi 0, %s70
    %s73 = sphi 0, %s72
    %s87 = sphi 0, %s73
    %s91 = sphi 0, %s91
    %s93 = sphi 0, %s91
    %s94 = sphi 0, %s93
    %s108 = sphi 0, %s94
    %s112 = sphi 0, %s112
    %s114 = sphi 0, %s112
    %s115 = sphi 0, %s114
    %s129 = sphi 0, %s115
    %s133 = sphi 0, %s133
    %s135 = sphi 0, %s133
    %s136 = sphi 0, %s135
    %s150 = sphi 0, %s136
    %s154 = sphi 0, %s154
    %s156 = sphi 0, %s154
    %s157 = sphi 0, %s156
    %s171 = sphi 0, %s157
    %s175 = sphi 0, %s175
    %s177 = sphi 0, %s175
    %s178 = sphi 0, %s177
    %s192 = sphi 0, %s178
    %s196 = sphi 0, %s196
    %s198 = sphi 0, %s196
    %s199 = sphi 0, %s198
    %s213 = sphi 0, %s199
    %s219 = sphi 0, %s221
    %s222 = sphi 0, %s219
    %s223 = sphi 0, %s222
    %s239 = sphi 0, %s223
  $region4: #{tpu_custom_call.1} parent=0 // loop_header_branch
    %18 = sbr.rel (%p16) target = $region8
  $region5: #{tpu_custom_call.1} parent=0 // loop_body
    %s20 = ssub.s32 %s15, 1
    %s21 = ssub.s32 %s15, 2
    %s22 = sadd.s32 %s15, 1
    %s23 = ssub.s32 %s15, %s22
    %p24 = scmp.eq.s32.totalorder %s23, 0
    %s26 = sadd.s32 %s25, 1
    %s27 = scalar_select %p24, %s25, %s26
    %p30 = pneg %p24
    %p31 = scmp.eq.s32.totalorder %s15, 1
    %p32 = por %p30, %p31
    %p33 = scmp.ne.s32.totalorder %s25, %s28
    %p34 = scmp.eq.s32.totalorder %s15, 0
    %p35 = por %p33, %p34
    %p36 = scmp.ne.s32.totalorder %s25, %s28
    %p37 = scmp.eq.s32.totalorder %s20, 1
    %p38 = por %p36, %p37
    %p39 = scmp.ne.s32.totalorder %s28, %s29
    %p40 = scmp.eq.s32.totalorder %s20, 0
    %p41 = por %p39, %p40
    %p42 = scmp.ne.s32.totalorder %s28, %s29
    %p43 = scmp.eq.s32.totalorder %s21, 1
    %p44 = por %p42, %p43
    %p46 = scmp.ne.s32.totalorder %s29, %s45
    %p47 = scmp.eq.s32.totalorder %s21, 0
    %p48 = por %p46, %p47
    %s50 = sadd.s32 %s49, 1
    %p53 = scmp.eq.s32.totalorder %s15, 1
    %p54 = scmp.ne.s32.totalorder %s49, %s51
    %p55 = scmp.eq.s32.totalorder %s15, 0
    %p56 = por %p54, %p55
    %p57 = scmp.ne.s32.totalorder %s49, %s51
    %p58 = scmp.eq.s32.totalorder %s20, 1
    %p59 = por %p57, %p58
    %p60 = scmp.ne.s32.totalorder %s51, %s52
    %p61 = scmp.eq.s32.totalorder %s20, 0
    %p62 = por %p60, %p61
    %p63 = scmp.ne.s32.totalorder %s51, %s52
    %p64 = scmp.eq.s32.totalorder %s21, 1
    %p65 = por %p63, %p64
    %p67 = scmp.ne.s32.totalorder %s52, %s66
    %p68 = scmp.eq.s32.totalorder %s21, 0
    %p69 = por %p67, %p68
    %s71 = sadd.s32 %s70, 1
    %p74 = scmp.eq.s32.totalorder %s15, 1
    %p75 = scmp.ne.s32.totalorder %s70, %s72
    %p76 = scmp.eq.s32.totalorder %s15, 0
    %p77 = por %p75, %p76
    %p78 = scmp.ne.s32.totalorder %s70, %s72
    %p79 = scmp.eq.s32.totalorder %s20, 1
    %p80 = por %p78, %p79
    %p81 = scmp.ne.s32.totalorder %s72, %s73
    %p82 = scmp.eq.s32.totalorder %s20, 0
    %p83 = por %p81, %p82
    %p84 = scmp.ne.s32.totalorder %s72, %s73
    %p85 = scmp.eq.s32.totalorder %s21, 1
    %p86 = por %p84, %p85
    %p88 = scmp.ne.s32.totalorder %s73, %s87
    %p89 = scmp.eq.s32.totalorder %s21, 0
    %p90 = por %p88, %p89
    %s92 = sadd.s32 %s91, 1
    %p95 = scmp.eq.s32.totalorder %s15, 1
    %p96 = scmp.ne.s32.totalorder %s91, %s93
    %p97 = scmp.eq.s32.totalorder %s15, 0
    %p98 = por %p96, %p97
    %p99 = scmp.ne.s32.totalorder %s91, %s93
    %p100 = scmp.eq.s32.totalorder %s20, 1
    %p101 = por %p99, %p100
    %p102 = scmp.ne.s32.totalorder %s93, %s94
    %p103 = scmp.eq.s32.totalorder %s20, 0
    %p104 = por %p102, %p103
    %p105 = scmp.ne.s32.totalorder %s93, %s94
    %p106 = scmp.eq.s32.totalorder %s21, 1
    %p107 = por %p105, %p106
    %p109 = scmp.ne.s32.totalorder %s94, %s108
    %p110 = scmp.eq.s32.totalorder %s21, 0
    %p111 = por %p109, %p110
    %s113 = sadd.s32 %s112, 1
    %p116 = scmp.eq.s32.totalorder %s15, 1
    %p117 = scmp.ne.s32.totalorder %s112, %s114
    %p118 = scmp.eq.s32.totalorder %s15, 0
    %p119 = por %p117, %p118
    %p120 = scmp.ne.s32.totalorder %s112, %s114
    %p121 = scmp.eq.s32.totalorder %s20, 1
    %p122 = por %p120, %p121
    %p123 = scmp.ne.s32.totalorder %s114, %s115
    %p124 = scmp.eq.s32.totalorder %s20, 0
    %p125 = por %p123, %p124
    %p126 = scmp.ne.s32.totalorder %s114, %s115
    %p127 = scmp.eq.s32.totalorder %s21, 1
    %p128 = por %p126, %p127
    %p130 = scmp.ne.s32.totalorder %s115, %s129
    %p131 = scmp.eq.s32.totalorder %s21, 0
    %p132 = por %p130, %p131
    %s134 = sadd.s32 %s133, 1
    %p137 = scmp.eq.s32.totalorder %s15, 1
    %p138 = scmp.ne.s32.totalorder %s133, %s135
    %p139 = scmp.eq.s32.totalorder %s15, 0
    %p140 = por %p138, %p139
    %p141 = scmp.ne.s32.totalorder %s133, %s135
    %p142 = scmp.eq.s32.totalorder %s20, 1
    %p143 = por %p141, %p142
    %p144 = scmp.ne.s32.totalorder %s135, %s136
    %p145 = scmp.eq.s32.totalorder %s20, 0
    %p146 = por %p144, %p145
    %p147 = scmp.ne.s32.totalorder %s135, %s136
    %p148 = scmp.eq.s32.totalorder %s21, 1
    %p149 = por %p147, %p148
    %p151 = scmp.ne.s32.totalorder %s136, %s150
    %p152 = scmp.eq.s32.totalorder %s21, 0
    %p153 = por %p151, %p152
    %s155 = sadd.s32 %s154, 1
    %p158 = scmp.eq.s32.totalorder %s15, 1
    %p159 = scmp.ne.s32.totalorder %s154, %s156
    %p160 = scmp.eq.s32.totalorder %s15, 0
    %p161 = por %p159, %p160
    %p162 = scmp.ne.s32.totalorder %s154, %s156
    %p163 = scmp.eq.s32.totalorder %s20, 1
    %p164 = por %p162, %p163
    %p165 = scmp.ne.s32.totalorder %s156, %s157
    %p166 = scmp.eq.s32.totalorder %s20, 0
    %p167 = por %p165, %p166
    %p168 = scmp.ne.s32.totalorder %s156, %s157
    %p169 = scmp.eq.s32.totalorder %s21, 1
    %p170 = por %p168, %p169
    %p172 = scmp.ne.s32.totalorder %s157, %s171
    %p173 = scmp.eq.s32.totalorder %s21, 0
    %p174 = por %p172, %p173
    %s176 = sadd.s32 %s175, 1
    %p179 = scmp.eq.s32.totalorder %s15, 1
    %p180 = scmp.ne.s32.totalorder %s175, %s177
    %p181 = scmp.eq.s32.totalorder %s15, 0
    %p182 = por %p180, %p181
    %p183 = scmp.ne.s32.totalorder %s175, %s177
    %p184 = scmp.eq.s32.totalorder %s20, 1
    %p185 = por %p183, %p184
    %p186 = scmp.ne.s32.totalorder %s177, %s178
    %p187 = scmp.eq.s32.totalorder %s20, 0
    %p188 = por %p186, %p187
    %p189 = scmp.ne.s32.totalorder %s177, %s178
    %p190 = scmp.eq.s32.totalorder %s21, 1
    %p191 = por %p189, %p190
    %p193 = scmp.ne.s32.totalorder %s178, %s192
    %p194 = scmp.eq.s32.totalorder %s21, 0
    %p195 = por %p193, %p194
    %s197 = sadd.s32 %s196, 1
    %p200 = scmp.eq.s32.totalorder %s15, 1
    %p201 = scmp.ne.s32.totalorder %s196, %s198
    %p202 = scmp.eq.s32.totalorder %s15, 0
    %p203 = por %p201, %p202
    %p204 = scmp.ne.s32.totalorder %s196, %s198
    %p205 = scmp.eq.s32.totalorder %s20, 1
    %p206 = por %p204, %p205
    %p207 = scmp.ne.s32.totalorder %s198, %s199
    %p208 = scmp.eq.s32.totalorder %s20, 0
    %p209 = por %p207, %p208
    %p210 = scmp.ne.s32.totalorder %s198, %s199
    %p211 = scmp.eq.s32.totalorder %s21, 1
    %p212 = por %p210, %p211
    %p214 = scmp.ne.s32.totalorder %s199, %s213
    %p215 = scmp.eq.s32.totalorder %s21, 0
    %p216 = por %p214, %p215
    %s217 = ssub.s32 %s15, %s22
    %p218 = scmp.eq.s32.totalorder %s217, 0
    %s220 = sadd.s32 %s219, 1
    %s221 = scalar_select %p218, %s219, %s220
    %p224 = pneg %p218
    %p225 = scmp.eq.s32.totalorder %s15, 1
    %p226 = por %p224, %p225
    %p227 = scmp.ne.s32.totalorder %s219, %s222
    %p228 = scmp.eq.s32.totalorder %s15, 0
    %p229 = por %p227, %p228
    %p230 = scmp.ne.s32.totalorder %s219, %s222
    %p231 = scmp.eq.s32.totalorder %s20, 1
    %p232 = por %p230, %p231
    %p233 = scmp.ne.s32.totalorder %s222, %s223
    %p234 = scmp.eq.s32.totalorder %s20, 0
    %p235 = por %p233, %p234
    %p236 = scmp.ne.s32.totalorder %s222, %s223
    %p237 = scmp.eq.s32.totalorder %s21, 1
    %p238 = por %p236, %p237
    %p240 = scmp.ne.s32.totalorder %s223, %s239
    %p241 = scmp.eq.s32.totalorder %s21, 0
    %p242 = por %p240, %p241
    %p243 = scmp.le.s32.totalorder 1, %s15
    %p244 = scmp.lt.s32.totalorder %s15, 3
    %p245 = pnand %p243, %p244
    %p246 = pneg %p245
    // Predicated region
    $region9: #{tpu_custom_call.1} parent=5 // pred_check
      _
    $region10: #{tpu_custom_call.1} parent=5 // pred_check_branch
      %248 = sbr.rel (%p245) target = $region12
    $region11: #{tpu_custom_call.1} parent=5 // pred_region
      %s249 = ssub.s32 %s15, 1
      // Predicated region
      $region13: #{tpu_custom_call.1} parent=11 // pred_check
        %p250 = pneg %p62
      $region14: #{tpu_custom_call.1} parent=11 // pred_check_branch
        %252 = sbr.rel (%p250) target = $region16
      $region15: #{tpu_custom_call.1} parent=11 // pred_region
        _
      $region16: #{tpu_custom_call.1} parent=11 // pred_fallthru
        _
      // Predicated region
      $region17: #{tpu_custom_call.1} parent=11 // pred_check
        %p253 = pneg %p83
      $region18: #{tpu_custom_call.1} parent=11 // pred_check_branch
        %255 = sbr.rel (%p253) target = $region20
      $region19: #{tpu_custom_call.1} parent=11 // pred_region
        _
      $region20: #{tpu_custom_call.1} parent=11 // pred_fallthru
        _
      // Predicated region
      $region21: #{tpu_custom_call.1} parent=11 // pred_check
        %p256 = pneg %p104
      $region22: #{tpu_custom_call.1} parent=11 // pred_check_branch
        %258 = sbr.rel (%p256) target = $region24
      $region23: #{tpu_custom_call.1} parent=11 // pred_region
        _
      $region24: #{tpu_custom_call.1} parent=11 // pred_fallthru
        _
      // Predicated region
      $region25: #{tpu_custom_call.1} parent=11 // pred_check
        %p259 = pneg %p125
      $region26: #{tpu_custom_call.1} parent=11 // pred_check_branch
        %261 = sbr.rel (%p259) target = $region28
      $region27: #{tpu_custom_call.1} parent=11 // pred_region
        _
      $region28: #{tpu_custom_call.1} parent=11 // pred_fallthru
        _
      // Predicated region
      $region29: #{tpu_custom_call.1} parent=11 // pred_check
        %p262 = pneg %p146
      $region30: #{tpu_custom_call.1} parent=11 // pred_check_branch
        %264 = sbr.rel (%p262) target = $region32
      $region31: #{tpu_custom_call.1} parent=11 // pred_region
        _
      $region32: #{tpu_custom_call.1} parent=11 // pred_fallthru
        _
      // Predicated region
      $region33: #{tpu_custom_call.1} parent=11 // pred_check
        %p265 = pneg %p167
      $region34: #{tpu_custom_call.1} parent=11 // pred_check_branch
        %267 = sbr.rel (%p265) target = $region36
      $region35: #{tpu_custom_call.1} parent=11 // pred_region
        _
      $region36: #{tpu_custom_call.1} parent=11 // pred_fallthru
        _
      // Predicated region
      $region37: #{tpu_custom_call.1} parent=11 // pred_check
        %p268 = pneg %p188
      $region38: #{tpu_custom_call.1} parent=11 // pred_check_branch
        %270 = sbr.rel (%p268) target = $region40
      $region39: #{tpu_custom_call.1} parent=11 // pred_region
        _
      $region40: #{tpu_custom_call.1} parent=11 // pred_fallthru
        _
      // Predicated region
      $region41: #{tpu_custom_call.1} parent=11 // pred_check
        %p271 = pneg %p209
      $region42: #{tpu_custom_call.1} parent=11 // pred_check_branch
        %273 = sbr.rel (%p271) target = $region44
      $region43: #{tpu_custom_call.1} parent=11 // pred_region
        _
      $region44: #{tpu_custom_call.1} parent=11 // pred_fallthru
        _
    $region12: #{tpu_custom_call.1} parent=5 // pred_fallthru
      _
    %p274 = scmp.lt.s32.totalorder %s15, 2
    // Predicated region
    $region45: #{tpu_custom_call.1} parent=5 // pred_check
      %p275 = pneg %p274
    $region46: #{tpu_custom_call.1} parent=5 // pred_check_branch
      %277 = sbr.rel (%p275) target = $region48
    $region47: #{tpu_custom_call.1} parent=5 // pred_region
      // Predicated region
      $region49: #{tpu_custom_call.1} parent=47 // pred_check
        %p278 = pneg %p35
      $region50: #{tpu_custom_call.1} parent=47 // pred_check_branch
        %280 = sbr.rel (%p278) target = $region52
      $region51: #{tpu_custom_call.1} parent=47 // pred_region
        %p281 = scmp.lt.s32.totalorder %s15, 1
        %s282 = scalar_select %p281, %s15, 1
        %s283 = smul.addr %s282, 8
        %s284 = smul.addr %s283, 4
        %s285 = scalar_lea.vmem %s0, %s284
      $region52: #{tpu_custom_call.1} parent=47 // pred_fallthru
        _
    $region48: #{tpu_custom_call.1} parent=5 // pred_fallthru
      _
    %p286 = scmp.le.s32.totalorder 1, %s15
    %p287 = scmp.lt.s32.totalorder %s15, 3
    %p288 = pnand %p286, %p287
    %p289 = pneg %p288
    // Predicated region
    $region53: #{tpu_custom_call.1} parent=5 // pred_check
      _
    $region54: #{tpu_custom_call.1} parent=5 // pred_check_branch
      %291 = sbr.rel (%p288) target = $region56
    $region55: #{tpu_custom_call.1} parent=5 // pred_region
      %s292 = ssub.s32 %s15, 1
      %p293 = scmp.lt.s32.totalorder %s20, 1
      %s294 = scalar_select %p293, %s20, 1
      %s295 = smul.addr %s294, 8
      %s296 = smul.addr %s295, 4
      %s297 = scalar_lea.vmem %s0, %s296
      %p298 = pneg %p41
      %p299 = pneg %p38
      %p300 = pneg %p62
      %p301 = pneg %p59
      %p302 = pneg %p83
      %p303 = pneg %p80
      %p304 = pneg %p104
      %p305 = pneg %p101
      %p306 = pneg %p125
      %p307 = pneg %p122
      %p308 = pneg %p146
      %p309 = pneg %p143
      %p310 = pneg %p167
      %p311 = pneg %p164
      %p312 = pneg %p188
      %p313 = pneg %p185
      %p314 = pneg %p209
      %p315 = pneg %p206
      %p316 = pneg %p235
      %p317 = pneg %p232
      %p318 = scmp.lt.s32.totalorder %s20, 1
      %s319 = scalar_select %p318, %s20, 1
      %s320 = smul.addr %s319, 8
      %s321 = smul.addr %s320, 8
      %s322 = scalar_lea.vmem %s9, %s321
      %p323 = scmp.lt.s32.totalorder %s20, 1
      %s324 = scalar_select %p323, %s20, 1
      %s325 = smul.addr %s324, 8
      %s326 = smul.addr %s325, 4
      %s327 = scalar_lea.vmem %s0, %s326
      %p328 = scmp.lt.s32.totalorder %s20, 1
      %s329 = scalar_select %p328, %s20, 1
      %s330 = smul.addr %s329, 8
      %s331 = smul.addr %s330, 8
      %s332 = scalar_lea.vmem %s9, %s331
      %v334 = vld [vmem:[%s327] sm:$0xf]
      %v335 = vld [vmem:[%s327 + $0x4] sm:$0xf]
      %v336 = vld [vmem:[%s327 + $0x8] sm:$0xf]
      %v337 = vld [vmem:[%s327 + $0xc] sm:$0xf]
      %v338 = vld [vmem:[%s327 + $0x10] sm:$0xf]
      %v339 = vld [vmem:[%s327 + $0x14] sm:$0xf]
      %v340 = vld [vmem:[%s327 + $0x18] sm:$0xf]
      %v341 = vld [vmem:[%s327 + $0x1c] sm:$0xf]
      %v342 = vld [vmem:[%s1] sm:$0xf]
      %v343 = vld [vmem:[%s1 + $0x4] sm:$0xf]
      %v344 = vld [vmem:[%s1 + $0x8] sm:$0xf]
      %v345 = vld [vmem:[%s1 + $0xc] sm:$0xf]
      %v346 = vld [vmem:[%s2] sm:$0x1]
      %v348 = vlaneseq
      %v349 = vshrl.u32 %v348, 7
      %v350 = vsub.s32 0, %v349
      %v351 = vrot.slane %v346, %v350
      %v361 = vunpack.c.l.b16 %v334
      %v362 = vunpack.c.l.b16 %v335
      %v363 = vunpack.c.l.b16 %v336
      %v364 = vunpack.c.l.b16 %v337
      %v365 = vunpack.c.l.b16 %v338
      %v366 = vunpack.c.l.b16 %v339
      %v367 = vunpack.c.l.b16 %v340
      %v368 = vunpack.c.l.b16 %v341
      %v369 = vpack.c.b16 %v362, %v361
      %v370 = vpack.c.b16 %v364, %v363
      %v371 = vpack.c.b16 %v366, %v365
      %v372 = vpack.c.b16 %v368, %v367
      %v377 = vunpack.c.l.b16 %v342
      %v378 = vunpack.c.l.b16 %v343
      %v379 = vunpack.c.l.b16 %v344
      %v380 = vunpack.c.l.b16 %v345
      %v381 = vpack.c.b16 %v378, %v377
      %v382 = vpack.c.b16 %v380, %v379
      %vm385 = vcmask 261120
      %v387 = vsel %vm385, %v369, 0
      %v390 = vsel %vm385, %v370, 0
      %v393 = vsel %vm385, %v371, 0
      %v396 = vsel %vm385, %v372, 0
      %398 = vmatprep.subr.bf16.mxu0 0
      %399 = vmatpush1.bf16.msra.mxu0 %v381
      %400 = vmatprep.subr.bf16.mxu0 0
      %401 = vmatpush1.bf16.msra.mxu0 %v382
      %402 = vmatprep.subr.bf16.mxu0 0
      %403 = vmatpush1.bf16.msra.mxu0 0
      %404 = vmatprep.subr.bf16.mxu0 0
      %405 = vmatpush1.bf16.msra.mxu0 0
      %406 = vmatprep.subr.bf16.mxu0 0
      %407 = vmatpush1.bf16.msra.mxu0 0
      %408 = vmatprep.subr.bf16.mxu0 0
      %409 = vmatpush1.bf16.msra.mxu0 0
      %410 = vmatprep.subr.bf16.mxu0 0
      %411 = vmatpush1.bf16.msra.mxu0 0
      %412 = vmatprep.subr.bf16.mxu0 0
      %413 = vmatpush1.bf16.msra.mxu0 0
      %414 = vmatprep.subr.bf16.mxu0 0
      %415 = vmatpush1.bf16.msra.mxu0 0
      %416 = vmatprep.subr.bf16.mxu0 0
      %417 = vmatpush1.bf16.msra.mxu0 0
      %418 = vmatprep.subr.bf16.mxu0 0
      %419 = vmatpush1.bf16.msra.mxu0 0
      %420 = vmatprep.subr.bf16.mxu0 0
      %421 = vmatpush1.bf16.msra.mxu0 0
      %422 = vmatprep.subr.bf16.mxu0 0
      %423 = vmatpush1.bf16.msra.mxu0 0
      %424 = vmatprep.subr.bf16.mxu0 0
      %425 = vmatpush1.bf16.msra.mxu0 0
      %426 = vmatprep.subr.bf16.mxu0 0
      %427 = vmatpush1.bf16.msra.mxu0 0
      %428 = vmatprep.subr.bf16.mxu0 0
      %429 = vmatpush1.bf16.msra.mxu0 0
      %430 = vmatprep.mubr.bf16.mxu0 0
      %431 = vmatmul.mubr.bf16.gmra.mrb[0].mxu0 %v387
      %v432 = vpop.f32.mrb[0].mxu0
      %v433 = vadd.f32 %v351, %v432
      %v434 = vpop.f32.mrb[0].mxu0
      %v435 = vpop.f32.mrb[0].mxu0
      %v436 = vadd.f32 %v351, %v435
      %v437 = vpop.f32.mrb[0].mxu0
      %438 = vmatprep.mubr.bf16.mxu0 0
      %439 = vmatmul.mubr.bf16.gmra.mrb[0].mxu0 %v390
      %v440 = vpop.f32.mrb[0].mxu0
      %v441 = vadd.f32 %v351, %v440
      %v442 = vpop.f32.mrb[0].mxu0
      %v443 = vpop.f32.mrb[0].mxu0
      %v444 = vadd.f32 %v351, %v443
      %v445 = vpop.f32.mrb[0].mxu0
      %446 = vmatprep.mubr.bf16.mxu0 0
      %447 = vmatmul.mubr.bf16.gmra.mrb[0].mxu0 %v393
      %v448 = vpop.f32.mrb[0].mxu0
      %v449 = vadd.f32 %v351, %v448
      %v450 = vpop.f32.mrb[0].mxu0
      %v451 = vpop.f32.mrb[0].mxu0
      %v452 = vadd.f32 %v351, %v451
      %v453 = vpop.f32.mrb[0].mxu0
      %454 = vmatprep.mubr.bf16.mxu0 0
      %455 = vmatmul.mubr.bf16.gmra.mrb[0].mxu0 %v396
      %v456 = vpop.f32.mrb[0].mxu0
      %v457 = vadd.f32 %v351, %v456
      %v458 = vpop.f32.mrb[0].mxu0
      %v459 = vpop.f32.mrb[0].mxu0
      %v460 = vadd.f32 %v351, %v459
      %v461 = vpop.f32.mrb[0].mxu0
      %462 = vdwg.mxu0
      %v463 = vpack.c.bf16 %v436, %v433
      %v464 = vpack.c.bf16 %v444, %v441
      %v465 = vpack.c.bf16 %v452, %v449
      %v466 = vpack.c.bf16 %v460, %v457
      %v471 = vunpack.c.l.b16 %v463
      %v472 = vunpack.c.h.b16 %v463
      %v473 = vunpack.c.l.b16 %v464
      %v474 = vunpack.c.h.b16 %v464
      %v475 = vunpack.c.l.b16 %v465
      %v476 = vunpack.c.h.b16 %v465
      %v477 = vunpack.c.l.b16 %v466
      %v478 = vunpack.c.h.b16 %v466
      %v479 = vpack.c.b16 %v471, %v471
      %v480 = vpack.c.b16 %v472, %v472
      %v481 = vpack.c.b16 %v473, %v473
      %v482 = vpack.c.b16 %v474, %v474
      %v483 = vpack.c.b16 %v475, %v475
      %v484 = vpack.c.b16 %v476, %v476
      %v485 = vpack.c.b16 %v477, %v477
      %v486 = vpack.c.b16 %v478, %v478
      %v495 = vld [vmem:[%s5] sm:$0xf]
      %v496 = vld [vmem:[%s5 + $0x4] sm:$0xf]
      %v497 = vld [vmem:[%s5 + $0x8] sm:$0xf]
      %v498 = vld [vmem:[%s5 + $0xc] sm:$0xf]
      %v499 = vld [vmem:[%s5 + $0x10] sm:$0xf]
      %v500 = vld [vmem:[%s5 + $0x14] sm:$0xf]
      %v501 = vld [vmem:[%s5 + $0x18] sm:$0xf]
      %v502 = vld [vmem:[%s5 + $0x1c] sm:$0xf]
      %vm503 = vcmask 64512
      %v505 = vsel %vm503, %v479, 0
      %v508 = vsel %vm503, %v495, 0
      %510 = vmatprep.subr.bf16.mxu0 0
      %511 = vmatpush1.bf16.xpose.msra.mxu0 %v508
      %512 = vmatprep.subr.bf16.mxu0 0
      %513 = vmatpush1.bf16.xpose.msra.mxu0 0
      %514 = vmatprep.subr.bf16.mxu0 0
      %515 = vmatpush1.bf16.xpose.msra.mxu0 0
      %516 = vmatprep.subr.bf16.mxu0 0
      %517 = vmatpush1.bf16.xpose.msra.mxu0 0
      %518 = vmatprep.subr.bf16.mxu0 0
      %519 = vmatpush1.bf16.xpose.msra.mxu0 0
      %520 = vmatprep.subr.bf16.mxu0 0
      %521 = vmatpush1.bf16.xpose.msra.mxu0 0
      %522 = vmatprep.subr.bf16.mxu0 0
      %523 = vmatpush1.bf16.xpose.msra.mxu0 0
      %524 = vmatprep.subr.bf16.mxu0 0
      %525 = vmatpush1.bf16.xpose.msra.mxu0 0
      %526 = vmatprep.subr.bf16.mxu0 0
      %527 = vmatpush1.bf16.xpose.msra.mxu0 0
      %528 = vmatprep.subr.bf16.mxu0 0
      %529 = vmatpush1.bf16.xpose.msra.mxu0 0
      %530 = vmatprep.subr.bf16.mxu0 0
      %531 = vmatpush1.bf16.xpose.msra.mxu0 0
      %532 = vmatprep.subr.bf16.mxu0 0
      %533 = vmatpush1.bf16.xpose.msra.mxu0 0
      %534 = vmatprep.subr.bf16.mxu0 0
      %535 = vmatpush1.bf16.xpose.msra.mxu0 0
      %536 = vmatprep.subr.bf16.mxu0 0
      %537 = vmatpush1.bf16.xpose.msra.mxu0 0
      %538 = vmatprep.subr.bf16.mxu0 0
      %539 = vmatpush1.bf16.xpose.msra.mxu0 0
      %540 = vmatprep.subr.bf16.mxu0 0
      %541 = vmatpush1.bf16.xpose.msra.mxu0 0
      %542 = vmatprep.mubr.bf16.mxu0 0
      %543 = vmatmul.mubr.bf16.gmra.mrb[0].mxu0 %v505
      %v544 = vpop.f32.mrb[0].mxu0
      %v545 = vadd.f32 0.0, %v544
      %v546 = vpop.f32.mrb[0].mxu0
      %v547 = vpop.f32.mrb[0].mxu0
      %v548 = vpop.f32.mrb[0].mxu0
      %549 = vdwg.mxu0
      %v551 = vsel %vm503, %v480, 0
      %v554 = vsel %vm503, %v496, 0
      %556 = vmatprep.subr.bf16.mxu0 0
      %557 = vmatpush1.bf16.xpose.msra.mxu0 %v554
      %558 = vmatprep.subr.bf16.mxu0 0
      %559 = vmatpush1.bf16.xpose.msra.mxu0 0
      %560 = vmatprep.subr.bf16.mxu0 0
      %561 = vmatpush1.bf16.xpose.msra.mxu0 0
      %562 = vmatprep.subr.bf16.mxu0 0
      %563 = vmatpush1.bf16.xpose.msra.mxu0 0
      %564 = vmatprep.subr.bf16.mxu0 0
      %565 = vmatpush1.bf16.xpose.msra.mxu0 0
      %566 = vmatprep.subr.bf16.mxu0 0
      %567 = vmatpush1.bf16.xpose.msra.mxu0 0
      %568 = vmatprep.subr.bf16.mxu0 0
      %569 = vmatpush1.bf16.xpose.msra.mxu0 0
      %570 = vmatprep.subr.bf16.mxu0 0
      %571 = vmatpush1.bf16.xpose.msra.mxu0 0
      %572 = vmatprep.subr.bf16.mxu0 0
      %573 = vmatpush1.bf16.xpose.msra.mxu0 0
      %574 = vmatprep.subr.bf16.mxu0 0
      %575 = vmatpush1.bf16.xpose.msra.mxu0 0
      %576 = vmatprep.subr.bf16.mxu0 0
      %577 = vmatpush1.bf16.xpose.msra.mxu0 0
      %578 = vmatprep.subr.bf16.mxu0 0
      %579 = vmatpush1.bf16.xpose.msra.mxu0 0
      %580 = vmatprep.subr.bf16.mxu0 0
      %581 = vmatpush1.bf16.xpose.msra.mxu0 0
      %582 = vmatprep.subr.bf16.mxu0 0
      %583 = vmatpush1.bf16.xpose.msra.mxu0 0
      %584 = vmatprep.subr.bf16.mxu0 0
      %585 = vmatpush1.bf16.xpose.msra.mxu0 0
      %586 = vmatprep.subr.bf16.mxu0 0
      %587 = vmatpush1.bf16.xpose.msra.mxu0 0
      %588 = vmatprep.mubr.bf16.mxu0 0
      %589 = vmatmul.mubr.bf16.gmra.mrb[0].mxu0 %v551
      %v590 = vpop.f32.mrb[0].mxu0
      %v591 = vadd.f32 0.0, %v590
      %v592 = vpop.f32.mrb[0].mxu0
      %v593 = vpop.f32.mrb[0].mxu0
      %v594 = vpop.f32.mrb[0].mxu0
      %595 = vdwg.mxu0
      %v597 = vsel %vm503, %v481, 0
      %v600 = vsel %vm503, %v497, 0
      %602 = vmatprep.subr.bf16.mxu0 0
      %603 = vmatpush1.bf16.xpose.msra.mxu0 %v600
      %604 = vmatprep.subr.bf16.mxu0 0
      %605 = vmatpush1.bf16.xpose.msra.mxu0 0
      %606 = vmatprep.subr.bf16.mxu0 0
      %607 = vmatpush1.bf16.xpose.msra.mxu0 0
      %608 = vmatprep.subr.bf16.mxu0 0
      %609 = vmatpush1.bf16.xpose.msra.mxu0 0
      %610 = vmatprep.subr.bf16.mxu0 0
      %611 = vmatpush1.bf16.xpose.msra.mxu0 0
      %612 = vmatprep.subr.bf16.mxu0 0
      %613 = vmatpush1.bf16.xpose.msra.mxu0 0
      %614 = vmatprep.subr.bf16.mxu0 0
      %615 = vmatpush1.bf16.xpose.msra.mxu0 0
      %616 = vmatprep.subr.bf16.mxu0 0
      %617 = vmatpush1.bf16.xpose.msra.mxu0 0
      %618 = vmatprep.subr.bf16.mxu0 0
      %619 = vmatpush1.bf16.xpose.msra.mxu0 0
      %620 = vmatprep.subr.bf16.mxu0 0
      %621 = vmatpush1.bf16.xpose.msra.mxu0 0
      %622 = vmatprep.subr.bf16.mxu0 0
      %623 = vmatpush1.bf16.xpose.msra.mxu0 0
      %624 = vmatprep.subr.bf16.mxu0 0
      %625 = vmatpush1.bf16.xpose.msra.mxu0 0
      %626 = vmatprep.subr.bf16.mxu0 0
      %627 = vmatpush1.bf16.xpose.msra.mxu0 0
      %628 = vmatprep.subr.bf16.mxu0 0
      %629 = vmatpush1.bf16.xpose.msra.mxu0 0
      %630 = vmatprep.subr.bf16.mxu0 0
      %631 = vmatpush1.bf16.xpose.msra.mxu0 0
      %632 = vmatprep.subr.bf16.mxu0 0
      %633 = vmatpush1.bf16.xpose.msra.mxu0 0
      %634 = vmatprep.mubr.bf16.mxu0 0
      %635 = vmatmul.mubr.bf16.gmra.mrb[0].mxu0 %v597
      %v636 = vpop.f32.mrb[0].mxu0
      %v637 = vadd.f32 0.0, %v636
      %v638 = vpop.f32.mrb[0].mxu0
      %v639 = vpop.f32.mrb[0].mxu0
      %v640 = vpop.f32.mrb[0].mxu0
      %641 = vdwg.mxu0
      %v643 = vsel %vm503, %v482, 0
      %v646 = vsel %vm503, %v498, 0
      %648 = vmatprep.subr.bf16.mxu0 0
      %649 = vmatpush1.bf16.xpose.msra.mxu0 %v646
      %650 = vmatprep.subr.bf16.mxu0 0
      %651 = vmatpush1.bf16.xpose.msra.mxu0 0
      %652 = vmatprep.subr.bf16.mxu0 0
      %653 = vmatpush1.bf16.xpose.msra.mxu0 0
      %654 = vmatprep.subr.bf16.mxu0 0
      %655 = vmatpush1.bf16.xpose.msra.mxu0 0
      %656 = vmatprep.subr.bf16.mxu0 0
      %657 = vmatpush1.bf16.xpose.msra.mxu0 0
      %658 = vmatprep.subr.bf16.mxu0 0
      %659 = vmatpush1.bf16.xpose.msra.mxu0 0
      %660 = vmatprep.subr.bf16.mxu0 0
      %661 = vmatpush1.bf16.xpose.msra.mxu0 0
      %662 = vmatprep.subr.bf16.mxu0 0
      %663 = vmatpush1.bf16.xpose.msra.mxu0 0
      %664 = vmatprep.subr.bf16.mxu0 0
      %665 = vmatpush1.bf16.xpose.msra.mxu0 0
      %666 = vmatprep.subr.bf16.mxu0 0
      %667 = vmatpush1.bf16.xpose.msra.mxu0 0
      %668 = vmatprep.subr.bf16.mxu0 0
      %669 = vmatpush1.bf16.xpose.msra.mxu0 0
      %670 = vmatprep.subr.bf16.mxu0 0
      %671 = vmatpush1.bf16.xpose.msra.mxu0 0
      %672 = vmatprep.subr.bf16.mxu0 0
      %673 = vmatpush1.bf16.xpose.msra.mxu0 0
      %674 = vmatprep.subr.bf16.mxu0 0
      %675 = vmatpush1.bf16.xpose.msra.mxu0 0
      %676 = vmatprep.subr.bf16.mxu0 0
      %677 = vmatpush1.bf16.xpose.msra.mxu0 0
      %678 = vmatprep.subr.bf16.mxu0 0
      %679 = vmatpush1.bf16.xpose.msra.mxu0 0
      %680 = vmatprep.mubr.bf16.mxu0 0
      %681 = vmatmul.mubr.bf16.gmra.mrb[0].mxu0 %v643
      %v682 = vpop.f32.mrb[0].mxu0
      %v683 = vadd.f32 0.0, %v682
      %v684 = vpop.f32.mrb[0].mxu0
      %v685 = vpop.f32.mrb[0].mxu0
      %v686 = vpop.f32.mrb[0].mxu0
      %687 = vdwg.mxu0
      %v689 = vsel %vm503, %v483, 0
      %v692 = vsel %vm503, %v499, 0
      %694 = vmatprep.subr.bf16.mxu0 0
      %695 = vmatpush1.bf16.xpose.msra.mxu0 %v692
      %696 = vmatprep.subr.bf16.mxu0 0
      %697 = vmatpush1.bf16.xpose.msra.mxu0 0
      %698 = vmatprep.subr.bf16.mxu0 0
      %699 = vmatpush1.bf16.xpose.msra.mxu0 0
      %700 = vmatprep.subr.bf16.mxu0 0
      %701 = vmatpush1.bf16.xpose.msra.mxu0 0
      %702 = vmatprep.subr.bf16.mxu0 0
      %703 = vmatpush1.bf16.xpose.msra.mxu0 0
      %704 = vmatprep.subr.bf16.mxu0 0
      %705 = vmatpush1.bf16.xpose.msra.mxu0 0
      %706 = vmatprep.subr.bf16.mxu0 0
      %707 = vmatpush1.bf16.xpose.msra.mxu0 0
      %708 = vmatprep.subr.bf16.mxu0 0
      %709 = vmatpush1.bf16.xpose.msra.mxu0 0
      %710 = vmatprep.subr.bf16.mxu0 0
      %711 = vmatpush1.bf16.xpose.msra.mxu0 0
      %712 = vmatprep.subr.bf16.mxu0 0
      %713 = vmatpush1.bf16.xpose.msra.mxu0 0
      %714 = vmatprep.subr.bf16.mxu0 0
      %715 = vmatpush1.bf16.xpose.msra.mxu0 0
      %716 = vmatprep.subr.bf16.mxu0 0
      %717 = vmatpush1.bf16.xpose.msra.mxu0 0
      %718 = vmatprep.subr.bf16.mxu0 0
      %719 = vmatpush1.bf16.xpose.msra.mxu0 0
      %720 = vmatprep.subr.bf16.mxu0 0
      %721 = vmatpush1.bf16.xpose.msra.mxu0 0
      %722 = vmatprep.subr.bf16.mxu0 0
      %723 = vmatpush1.bf16.xpose.msra.mxu0 0
      %724 = vmatprep.subr.bf16.mxu0 0
      %725 = vmatpush1.bf16.xpose.msra.mxu0 0
      %726 = vmatprep.mubr.bf16.mxu0 0
      %727 = vmatmul.mubr.bf16.gmra.mrb[0].mxu0 %v689
      %v728 = vpop.f32.mrb[0].mxu0
      %v729 = vadd.f32 0.0, %v728
      %v730 = vpop.f32.mrb[0].mxu0
      %v731 = vpop.f32.mrb[0].mxu0
      %v732 = vpop.f32.mrb[0].mxu0
      %733 = vdwg.mxu0
      %v735 = vsel %vm503, %v484, 0
      %v738 = vsel %vm503, %v500, 0
      %740 = vmatprep.subr.bf16.mxu0 0
      %741 = vmatpush1.bf16.xpose.msra.mxu0 %v738
      %742 = vmatprep.subr.bf16.mxu0 0
      %743 = vmatpush1.bf16.xpose.msra.mxu0 0
      %744 = vmatprep.subr.bf16.mxu0 0
      %745 = vmatpush1.bf16.xpose.msra.mxu0 0
      %746 = vmatprep.subr.bf16.mxu0 0
      %747 = vmatpush1.bf16.xpose.msra.mxu0 0
      %748 = vmatprep.subr.bf16.mxu0 0
      %749 = vmatpush1.bf16.xpose.msra.mxu0 0
      %750 = vmatprep.subr.bf16.mxu0 0
      %751 = vmatpush1.bf16.xpose.msra.mxu0 0
      %752 = vmatprep.subr.bf16.mxu0 0
      %753 = vmatpush1.bf16.xpose.msra.mxu0 0
      %754 = vmatprep.subr.bf16.mxu0 0
      %755 = vmatpush1.bf16.xpose.msra.mxu0 0
      %756 = vmatprep.subr.bf16.mxu0 0
      %757 = vmatpush1.bf16.xpose.msra.mxu0 0
      %758 = vmatprep.subr.bf16.mxu0 0
      %759 = vmatpush1.bf16.xpose.msra.mxu0 0
      %760 = vmatprep.subr.bf16.mxu0 0
      %761 = vmatpush1.bf16.xpose.msra.mxu0 0
      %762 = vmatprep.subr.bf16.mxu0 0
      %763 = vmatpush1.bf16.xpose.msra.mxu0 0
      %764 = vmatprep.subr.bf16.mxu0 0
      %765 = vmatpush1.bf16.xpose.msra.mxu0 0
      %766 = vmatprep.subr.bf16.mxu0 0
      %767 = vmatpush1.bf16.xpose.msra.mxu0 0
      %768 = vmatprep.subr.bf16.mxu0 0
      %769 = vmatpush1.bf16.xpose.msra.mxu0 0
      %770 = vmatprep.subr.bf16.mxu0 0
      %771 = vmatpush1.bf16.xpose.msra.mxu0 0
      %772 = vmatprep.mubr.bf16.mxu0 0
      %773 = vmatmul.mubr.bf16.gmra.mrb[0].mxu0 %v735
      %v774 = vpop.f32.mrb[0].mxu0
      %v775 = vadd.f32 0.0, %v774
      %v776 = vpop.f32.mrb[0].mxu0
      %v777 = vpop.f32.mrb[0].mxu0
      %v778 = vpop.f32.mrb[0].mxu0
      %779 = vdwg.mxu0
      %v781 = vsel %vm503, %v485, 0
      %v784 = vsel %vm503, %v501, 0
      %786 = vmatprep.subr.bf16.mxu0 0
      %787 = vmatpush1.bf16.xpose.msra.mxu0 %v784
      %788 = vmatprep.subr.bf16.mxu0 0
      %789 = vmatpush1.bf16.xpose.msra.mxu0 0
      %790 = vmatprep.subr.bf16.mxu0 0
      %791 = vmatpush1.bf16.xpose.msra.mxu0 0
      %792 = vmatprep.subr.bf16.mxu0 0
      %793 = vmatpush1.bf16.xpose.msra.mxu0 0
      %794 = vmatprep.subr.bf16.mxu0 0
      %795 = vmatpush1.bf16.xpose.msra.mxu0 0
      %796 = vmatprep.subr.bf16.mxu0 0
      %797 = vmatpush1.bf16.xpose.msra.mxu0 0
      %798 = vmatprep.subr.bf16.mxu0 0
      %799 = vmatpush1.bf16.xpose.msra.mxu0 0
      %800 = vmatprep.subr.bf16.mxu0 0
      %801 = vmatpush1.bf16.xpose.msra.mxu0 0
      %802 = vmatprep.subr.bf16.mxu0 0
      %803 = vmatpush1.bf16.xpose.msra.mxu0 0
      %804 = vmatprep.subr.bf16.mxu0 0
      %805 = vmatpush1.bf16.xpose.msra.mxu0 0
      %806 = vmatprep.subr.bf16.mxu0 0
      %807 = vmatpush1.bf16.xpose.msra.mxu0 0
      %808 = vmatprep.subr.bf16.mxu0 0
      %809 = vmatpush1.bf16.xpose.msra.mxu0 0
      %810 = vmatprep.subr.bf16.mxu0 0
      %811 = vmatpush1.bf16.xpose.msra.mxu0 0
      %812 = vmatprep.subr.bf16.mxu0 0
      %813 = vmatpush1.bf16.xpose.msra.mxu0 0
      %814 = vmatprep.subr.bf16.mxu0 0
      %815 = vmatpush1.bf16.xpose.msra.mxu0 0
      %816 = vmatprep.subr.bf16.mxu0 0
      %817 = vmatpush1.bf16.xpose.msra.mxu0 0
      %818 = vmatprep.mubr.bf16.mxu0 0
      %819 = vmatmul.mubr.bf16.gmra.mrb[0].mxu0 %v781
      %v820 = vpop.f32.mrb[0].mxu0
      %v821 = vadd.f32 0.0, %v820
      %v822 = vpop.f32.mrb[0].mxu0
      %v823 = vpop.f32.mrb[0].mxu0
      %v824 = vpop.f32.mrb[0].mxu0
      %825 = vdwg.mxu0
      %v827 = vsel %vm503, %v486, 0
      %v830 = vsel %vm503, %v502, 0
      %832 = vmatprep.subr.bf16.mxu0 0
      %833 = vmatpush1.bf16.xpose.msra.mxu0 %v830
      %834 = vmatprep.subr.bf16.mxu0 0
      %835 = vmatpush1.bf16.xpose.msra.mxu0 0
      %836 = vmatprep.subr.bf16.mxu0 0
      %837 = vmatpush1.bf16.xpose.msra.mxu0 0
      %838 = vmatprep.subr.bf16.mxu0 0
      %839 = vmatpush1.bf16.xpose.msra.mxu0 0
      %840 = vmatprep.subr.bf16.mxu0 0
      %841 = vmatpush1.bf16.xpose.msra.mxu0 0
      %842 = vmatprep.subr.bf16.mxu0 0
      %843 = vmatpush1.bf16.xpose.msra.mxu0 0
      %844 = vmatprep.subr.bf16.mxu0 0
      %845 = vmatpush1.bf16.xpose.msra.mxu0 0
      %846 = vmatprep.subr.bf16.mxu0 0
      %847 = vmatpush1.bf16.xpose.msra.mxu0 0
      %848 = vmatprep.subr.bf16.mxu0 0
      %849 = vmatpush1.bf16.xpose.msra.mxu0 0
      %850 = vmatprep.subr.bf16.mxu0 0
      %851 = vmatpush1.bf16.xpose.msra.mxu0 0
      %852 = vmatprep.subr.bf16.mxu0 0
      %853 = vmatpush1.bf16.xpose.msra.mxu0 0
      %854 = vmatprep.subr.bf16.mxu0 0
      %855 = vmatpush1.bf16.xpose.msra.mxu0 0
      %856 = vmatprep.subr.bf16.mxu0 0
      %857 = vmatpush1.bf16.xpose.msra.mxu0 0
      %858 = vmatprep.subr.bf16.mxu0 0
      %859 = vmatpush1.bf16.xpose.msra.mxu0 0
      %860 = vmatprep.subr.bf16.mxu0 0
      %861 = vmatpush1.bf16.xpose.msra.mxu0 0
      %862 = vmatprep.subr.bf16.mxu0 0
      %863 = vmatpush1.bf16.xpose.msra.mxu0 0
      %864 = vmatprep.mubr.bf16.mxu0 0
      %865 = vmatmul.mubr.bf16.gmra.mrb[0].mxu0 %v827
      %v866 = vpop.f32.mrb[0].mxu0
      %v867 = vadd.f32 0.0, %v866
      %v868 = vpop.f32.mrb[0].mxu0
      %v869 = vpop.f32.mrb[0].mxu0
      %v870 = vpop.f32.mrb[0].mxu0
      %871 = vdwg.mxu0
      %v872 = vld [vmem:[%s6] sm:$0xf]
      %v873 = vld [vmem:[%s6 + $0x4] sm:$0xf]
      %v874 = vld [vmem:[%s6 + $0x8] sm:$0xf]
      %v875 = vld [vmem:[%s6 + $0xc] sm:$0xf]
      %v876 = vld [vmem:[%s6 + $0x10] sm:$0xf]
      %v877 = vld [vmem:[%s6 + $0x14] sm:$0xf]
      %v878 = vld [vmem:[%s6 + $0x18] sm:$0xf]
      %v879 = vld [vmem:[%s6 + $0x1c] sm:$0xf]
      %880 = vxpose.xlu0.c.b16.start [1/8] %v479, 128
      %881 = vxpose.xlu0.c.b16.cont [2/8] 0, 128
      %882 = vxpose.xlu0.c.b16.cont [3/8] 0, 128
      %883 = vxpose.xlu0.c.b16.cont [4/8] 0, 128
      %884 = vxpose.xlu0.c.b16.cont [5/8] 0, 128
      %885 = vxpose.xlu0.c.b16.cont [6/8] 0, 128
      %886 = vxpose.xlu0.c.b16.cont [7/8] 0, 128
      %887 = vxpose.xlu0.c.b16.end [8/8] 0, 128
      %v888 = vpop.trf.xlu0
      %v889 = vpop.trf.xlu0
      %v890 = vpop.trf.xlu0
      %v891 = vpop.trf.xlu0
      %v892 = vpop.trf.xlu0
      %v893 = vpop.trf.xlu0
      %v894 = vpop.trf.xlu0
      %v895 = vpop.trf.xlu0
      %896 = vxpose.xlu0.c.b16.start [1/8] %v480, 128
      %897 = vxpose.xlu0.c.b16.cont [2/8] 0, 128
      %898 = vxpose.xlu0.c.b16.cont [3/8] 0, 128
      %899 = vxpose.xlu0.c.b16.cont [4/8] 0, 128
      %900 = vxpose.xlu0.c.b16.cont [5/8] 0, 128
      %901 = vxpose.xlu0.c.b16.cont [6/8] 0, 128
      %902 = vxpose.xlu0.c.b16.cont [7/8] 0, 128
      %903 = vxpose.xlu0.c.b16.end [8/8] 0, 128
      %v904 = vpop.trf.xlu0
      %v905 = vpop.trf.xlu0
      %v906 = vpop.trf.xlu0
      %v907 = vpop.trf.xlu0
      %v908 = vpop.trf.xlu0
      %v909 = vpop.trf.xlu0
      %v910 = vpop.trf.xlu0
      %v911 = vpop.trf.xlu0
      %912 = vxpose.xlu0.c.b16.start [1/8] %v481, 128
      %913 = vxpose.xlu0.c.b16.cont [2/8] 0, 128
      %914 = vxpose.xlu0.c.b16.cont [3/8] 0, 128
      %915 = vxpose.xlu0.c.b16.cont [4/8] 0, 128
      %916 = vxpose.xlu0.c.b16.cont [5/8] 0, 128
      %917 = vxpose.xlu0.c.b16.cont [6/8] 0, 128
      %918 = vxpose.xlu0.c.b16.cont [7/8] 0, 128
      %919 = vxpose.xlu0.c.b16.end [8/8] 0, 128
      %v920 = vpop.trf.xlu0
      %v921 = vpop.trf.xlu0
      %v922 = vpop.trf.xlu0
      %v923 = vpop.trf.xlu0
      %v924 = vpop.trf.xlu0
      %v925 = vpop.trf.xlu0
      %v926 = vpop.trf.xlu0
      %v927 = vpop.trf.xlu0
      %928 = vxpose.xlu0.c.b16.start [1/8] %v482, 128
      %929 = vxpose.xlu0.c.b16.cont [2/8] 0, 128
      %930 = vxpose.xlu0.c.b16.cont [3/8] 0, 128
      %931 = vxpose.xlu0.c.b16.cont [4/8] 0, 128
      %932 = vxpose.xlu0.c.b16.cont [5/8] 0, 128
      %933 = vxpose.xlu0.c.b16.cont [6/8] 0, 128
      %934 = vxpose.xlu0.c.b16.cont [7/8] 0, 128
      %935 = vxpose.xlu0.c.b16.end [8/8] 0, 128
      %v936 = vpop.trf.xlu0
      %v937 = vpop.trf.xlu0
      %v938 = vpop.trf.xlu0
      %v939 = vpop.trf.xlu0
      %v940 = vpop.trf.xlu0
      %v941 = vpop.trf.xlu0
      %v942 = vpop.trf.xlu0
      %v943 = vpop.trf.xlu0
      %944 = vxpose.xlu0.c.b16.start [1/8] %v483, 128
      %945 = vxpose.xlu0.c.b16.cont [2/8] 0, 128
      %946 = vxpose.xlu0.c.b16.cont [3/8] 0, 128
      %947 = vxpose.xlu0.c.b16.cont [4/8] 0, 128
      %948 = vxpose.xlu0.c.b16.cont [5/8] 0, 128
      %949 = vxpose.xlu0.c.b16.cont [6/8] 0, 128
      %950 = vxpose.xlu0.c.b16.cont [7/8] 0, 128
      %951 = vxpose.xlu0.c.b16.end [8/8] 0, 128
      %v952 = vpop.trf.xlu0
      %v953 = vpop.trf.xlu0
      %v954 = vpop.trf.xlu0
      %v955 = vpop.trf.xlu0
      %v956 = vpop.trf.xlu0
      %v957 = vpop.trf.xlu0
      %v958 = vpop.trf.xlu0
      %v959 = vpop.trf.xlu0
      %960 = vxpose.xlu0.c.b16.start [1/8] %v484, 128
      %961 = vxpose.xlu0.c.b16.cont [2/8] 0, 128
      %962 = vxpose.xlu0.c.b16.cont [3/8] 0, 128
      %963 = vxpose.xlu0.c.b16.cont [4/8] 0, 128
      %964 = vxpose.xlu0.c.b16.cont [5/8] 0, 128
      %965 = vxpose.xlu0.c.b16.cont [6/8] 0, 128
      %966 = vxpose.xlu0.c.b16.cont [7/8] 0, 128
      %967 = vxpose.xlu0.c.b16.end [8/8] 0, 128
      %v968 = vpop.trf.xlu0
      %v969 = vpop.trf.xlu0
      %v970 = vpop.trf.xlu0
      %v971 = vpop.trf.xlu0
      %v972 = vpop.trf.xlu0
      %v973 = vpop.trf.xlu0
      %v974 = vpop.trf.xlu0
      %v975 = vpop.trf.xlu0
      %976 = vxpose.xlu0.c.b16.start [1/8] %v485, 128
      %977 = vxpose.xlu0.c.b16.cont [2/8] 0, 128
      %978 = vxpose.xlu0.c.b16.cont [3/8] 0, 128
      %979 = vxpose.xlu0.c.b16.cont [4/8] 0, 128
      %980 = vxpose.xlu0.c.b16.cont [5/8] 0, 128
      %981 = vxpose.xlu0.c.b16.cont [6/8] 0, 128
      %982 = vxpose.xlu0.c.b16.cont [7/8] 0, 128
      %983 = vxpose.xlu0.c.b16.end [8/8] 0, 128
      %v984 = vpop.trf.xlu0
      %v985 = vpop.trf.xlu0
      %v986 = vpop.trf.xlu0
      %v987 = vpop.trf.xlu0
      %v988 = vpop.trf.xlu0
      %v989 = vpop.trf.xlu0
      %v990 = vpop.trf.xlu0
      %v991 = vpop.trf.xlu0
      %992 = vxpose.xlu0.c.b16.start [1/8] %v486, 128
      %993 = vxpose.xlu0.c.b16.cont [2/8] 0, 128
      %994 = vxpose.xlu0.c.b16.cont [3/8] 0, 128
      %995 = vxpose.xlu0.c.b16.cont [4/8] 0, 128
      %996 = vxpose.xlu0.c.b16.cont [5/8] 0, 128
      %997 = vxpose.xlu0.c.b16.cont [6/8] 0, 128
      %998 = vxpose.xlu0.c.b16.cont [7/8] 0, 128
      %999 = vxpose.xlu0.c.b16.end [8/8] 0, 128
      %v1000 = vpop.trf.xlu0
      %v1001 = vpop.trf.xlu0
      %v1002 = vpop.trf.xlu0
      %v1003 = vpop.trf.xlu0
      %v1004 = vpop.trf.xlu0
      %v1005 = vpop.trf.xlu0
      %v1006 = vpop.trf.xlu0
      %v1007 = vpop.trf.xlu0
      %v1008 = vcombine.low %v888, %v952
      %v1010 = vunpack.c.l.s4 1983009808
      %v1011 = vunpack.c.0.s8 %v1010
      %v1012 = vlaneseq
      %v1013 = vshrl.u32 %v1012, 7
      %v1014 = vsub.s32 %v1011, %v1013
      %v1015 = vrot.slane %v1008, %v1014
      %v1016 = vcombine.low %v920, %v984
      %v1018 = vunpack.c.l.s4 1983009808
      %v1019 = vunpack.c.0.s8 %v1018
      %v1020 = vlaneseq
      %v1021 = vshrl.u32 %v1020, 7
      %v1022 = vsub.s32 %v1019, %v1021
      %v1023 = vrot.slane %v1016, %v1022
      %v1024 = vcombine.low %v1015, %v1023
      %v1025 = vcombine.high %v1015, %v1023
      %v1027 = vunpack.c.l.s4 1934713408
      %v1028 = vunpack.c.0.s8 %v1027
      %v1029 = vlaneseq
      %v1030 = vshrl.u32 %v1029, 7
      %v1031 = vsub.s32 %v1028, %v1030
      %v1032 = vrot.slane %v1024, %v1031
      %v1034 = vunpack.c.l.s4 1934713408
      %v1035 = vunpack.c.0.s8 %v1034
      %v1036 = vlaneseq
      %v1037 = vshrl.u32 %v1036, 7
      %v1038 = vsub.s32 %v1035, %v1037
      %v1039 = vrot.slane %v1025, %v1038
      %v1040 = vcombine.high %v1032, 0
      %v1041 = vcombine.high %v1039, 0
      %v1042 = vcombine.low %v904, %v968
      %v1044 = vunpack.c.l.s4 1983009808
      %v1045 = vunpack.c.0.s8 %v1044
      %v1046 = vlaneseq
      %v1047 = vshrl.u32 %v1046, 7
      %v1048 = vsub.s32 %v1045, %v1047
      %v1049 = vrot.slane %v1042, %v1048
      %v1050 = vcombine.low %v936, %v1000
      %v1052 = vunpack.c.l.s4 1983009808
      %v1053 = vunpack.c.0.s8 %v1052
      %v1054 = vlaneseq
      %v1055 = vshrl.u32 %v1054, 7
      %v1056 = vsub.s32 %v1053, %v1055
      %v1057 = vrot.slane %v1050, %v1056
      %v1058 = vcombine.low %v1049, %v1057
      %v1059 = vcombine.high %v1049, %v1057
      %v1061 = vunpack.c.l.s4 1934713408
      %v1062 = vunpack.c.0.s8 %v1061
      %v1063 = vlaneseq
      %v1064 = vshrl.u32 %v1063, 7
      %v1065 = vsub.s32 %v1062, %v1064
      %v1066 = vrot.slane %v1058, %v1065
      %v1068 = vunpack.c.l.s4 1934713408
      %v1069 = vunpack.c.0.s8 %v1068
      %v1070 = vlaneseq
      %v1071 = vshrl.u32 %v1070, 7
      %v1072 = vsub.s32 %v1069, %v1071
      %v1073 = vrot.slane %v1059, %v1072
      %v1074 = vcombine.high %v1066, 0
      %v1075 = vcombine.high %v1073, 0
      %v1078 = vpack.i.b16 %v1066, %v1032
      %v1080 = vshrl.u32 %v1032, 16
      %v1081 = vshrl.u32 %v1066, 16
      %v1082 = vpack.i.b16 %v1081, %v1080
      %v1086 = vpack.i.b16 %v1074, %v1040
      %v1088 = vshrl.u32 %v1040, 16
      %v1089 = vshrl.u32 %v1074, 16
      %v1090 = vpack.i.b16 %v1089, %v1088
      %v1094 = vpack.i.b16 %v1073, %v1039
      %v1096 = vshrl.u32 %v1039, 16
      %v1097 = vshrl.u32 %v1073, 16
      %v1098 = vpack.i.b16 %v1097, %v1096
      %v1102 = vpack.i.b16 %v1075, %v1041
      %v1104 = vshrl.u32 %v1041, 16
      %v1105 = vshrl.u32 %v1075, 16
      %v1106 = vpack.i.b16 %v1105, %v1104
      %1108 = vxpose.xlu0.c.b16.start [1/8] %v1078, 128
      %1109 = vxpose.xlu0.c.b16.cont [2/8] 0, 128
      %1110 = vxpose.xlu0.c.b16.cont [3/8] 0, 128
      %1111 = vxpose.xlu0.c.b16.cont [4/8] 0, 128
      %1112 = vxpose.xlu0.c.b16.cont [5/8] 0, 128
      %1113 = vxpose.xlu0.c.b16.cont [6/8] 0, 128
      %1114 = vxpose.xlu0.c.b16.cont [7/8] 0, 128
      %1115 = vxpose.xlu0.c.b16.end [8/8] 0, 128
      %v1116 = vpop.trf.xlu0
      %v1117 = vpop.trf.xlu0
      %v1118 = vpop.trf.xlu0
      %v1119 = vpop.trf.xlu0
      %v1120 = vpop.trf.xlu0
      %v1121 = vpop.trf.xlu0
      %v1122 = vpop.trf.xlu0
      %v1123 = vpop.trf.xlu0
      %1124 = vxpose.xlu0.c.b16.start [1/8] %v1082, 128
      %1125 = vxpose.xlu0.c.b16.cont [2/8] 0, 128
      %1126 = vxpose.xlu0.c.b16.cont [3/8] 0, 128
      %1127 = vxpose.xlu0.c.b16.cont [4/8] 0, 128
      %1128 = vxpose.xlu0.c.b16.cont [5/8] 0, 128
      %1129 = vxpose.xlu0.c.b16.cont [6/8] 0, 128
      %1130 = vxpose.xlu0.c.b16.cont [7/8] 0, 128
      %1131 = vxpose.xlu0.c.b16.end [8/8] 0, 128
      %v1132 = vpop.trf.xlu0
      %v1133 = vpop.trf.xlu0
      %v1134 = vpop.trf.xlu0
      %v1135 = vpop.trf.xlu0
      %v1136 = vpop.trf.xlu0
      %v1137 = vpop.trf.xlu0
      %v1138 = vpop.trf.xlu0
      %v1139 = vpop.trf.xlu0
      %1140 = vxpose.xlu0.c.b16.start [1/8] %v1086, 128
      %1141 = vxpose.xlu0.c.b16.cont [2/8] 0, 128
      %1142 = vxpose.xlu0.c.b16.cont [3/8] 0, 128
      %1143 = vxpose.xlu0.c.b16.cont [4/8] 0, 128
      %1144 = vxpose.xlu0.c.b16.cont [5/8] 0, 128
      %1145 = vxpose.xlu0.c.b16.cont [6/8] 0, 128
      %1146 = vxpose.xlu0.c.b16.cont [7/8] 0, 128
      %1147 = vxpose.xlu0.c.b16.end [8/8] 0, 128
      %v1148 = vpop.trf.xlu0
      %v1149 = vpop.trf.xlu0
      %v1150 = vpop.trf.xlu0
      %v1151 = vpop.trf.xlu0
      %v1152 = vpop.trf.xlu0
      %v1153 = vpop.trf.xlu0
      %v1154 = vpop.trf.xlu0
      %v1155 = vpop.trf.xlu0
      %1156 = vxpose.xlu0.c.b16.start [1/8] %v1090, 128
      %1157 = vxpose.xlu0.c.b16.cont [2/8] 0, 128
      %1158 = vxpose.xlu0.c.b16.cont [3/8] 0, 128
      %1159 = vxpose.xlu0.c.b16.cont [4/8] 0, 128
      %1160 = vxpose.xlu0.c.b16.cont [5/8] 0, 128
      %1161 = vxpose.xlu0.c.b16.cont [6/8] 0, 128
      %1162 = vxpose.xlu0.c.b16.cont [7/8] 0, 128
      %1163 = vxpose.xlu0.c.b16.end [8/8] 0, 128
      %v1164 = vpop.trf.xlu0
      %v1165 = vpop.trf.xlu0
      %v1166 = vpop.trf.xlu0
      %v1167 = vpop.trf.xlu0
      %v1168 = vpop.trf.xlu0
      %v1169 = vpop.trf.xlu0
      %v1170 = vpop.trf.xlu0
      %v1171 = vpop.trf.xlu0
      %1172 = vxpose.xlu0.c.b16.start [1/8] %v1094, 128
      %1173 = vxpose.xlu0.c.b16.cont [2/8] 0, 128
      %1174 = vxpose.xlu0.c.b16.cont [3/8] 0, 128
      %1175 = vxpose.xlu0.c.b16.cont [4/8] 0, 128
      %1176 = vxpose.xlu0.c.b16.cont [5/8] 0, 128
      %1177 = vxpose.xlu0.c.b16.cont [6/8] 0, 128
      %1178 = vxpose.xlu0.c.b16.cont [7/8] 0, 128
      %1179 = vxpose.xlu0.c.b16.end [8/8] 0, 128
      %v1180 = vpop.trf.xlu0
      %v1181 = vpop.trf.xlu0
      %v1182 = vpop.trf.xlu0
      %v1183 = vpop.trf.xlu0
      %v1184 = vpop.trf.xlu0
      %v1185 = vpop.trf.xlu0
      %v1186 = vpop.trf.xlu0
      %v1187 = vpop.trf.xlu0
      %1188 = vxpose.xlu0.c.b16.start [1/8] %v1098, 128
      %1189 = vxpose.xlu0.c.b16.cont [2/8] 0, 128
      %1190 = vxpose.xlu0.c.b16.cont [3/8] 0, 128
      %1191 = vxpose.xlu0.c.b16.cont [4/8] 0, 128
      %1192 = vxpose.xlu0.c.b16.cont [5/8] 0, 128
      %1193 = vxpose.xlu0.c.b16.cont [6/8] 0, 128
      %1194 = vxpose.xlu0.c.b16.cont [7/8] 0, 128
      %1195 = vxpose.xlu0.c.b16.end [8/8] 0, 128
      %v1196 = vpop.trf.xlu0
      %v1197 = vpop.trf.xlu0
      %v1198 = vpop.trf.xlu0
      %v1199 = vpop.trf.xlu0
      %v1200 = vpop.trf.xlu0
      %v1201 = vpop.trf.xlu0
      %v1202 = vpop.trf.xlu0
      %v1203 = vpop.trf.xlu0
      %1204 = vxpose.xlu0.c.b16.start [1/8] %v1102, 128
      %1205 = vxpose.xlu0.c.b16.cont [2/8] 0, 128
      %1206 = vxpose.xlu0.c.b16.cont [3/8] 0, 128
      %1207 = vxpose.xlu0.c.b16.cont [4/8] 0, 128
      %1208 = vxpose.xlu0.c.b16.cont [5/8] 0, 128
      %1209 = vxpose.xlu0.c.b16.cont [6/8] 0, 128
      %1210 = vxpose.xlu0.c.b16.cont [7/8] 0, 128
      %1211 = vxpose.xlu0.c.b16.end [8/8] 0, 128
      %v1212 = vpop.trf.xlu0
      %v1213 = vpop.trf.xlu0
      %v1214 = vpop.trf.xlu0
      %v1215 = vpop.trf.xlu0
      %v1216 = vpop.trf.xlu0
      %v1217 = vpop.trf.xlu0
      %v1218 = vpop.trf.xlu0
      %v1219 = vpop.trf.xlu0
      %1220 = vxpose.xlu0.c.b16.start [1/8] %v1106, 128
      %1221 = vxpose.xlu0.c.b16.cont [2/8] 0, 128
      %1222 = vxpose.xlu0.c.b16.cont [3/8] 0, 128
      %1223 = vxpose.xlu0.c.b16.cont [4/8] 0, 128
      %1224 = vxpose.xlu0.c.b16.cont [5/8] 0, 128
      %1225 = vxpose.xlu0.c.b16.cont [6/8] 0, 128
      %1226 = vxpose.xlu0.c.b16.cont [7/8] 0, 128
      %1227 = vxpose.xlu0.c.b16.end [8/8] 0, 128
      %v1228 = vpop.trf.xlu0
      %v1229 = vpop.trf.xlu0
      %v1230 = vpop.trf.xlu0
      %v1231 = vpop.trf.xlu0
      %v1232 = vpop.trf.xlu0
      %v1233 = vpop.trf.xlu0
      %v1234 = vpop.trf.xlu0
      %v1235 = vpop.trf.xlu0
      %v1236 = vcombine.low %v1116, %v1180
      %v1238 = vunpack.c.l.s4 1983009808
      %v1239 = vunpack.c.0.s8 %v1238
      %v1240 = vlaneseq
      %v1241 = vshrl.u32 %v1240, 7
      %v1242 = vsub.s32 %v1239, %v1241
      %v1243 = vrot.slane %v1236, %v1242
      %v1244 = vcombine.low %v1148, %v1212
      %v1246 = vunpack.c.l.s4 1983009808
      %v1247 = vunpack.c.0.s8 %v1246
      %v1248 = vlaneseq
      %v1249 = vshrl.u32 %v1248, 7
      %v1250 = vsub.s32 %v1247, %v1249
      %v1251 = vrot.slane %v1244, %v1250
      %v1252 = vcombine.low %v1243, %v1251
      %v1253 = vcombine.high %v1243, %v1251
      %v1255 = vunpack.c.l.s4 1934713408
      %v1256 = vunpack.c.0.s8 %v1255
      %v1257 = vlaneseq
      %v1258 = vshrl.u32 %v1257, 7
      %v1259 = vsub.s32 %v1256, %v1258
      %v1260 = vrot.slane %v1252, %v1259
      %v1262 = vunpack.c.l.s4 1934713408
      %v1263 = vunpack.c.0.s8 %v1262
      %v1264 = vlaneseq
      %v1265 = vshrl.u32 %v1264, 7
      %v1266 = vsub.s32 %v1263, %v1265
      %v1267 = vrot.slane %v1253, %v1266
      %v1268 = vcombine.high %v1260, 0
      %v1269 = vcombine.high %v1267, 0
      %v1270 = vcombine.low %v1132, %v1196
      %v1272 = vunpack.c.l.s4 1983009808
      %v1273 = vunpack.c.0.s8 %v1272
      %v1274 = vlaneseq
      %v1275 = vshrl.u32 %v1274, 7
      %v1276 = vsub.s32 %v1273, %v1275
      %v1277 = vrot.slane %v1270, %v1276
      %v1278 = vcombine.low %v1164, %v1228
      %v1280 = vunpack.c.l.s4 1983009808
      %v1281 = vunpack.c.0.s8 %v1280
      %v1282 = vlaneseq
      %v1283 = vshrl.u32 %v1282, 7
      %v1284 = vsub.s32 %v1281, %v1283
      %v1285 = vrot.slane %v1278, %v1284
      %v1286 = vcombine.low %v1277, %v1285
      %v1287 = vcombine.high %v1277, %v1285
      %v1289 = vunpack.c.l.s4 1934713408
      %v1290 = vunpack.c.0.s8 %v1289
      %v1291 = vlaneseq
      %v1292 = vshrl.u32 %v1291, 7
      %v1293 = vsub.s32 %v1290, %v1292
      %v1294 = vrot.slane %v1286, %v1293
      %v1296 = vunpack.c.l.s4 1934713408
      %v1297 = vunpack.c.0.s8 %v1296
      %v1298 = vlaneseq
      %v1299 = vshrl.u32 %v1298, 7
      %v1300 = vsub.s32 %v1297, %v1299
      %v1301 = vrot.slane %v1287, %v1300
      %v1302 = vcombine.high %v1294, 0
      %v1303 = vcombine.high %v1301, 0
      %v1306 = vpack.i.b16 %v1294, %v1260
      %v1307 = vshrl.u32 %v1260, 16
      %v1308 = vshrl.u32 %v1294, 16
      %v1309 = vpack.i.b16 %v1308, %v1307
      %v1312 = vpack.i.b16 %v1302, %v1268
      %v1313 = vshrl.u32 %v1268, 16
      %v1314 = vshrl.u32 %v1302, 16
      %v1315 = vpack.i.b16 %v1314, %v1313
      %v1318 = vpack.i.b16 %v1301, %v1267
      %v1319 = vshrl.u32 %v1267, 16
      %v1320 = vshrl.u32 %v1301, 16
      %v1321 = vpack.i.b16 %v1320, %v1319
      %v1324 = vpack.i.b16 %v1303, %v1269
      %v1325 = vshrl.u32 %v1269, 16
      %v1326 = vshrl.u32 %v1303, 16
      %v1327 = vpack.i.b16 %v1326, %v1325
      %v1329 = vsel %vm503, %v872, 0
      %vm1331 = vcmask 1043456
      %v1333 = vsel %vm1331, %v1306, 0
      %1335 = vmatprep.subr.bf16.mxu0 0
      %1336 = vmatpush1.bf16.msra.mxu0 %v1333
      %1337 = vmatprep.subr.bf16.mxu0 0
      %1338 = vmatpush1.bf16.msra.mxu0 0
      %1339 = vmatprep.subr.bf16.mxu0 0
      %1340 = vmatpush1.bf16.msra.mxu0 0
      %1341 = vmatprep.subr.bf16.mxu0 0
      %1342 = vmatpush1.bf16.msra.mxu0 0
      %1343 = vmatprep.subr.bf16.mxu0 0
      %1344 = vmatpush1.bf16.msra.mxu0 0
      %1345 = vmatprep.subr.bf16.mxu0 0
      %1346 = vmatpush1.bf16.msra.mxu0 0
      %1347 = vmatprep.subr.bf16.mxu0 0
      %1348 = vmatpush1.bf16.msra.mxu0 0
      %1349 = vmatprep.subr.bf16.mxu0 0
      %1350 = vmatpush1.bf16.msra.mxu0 0
      %1351 = vmatprep.subr.bf16.mxu0 0
      %1352 = vmatpush1.bf16.msra.mxu0 0
      %1353 = vmatprep.subr.bf16.mxu0 0
      %1354 = vmatpush1.bf16.msra.mxu0 0
      %1355 = vmatprep.subr.bf16.mxu0 0
      %1356 = vmatpush1.bf16.msra.mxu0 0
      %1357 = vmatprep.subr.bf16.mxu0 0
      %1358 = vmatpush1.bf16.msra.mxu0 0
      %1359 = vmatprep.subr.bf16.mxu0 0
      %1360 = vmatpush1.bf16.msra.mxu0 0
      %1361 = vmatprep.subr.bf16.mxu0 0
      %1362 = vmatpush1.bf16.msra.mxu0 0
      %1363 = vmatprep.subr.bf16.mxu0 0
      %1364 = vmatpush1.bf16.msra.mxu0 0
      %1365 = vmatprep.subr.bf16.mxu0 0
      %1366 = vmatpush1.bf16.msra.mxu0 0
      %1367 = vmatprep.mubr.bf16.mxu0 0
      %1368 = vmatmul.mubr.bf16.gmra.mrb[0].mxu0 %v1329
      %v1369 = vpop.f32.mrb[0].mxu0
      %v1370 = vadd.f32 0.0, %v1369
      %v1371 = vpop.f32.mrb[0].mxu0
      %v1372 = vpop.f32.mrb[0].mxu0
      %v1373 = vpop.f32.mrb[0].mxu0
      %1374 = vdwg.mxu0
      %v1376 = vsel %vm503, %v873, 0
      %v1379 = vsel %vm1331, %v1309, 0
      %1381 = vmatprep.subr.bf16.mxu0 0
      %1382 = vmatpush1.bf16.msra.mxu0 %v1379
      %1383 = vmatprep.subr.bf16.mxu0 0
      %1384 = vmatpush1.bf16.msra.mxu0 0
      %1385 = vmatprep.subr.bf16.mxu0 0
      %1386 = vmatpush1.bf16.msra.mxu0 0
      %1387 = vmatprep.subr.bf16.mxu0 0
      %1388 = vmatpush1.bf16.msra.mxu0 0
      %1389 = vmatprep.subr.bf16.mxu0 0
      %1390 = vmatpush1.bf16.msra.mxu0 0
      %1391 = vmatprep.subr.bf16.mxu0 0
      %1392 = vmatpush1.bf16.msra.mxu0 0
      %1393 = vmatprep.subr.bf16.mxu0 0
      %1394 = vmatpush1.bf16.msra.mxu0 0
      %1395 = vmatprep.subr.bf16.mxu0 0
      %1396 = vmatpush1.bf16.msra.mxu0 0
      %1397 = vmatprep.subr.bf16.mxu0 0
      %1398 = vmatpush1.bf16.msra.mxu0 0
      %1399 = vmatprep.subr.bf16.mxu0 0
      %1400 = vmatpush1.bf16.msra.mxu0 0
      %1401 = vmatprep.subr.bf16.mxu0 0
      %1402 = vmatpush1.bf16.msra.mxu0 0
      %1403 = vmatprep.subr.bf16.mxu0 0
      %1404 = vmatpush1.bf16.msra.mxu0 0
      %1405 = vmatprep.subr.bf16.mxu0 0
      %1406 = vmatpush1.bf16.msra.mxu0 0
      %1407 = vmatprep.subr.bf16.mxu0 0
      %1408 = vmatpush1.bf16.msra.mxu0 0
      %1409 = vmatprep.subr.bf16.mxu0 0
      %1410 = vmatpush1.bf16.msra.mxu0 0
      %1411 = vmatprep.subr.bf16.mxu0 0
      %1412 = vmatpush1.bf16.msra.mxu0 0
      %1413 = vmatprep.mubr.bf16.mxu0 0
      %1414 = vmatmul.mubr.bf16.gmra.mrb[0].mxu0 %v1376
      %v1415 = vpop.f32.mrb[0].mxu0
      %v1416 = vadd.f32 0.0, %v1415
      %v1417 = vpop.f32.mrb[0].mxu0
      %v1418 = vpop.f32.mrb[0].mxu0
      %v1419 = vpop.f32.mrb[0].mxu0
      %1420 = vdwg.mxu0
      %v1422 = vsel %vm503, %v874, 0
      %v1425 = vsel %vm1331, %v1312, 0
      %1427 = vmatprep.subr.bf16.mxu0 0
      %1428 = vmatpush1.bf16.msra.mxu0 %v1425
      %1429 = vmatprep.subr.bf16.mxu0 0
      %1430 = vmatpush1.bf16.msra.mxu0 0
      %1431 = vmatprep.subr.bf16.mxu0 0
      %1432 = vmatpush1.bf16.msra.mxu0 0
      %1433 = vmatprep.subr.bf16.mxu0 0
      %1434 = vmatpush1.bf16.msra.mxu0 0
      %1435 = vmatprep.subr.bf16.mxu0 0
      %1436 = vmatpush1.bf16.msra.mxu0 0
      %1437 = vmatprep.subr.bf16.mxu0 0
      %1438 = vmatpush1.bf16.msra.mxu0 0
      %1439 = vmatprep.subr.bf16.mxu0 0
      %1440 = vmatpush1.bf16.msra.mxu0 0
      %1441 = vmatprep.subr.bf16.mxu0 0
      %1442 = vmatpush1.bf16.msra.mxu0 0
      %1443 = vmatprep.subr.bf16.mxu0 0
      %1444 = vmatpush1.bf16.msra.mxu0 0
      %1445 = vmatprep.subr.bf16.mxu0 0
      %1446 = vmatpush1.bf16.msra.mxu0 0
      %1447 = vmatprep.subr.bf16.mxu0 0
      %1448 = vmatpush1.bf16.msra.mxu0 0
      %1449 = vmatprep.subr.bf16.mxu0 0
      %1450 = vmatpush1.bf16.msra.mxu0 0
      %1451 = vmatprep.subr.bf16.mxu0 0
      %1452 = vmatpush1.bf16.msra.mxu0 0
      %1453 = vmatprep.subr.bf16.mxu0 0
      %1454 = vmatpush1.bf16.msra.mxu0 0
      %1455 = vmatprep.subr.bf16.mxu0 0
      %1456 = vmatpush1.bf16.msra.mxu0 0
      %1457 = vmatprep.subr.bf16.mxu0 0
      %1458 = vmatpush1.bf16.msra.mxu0 0
      %1459 = vmatprep.mubr.bf16.mxu0 0
      %1460 = vmatmul.mubr.bf16.gmra.mrb[0].mxu0 %v1422
      %v1461 = vpop.f32.mrb[0].mxu0
      %v1462 = vadd.f32 0.0, %v1461
      %v1463 = vpop.f32.mrb[0].mxu0
      %v1464 = vpop.f32.mrb[0].mxu0
      %v1465 = vpop.f32.mrb[0].mxu0
      %1466 = vdwg.mxu0
      %v1468 = vsel %vm503, %v875, 0
      %v1471 = vsel %vm1331, %v1315, 0
      %1473 = vmatprep.subr.bf16.mxu0 0
      %1474 = vmatpush1.bf16.msra.mxu0 %v1471
      %1475 = vmatprep.subr.bf16.mxu0 0
      %1476 = vmatpush1.bf16.msra.mxu0 0
      %1477 = vmatprep.subr.bf16.mxu0 0
      %1478 = vmatpush1.bf16.msra.mxu0 0
      %1479 = vmatprep.subr.bf16.mxu0 0
      %1480 = vmatpush1.bf16.msra.mxu0 0
      %1481 = vmatprep.subr.bf16.mxu0 0
      %1482 = vmatpush1.bf16.msra.mxu0 0
      %1483 = vmatprep.subr.bf16.mxu0 0
      %1484 = vmatpush1.bf16.msra.mxu0 0
      %1485 = vmatprep.subr.bf16.mxu0 0
      %1486 = vmatpush1.bf16.msra.mxu0 0
      %1487 = vmatprep.subr.bf16.mxu0 0
      %1488 = vmatpush1.bf16.msra.mxu0 0
      %1489 = vmatprep.subr.bf16.mxu0 0
      %1490 = vmatpush1.bf16.msra.mxu0 0
      %1491 = vmatprep.subr.bf16.mxu0 0
      %1492 = vmatpush1.bf16.msra.mxu0 0
      %1493 = vmatprep.subr.bf16.mxu0 0
      %1494 = vmatpush1.bf16.msra.mxu0 0
      %1495 = vmatprep.subr.bf16.mxu0 0
      %1496 = vmatpush1.bf16.msra.mxu0 0
      %1497 = vmatprep.subr.bf16.mxu0 0
      %1498 = vmatpush1.bf16.msra.mxu0 0
      %1499 = vmatprep.subr.bf16.mxu0 0
      %1500 = vmatpush1.bf16.msra.mxu0 0
      %1501 = vmatprep.subr.bf16.mxu0 0
      %1502 = vmatpush1.bf16.msra.mxu0 0
      %1503 = vmatprep.subr.bf16.mxu0 0
      %1504 = vmatpush1.bf16.msra.mxu0 0
      %1505 = vmatprep.mubr.bf16.mxu0 0
      %1506 = vmatmul.mubr.bf16.gmra.mrb[0].mxu0 %v1468
      %v1507 = vpop.f32.mrb[0].mxu0
      %v1508 = vadd.f32 0.0, %v1507
      %v1509 = vpop.f32.mrb[0].mxu0
      %v1510 = vpop.f32.mrb[0].mxu0
      %v1511 = vpop.f32.mrb[0].mxu0
      %1512 = vdwg.mxu0
      %v1514 = vsel %vm503, %v876, 0
      %v1517 = vsel %vm1331, %v1318, 0
      %1519 = vmatprep.subr.bf16.mxu0 0
      %1520 = vmatpush1.bf16.msra.mxu0 %v1517
      %1521 = vmatprep.subr.bf16.mxu0 0
      %1522 = vmatpush1.bf16.msra.mxu0 0
      %1523 = vmatprep.subr.bf16.mxu0 0
      %1524 = vmatpush1.bf16.msra.mxu0 0
      %1525 = vmatprep.subr.bf16.mxu0 0
      %1526 = vmatpush1.bf16.msra.mxu0 0
      %1527 = vmatprep.subr.bf16.mxu0 0
      %1528 = vmatpush1.bf16.msra.mxu0 0
      %1529 = vmatprep.subr.bf16.mxu0 0
      %1530 = vmatpush1.bf16.msra.mxu0 0
      %1531 = vmatprep.subr.bf16.mxu0 0
      %1532 = vmatpush1.bf16.msra.mxu0 0
      %1533 = vmatprep.subr.bf16.mxu0 0
      %1534 = vmatpush1.bf16.msra.mxu0 0
      %1535 = vmatprep.subr.bf16.mxu0 0
      %1536 = vmatpush1.bf16.msra.mxu0 0
      %1537 = vmatprep.subr.bf16.mxu0 0
      %1538 = vmatpush1.bf16.msra.mxu0 0
      %1539 = vmatprep.subr.bf16.mxu0 0
      %1540 = vmatpush1.bf16.msra.mxu0 0
      %1541 = vmatprep.subr.bf16.mxu0 0
      %1542 = vmatpush1.bf16.msra.mxu0 0
      %1543 = vmatprep.subr.bf16.mxu0 0
      %1544 = vmatpush1.bf16.msra.mxu0 0
      %1545 = vmatprep.subr.bf16.mxu0 0
      %1546 = vmatpush1.bf16.msra.mxu0 0
      %1547 = vmatprep.subr.bf16.mxu0 0
      %1548 = vmatpush1.bf16.msra.mxu0 0
      %1549 = vmatprep.subr.bf16.mxu0 0
      %1550 = vmatpush1.bf16.msra.mxu0 0
      %1551 = vmatprep.mubr.bf16.mxu0 0
      %1552 = vmatmul.mubr.bf16.gmra.mrb[0].mxu0 %v1514
      %v1553 = vpop.f32.mrb[0].mxu0
      %v1554 = vadd.f32 0.0, %v1553
      %v1555 = vpop.f32.mrb[0].mxu0
      %v1556 = vpop.f32.mrb[0].mxu0
      %v1557 = vpop.f32.mrb[0].mxu0
      %1558 = vdwg.mxu0
      %v1560 = vsel %vm503, %v877, 0
      %v1563 = vsel %vm1331, %v1321, 0
      %1565 = vmatprep.subr.bf16.mxu0 0
      %1566 = vmatpush1.bf16.msra.mxu0 %v1563
      %1567 = vmatprep.subr.bf16.mxu0 0
      %1568 = vmatpush1.bf16.msra.mxu0 0
      %1569 = vmatprep.subr.bf16.mxu0 0
      %1570 = vmatpush1.bf16.msra.mxu0 0
      %1571 = vmatprep.subr.bf16.mxu0 0
      %1572 = vmatpush1.bf16.msra.mxu0 0
      %1573 = vmatprep.subr.bf16.mxu0 0
      %1574 = vmatpush1.bf16.msra.mxu0 0
      %1575 = vmatprep.subr.bf16.mxu0 0
      %1576 = vmatpush1.bf16.msra.mxu0 0
      %1577 = vmatprep.subr.bf16.mxu0 0
      %1578 = vmatpush1.bf16.msra.mxu0 0
      %1579 = vmatprep.subr.bf16.mxu0 0
      %1580 = vmatpush1.bf16.msra.mxu0 0
      %1581 = vmatprep.subr.bf16.mxu0 0
      %1582 = vmatpush1.bf16.msra.mxu0 0
      %1583 = vmatprep.subr.bf16.mxu0 0
      %1584 = vmatpush1.bf16.msra.mxu0 0
      %1585 = vmatprep.subr.bf16.mxu0 0
      %1586 = vmatpush1.bf16.msra.mxu0 0
      %1587 = vmatprep.subr.bf16.mxu0 0
      %1588 = vmatpush1.bf16.msra.mxu0 0
      %1589 = vmatprep.subr.bf16.mxu0 0
      %1590 = vmatpush1.bf16.msra.mxu0 0
      %1591 = vmatprep.subr.bf16.mxu0 0
      %1592 = vmatpush1.bf16.msra.mxu0 0
      %1593 = vmatprep.subr.bf16.mxu0 0
      %1594 = vmatpush1.bf16.msra.mxu0 0
      %1595 = vmatprep.subr.bf16.mxu0 0
      %1596 = vmatpush1.bf16.msra.mxu0 0
      %1597 = vmatprep.mubr.bf16.mxu0 0
      %1598 = vmatmul.mubr.bf16.gmra.mrb[0].mxu0 %v1560
      %v1599 = vpop.f32.mrb[0].mxu0
      %v1600 = vadd.f32 0.0, %v1599
      %v1601 = vpop.f32.mrb[0].mxu0
      %v1602 = vpop.f32.mrb[0].mxu0
      %v1603 = vpop.f32.mrb[0].mxu0
      %1604 = vdwg.mxu0
      %v1606 = vsel %vm503, %v878, 0
      %v1609 = vsel %vm1331, %v1324, 0
      %1611 = vmatprep.subr.bf16.mxu0 0
      %1612 = vmatpush1.bf16.msra.mxu0 %v1609
      %1613 = vmatprep.subr.bf16.mxu0 0
      %1614 = vmatpush1.bf16.msra.mxu0 0
      %1615 = vmatprep.subr.bf16.mxu0 0
      %1616 = vmatpush1.bf16.msra.mxu0 0
      %1617 = vmatprep.subr.bf16.mxu0 0
      %1618 = vmatpush1.bf16.msra.mxu0 0
      %1619 = vmatprep.subr.bf16.mxu0 0
      %1620 = vmatpush1.bf16.msra.mxu0 0
      %1621 = vmatprep.subr.bf16.mxu0 0
      %1622 = vmatpush1.bf16.msra.mxu0 0
      %1623 = vmatprep.subr.bf16.mxu0 0
      %1624 = vmatpush1.bf16.msra.mxu0 0
      %1625 = vmatprep.subr.bf16.mxu0 0
      %1626 = vmatpush1.bf16.msra.mxu0 0
      %1627 = vmatprep.subr.bf16.mxu0 0
      %1628 = vmatpush1.bf16.msra.mxu0 0
      %1629 = vmatprep.subr.bf16.mxu0 0
      %1630 = vmatpush1.bf16.msra.mxu0 0
      %1631 = vmatprep.subr.bf16.mxu0 0
      %1632 = vmatpush1.bf16.msra.mxu0 0
      %1633 = vmatprep.subr.bf16.mxu0 0
      %1634 = vmatpush1.bf16.msra.mxu0 0
      %1635 = vmatprep.subr.bf16.mxu0 0
      %1636 = vmatpush1.bf16.msra.mxu0 0
      %1637 = vmatprep.subr.bf16.mxu0 0
      %1638 = vmatpush1.bf16.msra.mxu0 0
      %1639 = vmatprep.subr.bf16.mxu0 0
      %1640 = vmatpush1.bf16.msra.mxu0 0
      %1641 = vmatprep.subr.bf16.mxu0 0
      %1642 = vmatpush1.bf16.msra.mxu0 0
      %1643 = vmatprep.mubr.bf16.mxu0 0
      %1644 = vmatmul.mubr.bf16.gmra.mrb[0].mxu0 %v1606
      %v1645 = vpop.f32.mrb[0].mxu0
      %v1646 = vadd.f32 0.0, %v1645
      %v1647 = vpop.f32.mrb[0].mxu0
      %v1648 = vpop.f32.mrb[0].mxu0
      %v1649 = vpop.f32.mrb[0].mxu0
      %1650 = vdwg.mxu0
      %v1652 = vsel %vm503, %v879, 0
      %v1655 = vsel %vm1331, %v1327, 0
      %1657 = vmatprep.subr.bf16.mxu0 0
      %1658 = vmatpush1.bf16.msra.mxu0 %v1655
      %1659 = vmatprep.subr.bf16.mxu0 0
      %1660 = vmatpush1.bf16.msra.mxu0 0
      %1661 = vmatprep.subr.bf16.mxu0 0
      %1662 = vmatpush1.bf16.msra.mxu0 0
      %1663 = vmatprep.subr.bf16.mxu0 0
      %1664 = vmatpush1.bf16.msra.mxu0 0
      %1665 = vmatprep.subr.bf16.mxu0 0
      %1666 = vmatpush1.bf16.msra.mxu0 0
      %1667 = vmatprep.subr.bf16.mxu0 0
      %1668 = vmatpush1.bf16.msra.mxu0 0
      %1669 = vmatprep.subr.bf16.mxu0 0
      %1670 = vmatpush1.bf16.msra.mxu0 0
      %1671 = vmatprep.subr.bf16.mxu0 0
      %1672 = vmatpush1.bf16.msra.mxu0 0
      %1673 = vmatprep.subr.bf16.mxu0 0
      %1674 = vmatpush1.bf16.msra.mxu0 0
      %1675 = vmatprep.subr.bf16.mxu0 0
      %1676 = vmatpush1.bf16.msra.mxu0 0
      %1677 = vmatprep.subr.bf16.mxu0 0
      %1678 = vmatpush1.bf16.msra.mxu0 0
      %1679 = vmatprep.subr.bf16.mxu0 0
      %1680 = vmatpush1.bf16.msra.mxu0 0
      %1681 = vmatprep.subr.bf16.mxu0 0
      %1682 = vmatpush1.bf16.msra.mxu0 0
      %1683 = vmatprep.subr.bf16.mxu0 0
      %1684 = vmatpush1.bf16.msra.mxu0 0
      %1685 = vmatprep.subr.bf16.mxu0 0
      %1686 = vmatpush1.bf16.msra.mxu0 0
      %1687 = vmatprep.subr.bf16.mxu0 0
      %1688 = vmatpush1.bf16.msra.mxu0 0
      %1689 = vmatprep.mubr.bf16.mxu0 0
      %1690 = vmatmul.mubr.bf16.gmra.mrb[0].mxu0 %v1652
      %v1691 = vpop.f32.mrb[0].mxu0
      %v1692 = vadd.f32 0.0, %v1691
      %v1693 = vpop.f32.mrb[0].mxu0
      %v1694 = vpop.f32.mrb[0].mxu0
      %v1695 = vpop.f32.mrb[0].mxu0
      %1696 = vdwg.mxu0
      %1697 = vxpose.xlu0.b32.start [1/16] %v1370, 128
      %1698 = vxpose.xlu0.b32.cont [2/16] 0.0, 128
      %1699 = vxpose.xlu0.b32.cont [3/16] 0.0, 128
      %1700 = vxpose.xlu0.b32.cont [4/16] 0.0, 128
      %1701 = vxpose.xlu0.b32.cont [5/16] 0.0, 128
      %1702 = vxpose.xlu0.b32.cont [6/16] 0.0, 128
      %1703 = vxpose.xlu0.b32.cont [7/16] 0.0, 128
      %1704 = vxpose.xlu0.b32.cont [8/16] 0.0, 128
      %1705 = vxpose.xlu0.b32.cont [9/16] 0.0, 128
      %1706 = vxpose.xlu0.b32.cont [10/16] 0.0, 128
      %1707 = vxpose.xlu0.b32.cont [11/16] 0.0, 128
      %1708 = vxpose.xlu0.b32.cont [12/16] 0.0, 128
      %1709 = vxpose.xlu0.b32.cont [13/16] 0.0, 128
      %1710 = vxpose.xlu0.b32.cont [14/16] 0.0, 128
      %1711 = vxpose.xlu0.b32.cont [15/16] 0.0, 128
      %1712 = vxpose.xlu0.b32.end [16/16] 0.0, 128
      %v1713 = vpop.trf.xlu0
      %v1714 = vpop.trf.xlu0
      %v1715 = vpop.trf.xlu0
      %v1716 = vpop.trf.xlu0
      %v1717 = vpop.trf.xlu0
      %v1718 = vpop.trf.xlu0
      %v1719 = vpop.trf.xlu0
      %v1720 = vpop.trf.xlu0
      %v1721 = vpop.trf.xlu0
      %v1722 = vpop.trf.xlu0
      %v1723 = vpop.trf.xlu0
      %v1724 = vpop.trf.xlu0
      %v1725 = vpop.trf.xlu0
      %v1726 = vpop.trf.xlu0
      %v1727 = vpop.trf.xlu0
      %v1728 = vpop.trf.xlu0
      %1729 = vxpose.xlu0.b32.start [1/16] %v1416, 128
      %1730 = vxpose.xlu0.b32.cont [2/16] 0.0, 128
      %1731 = vxpose.xlu0.b32.cont [3/16] 0.0, 128
      %1732 = vxpose.xlu0.b32.cont [4/16] 0.0, 128
      %1733 = vxpose.xlu0.b32.cont [5/16] 0.0, 128
      %1734 = vxpose.xlu0.b32.cont [6/16] 0.0, 128
      %1735 = vxpose.xlu0.b32.cont [7/16] 0.0, 128
      %1736 = vxpose.xlu0.b32.cont [8/16] 0.0, 128
      %1737 = vxpose.xlu0.b32.cont [9/16] 0.0, 128
      %1738 = vxpose.xlu0.b32.cont [10/16] 0.0, 128
      %1739 = vxpose.xlu0.b32.cont [11/16] 0.0, 128
      %1740 = vxpose.xlu0.b32.cont [12/16] 0.0, 128
      %1741 = vxpose.xlu0.b32.cont [13/16] 0.0, 128
      %1742 = vxpose.xlu0.b32.cont [14/16] 0.0, 128
      %1743 = vxpose.xlu0.b32.cont [15/16] 0.0, 128
      %1744 = vxpose.xlu0.b32.end [16/16] 0.0, 128
      %v1745 = vpop.trf.xlu0
      %v1746 = vpop.trf.xlu0
      %v1747 = vpop.trf.xlu0
      %v1748 = vpop.trf.xlu0
      %v1749 = vpop.trf.xlu0
      %v1750 = vpop.trf.xlu0
      %v1751 = vpop.trf.xlu0
      %v1752 = vpop.trf.xlu0
      %v1753 = vpop.trf.xlu0
      %v1754 = vpop.trf.xlu0
      %v1755 = vpop.trf.xlu0
      %v1756 = vpop.trf.xlu0
      %v1757 = vpop.trf.xlu0
      %v1758 = vpop.trf.xlu0
      %v1759 = vpop.trf.xlu0
      %v1760 = vpop.trf.xlu0
      %1761 = vxpose.xlu0.b32.start [1/16] %v1462, 128
      %1762 = vxpose.xlu0.b32.cont [2/16] 0.0, 128
      %1763 = vxpose.xlu0.b32.cont [3/16] 0.0, 128
      %1764 = vxpose.xlu0.b32.cont [4/16] 0.0, 128
      %1765 = vxpose.xlu0.b32.cont [5/16] 0.0, 128
      %1766 = vxpose.xlu0.b32.cont [6/16] 0.0, 128
      %1767 = vxpose.xlu0.b32.cont [7/16] 0.0, 128
      %1768 = vxpose.xlu0.b32.cont [8/16] 0.0, 128
      %1769 = vxpose.xlu0.b32.cont [9/16] 0.0, 128
      %1770 = vxpose.xlu0.b32.cont [10/16] 0.0, 128
      %1771 = vxpose.xlu0.b32.cont [11/16] 0.0, 128
      %1772 = vxpose.xlu0.b32.cont [12/16] 0.0, 128
      %1773 = vxpose.xlu0.b32.cont [13/16] 0.0, 128
      %1774 = vxpose.xlu0.b32.cont [14/16] 0.0, 128
      %1775 = vxpose.xlu0.b32.cont [15/16] 0.0, 128
      %1776 = vxpose.xlu0.b32.end [16/16] 0.0, 128
      %v1777 = vpop.trf.xlu0
      %v1778 = vpop.trf.xlu0
      %v1779 = vpop.trf.xlu0
      %v1780 = vpop.trf.xlu0
      %v1781 = vpop.trf.xlu0
      %v1782 = vpop.trf.xlu0
      %v1783 = vpop.trf.xlu0
      %v1784 = vpop.trf.xlu0
      %v1785 = vpop.trf.xlu0
      %v1786 = vpop.trf.xlu0
      %v1787 = vpop.trf.xlu0
      %v1788 = vpop.trf.xlu0
      %v1789 = vpop.trf.xlu0
      %v1790 = vpop.trf.xlu0
      %v1791 = vpop.trf.xlu0
      %v1792 = vpop.trf.xlu0
      %1793 = vxpose.xlu0.b32.start [1/16] %v1508, 128
      %1794 = vxpose.xlu0.b32.cont [2/16] 0.0, 128
      %1795 = vxpose.xlu0.b32.cont [3/16] 0.0, 128
      %1796 = vxpose.xlu0.b32.cont [4/16] 0.0, 128
      %1797 = vxpose.xlu0.b32.cont [5/16] 0.0, 128
      %1798 = vxpose.xlu0.b32.cont [6/16] 0.0, 128
      %1799 = vxpose.xlu0.b32.cont [7/16] 0.0, 128
      %1800 = vxpose.xlu0.b32.cont [8/16] 0.0, 128
      %1801 = vxpose.xlu0.b32.cont [9/16] 0.0, 128
      %1802 = vxpose.xlu0.b32.cont [10/16] 0.0, 128
      %1803 = vxpose.xlu0.b32.cont [11/16] 0.0, 128
      %1804 = vxpose.xlu0.b32.cont [12/16] 0.0, 128
      %1805 = vxpose.xlu0.b32.cont [13/16] 0.0, 128
      %1806 = vxpose.xlu0.b32.cont [14/16] 0.0, 128
      %1807 = vxpose.xlu0.b32.cont [15/16] 0.0, 128
      %1808 = vxpose.xlu0.b32.end [16/16] 0.0, 128
      %v1809 = vpop.trf.xlu0
      %v1810 = vpop.trf.xlu0
      %v1811 = vpop.trf.xlu0
      %v1812 = vpop.trf.xlu0
      %v1813 = vpop.trf.xlu0
      %v1814 = vpop.trf.xlu0
      %v1815 = vpop.trf.xlu0
      %v1816 = vpop.trf.xlu0
      %v1817 = vpop.trf.xlu0
      %v1818 = vpop.trf.xlu0
      %v1819 = vpop.trf.xlu0
      %v1820 = vpop.trf.xlu0
      %v1821 = vpop.trf.xlu0
      %v1822 = vpop.trf.xlu0
      %v1823 = vpop.trf.xlu0
      %v1824 = vpop.trf.xlu0
      %1825 = vxpose.xlu0.b32.start [1/16] %v1554, 128
      %1826 = vxpose.xlu0.b32.cont [2/16] 0.0, 128
      %1827 = vxpose.xlu0.b32.cont [3/16] 0.0, 128
      %1828 = vxpose.xlu0.b32.cont [4/16] 0.0, 128
      %1829 = vxpose.xlu0.b32.cont [5/16] 0.0, 128
      %1830 = vxpose.xlu0.b32.cont [6/16] 0.0, 128
      %1831 = vxpose.xlu0.b32.cont [7/16] 0.0, 128
      %1832 = vxpose.xlu0.b32.cont [8/16] 0.0, 128
      %1833 = vxpose.xlu0.b32.cont [9/16] 0.0, 128
      %1834 = vxpose.xlu0.b32.cont [10/16] 0.0, 128
      %1835 = vxpose.xlu0.b32.cont [11/16] 0.0, 128
      %1836 = vxpose.xlu0.b32.cont [12/16] 0.0, 128
      %1837 = vxpose.xlu0.b32.cont [13/16] 0.0, 128
      %1838 = vxpose.xlu0.b32.cont [14/16] 0.0, 128
      %1839 = vxpose.xlu0.b32.cont [15/16] 0.0, 128
      %1840 = vxpose.xlu0.b32.end [16/16] 0.0, 128
      %v1841 = vpop.trf.xlu0
      %v1842 = vpop.trf.xlu0
      %v1843 = vpop.trf.xlu0
      %v1844 = vpop.trf.xlu0
      %v1845 = vpop.trf.xlu0
      %v1846 = vpop.trf.xlu0
      %v1847 = vpop.trf.xlu0
      %v1848 = vpop.trf.xlu0
      %v1849 = vpop.trf.xlu0
      %v1850 = vpop.trf.xlu0
      %v1851 = vpop.trf.xlu0
      %v1852 = vpop.trf.xlu0
      %v1853 = vpop.trf.xlu0
      %v1854 = vpop.trf.xlu0
      %v1855 = vpop.trf.xlu0
      %v1856 = vpop.trf.xlu0
      %1857 = vxpose.xlu0.b32.start [1/16] %v1600, 128
      %1858 = vxpose.xlu0.b32.cont [2/16] 0.0, 128
      %1859 = vxpose.xlu0.b32.cont [3/16] 0.0, 128
      %1860 = vxpose.xlu0.b32.cont [4/16] 0.0, 128
      %1861 = vxpose.xlu0.b32.cont [5/16] 0.0, 128
      %1862 = vxpose.xlu0.b32.cont [6/16] 0.0, 128
      %1863 = vxpose.xlu0.b32.cont [7/16] 0.0, 128
      %1864 = vxpose.xlu0.b32.cont [8/16] 0.0, 128
      %1865 = vxpose.xlu0.b32.cont [9/16] 0.0, 128
      %1866 = vxpose.xlu0.b32.cont [10/16] 0.0, 128
      %1867 = vxpose.xlu0.b32.cont [11/16] 0.0, 128
      %1868 = vxpose.xlu0.b32.cont [12/16] 0.0, 128
      %1869 = vxpose.xlu0.b32.cont [13/16] 0.0, 128
      %1870 = vxpose.xlu0.b32.cont [14/16] 0.0, 128
      %1871 = vxpose.xlu0.b32.cont [15/16] 0.0, 128
      %1872 = vxpose.xlu0.b32.end [16/16] 0.0, 128
      %v1873 = vpop.trf.xlu0
      %v1874 = vpop.trf.xlu0
      %v1875 = vpop.trf.xlu0
      %v1876 = vpop.trf.xlu0
      %v1877 = vpop.trf.xlu0
      %v1878 = vpop.trf.xlu0
      %v1879 = vpop.trf.xlu0
      %v1880 = vpop.trf.xlu0
      %v1881 = vpop.trf.xlu0
      %v1882 = vpop.trf.xlu0
      %v1883 = vpop.trf.xlu0
      %v1884 = vpop.trf.xlu0
      %v1885 = vpop.trf.xlu0
      %v1886 = vpop.trf.xlu0
      %v1887 = vpop.trf.xlu0
      %v1888 = vpop.trf.xlu0
      %1889 = vxpose.xlu0.b32.start [1/16] %v1646, 128
      %1890 = vxpose.xlu0.b32.cont [2/16] 0.0, 128
      %1891 = vxpose.xlu0.b32.cont [3/16] 0.0, 128
      %1892 = vxpose.xlu0.b32.cont [4/16] 0.0, 128
      %1893 = vxpose.xlu0.b32.cont [5/16] 0.0, 128
      %1894 = vxpose.xlu0.b32.cont [6/16] 0.0, 128
      %1895 = vxpose.xlu0.b32.cont [7/16] 0.0, 128
      %1896 = vxpose.xlu0.b32.cont [8/16] 0.0, 128
      %1897 = vxpose.xlu0.b32.cont [9/16] 0.0, 128
      %1898 = vxpose.xlu0.b32.cont [10/16] 0.0, 128
      %1899 = vxpose.xlu0.b32.cont [11/16] 0.0, 128
      %1900 = vxpose.xlu0.b32.cont [12/16] 0.0, 128
      %1901 = vxpose.xlu0.b32.cont [13/16] 0.0, 128
      %1902 = vxpose.xlu0.b32.cont [14/16] 0.0, 128
      %1903 = vxpose.xlu0.b32.cont [15/16] 0.0, 128
      %1904 = vxpose.xlu0.b32.end [16/16] 0.0, 128
      %v1905 = vpop.trf.xlu0
      %v1906 = vpop.trf.xlu0
      %v1907 = vpop.trf.xlu0
      %v1908 = vpop.trf.xlu0
      %v1909 = vpop.trf.xlu0
      %v1910 = vpop.trf.xlu0
      %v1911 = vpop.trf.xlu0
      %v1912 = vpop.trf.xlu0
      %v1913 = vpop.trf.xlu0
      %v1914 = vpop.trf.xlu0
      %v1915 = vpop.trf.xlu0
      %v1916 = vpop.trf.xlu0
      %v1917 = vpop.trf.xlu0
      %v1918 = vpop.trf.xlu0
      %v1919 = vpop.trf.xlu0
      %v1920 = vpop.trf.xlu0
      %1921 = vxpose.xlu0.b32.start [1/16] %v1692, 128
      %1922 = vxpose.xlu0.b32.cont [2/16] 0.0, 128
      %1923 = vxpose.xlu0.b32.cont [3/16] 0.0, 128
      %1924 = vxpose.xlu0.b32.cont [4/16] 0.0, 128
      %1925 = vxpose.xlu0.b32.cont [5/16] 0.0, 128
      %1926 = vxpose.xlu0.b32.cont [6/16] 0.0, 128
      %1927 = vxpose.xlu0.b32.cont [7/16] 0.0, 128
      %1928 = vxpose.xlu0.b32.cont [8/16] 0.0, 128
      %1929 = vxpose.xlu0.b32.cont [9/16] 0.0, 128
      %1930 = vxpose.xlu0.b32.cont [10/16] 0.0, 128
      %1931 = vxpose.xlu0.b32.cont [11/16] 0.0, 128
      %1932 = vxpose.xlu0.b32.cont [12/16] 0.0, 128
      %1933 = vxpose.xlu0.b32.cont [13/16] 0.0, 128
      %1934 = vxpose.xlu0.b32.cont [14/16] 0.0, 128
      %1935 = vxpose.xlu0.b32.cont [15/16] 0.0, 128
      %1936 = vxpose.xlu0.b32.end [16/16] 0.0, 128
      %v1937 = vpop.trf.xlu0
      %v1938 = vpop.trf.xlu0
      %v1939 = vpop.trf.xlu0
      %v1940 = vpop.trf.xlu0
      %v1941 = vpop.trf.xlu0
      %v1942 = vpop.trf.xlu0
      %v1943 = vpop.trf.xlu0
      %v1944 = vpop.trf.xlu0
      %v1945 = vpop.trf.xlu0
      %v1946 = vpop.trf.xlu0
      %v1947 = vpop.trf.xlu0
      %v1948 = vpop.trf.xlu0
      %v1949 = vpop.trf.xlu0
      %v1950 = vpop.trf.xlu0
      %v1951 = vpop.trf.xlu0
      %v1952 = vpop.trf.xlu0
      %v1953 = vcombine.low %v1713, %v1777
      %v1954 = vcombine.high %v1713, %v1777
      %v1956 = vunpack.c.l.s4 1983009808
      %v1957 = vunpack.c.0.s8 %v1956
      %v1958 = vlaneseq
      %v1959 = vshrl.u32 %v1958, 7
      %v1960 = vsub.s32 %v1957, %v1959
      %v1961 = vrot.slane %v1953, %v1960
      %v1963 = vunpack.c.l.s4 1983009808
      %v1964 = vunpack.c.0.s8 %v1963
      %v1965 = vlaneseq
      %v1966 = vshrl.u32 %v1965, 7
      %v1967 = vsub.s32 %v1964, %v1966
      %v1968 = vrot.slane %v1954, %v1967
      %v1969 = vcombine.low %v1745, %v1809
      %v1970 = vcombine.high %v1745, %v1809
      %v1972 = vunpack.c.l.s4 1983009808
      %v1973 = vunpack.c.0.s8 %v1972
      %v1974 = vlaneseq
      %v1975 = vshrl.u32 %v1974, 7
      %v1976 = vsub.s32 %v1973, %v1975
      %v1977 = vrot.slane %v1969, %v1976
      %v1979 = vunpack.c.l.s4 1983009808
      %v1980 = vunpack.c.0.s8 %v1979
      %v1981 = vlaneseq
      %v1982 = vshrl.u32 %v1981, 7
      %v1983 = vsub.s32 %v1980, %v1982
      %v1984 = vrot.slane %v1970, %v1983
      %v1985 = vcombine.low %v1841, %v1905
      %v1986 = vcombine.high %v1841, %v1905
      %v1988 = vunpack.c.l.s4 1983009808
      %v1989 = vunpack.c.0.s8 %v1988
      %v1990 = vlaneseq
      %v1991 = vshrl.u32 %v1990, 7
      %v1992 = vsub.s32 %v1989, %v1991
      %v1993 = vrot.slane %v1985, %v1992
      %v1995 = vunpack.c.l.s4 1983009808
      %v1996 = vunpack.c.0.s8 %v1995
      %v1997 = vlaneseq
      %v1998 = vshrl.u32 %v1997, 7
      %v1999 = vsub.s32 %v1996, %v1998
      %v2000 = vrot.slane %v1986, %v1999
      %v2001 = vcombine.low %v1873, %v1937
      %v2002 = vcombine.high %v1873, %v1937
      %v2004 = vunpack.c.l.s4 1983009808
      %v2005 = vunpack.c.0.s8 %v2004
      %v2006 = vlaneseq
      %v2007 = vshrl.u32 %v2006, 7
      %v2008 = vsub.s32 %v2005, %v2007
      %v2009 = vrot.slane %v2001, %v2008
      %v2011 = vunpack.c.l.s4 1983009808
      %v2012 = vunpack.c.0.s8 %v2011
      %v2013 = vlaneseq
      %v2014 = vshrl.u32 %v2013, 7
      %v2015 = vsub.s32 %v2012, %v2014
      %v2016 = vrot.slane %v2002, %v2015
      %v2017 = vcombine.low %v1961, %v1977
      %v2018 = vcombine.high %v1961, %v1977
      %v2020 = vunpack.c.l.s4 1934713408
      %v2021 = vunpack.c.0.s8 %v2020
      %v2022 = vlaneseq
      %v2023 = vshrl.u32 %v2022, 7
      %v2024 = vsub.s32 %v2021, %v2023
      %v2025 = vrot.slane %v2017, %v2024
      %v2027 = vunpack.c.l.s4 1934713408
      %v2028 = vunpack.c.0.s8 %v2027
      %v2029 = vlaneseq
      %v2030 = vshrl.u32 %v2029, 7
      %v2031 = vsub.s32 %v2028, %v2030
      %v2032 = vrot.slane %v2018, %v2031
      %v2033 = vcombine.low %v1968, %v1984
      %v2034 = vcombine.high %v1968, %v1984
      %v2036 = vunpack.c.l.s4 1934713408
      %v2037 = vunpack.c.0.s8 %v2036
      %v2038 = vlaneseq
      %v2039 = vshrl.u32 %v2038, 7
      %v2040 = vsub.s32 %v2037, %v2039
      %v2041 = vrot.slane %v2033, %v2040
      %v2043 = vunpack.c.l.s4 1934713408
      %v2044 = vunpack.c.0.s8 %v2043
      %v2045 = vlaneseq
      %v2046 = vshrl.u32 %v2045, 7
      %v2047 = vsub.s32 %v2044, %v2046
      %v2048 = vrot.slane %v2034, %v2047
      %v2049 = vcombine.low %v1993, %v2009
      %v2050 = vcombine.high %v1993, %v2009
      %v2052 = vunpack.c.l.s4 1934713408
      %v2053 = vunpack.c.0.s8 %v2052
      %v2054 = vlaneseq
      %v2055 = vshrl.u32 %v2054, 7
      %v2056 = vsub.s32 %v2053, %v2055
      %v2057 = vrot.slane %v2049, %v2056
      %v2059 = vunpack.c.l.s4 1934713408
      %v2060 = vunpack.c.0.s8 %v2059
      %v2061 = vlaneseq
      %v2062 = vshrl.u32 %v2061, 7
      %v2063 = vsub.s32 %v2060, %v2062
      %v2064 = vrot.slane %v2050, %v2063
      %v2065 = vcombine.low %v2000, %v2016
      %v2066 = vcombine.high %v2000, %v2016
      %v2068 = vunpack.c.l.s4 1934713408
      %v2069 = vunpack.c.0.s8 %v2068
      %v2070 = vlaneseq
      %v2071 = vshrl.u32 %v2070, 7
      %v2072 = vsub.s32 %v2069, %v2071
      %v2073 = vrot.slane %v2065, %v2072
      %v2075 = vunpack.c.l.s4 1934713408
      %v2076 = vunpack.c.0.s8 %v2075
      %v2077 = vlaneseq
      %v2078 = vshrl.u32 %v2077, 7
      %v2079 = vsub.s32 %v2076, %v2078
      %v2080 = vrot.slane %v2066, %v2079
      %v2081 = vcombine.low %v2025, %v2057
      %v2082 = vcombine.high %v2025, %v2057
      %v2083 = vcombine.low %v2032, %v2064
      %v2084 = vcombine.high %v2032, %v2064
      %v2085 = vcombine.low %v2041, %v2073
      %v2086 = vcombine.high %v2041, %v2073
      %v2087 = vcombine.low %v2048, %v2080
      %v2088 = vcombine.high %v2048, %v2080
      %v2089 = vpack.c.bf16 %v591, %v545
      %v2090 = vpack.c.bf16 %v683, %v637
      %v2091 = vpack.c.bf16 %v775, %v729
      %v2092 = vpack.c.bf16 %v867, %v821
      %v2093 = vld [vmem:[%s7] sm:$0xf]
      %v2095 = vsel %vm503, %v2089, 0
      %v2098 = vsel %vm503, %v2090, 0
      %v2101 = vsel %vm503, %v2091, 0
      %v2104 = vsel %vm503, %v2092, 0
      %v2107 = vsel %vm1331, %v2093, 0
      %2109 = vmatprep.subr.bf16.mxu0 0
      %2110 = vmatpush1.bf16.msra.mxu0 %v2107
      %2111 = vmatprep.subr.bf16.mxu0 0
      %2112 = vmatpush1.bf16.msra.mxu0 0
      %2113 = vmatprep.subr.bf16.mxu0 0
      %2114 = vmatpush1.bf16.msra.mxu0 0
      %2115 = vmatprep.subr.bf16.mxu0 0
      %2116 = vmatpush1.bf16.msra.mxu0 0
      %2117 = vmatprep.subr.bf16.mxu0 0
      %2118 = vmatpush1.bf16.msra.mxu0 0
      %2119 = vmatprep.subr.bf16.mxu0 0
      %2120 = vmatpush1.bf16.msra.mxu0 0
      %2121 = vmatprep.subr.bf16.mxu0 0
      %2122 = vmatpush1.bf16.msra.mxu0 0
      %2123 = vmatprep.subr.bf16.mxu0 0
      %2124 = vmatpush1.bf16.msra.mxu0 0
      %2125 = vmatprep.subr.bf16.mxu0 0
      %2126 = vmatpush1.bf16.msra.mxu0 0
      %2127 = vmatprep.subr.bf16.mxu0 0
      %2128 = vmatpush1.bf16.msra.mxu0 0
      %2129 = vmatprep.subr.bf16.mxu0 0
      %2130 = vmatpush1.bf16.msra.mxu0 0
      %2131 = vmatprep.subr.bf16.mxu0 0
      %2132 = vmatpush1.bf16.msra.mxu0 0
      %2133 = vmatprep.subr.bf16.mxu0 0
      %2134 = vmatpush1.bf16.msra.mxu0 0
      %2135 = vmatprep.subr.bf16.mxu0 0
      %2136 = vmatpush1.bf16.msra.mxu0 0
      %2137 = vmatprep.subr.bf16.mxu0 0
      %2138 = vmatpush1.bf16.msra.mxu0 0
      %2139 = vmatprep.subr.bf16.mxu0 0
      %2140 = vmatpush1.bf16.msra.mxu0 0
      %2141 = vmatprep.mubr.bf16.mxu0 0
      %2142 = vmatmul.mubr.bf16.gmra.mrb[0].mxu0 %v2095
      %v2143 = vpop.f32.mrb[0].mxu0
      %v2144 = vadd.f32 0.0, %v2143
      %v2145 = vpop.f32.mrb[0].mxu0
      %v2146 = vpop.f32.mrb[0].mxu0
      %v2147 = vadd.f32 0.0, %v2146
      %v2148 = vpop.f32.mrb[0].mxu0
      %2149 = vmatprep.mubr.bf16.mxu0 0
      %2150 = vmatmul.mubr.bf16.gmra.mrb[0].mxu0 %v2098
      %v2151 = vpop.f32.mrb[0].mxu0
      %v2152 = vadd.f32 0.0, %v2151
      %v2153 = vpop.f32.mrb[0].mxu0
      %v2154 = vpop.f32.mrb[0].mxu0
      %v2155 = vadd.f32 0.0, %v2154
      %v2156 = vpop.f32.mrb[0].mxu0
      %2157 = vmatprep.mubr.bf16.mxu0 0
      %2158 = vmatmul.mubr.bf16.gmra.mrb[0].mxu0 %v2101
      %v2159 = vpop.f32.mrb[0].mxu0
      %v2160 = vadd.f32 0.0, %v2159
      %v2161 = vpop.f32.mrb[0].mxu0
      %v2162 = vpop.f32.mrb[0].mxu0
      %v2163 = vadd.f32 0.0, %v2162
      %v2164 = vpop.f32.mrb[0].mxu0
      %2165 = vmatprep.mubr.bf16.mxu0 0
      %2166 = vmatmul.mubr.bf16.gmra.mrb[0].mxu0 %v2104
      %v2167 = vpop.f32.mrb[0].mxu0
      %v2168 = vadd.f32 0.0, %v2167
      %v2169 = vpop.f32.mrb[0].mxu0
      %v2170 = vpop.f32.mrb[0].mxu0
      %v2171 = vadd.f32 0.0, %v2170
      %v2172 = vpop.f32.mrb[0].mxu0
      %2173 = vdwg.mxu0
      %2174 = vrot.lane.b32.xlu0 %v463, 96
      %v2175 = vpop.permute.xlu0 %2174
      %2176 = vrot.lane.b32.xlu0 %v464, 96
      %v2177 = vpop.permute.xlu0 %2176
      %2178 = vrot.lane.b32.xlu0 %v465, 96
      %v2179 = vpop.permute.xlu0 %2178
      %2180 = vrot.lane.b32.xlu0 %v466, 96
      %v2181 = vpop.permute.xlu0 %2180
      %v2183 = vsel %vm503, %v463, 0
      %v2186 = vsel %vm503, %v464, 0
      %v2189 = vsel %vm503, %v465, 0
      %v2192 = vsel %vm503, %v466, 0
      %v2195 = vsel %vm503, %v2175, 0
      %v2198 = vsel %vm503, %v2177, 0
      %v2201 = vsel %vm503, %v2179, 0
      %v2204 = vsel %vm503, %v2181, 0
      %2206 = vmatprep.subr.bf16.mxu0 0
      %2207 = vmatpush1.bf16.xpose.msra.mxu0 %v2195
      %2208 = vmatprep.subr.bf16.mxu0 0
      %2209 = vmatpush1.bf16.xpose.msra.mxu0 %v2198
      %2210 = vmatprep.subr.bf16.mxu0 0
      %2211 = vmatpush1.bf16.xpose.msra.mxu0 %v2201
      %2212 = vmatprep.subr.bf16.mxu0 0
      %2213 = vmatpush1.bf16.xpose.msra.mxu0 %v2204
      %2214 = vmatprep.subr.bf16.mxu0 0
      %2215 = vmatpush1.bf16.xpose.msra.mxu0 0
      %2216 = vmatprep.subr.bf16.mxu0 0
      %2217 = vmatpush1.bf16.xpose.msra.mxu0 0
      %2218 = vmatprep.subr.bf16.mxu0 0
      %2219 = vmatpush1.bf16.xpose.msra.mxu0 0
      %2220 = vmatprep.subr.bf16.mxu0 0
      %2221 = vmatpush1.bf16.xpose.msra.mxu0 0
      %2222 = vmatprep.subr.bf16.mxu0 0
      %2223 = vmatpush1.bf16.xpose.msra.mxu0 0
      %2224 = vmatprep.subr.bf16.mxu0 0
      %2225 = vmatpush1.bf16.xpose.msra.mxu0 0
      %2226 = vmatprep.subr.bf16.mxu0 0
      %2227 = vmatpush1.bf16.xpose.msra.mxu0 0
      %2228 = vmatprep.subr.bf16.mxu0 0
      %2229 = vmatpush1.bf16.xpose.msra.mxu0 0
      %2230 = vmatprep.subr.bf16.mxu0 0
      %2231 = vmatpush1.bf16.xpose.msra.mxu0 0
      %2232 = vmatprep.subr.bf16.mxu0 0
      %2233 = vmatpush1.bf16.xpose.msra.mxu0 0
      %2234 = vmatprep.subr.bf16.mxu0 0
      %2235 = vmatpush1.bf16.xpose.msra.mxu0 0
      %2236 = vmatprep.subr.bf16.mxu0 0
      %2237 = vmatpush1.bf16.xpose.msra.mxu0 0
      %2238 = vmatprep.mubr.bf16.mxu0 0
      %2239 = vmatmul.mubr.bf16.gmra.mrb[0].mxu0 %v2183
      %v2240 = vpop.f32.mrb[0].mxu0
      %v2241 = vadd.f32 %v2144, %v2240
      %v2242 = vpop.f32.mrb[0].mxu0
      %v2243 = vpop.f32.mrb[0].mxu0
      %v2244 = vadd.f32 %v2147, %v2243
      %v2245 = vpop.f32.mrb[0].mxu0
      %2246 = vmatprep.mubr.bf16.mxu0 0
      %2247 = vmatmul.mubr.bf16.gmra.mrb[0].mxu0 %v2186
      %v2248 = vpop.f32.mrb[0].mxu0
      %v2249 = vadd.f32 %v2152, %v2248
      %v2250 = vpop.f32.mrb[0].mxu0
      %v2251 = vpop.f32.mrb[0].mxu0
      %v2252 = vadd.f32 %v2155, %v2251
      %v2253 = vpop.f32.mrb[0].mxu0
      %2254 = vmatprep.mubr.bf16.mxu0 0
      %2255 = vmatmul.mubr.bf16.gmra.mrb[0].mxu0 %v2189
      %v2256 = vpop.f32.mrb[0].mxu0
      %v2257 = vadd.f32 %v2160, %v2256
      %v2258 = vpop.f32.mrb[0].mxu0
      %v2259 = vpop.f32.mrb[0].mxu0
      %v2260 = vadd.f32 %v2163, %v2259
      %v2261 = vpop.f32.mrb[0].mxu0
      %2262 = vmatprep.mubr.bf16.mxu0 0
      %2263 = vmatmul.mubr.bf16.gmra.mrb[0].mxu0 %v2192
      %v2264 = vpop.f32.mrb[0].mxu0
      %v2265 = vadd.f32 %v2168, %v2264
      %v2266 = vpop.f32.mrb[0].mxu0
      %v2267 = vpop.f32.mrb[0].mxu0
      %v2268 = vadd.f32 %v2171, %v2267
      %v2269 = vpop.f32.mrb[0].mxu0
      %2270 = vdwg.mxu0
      %v2271 = vpack.c.bf16 %v2082, %v2081
      %v2272 = vpack.c.bf16 %v2084, %v2083
      %v2273 = vpack.c.bf16 %v2086, %v2085
      %v2274 = vpack.c.bf16 %v2088, %v2087
      %v2275 = vld [vmem:[%s8] sm:$0xf]
      %v2277 = vsel %vm503, %v2271, 0
      %v2280 = vsel %vm503, %v2272, 0
      %v2283 = vsel %vm503, %v2273, 0
      %v2286 = vsel %vm503, %v2274, 0
      %v2289 = vsel %vm1331, %v2275, 0
      %2291 = vmatprep.subr.bf16.mxu0 0
      %2292 = vmatpush1.bf16.msra.mxu0 %v2289
      %2293 = vmatprep.subr.bf16.mxu0 0
      %2294 = vmatpush1.bf16.msra.mxu0 0
      %2295 = vmatprep.subr.bf16.mxu0 0
      %2296 = vmatpush1.bf16.msra.mxu0 0
      %2297 = vmatprep.subr.bf16.mxu0 0
      %2298 = vmatpush1.bf16.msra.mxu0 0
      %2299 = vmatprep.subr.bf16.mxu0 0
      %2300 = vmatpush1.bf16.msra.mxu0 0
      %2301 = vmatprep.subr.bf16.mxu0 0
      %2302 = vmatpush1.bf16.msra.mxu0 0
      %2303 = vmatprep.subr.bf16.mxu0 0
      %2304 = vmatpush1.bf16.msra.mxu0 0
      %2305 = vmatprep.subr.bf16.mxu0 0
      %2306 = vmatpush1.bf16.msra.mxu0 0
      %2307 = vmatprep.subr.bf16.mxu0 0
      %2308 = vmatpush1.bf16.msra.mxu0 0
      %2309 = vmatprep.subr.bf16.mxu0 0
      %2310 = vmatpush1.bf16.msra.mxu0 0
      %2311 = vmatprep.subr.bf16.mxu0 0
      %2312 = vmatpush1.bf16.msra.mxu0 0
      %2313 = vmatprep.subr.bf16.mxu0 0
      %2314 = vmatpush1.bf16.msra.mxu0 0
      %2315 = vmatprep.subr.bf16.mxu0 0
      %2316 = vmatpush1.bf16.msra.mxu0 0
      %2317 = vmatprep.subr.bf16.mxu0 0
      %2318 = vmatpush1.bf16.msra.mxu0 0
      %2319 = vmatprep.subr.bf16.mxu0 0
      %2320 = vmatpush1.bf16.msra.mxu0 0
      %2321 = vmatprep.subr.bf16.mxu0 0
      %2322 = vmatpush1.bf16.msra.mxu0 0
      %2323 = vmatprep.mubr.bf16.mxu0 0
      %2324 = vmatmul.mubr.bf16.gmra.mrb[0].mxu0 %v2277
      %v2325 = vpop.f32.mrb[0].mxu0
      %v2326 = vadd.f32 0.0, %v2325
      %v2327 = vpop.f32.mrb[0].mxu0
      %v2328 = vpop.f32.mrb[0].mxu0
      %v2329 = vadd.f32 0.0, %v2328
      %v2330 = vpop.f32.mrb[0].mxu0
      %2331 = vmatprep.mubr.bf16.mxu0 0
      %2332 = vmatmul.mubr.bf16.gmra.mrb[0].mxu0 %v2280
      %v2333 = vpop.f32.mrb[0].mxu0
      %v2334 = vadd.f32 0.0, %v2333
      %v2335 = vpop.f32.mrb[0].mxu0
      %v2336 = vpop.f32.mrb[0].mxu0
      %v2337 = vadd.f32 0.0, %v2336
      %v2338 = vpop.f32.mrb[0].mxu0
      %2339 = vmatprep.mubr.bf16.mxu0 0
      %2340 = vmatmul.mubr.bf16.gmra.mrb[0].mxu0 %v2283
      %v2341 = vpop.f32.mrb[0].mxu0
      %v2342 = vadd.f32 0.0, %v2341
      %v2343 = vpop.f32.mrb[0].mxu0
      %v2344 = vpop.f32.mrb[0].mxu0
      %v2345 = vadd.f32 0.0, %v2344
      %v2346 = vpop.f32.mrb[0].mxu0
      %2347 = vmatprep.mubr.bf16.mxu0 0
      %2348 = vmatmul.mubr.bf16.gmra.mrb[0].mxu0 %v2286
      %v2349 = vpop.f32.mrb[0].mxu0
      %v2350 = vadd.f32 0.0, %v2349
      %v2351 = vpop.f32.mrb[0].mxu0
      %v2352 = vpop.f32.mrb[0].mxu0
      %v2353 = vadd.f32 0.0, %v2352
      %v2354 = vpop.f32.mrb[0].mxu0
      %2355 = vdwg.mxu0
      %v2356 = vadd.f32 %v2241, %v2326
      %v2357 = vadd.f32 %v2244, %v2329
      %v2358 = vadd.f32 %v2249, %v2334
      %v2359 = vadd.f32 %v2252, %v2337
      %v2360 = vadd.f32 %v2257, %v2342
      %v2361 = vadd.f32 %v2260, %v2345
      %v2362 = vadd.f32 %v2265, %v2350
      %v2363 = vadd.f32 %v2268, %v2353
      %vm2364 = vcmask 523264
      %v2365 = vsel %vm2364, %v2356, -inf
      %2366 = vmax.xlane.f32.xlu0 %v2365
      %v2367 = vpop.xlane.xlu0 %2366
      %v2368 = vsel %vm2364, %v2357, -inf
      %2369 = vmax.xlane.f32.xlu0 %v2368
      %v2370 = vpop.xlane.xlu0 %2369
      %v2371 = vsel %vm2364, %v2358, -inf
      %2372 = vmax.xlane.f32.xlu0 %v2371
      %v2373 = vpop.xlane.xlu0 %2372
      %v2374 = vsel %vm2364, %v2359, -inf
      %2375 = vmax.xlane.f32.xlu0 %v2374
      %v2376 = vpop.xlane.xlu0 %2375
      %v2377 = vsel %vm2364, %v2360, -inf
      %2378 = vmax.xlane.f32.xlu0 %v2377
      %v2379 = vpop.xlane.xlu0 %2378
      %v2380 = vsel %vm2364, %v2361, -inf
      %2381 = vmax.xlane.f32.xlu0 %v2380
      %v2382 = vpop.xlane.xlu0 %2381
      %v2383 = vsel %vm2364, %v2362, -inf
      %2384 = vmax.xlane.f32.xlu0 %v2383
      %v2385 = vpop.xlane.xlu0 %2384
      %v2386 = vsel %vm2364, %v2363, -inf
      %2387 = vmax.xlane.f32.xlu0 %v2386
      %v2388 = vpop.xlane.xlu0 %2387
      %v2389 = vsub.f32 %v2356, %v2367
      %v2390 = vsub.f32 %v2357, %v2370
      %v2391 = vsub.f32 %v2358, %v2373
      %v2392 = vsub.f32 %v2359, %v2376
      %v2393 = vsub.f32 %v2360, %v2379
      %v2394 = vsub.f32 %v2361, %v2382
      %v2395 = vsub.f32 %v2362, %v2385
      %v2396 = vsub.f32 %v2363, %v2388
      %v2397 = vmul.f32 %v2389, 1.442695
      %v2398 = vpow.pop %v2397
      %v2399 = vmul.f32 %v2390, 1.442695
      %v2400 = vpow.pop %v2399
      %v2401 = vmul.f32 %v2391, 1.442695
      %v2402 = vpow.pop %v2401
      %v2403 = vmul.f32 %v2392, 1.442695
      %v2404 = vpow.pop %v2403
      %v2405 = vmul.f32 %v2393, 1.442695
      %v2406 = vpow.pop %v2405
      %v2407 = vmul.f32 %v2394, 1.442695
      %v2408 = vpow.pop %v2407
      %v2409 = vmul.f32 %v2395, 1.442695
      %v2410 = vpow.pop %v2409
      %v2411 = vmul.f32 %v2396, 1.442695
      %v2412 = vpow.pop %v2411
      %v2413 = vsel %vm2364, %v2398, 0.0
      %2414 = vadd.xlane.f32.xlu0 %v2413
      %v2415 = vpop.xlane.xlu0 %2414
      %v2416 = vsel %vm2364, %v2400, 0.0
      %2417 = vadd.xlane.f32.xlu0 %v2416
      %v2418 = vpop.xlane.xlu0 %2417
      %v2419 = vsel %vm2364, %v2402, 0.0
      %2420 = vadd.xlane.f32.xlu0 %v2419
      %v2421 = vpop.xlane.xlu0 %2420
      %v2422 = vsel %vm2364, %v2404, 0.0
      %2423 = vadd.xlane.f32.xlu0 %v2422
      %v2424 = vpop.xlane.xlu0 %2423
      %v2425 = vsel %vm2364, %v2406, 0.0
      %2426 = vadd.xlane.f32.xlu0 %v2425
      %v2427 = vpop.xlane.xlu0 %2426
      %v2428 = vsel %vm2364, %v2408, 0.0
      %2429 = vadd.xlane.f32.xlu0 %v2428
      %v2430 = vpop.xlane.xlu0 %2429
      %v2431 = vsel %vm2364, %v2410, 0.0
      %2432 = vadd.xlane.f32.xlu0 %v2431
      %v2433 = vpop.xlane.xlu0 %2432
      %v2434 = vsel %vm2364, %v2412, 0.0
      %2435 = vadd.xlane.f32.xlu0 %v2434
      %v2436 = vpop.xlane.xlu0 %2435
      %v2437 = vrcp.pop %v2415
      %v2438 = vrcp.pop %v2418
      %v2439 = vrcp.pop %v2421
      %v2440 = vrcp.pop %v2424
      %v2441 = vrcp.pop %v2427
      %v2442 = vrcp.pop %v2430
      %v2443 = vrcp.pop %v2433
      %v2444 = vrcp.pop %v2436
      %v2445 = vmul.f32 %v2398, %v2437
      %v2446 = vmul.f32 %v2400, %v2438
      %v2447 = vmul.f32 %v2402, %v2439
      %v2448 = vmul.f32 %v2404, %v2440
      %v2449 = vmul.f32 %v2406, %v2441
      %v2450 = vmul.f32 %v2408, %v2442
      %v2451 = vmul.f32 %v2410, %v2443
      %v2452 = vmul.f32 %v2412, %v2444
      %v2453 = vpack.c.bf16 %v2446, %v2445
      %v2454 = vpack.c.bf16 %v2448, %v2447
      %v2455 = vpack.c.bf16 %v2450, %v2449
      %v2456 = vpack.c.bf16 %v2452, %v2451
      %2457 = vrot.lane.b32.xlu0 %v463, 64
      %v2458 = vpop.permute.xlu0 %2457
      %2459 = vrot.lane.b32.xlu0 %v464, 64
      %v2460 = vpop.permute.xlu0 %2459
      %2461 = vrot.lane.b32.xlu0 %v465, 64
      %v2462 = vpop.permute.xlu0 %2461
      %2463 = vrot.lane.b32.xlu0 %v466, 64
      %v2464 = vpop.permute.xlu0 %2463
      %v2470 = vsel %vm2364, %v2453, 0
      %v2473 = vsel %vm2364, %v2454, 0
      %v2476 = vsel %vm2364, %v2455, 0
      %v2479 = vsel %vm2364, %v2456, 0
      %2481 = vmatprep.subr.bf16.mxu0 0
      %2482 = vmatpush1.bf16.msra.mxu0 %v2458
      %2483 = vmatprep.subr.bf16.mxu0 0
      %2484 = vmatpush1.bf16.msra.mxu0 %v2460
      %2485 = vmatprep.subr.bf16.mxu0 0
      %2486 = vmatpush1.bf16.msra.mxu0 %v2462
      %2487 = vmatprep.subr.bf16.mxu0 0
      %2488 = vmatpush1.bf16.msra.mxu0 %v2464
      %2489 = vmatprep.subr.bf16.mxu0 0
      %2490 = vmatpush1.bf16.msra.mxu0 0
      %2491 = vmatprep.subr.bf16.mxu0 0
      %2492 = vmatpush1.bf16.msra.mxu0 0
      %2493 = vmatprep.subr.bf16.mxu0 0
      %2494 = vmatpush1.bf16.msra.mxu0 0
      %2495 = vmatprep.subr.bf16.mxu0 0
      %2496 = vmatpush1.bf16.msra.mxu0 0
      %2497 = vmatprep.subr.bf16.mxu0 0
      %2498 = vmatpush1.bf16.msra.mxu0 0
      %2499 = vmatprep.subr.bf16.mxu0 0
      %2500 = vmatpush1.bf16.msra.mxu0 0
      %2501 = vmatprep.subr.bf16.mxu0 0
      %2502 = vmatpush1.bf16.msra.mxu0 0
      %2503 = vmatprep.subr.bf16.mxu0 0
      %2504 = vmatpush1.bf16.msra.mxu0 0
      %2505 = vmatprep.subr.bf16.mxu0 0
      %2506 = vmatpush1.bf16.msra.mxu0 0
      %2507 = vmatprep.subr.bf16.mxu0 0
      %2508 = vmatpush1.bf16.msra.mxu0 0
      %2509 = vmatprep.subr.bf16.mxu0 0
      %2510 = vmatpush1.bf16.msra.mxu0 0
      %2511 = vmatprep.subr.bf16.mxu0 0
      %2512 = vmatpush1.bf16.msra.mxu0 0
      %2513 = vmatprep.mubr.bf16.mxu0 0
      %2514 = vmatmul.mubr.bf16.gmra.mrb[0].mxu0 %v2470
      %v2515 = vpop.f32.mrb[0].mxu0
      %v2516 = vadd.f32 0.0, %v2515
      %v2517 = vpop.f32.mrb[0].mxu0
      %v2518 = vpop.f32.mrb[0].mxu0
      %v2519 = vadd.f32 0.0, %v2518
      %v2520 = vpop.f32.mrb[0].mxu0
      %2521 = vmatprep.mubr.bf16.mxu0 0
      %2522 = vmatmul.mubr.bf16.gmra.mrb[0].mxu0 %v2473
      %v2523 = vpop.f32.mrb[0].mxu0
      %v2524 = vadd.f32 0.0, %v2523
      %v2525 = vpop.f32.mrb[0].mxu0
      %v2526 = vpop.f32.mrb[0].mxu0
      %v2527 = vadd.f32 0.0, %v2526
      %v2528 = vpop.f32.mrb[0].mxu0
      %2529 = vmatprep.mubr.bf16.mxu0 0
      %2530 = vmatmul.mubr.bf16.gmra.mrb[0].mxu0 %v2476
      %v2531 = vpop.f32.mrb[0].mxu0
      %v2532 = vadd.f32 0.0, %v2531
      %v2533 = vpop.f32.mrb[0].mxu0
      %v2534 = vpop.f32.mrb[0].mxu0
      %v2535 = vadd.f32 0.0, %v2534
      %v2536 = vpop.f32.mrb[0].mxu0
      %2537 = vmatprep.mubr.bf16.mxu0 0
      %2538 = vmatmul.mubr.bf16.gmra.mrb[0].mxu0 %v2479
      %v2539 = vpop.f32.mrb[0].mxu0
      %v2540 = vadd.f32 0.0, %v2539
      %v2541 = vpop.f32.mrb[0].mxu0
      %v2542 = vpop.f32.mrb[0].mxu0
      %v2543 = vadd.f32 0.0, %v2542
      %v2544 = vpop.f32.mrb[0].mxu0
      %2545 = vdwg.mxu0
      %v2546 = vpack.c.bf16 %v2519, %v2516
      %v2547 = vpack.c.bf16 %v2527, %v2524
      %v2548 = vpack.c.bf16 %v2535, %v2532
      %v2549 = vpack.c.bf16 %v2543, %v2540
      %v2550 = vld [vmem:[%s5] sm:$0xf]
      %v2551 = vld [vmem:[%s5 + $0x4] sm:$0xf]
      %v2552 = vld [vmem:[%s5 + $0x8] sm:$0xf]
      %v2553 = vld [vmem:[%s5 + $0xc] sm:$0xf]
      %v2554 = vld [vmem:[%s5 + $0x10] sm:$0xf]
      %v2555 = vld [vmem:[%s5 + $0x14] sm:$0xf]
      %v2556 = vld [vmem:[%s5 + $0x18] sm:$0xf]
      %v2557 = vld [vmem:[%s5 + $0x1c] sm:$0xf]
      %2558 = vrot.lane.b32.xlu0 %v479, 120
      %v2559 = vpop.permute.xlu0 %2558
      %v2561 = vsel %vm503, %v2559, 0
      %v2564 = vsel %vm503, %v2550, 0
      %2566 = vmatprep.subr.bf16.mxu0 0
      %2567 = vmatpush1.bf16.xpose.msra.mxu0 %v2564
      %2568 = vmatprep.subr.bf16.mxu0 0
      %2569 = vmatpush1.bf16.xpose.msra.mxu0 0
      %2570 = vmatprep.subr.bf16.mxu0 0
      %2571 = vmatpush1.bf16.xpose.msra.mxu0 0
      %2572 = vmatprep.subr.bf16.mxu0 0
      %2573 = vmatpush1.bf16.xpose.msra.mxu0 0
      %2574 = vmatprep.subr.bf16.mxu0 0
      %2575 = vmatpush1.bf16.xpose.msra.mxu0 0
      %2576 = vmatprep.subr.bf16.mxu0 0
      %2577 = vmatpush1.bf16.xpose.msra.mxu0 0
      %2578 = vmatprep.subr.bf16.mxu0 0
      %2579 = vmatpush1.bf16.xpose.msra.mxu0 0
      %2580 = vmatprep.subr.bf16.mxu0 0
      %2581 = vmatpush1.bf16.xpose.msra.mxu0 0
      %2582 = vmatprep.subr.bf16.mxu0 0
      %2583 = vmatpush1.bf16.xpose.msra.mxu0 0
      %2584 = vmatprep.subr.bf16.mxu0 0
      %2585 = vmatpush1.bf16.xpose.msra.mxu0 0
      %2586 = vmatprep.subr.bf16.mxu0 0
      %2587 = vmatpush1.bf16.xpose.msra.mxu0 0
      %2588 = vmatprep.subr.bf16.mxu0 0
      %2589 = vmatpush1.bf16.xpose.msra.mxu0 0
      %2590 = vmatprep.subr.bf16.mxu0 0
      %2591 = vmatpush1.bf16.xpose.msra.mxu0 0
      %2592 = vmatprep.subr.bf16.mxu0 0
      %2593 = vmatpush1.bf16.xpose.msra.mxu0 0
      %2594 = vmatprep.subr.bf16.mxu0 0
      %2595 = vmatpush1.bf16.xpose.msra.mxu0 0
      %2596 = vmatprep.subr.bf16.mxu0 0
      %2597 = vmatpush1.bf16.xpose.msra.mxu0 0
      %2598 = vmatprep.mubr.bf16.mxu0 0
      %2599 = vmatmul.mubr.bf16.gmra.mrb[0].mxu0 %v2561
      %v2600 = vpop.f32.mrb[0].mxu0
      %v2601 = vadd.f32 0.0, %v2600
      %v2602 = vpop.f32.mrb[0].mxu0
      %v2603 = vpop.f32.mrb[0].mxu0
      %v2604 = vpop.f32.mrb[0].mxu0
      %2605 = vdwg.mxu0
      %2606 = vrot.lane.b32.xlu0 %v480, 120
      %v2607 = vpop.permute.xlu0 %2606
      %v2609 = vsel %vm503, %v2607, 0
      %v2612 = vsel %vm503, %v2551, 0
      %2614 = vmatprep.subr.bf16.mxu0 0
      %2615 = vmatpush1.bf16.xpose.msra.mxu0 %v2612
      %2616 = vmatprep.subr.bf16.mxu0 0
      %2617 = vmatpush1.bf16.xpose.msra.mxu0 0
      %2618 = vmatprep.subr.bf16.mxu0 0
      %2619 = vmatpush1.bf16.xpose.msra.mxu0 0
      %2620 = vmatprep.subr.bf16.mxu0 0
      %2621 = vmatpush1.bf16.xpose.msra.mxu0 0
      %2622 = vmatprep.subr.bf16.mxu0 0
      %2623 = vmatpush1.bf16.xpose.msra.mxu0 0
      %2624 = vmatprep.subr.bf16.mxu0 0
      %2625 = vmatpush1.bf16.xpose.msra.mxu0 0
      %2626 = vmatprep.subr.bf16.mxu0 0
      %2627 = vmatpush1.bf16.xpose.msra.mxu0 0
      %2628 = vmatprep.subr.bf16.mxu0 0
      %2629 = vmatpush1.bf16.xpose.msra.mxu0 0
      %2630 = vmatprep.subr.bf16.mxu0 0
      %2631 = vmatpush1.bf16.xpose.msra.mxu0 0
      %2632 = vmatprep.subr.bf16.mxu0 0
      %2633 = vmatpush1.bf16.xpose.msra.mxu0 0
      %2634 = vmatprep.subr.bf16.mxu0 0
      %2635 = vmatpush1.bf16.xpose.msra.mxu0 0
      %2636 = vmatprep.subr.bf16.mxu0 0
      %2637 = vmatpush1.bf16.xpose.msra.mxu0 0
      %2638 = vmatprep.subr.bf16.mxu0 0
      %2639 = vmatpush1.bf16.xpose.msra.mxu0 0
      %2640 = vmatprep.subr.bf16.mxu0 0
      %2641 = vmatpush1.bf16.xpose.msra.mxu0 0
      %2642 = vmatprep.subr.bf16.mxu0 0
      %2643 = vmatpush1.bf16.xpose.msra.mxu0 0
      %2644 = vmatprep.subr.bf16.mxu0 0
      %2645 = vmatpush1.bf16.xpose.msra.mxu0 0
      %2646 = vmatprep.mubr.bf16.mxu0 0
      %2647 = vmatmul.mubr.bf16.gmra.mrb[0].mxu0 %v2609
      %v2648 = vpop.f32.mrb[0].mxu0
      %v2649 = vadd.f32 0.0, %v2648
      %v2650 = vpop.f32.mrb[0].mxu0
      %v2651 = vpop.f32.mrb[0].mxu0
      %v2652 = vpop.f32.mrb[0].mxu0
      %2653 = vdwg.mxu0
      %2654 = vrot.lane.b32.xlu0 %v481, 120
      %v2655 = vpop.permute.xlu0 %2654
      %v2657 = vsel %vm503, %v2655, 0
      %v2660 = vsel %vm503, %v2552, 0
      %2662 = vmatprep.subr.bf16.mxu0 0
      %2663 = vmatpush1.bf16.xpose.msra.mxu0 %v2660
      %2664 = vmatprep.subr.bf16.mxu0 0
      %2665 = vmatpush1.bf16.xpose.msra.mxu0 0
      %2666 = vmatprep.subr.bf16.mxu0 0
      %2667 = vmatpush1.bf16.xpose.msra.mxu0 0
      %2668 = vmatprep.subr.bf16.mxu0 0
      %2669 = vmatpush1.bf16.xpose.msra.mxu0 0
      %2670 = vmatprep.subr.bf16.mxu0 0
      %2671 = vmatpush1.bf16.xpose.msra.mxu0 0
      %2672 = vmatprep.subr.bf16.mxu0 0
      %2673 = vmatpush1.bf16.xpose.msra.mxu0 0
      %2674 = vmatprep.subr.bf16.mxu0 0
      %2675 = vmatpush1.bf16.xpose.msra.mxu0 0
      %2676 = vmatprep.subr.bf16.mxu0 0
      %2677 = vmatpush1.bf16.xpose.msra.mxu0 0
      %2678 = vmatprep.subr.bf16.mxu0 0
      %2679 = vmatpush1.bf16.xpose.msra.mxu0 0
      %2680 = vmatprep.subr.bf16.mxu0 0
      %2681 = vmatpush1.bf16.xpose.msra.mxu0 0
      %2682 = vmatprep.subr.bf16.mxu0 0
      %2683 = vmatpush1.bf16.xpose.msra.mxu0 0
      %2684 = vmatprep.subr.bf16.mxu0 0
      %2685 = vmatpush1.bf16.xpose.msra.mxu0 0
      %2686 = vmatprep.subr.bf16.mxu0 0
      %2687 = vmatpush1.bf16.xpose.msra.mxu0 0
      %2688 = vmatprep.subr.bf16.mxu0 0
      %2689 = vmatpush1.bf16.xpose.msra.mxu0 0
      %2690 = vmatprep.subr.bf16.mxu0 0
      %2691 = vmatpush1.bf16.xpose.msra.mxu0 0
      %2692 = vmatprep.subr.bf16.mxu0 0
      %2693 = vmatpush1.bf16.xpose.msra.mxu0 0
      %2694 = vmatprep.mubr.bf16.mxu0 0
      %2695 = vmatmul.mubr.bf16.gmra.mrb[0].mxu0 %v2657
      %v2696 = vpop.f32.mrb[0].mxu0
      %v2697 = vadd.f32 0.0, %v2696
      %v2698 = vpop.f32.mrb[0].mxu0
      %v2699 = vpop.f32.mrb[0].mxu0
      %v2700 = vpop.f32.mrb[0].mxu0
      %2701 = vdwg.mxu0
      %2702 = vrot.lane.b32.xlu0 %v482, 120
      %v2703 = vpop.permute.xlu0 %2702
      %v2705 = vsel %vm503, %v2703, 0
      %v2708 = vsel %vm503, %v2553, 0
      %2710 = vmatprep.subr.bf16.mxu0 0
      %2711 = vmatpush1.bf16.xpose.msra.mxu0 %v2708
      %2712 = vmatprep.subr.bf16.mxu0 0
      %2713 = vmatpush1.bf16.xpose.msra.mxu0 0
      %2714 = vmatprep.subr.bf16.mxu0 0
      %2715 = vmatpush1.bf16.xpose.msra.mxu0 0
      %2716 = vmatprep.subr.bf16.mxu0 0
      %2717 = vmatpush1.bf16.xpose.msra.mxu0 0
      %2718 = vmatprep.subr.bf16.mxu0 0
      %2719 = vmatpush1.bf16.xpose.msra.mxu0 0
      %2720 = vmatprep.subr.bf16.mxu0 0
      %2721 = vmatpush1.bf16.xpose.msra.mxu0 0
      %2722 = vmatprep.subr.bf16.mxu0 0
      %2723 = vmatpush1.bf16.xpose.msra.mxu0 0
      %2724 = vmatprep.subr.bf16.mxu0 0
      %2725 = vmatpush1.bf16.xpose.msra.mxu0 0
      %2726 = vmatprep.subr.bf16.mxu0 0
      %2727 = vmatpush1.bf16.xpose.msra.mxu0 0
      %2728 = vmatprep.subr.bf16.mxu0 0
      %2729 = vmatpush1.bf16.xpose.msra.mxu0 0
      %2730 = vmatprep.subr.bf16.mxu0 0
      %2731 = vmatpush1.bf16.xpose.msra.mxu0 0
      %2732 = vmatprep.subr.bf16.mxu0 0
      %2733 = vmatpush1.bf16.xpose.msra.mxu0 0
      %2734 = vmatprep.subr.bf16.mxu0 0
      %2735 = vmatpush1.bf16.xpose.msra.mxu0 0
      %2736 = vmatprep.subr.bf16.mxu0 0
      %2737 = vmatpush1.bf16.xpose.msra.mxu0 0
      %2738 = vmatprep.subr.bf16.mxu0 0
      %2739 = vmatpush1.bf16.xpose.msra.mxu0 0
      %2740 = vmatprep.subr.bf16.mxu0 0
      %2741 = vmatpush1.bf16.xpose.msra.mxu0 0
      %2742 = vmatprep.mubr.bf16.mxu0 0
      %2743 = vmatmul.mubr.bf16.gmra.mrb[0].mxu0 %v2705
      %v2744 = vpop.f32.mrb[0].mxu0
      %v2745 = vadd.f32 0.0, %v2744
      %v2746 = vpop.f32.mrb[0].mxu0
      %v2747 = vpop.f32.mrb[0].mxu0
      %v2748 = vpop.f32.mrb[0].mxu0
      %2749 = vdwg.mxu0
      %2750 = vrot.lane.b32.xlu0 %v483, 120
      %v2751 = vpop.permute.xlu0 %2750
      %v2753 = vsel %vm503, %v2751, 0
      %v2756 = vsel %vm503, %v2554, 0
      %2758 = vmatprep.subr.bf16.mxu0 0
      %2759 = vmatpush1.bf16.xpose.msra.mxu0 %v2756
      %2760 = vmatprep.subr.bf16.mxu0 0
      %2761 = vmatpush1.bf16.xpose.msra.mxu0 0
      %2762 = vmatprep.subr.bf16.mxu0 0
      %2763 = vmatpush1.bf16.xpose.msra.mxu0 0
      %2764 = vmatprep.subr.bf16.mxu0 0
      %2765 = vmatpush1.bf16.xpose.msra.mxu0 0
      %2766 = vmatprep.subr.bf16.mxu0 0
      %2767 = vmatpush1.bf16.xpose.msra.mxu0 0
      %2768 = vmatprep.subr.bf16.mxu0 0
      %2769 = vmatpush1.bf16.xpose.msra.mxu0 0
      %2770 = vmatprep.subr.bf16.mxu0 0
      %2771 = vmatpush1.bf16.xpose.msra.mxu0 0
      %2772 = vmatprep.subr.bf16.mxu0 0
      %2773 = vmatpush1.bf16.xpose.msra.mxu0 0
      %2774 = vmatprep.subr.bf16.mxu0 0
      %2775 = vmatpush1.bf16.xpose.msra.mxu0 0
      %2776 = vmatprep.subr.bf16.mxu0 0
      %2777 = vmatpush1.bf16.xpose.msra.mxu0 0
      %2778 = vmatprep.subr.bf16.mxu0 0
      %2779 = vmatpush1.bf16.xpose.msra.mxu0 0
      %2780 = vmatprep.subr.bf16.mxu0 0
      %2781 = vmatpush1.bf16.xpose.msra.mxu0 0
      %2782 = vmatprep.subr.bf16.mxu0 0
      %2783 = vmatpush1.bf16.xpose.msra.mxu0 0
      %2784 = vmatprep.subr.bf16.mxu0 0
      %2785 = vmatpush1.bf16.xpose.msra.mxu0 0
      %2786 = vmatprep.subr.bf16.mxu0 0
      %2787 = vmatpush1.bf16.xpose.msra.mxu0 0
      %2788 = vmatprep.subr.bf16.mxu0 0
      %2789 = vmatpush1.bf16.xpose.msra.mxu0 0
      %2790 = vmatprep.mubr.bf16.mxu0 0
      %2791 = vmatmul.mubr.bf16.gmra.mrb[0].mxu0 %v2753
      %v2792 = vpop.f32.mrb[0].mxu0
      %v2793 = vadd.f32 0.0, %v2792
      %v2794 = vpop.f32.mrb[0].mxu0
      %v2795 = vpop.f32.mrb[0].mxu0
      %v2796 = vpop.f32.mrb[0].mxu0
      %2797 = vdwg.mxu0
      %2798 = vrot.lane.b32.xlu0 %v484, 120
      %v2799 = vpop.permute.xlu0 %2798
      %v2801 = vsel %vm503, %v2799, 0
      %v2804 = vsel %vm503, %v2555, 0
      %2806 = vmatprep.subr.bf16.mxu0 0
      %2807 = vmatpush1.bf16.xpose.msra.mxu0 %v2804
      %2808 = vmatprep.subr.bf16.mxu0 0
      %2809 = vmatpush1.bf16.xpose.msra.mxu0 0
      %2810 = vmatprep.subr.bf16.mxu0 0
      %2811 = vmatpush1.bf16.xpose.msra.mxu0 0
      %2812 = vmatprep.subr.bf16.mxu0 0
      %2813 = vmatpush1.bf16.xpose.msra.mxu0 0
      %2814 = vmatprep.subr.bf16.mxu0 0
      %2815 = vmatpush1.bf16.xpose.msra.mxu0 0
      %2816 = vmatprep.subr.bf16.mxu0 0
      %2817 = vmatpush1.bf16.xpose.msra.mxu0 0
      %2818 = vmatprep.subr.bf16.mxu0 0
      %2819 = vmatpush1.bf16.xpose.msra.mxu0 0
      %2820 = vmatprep.subr.bf16.mxu0 0
      %2821 = vmatpush1.bf16.xpose.msra.mxu0 0
      %2822 = vmatprep.subr.bf16.mxu0 0
      %2823 = vmatpush1.bf16.xpose.msra.mxu0 0
      %2824 = vmatprep.subr.bf16.mxu0 0
      %2825 = vmatpush1.bf16.xpose.msra.mxu0 0
      %2826 = vmatprep.subr.bf16.mxu0 0
      %2827 = vmatpush1.bf16.xpose.msra.mxu0 0
      %2828 = vmatprep.subr.bf16.mxu0 0
      %2829 = vmatpush1.bf16.xpose.msra.mxu0 0
      %2830 = vmatprep.subr.bf16.mxu0 0
      %2831 = vmatpush1.bf16.xpose.msra.mxu0 0
      %2832 = vmatprep.subr.bf16.mxu0 0
      %2833 = vmatpush1.bf16.xpose.msra.mxu0 0
      %2834 = vmatprep.subr.bf16.mxu0 0
      %2835 = vmatpush1.bf16.xpose.msra.mxu0 0
      %2836 = vmatprep.subr.bf16.mxu0 0
      %2837 = vmatpush1.bf16.xpose.msra.mxu0 0
      %2838 = vmatprep.mubr.bf16.mxu0 0
      %2839 = vmatmul.mubr.bf16.gmra.mrb[0].mxu0 %v2801
      %v2840 = vpop.f32.mrb[0].mxu0
      %v2841 = vadd.f32 0.0, %v2840
      %v2842 = vpop.f32.mrb[0].mxu0
      %v2843 = vpop.f32.mrb[0].mxu0
      %v2844 = vpop.f32.mrb[0].mxu0
      %2845 = vdwg.mxu0
      %2846 = vrot.lane.b32.xlu0 %v485, 120
      %v2847 = vpop.permute.xlu0 %2846
      %v2849 = vsel %vm503, %v2847, 0
      %v2852 = vsel %vm503, %v2556, 0
      %2854 = vmatprep.subr.bf16.mxu0 0
      %2855 = vmatpush1.bf16.xpose.msra.mxu0 %v2852
      %2856 = vmatprep.subr.bf16.mxu0 0
      %2857 = vmatpush1.bf16.xpose.msra.mxu0 0
      %2858 = vmatprep.subr.bf16.mxu0 0
      %2859 = vmatpush1.bf16.xpose.msra.mxu0 0
      %2860 = vmatprep.subr.bf16.mxu0 0
      %2861 = vmatpush1.bf16.xpose.msra.mxu0 0
      %2862 = vmatprep.subr.bf16.mxu0 0
      %2863 = vmatpush1.bf16.xpose.msra.mxu0 0
      %2864 = vmatprep.subr.bf16.mxu0 0
      %2865 = vmatpush1.bf16.xpose.msra.mxu0 0
      %2866 = vmatprep.subr.bf16.mxu0 0
      %2867 = vmatpush1.bf16.xpose.msra.mxu0 0
      %2868 = vmatprep.subr.bf16.mxu0 0
      %2869 = vmatpush1.bf16.xpose.msra.mxu0 0
      %2870 = vmatprep.subr.bf16.mxu0 0
      %2871 = vmatpush1.bf16.xpose.msra.mxu0 0
      %2872 = vmatprep.subr.bf16.mxu0 0
      %2873 = vmatpush1.bf16.xpose.msra.mxu0 0
      %2874 = vmatprep.subr.bf16.mxu0 0
      %2875 = vmatpush1.bf16.xpose.msra.mxu0 0
      %2876 = vmatprep.subr.bf16.mxu0 0
      %2877 = vmatpush1.bf16.xpose.msra.mxu0 0
      %2878 = vmatprep.subr.bf16.mxu0 0
      %2879 = vmatpush1.bf16.xpose.msra.mxu0 0
      %2880 = vmatprep.subr.bf16.mxu0 0
      %2881 = vmatpush1.bf16.xpose.msra.mxu0 0
      %2882 = vmatprep.subr.bf16.mxu0 0
      %2883 = vmatpush1.bf16.xpose.msra.mxu0 0
      %2884 = vmatprep.subr.bf16.mxu0 0
      %2885 = vmatpush1.bf16.xpose.msra.mxu0 0
      %2886 = vmatprep.mubr.bf16.mxu0 0
      %2887 = vmatmul.mubr.bf16.gmra.mrb[0].mxu0 %v2849
      %v2888 = vpop.f32.mrb[0].mxu0
      %v2889 = vadd.f32 0.0, %v2888
      %v2890 = vpop.f32.mrb[0].mxu0
      %v2891 = vpop.f32.mrb[0].mxu0
      %v2892 = vpop.f32.mrb[0].mxu0
      %2893 = vdwg.mxu0
      %2894 = vrot.lane.b32.xlu0 %v486, 120
      %v2895 = vpop.permute.xlu0 %2894
      %v2897 = vsel %vm503, %v2895, 0
      %v2900 = vsel %vm503, %v2557, 0
      %2902 = vmatprep.subr.bf16.mxu0 0
      %2903 = vmatpush1.bf16.xpose.msra.mxu0 %v2900
      %2904 = vmatprep.subr.bf16.mxu0 0
      %2905 = vmatpush1.bf16.xpose.msra.mxu0 0
      %2906 = vmatprep.subr.bf16.mxu0 0
      %2907 = vmatpush1.bf16.xpose.msra.mxu0 0
      %2908 = vmatprep.subr.bf16.mxu0 0
      %2909 = vmatpush1.bf16.xpose.msra.mxu0 0
      %2910 = vmatprep.subr.bf16.mxu0 0
      %2911 = vmatpush1.bf16.xpose.msra.mxu0 0
      %2912 = vmatprep.subr.bf16.mxu0 0
      %2913 = vmatpush1.bf16.xpose.msra.mxu0 0
      %2914 = vmatprep.subr.bf16.mxu0 0
      %2915 = vmatpush1.bf16.xpose.msra.mxu0 0
      %2916 = vmatprep.subr.bf16.mxu0 0
      %2917 = vmatpush1.bf16.xpose.msra.mxu0 0
      %2918 = vmatprep.subr.bf16.mxu0 0
      %2919 = vmatpush1.bf16.xpose.msra.mxu0 0
      %2920 = vmatprep.subr.bf16.mxu0 0
      %2921 = vmatpush1.bf16.xpose.msra.mxu0 0
      %2922 = vmatprep.subr.bf16.mxu0 0
      %2923 = vmatpush1.bf16.xpose.msra.mxu0 0
      %2924 = vmatprep.subr.bf16.mxu0 0
      %2925 = vmatpush1.bf16.xpose.msra.mxu0 0
      %2926 = vmatprep.subr.bf16.mxu0 0
      %2927 = vmatpush1.bf16.xpose.msra.mxu0 0
      %2928 = vmatprep.subr.bf16.mxu0 0
      %2929 = vmatpush1.bf16.xpose.msra.mxu0 0
      %2930 = vmatprep.subr.bf16.mxu0 0
      %2931 = vmatpush1.bf16.xpose.msra.mxu0 0
      %2932 = vmatprep.subr.bf16.mxu0 0
      %2933 = vmatpush1.bf16.xpose.msra.mxu0 0
      %2934 = vmatprep.mubr.bf16.mxu0 0
      %2935 = vmatmul.mubr.bf16.gmra.mrb[0].mxu0 %v2897
      %v2936 = vpop.f32.mrb[0].mxu0
      %v2937 = vadd.f32 0.0, %v2936
      %v2938 = vpop.f32.mrb[0].mxu0
      %v2939 = vpop.f32.mrb[0].mxu0
      %v2940 = vpop.f32.mrb[0].mxu0
      %2941 = vdwg.mxu0
      %v2942 = vld [vmem:[%s6] sm:$0xf]
      %v2943 = vld [vmem:[%s6 + $0x4] sm:$0xf]
      %v2944 = vld [vmem:[%s6 + $0x8] sm:$0xf]
      %v2945 = vld [vmem:[%s6 + $0xc] sm:$0xf]
      %v2946 = vld [vmem:[%s6 + $0x10] sm:$0xf]
      %v2947 = vld [vmem:[%s6 + $0x14] sm:$0xf]
      %v2948 = vld [vmem:[%s6 + $0x18] sm:$0xf]
      %v2949 = vld [vmem:[%s6 + $0x1c] sm:$0xf]
      %2958 = vxpose.xlu0.c.b16.start [1/8] %v2559, 128
      %2959 = vxpose.xlu0.c.b16.cont [2/8] 0, 128
      %2960 = vxpose.xlu0.c.b16.cont [3/8] 0, 128
      %2961 = vxpose.xlu0.c.b16.cont [4/8] 0, 128
      %2962 = vxpose.xlu0.c.b16.cont [5/8] 0, 128
      %2963 = vxpose.xlu0.c.b16.cont [6/8] 0, 128
      %2964 = vxpose.xlu0.c.b16.cont [7/8] 0, 128
      %2965 = vxpose.xlu0.c.b16.end [8/8] 0, 128
      %v2966 = vpop.trf.xlu0
      %v2967 = vpop.trf.xlu0
      %v2968 = vpop.trf.xlu0
      %v2969 = vpop.trf.xlu0
      %v2970 = vpop.trf.xlu0
      %v2971 = vpop.trf.xlu0
      %v2972 = vpop.trf.xlu0
      %v2973 = vpop.trf.xlu0
      %2974 = vxpose.xlu0.c.b16.start [1/8] %v2607, 128
      %2975 = vxpose.xlu0.c.b16.cont [2/8] 0, 128
      %2976 = vxpose.xlu0.c.b16.cont [3/8] 0, 128
      %2977 = vxpose.xlu0.c.b16.cont [4/8] 0, 128
      %2978 = vxpose.xlu0.c.b16.cont [5/8] 0, 128
      %2979 = vxpose.xlu0.c.b16.cont [6/8] 0, 128
      %2980 = vxpose.xlu0.c.b16.cont [7/8] 0, 128
      %2981 = vxpose.xlu0.c.b16.end [8/8] 0, 128
      %v2982 = vpop.trf.xlu0
      %v2983 = vpop.trf.xlu0
      %v2984 = vpop.trf.xlu0
      %v2985 = vpop.trf.xlu0
      %v2986 = vpop.trf.xlu0
      %v2987 = vpop.trf.xlu0
      %v2988 = vpop.trf.xlu0
      %v2989 = vpop.trf.xlu0
      %2990 = vxpose.xlu0.c.b16.start [1/8] %v2655, 128
      %2991 = vxpose.xlu0.c.b16.cont [2/8] 0, 128
      %2992 = vxpose.xlu0.c.b16.cont [3/8] 0, 128
      %2993 = vxpose.xlu0.c.b16.cont [4/8] 0, 128
      %2994 = vxpose.xlu0.c.b16.cont [5/8] 0, 128
      %2995 = vxpose.xlu0.c.b16.cont [6/8] 0, 128
      %2996 = vxpose.xlu0.c.b16.cont [7/8] 0, 128
      %2997 = vxpose.xlu0.c.b16.end [8/8] 0, 128
      %v2998 = vpop.trf.xlu0
      %v2999 = vpop.trf.xlu0
      %v3000 = vpop.trf.xlu0
      %v3001 = vpop.trf.xlu0
      %v3002 = vpop.trf.xlu0
      %v3003 = vpop.trf.xlu0
      %v3004 = vpop.trf.xlu0
      %v3005 = vpop.trf.xlu0
      %3006 = vxpose.xlu0.c.b16.start [1/8] %v2703, 128
      %3007 = vxpose.xlu0.c.b16.cont [2/8] 0, 128
      %3008 = vxpose.xlu0.c.b16.cont [3/8] 0, 128
      %3009 = vxpose.xlu0.c.b16.cont [4/8] 0, 128
      %3010 = vxpose.xlu0.c.b16.cont [5/8] 0, 128
      %3011 = vxpose.xlu0.c.b16.cont [6/8] 0, 128
      %3012 = vxpose.xlu0.c.b16.cont [7/8] 0, 128
      %3013 = vxpose.xlu0.c.b16.end [8/8] 0, 128
      %v3014 = vpop.trf.xlu0
      %v3015 = vpop.trf.xlu0
      %v3016 = vpop.trf.xlu0
      %v3017 = vpop.trf.xlu0
      %v3018 = vpop.trf.xlu0
      %v3019 = vpop.trf.xlu0
      %v3020 = vpop.trf.xlu0
      %v3021 = vpop.trf.xlu0
      %3022 = vxpose.xlu0.c.b16.start [1/8] %v2751, 128
      %3023 = vxpose.xlu0.c.b16.cont [2/8] 0, 128
      %3024 = vxpose.xlu0.c.b16.cont [3/8] 0, 128
      %3025 = vxpose.xlu0.c.b16.cont [4/8] 0, 128
      %3026 = vxpose.xlu0.c.b16.cont [5/8] 0, 128
      %3027 = vxpose.xlu0.c.b16.cont [6/8] 0, 128
      %3028 = vxpose.xlu0.c.b16.cont [7/8] 0, 128
      %3029 = vxpose.xlu0.c.b16.end [8/8] 0, 128
      %v3030 = vpop.trf.xlu0
      %v3031 = vpop.trf.xlu0
      %v3032 = vpop.trf.xlu0
      %v3033 = vpop.trf.xlu0
      %v3034 = vpop.trf.xlu0
      %v3035 = vpop.trf.xlu0
      %v3036 = vpop.trf.xlu0
      %v3037 = vpop.trf.xlu0
      %3038 = vxpose.xlu0.c.b16.start [1/8] %v2799, 128
      %3039 = vxpose.xlu0.c.b16.cont [2/8] 0, 128
      %3040 = vxpose.xlu0.c.b16.cont [3/8] 0, 128
      %3041 = vxpose.xlu0.c.b16.cont [4/8] 0, 128
      %3042 = vxpose.xlu0.c.b16.cont [5/8] 0, 128
      %3043 = vxpose.xlu0.c.b16.cont [6/8] 0, 128
      %3044 = vxpose.xlu0.c.b16.cont [7/8] 0, 128
      %3045 = vxpose.xlu0.c.b16.end [8/8] 0, 128
      %v3046 = vpop.trf.xlu0
      %v3047 = vpop.trf.xlu0
      %v3048 = vpop.trf.xlu0
      %v3049 = vpop.trf.xlu0
      %v3050 = vpop.trf.xlu0
      %v3051 = vpop.trf.xlu0
      %v3052 = vpop.trf.xlu0
      %v3053 = vpop.trf.xlu0
      %3054 = vxpose.xlu0.c.b16.start [1/8] %v2847, 128
      %3055 = vxpose.xlu0.c.b16.cont [2/8] 0, 128
      %3056 = vxpose.xlu0.c.b16.cont [3/8] 0, 128
      %3057 = vxpose.xlu0.c.b16.cont [4/8] 0, 128
      %3058 = vxpose.xlu0.c.b16.cont [5/8] 0, 128
      %3059 = vxpose.xlu0.c.b16.cont [6/8] 0, 128
      %3060 = vxpose.xlu0.c.b16.cont [7/8] 0, 128
      %3061 = vxpose.xlu0.c.b16.end [8/8] 0, 128
      %v3062 = vpop.trf.xlu0
      %v3063 = vpop.trf.xlu0
      %v3064 = vpop.trf.xlu0
      %v3065 = vpop.trf.xlu0
      %v3066 = vpop.trf.xlu0
      %v3067 = vpop.trf.xlu0
      %v3068 = vpop.trf.xlu0
      %v3069 = vpop.trf.xlu0
      %3070 = vxpose.xlu0.c.b16.start [1/8] %v2895, 128
      %3071 = vxpose.xlu0.c.b16.cont [2/8] 0, 128
      %3072 = vxpose.xlu0.c.b16.cont [3/8] 0, 128
      %3073 = vxpose.xlu0.c.b16.cont [4/8] 0, 128
      %3074 = vxpose.xlu0.c.b16.cont [5/8] 0, 128
      %3075 = vxpose.xlu0.c.b16.cont [6/8] 0, 128
      %3076 = vxpose.xlu0.c.b16.cont [7/8] 0, 128
      %3077 = vxpose.xlu0.c.b16.end [8/8] 0, 128
      %v3078 = vpop.trf.xlu0
      %v3079 = vpop.trf.xlu0
      %v3080 = vpop.trf.xlu0
      %v3081 = vpop.trf.xlu0
      %v3082 = vpop.trf.xlu0
      %v3083 = vpop.trf.xlu0
      %v3084 = vpop.trf.xlu0
      %v3085 = vpop.trf.xlu0
      %v3086 = vcombine.low %v2966, %v3030
      %v3088 = vunpack.c.l.s4 1983009808
      %v3089 = vunpack.c.0.s8 %v3088
      %v3090 = vlaneseq
      %v3091 = vshrl.u32 %v3090, 7
      %v3092 = vsub.s32 %v3089, %v3091
      %v3093 = vrot.slane %v3086, %v3092
      %v3094 = vcombine.low %v2998, %v3062
      %v3096 = vunpack.c.l.s4 1983009808
      %v3097 = vunpack.c.0.s8 %v3096
      %v3098 = vlaneseq
      %v3099 = vshrl.u32 %v3098, 7
      %v3100 = vsub.s32 %v3097, %v3099
      %v3101 = vrot.slane %v3094, %v3100
      %v3102 = vcombine.low %v3093, %v3101
      %v3103 = vcombine.high %v3093, %v3101
      %v3105 = vunpack.c.l.s4 1934713408
      %v3106 = vunpack.c.0.s8 %v3105
      %v3107 = vlaneseq
      %v3108 = vshrl.u32 %v3107, 7
      %v3109 = vsub.s32 %v3106, %v3108
      %v3110 = vrot.slane %v3102, %v3109
      %v3112 = vunpack.c.l.s4 1934713408
      %v3113 = vunpack.c.0.s8 %v3112
      %v3114 = vlaneseq
      %v3115 = vshrl.u32 %v3114, 7
      %v3116 = vsub.s32 %v3113, %v3115
      %v3117 = vrot.slane %v3103, %v3116
      %v3118 = vcombine.high %v3110, 0
      %v3119 = vcombine.high %v3117, 0
      %v3120 = vcombine.low %v2982, %v3046
      %v3122 = vunpack.c.l.s4 1983009808
      %v3123 = vunpack.c.0.s8 %v3122
      %v3124 = vlaneseq
      %v3125 = vshrl.u32 %v3124, 7
      %v3126 = vsub.s32 %v3123, %v3125
      %v3127 = vrot.slane %v3120, %v3126
      %v3128 = vcombine.low %v3014, %v3078
      %v3130 = vunpack.c.l.s4 1983009808
      %v3131 = vunpack.c.0.s8 %v3130
      %v3132 = vlaneseq
      %v3133 = vshrl.u32 %v3132, 7
      %v3134 = vsub.s32 %v3131, %v3133
      %v3135 = vrot.slane %v3128, %v3134
      %v3136 = vcombine.low %v3127, %v3135
      %v3137 = vcombine.high %v3127, %v3135
      %v3139 = vunpack.c.l.s4 1934713408
      %v3140 = vunpack.c.0.s8 %v3139
      %v3141 = vlaneseq
      %v3142 = vshrl.u32 %v3141, 7
      %v3143 = vsub.s32 %v3140, %v3142
      %v3144 = vrot.slane %v3136, %v3143
      %v3146 = vunpack.c.l.s4 1934713408
      %v3147 = vunpack.c.0.s8 %v3146
      %v3148 = vlaneseq
      %v3149 = vshrl.u32 %v3148, 7
      %v3150 = vsub.s32 %v3147, %v3149
      %v3151 = vrot.slane %v3137, %v3150
      %v3152 = vcombine.high %v3144, 0
      %v3153 = vcombine.high %v3151, 0
      %v3156 = vpack.i.b16 %v3144, %v3110
      %v3158 = vshrl.u32 %v3110, 16
      %v3159 = vshrl.u32 %v3144, 16
      %v3160 = vpack.i.b16 %v3159, %v3158
      %v3164 = vpack.i.b16 %v3152, %v3118
      %v3166 = vshrl.u32 %v3118, 16
      %v3167 = vshrl.u32 %v3152, 16
      %v3168 = vpack.i.b16 %v3167, %v3166
      %v3172 = vpack.i.b16 %v3151, %v3117
      %v3174 = vshrl.u32 %v3117, 16
      %v3175 = vshrl.u32 %v3151, 16
      %v3176 = vpack.i.b16 %v3175, %v3174
      %v3180 = vpack.i.b16 %v3153, %v3119
      %v3182 = vshrl.u32 %v3119, 16
      %v3183 = vshrl.u32 %v3153, 16
      %v3184 = vpack.i.b16 %v3183, %v3182
      %3186 = vxpose.xlu0.c.b16.start [1/8] %v3156, 128
      %3187 = vxpose.xlu0.c.b16.cont [2/8] 0, 128
      %3188 = vxpose.xlu0.c.b16.cont [3/8] 0, 128
      %3189 = vxpose.xlu0.c.b16.cont [4/8] 0, 128
      %3190 = vxpose.xlu0.c.b16.cont [5/8] 0, 128
      %3191 = vxpose.xlu0.c.b16.cont [6/8] 0, 128
      %3192 = vxpose.xlu0.c.b16.cont [7/8] 0, 128
      %3193 = vxpose.xlu0.c.b16.end [8/8] 0, 128
      %v3194 = vpop.trf.xlu0
      %v3195 = vpop.trf.xlu0
      %v3196 = vpop.trf.xlu0
      %v3197 = vpop.trf.xlu0
      %v3198 = vpop.trf.xlu0
      %v3199 = vpop.trf.xlu0
      %v3200 = vpop.trf.xlu0
      %v3201 = vpop.trf.xlu0
      %3202 = vxpose.xlu0.c.b16.start [1/8] %v3160, 128
      %3203 = vxpose.xlu0.c.b16.cont [2/8] 0, 128
      %3204 = vxpose.xlu0.c.b16.cont [3/8] 0, 128
      %3205 = vxpose.xlu0.c.b16.cont [4/8] 0, 128
      %3206 = vxpose.xlu0.c.b16.cont [5/8] 0, 128
      %3207 = vxpose.xlu0.c.b16.cont [6/8] 0, 128
      %3208 = vxpose.xlu0.c.b16.cont [7/8] 0, 128
      %3209 = vxpose.xlu0.c.b16.end [8/8] 0, 128
      %v3210 = vpop.trf.xlu0
      %v3211 = vpop.trf.xlu0
      %v3212 = vpop.trf.xlu0
      %v3213 = vpop.trf.xlu0
      %v3214 = vpop.trf.xlu0
      %v3215 = vpop.trf.xlu0
      %v3216 = vpop.trf.xlu0
      %v3217 = vpop.trf.xlu0
      %3218 = vxpose.xlu0.c.b16.start [1/8] %v3164, 128
      %3219 = vxpose.xlu0.c.b16.cont [2/8] 0, 128
      %3220 = vxpose.xlu0.c.b16.cont [3/8] 0, 128
      %3221 = vxpose.xlu0.c.b16.cont [4/8] 0, 128
      %3222 = vxpose.xlu0.c.b16.cont [5/8] 0, 128
      %3223 = vxpose.xlu0.c.b16.cont [6/8] 0, 128
      %3224 = vxpose.xlu0.c.b16.cont [7/8] 0, 128
      %3225 = vxpose.xlu0.c.b16.end [8/8] 0, 128
      %v3226 = vpop.trf.xlu0
      %v3227 = vpop.trf.xlu0
      %v3228 = vpop.trf.xlu0
      %v3229 = vpop.trf.xlu0
      %v3230 = vpop.trf.xlu0
      %v3231 = vpop.trf.xlu0
      %v3232 = vpop.trf.xlu0
      %v3233 = vpop.trf.xlu0
      %3234 = vxpose.xlu0.c.b16.start [1/8] %v3168, 128
      %3235 = vxpose.xlu0.c.b16.cont [2/8] 0, 128
      %3236 = vxpose.xlu0.c.b16.cont [3/8] 0, 128
      %3237 = vxpose.xlu0.c.b16.cont [4/8] 0, 128
      %3238 = vxpose.xlu0.c.b16.cont [5/8] 0, 128
      %3239 = vxpose.xlu0.c.b16.cont [6/8] 0, 128
      %3240 = vxpose.xlu0.c.b16.cont [7/8] 0, 128
      %3241 = vxpose.xlu0.c.b16.end [8/8] 0, 128
      %v3242 = vpop.trf.xlu0
      %v3243 = vpop.trf.xlu0
      %v3244 = vpop.trf.xlu0
      %v3245 = vpop.trf.xlu0
      %v3246 = vpop.trf.xlu0
      %v3247 = vpop.trf.xlu0
      %v3248 = vpop.trf.xlu0
      %v3249 = vpop.trf.xlu0
      %3250 = vxpose.xlu0.c.b16.start [1/8] %v3172, 128
      %3251 = vxpose.xlu0.c.b16.cont [2/8] 0, 128
      %3252 = vxpose.xlu0.c.b16.cont [3/8] 0, 128
      %3253 = vxpose.xlu0.c.b16.cont [4/8] 0, 128
      %3254 = vxpose.xlu0.c.b16.cont [5/8] 0, 128
      %3255 = vxpose.xlu0.c.b16.cont [6/8] 0, 128
      %3256 = vxpose.xlu0.c.b16.cont [7/8] 0, 128
      %3257 = vxpose.xlu0.c.b16.end [8/8] 0, 128
      %v3258 = vpop.trf.xlu0
      %v3259 = vpop.trf.xlu0
      %v3260 = vpop.trf.xlu0
      %v3261 = vpop.trf.xlu0
      %v3262 = vpop.trf.xlu0
      %v3263 = vpop.trf.xlu0
      %v3264 = vpop.trf.xlu0
      %v3265 = vpop.trf.xlu0
      %3266 = vxpose.xlu0.c.b16.start [1/8] %v3176, 128
      %3267 = vxpose.xlu0.c.b16.cont [2/8] 0, 128
      %3268 = vxpose.xlu0.c.b16.cont [3/8] 0, 128
      %3269 = vxpose.xlu0.c.b16.cont [4/8] 0, 128
      %3270 = vxpose.xlu0.c.b16.cont [5/8] 0, 128
      %3271 = vxpose.xlu0.c.b16.cont [6/8] 0, 128
      %3272 = vxpose.xlu0.c.b16.cont [7/8] 0, 128
      %3273 = vxpose.xlu0.c.b16.end [8/8] 0, 128
      %v3274 = vpop.trf.xlu0
      %v3275 = vpop.trf.xlu0
      %v3276 = vpop.trf.xlu0
      %v3277 = vpop.trf.xlu0
      %v3278 = vpop.trf.xlu0
      %v3279 = vpop.trf.xlu0
      %v3280 = vpop.trf.xlu0
      %v3281 = vpop.trf.xlu0
      %3282 = vxpose.xlu0.c.b16.start [1/8] %v3180, 128
      %3283 = vxpose.xlu0.c.b16.cont [2/8] 0, 128
      %3284 = vxpose.xlu0.c.b16.cont [3/8] 0, 128
      %3285 = vxpose.xlu0.c.b16.cont [4/8] 0, 128
      %3286 = vxpose.xlu0.c.b16.cont [5/8] 0, 128
      %3287 = vxpose.xlu0.c.b16.cont [6/8] 0, 128
      %3288 = vxpose.xlu0.c.b16.cont [7/8] 0, 128
      %3289 = vxpose.xlu0.c.b16.end [8/8] 0, 128
      %v3290 = vpop.trf.xlu0
      %v3291 = vpop.trf.xlu0
      %v3292 = vpop.trf.xlu0
      %v3293 = vpop.trf.xlu0
      %v3294 = vpop.trf.xlu0
      %v3295 = vpop.trf.xlu0
      %v3296 = vpop.trf.xlu0
      %v3297 = vpop.trf.xlu0
      %3298 = vxpose.xlu0.c.b16.start [1/8] %v3184, 128
      %3299 = vxpose.xlu0.c.b16.cont [2/8] 0, 128
      %3300 = vxpose.xlu0.c.b16.cont [3/8] 0, 128
      %3301 = vxpose.xlu0.c.b16.cont [4/8] 0, 128
      %3302 = vxpose.xlu0.c.b16.cont [5/8] 0, 128
      %3303 = vxpose.xlu0.c.b16.cont [6/8] 0, 128
      %3304 = vxpose.xlu0.c.b16.cont [7/8] 0, 128
      %3305 = vxpose.xlu0.c.b16.end [8/8] 0, 128
      %v3306 = vpop.trf.xlu0
      %v3307 = vpop.trf.xlu0
      %v3308 = vpop.trf.xlu0
      %v3309 = vpop.trf.xlu0
      %v3310 = vpop.trf.xlu0
      %v3311 = vpop.trf.xlu0
      %v3312 = vpop.trf.xlu0
      %v3313 = vpop.trf.xlu0
      %v3314 = vcombine.low %v3194, %v3258
      %v3316 = vunpack.c.l.s4 1983009808
      %v3317 = vunpack.c.0.s8 %v3316
      %v3318 = vlaneseq
      %v3319 = vshrl.u32 %v3318, 7
      %v3320 = vsub.s32 %v3317, %v3319
      %v3321 = vrot.slane %v3314, %v3320
      %v3322 = vcombine.low %v3226, %v3290
      %v3324 = vunpack.c.l.s4 1983009808
      %v3325 = vunpack.c.0.s8 %v3324
      %v3326 = vlaneseq
      %v3327 = vshrl.u32 %v3326, 7
      %v3328 = vsub.s32 %v3325, %v3327
      %v3329 = vrot.slane %v3322, %v3328
      %v3330 = vcombine.low %v3321, %v3329
      %v3331 = vcombine.high %v3321, %v3329
      %v3333 = vunpack.c.l.s4 1934713408
      %v3334 = vunpack.c.0.s8 %v3333
      %v3335 = vlaneseq
      %v3336 = vshrl.u32 %v3335, 7
      %v3337 = vsub.s32 %v3334, %v3336
      %v3338 = vrot.slane %v3330, %v3337
      %v3340 = vunpack.c.l.s4 1934713408
      %v3341 = vunpack.c.0.s8 %v3340
      %v3342 = vlaneseq
      %v3343 = vshrl.u32 %v3342, 7
      %v3344 = vsub.s32 %v3341, %v3343
      %v3345 = vrot.slane %v3331, %v3344
      %v3346 = vcombine.high %v3338, 0
      %v3347 = vcombine.high %v3345, 0
      %v3348 = vcombine.low %v3210, %v3274
      %v3350 = vunpack.c.l.s4 1983009808
      %v3351 = vunpack.c.0.s8 %v3350
      %v3352 = vlaneseq
      %v3353 = vshrl.u32 %v3352, 7
      %v3354 = vsub.s32 %v3351, %v3353
      %v3355 = vrot.slane %v3348, %v3354
      %v3356 = vcombine.low %v3242, %v3306
      %v3358 = vunpack.c.l.s4 1983009808
      %v3359 = vunpack.c.0.s8 %v3358
      %v3360 = vlaneseq
      %v3361 = vshrl.u32 %v3360, 7
      %v3362 = vsub.s32 %v3359, %v3361
      %v3363 = vrot.slane %v3356, %v3362
      %v3364 = vcombine.low %v3355, %v3363
      %v3365 = vcombine.high %v3355, %v3363
      %v3367 = vunpack.c.l.s4 1934713408
      %v3368 = vunpack.c.0.s8 %v3367
      %v3369 = vlaneseq
      %v3370 = vshrl.u32 %v3369, 7
      %v3371 = vsub.s32 %v3368, %v3370
      %v3372 = vrot.slane %v3364, %v3371
      %v3374 = vunpack.c.l.s4 1934713408
      %v3375 = vunpack.c.0.s8 %v3374
      %v3376 = vlaneseq
      %v3377 = vshrl.u32 %v3376, 7
      %v3378 = vsub.s32 %v3375, %v3377
      %v3379 = vrot.slane %v3365, %v3378
      %v3380 = vcombine.high %v3372, 0
      %v3381 = vcombine.high %v3379, 0
      %v3384 = vpack.i.b16 %v3372, %v3338
      %v3385 = vshrl.u32 %v3338, 16
      %v3386 = vshrl.u32 %v3372, 16
      %v3387 = vpack.i.b16 %v3386, %v3385
      %v3390 = vpack.i.b16 %v3380, %v3346
      %v3391 = vshrl.u32 %v3346, 16
      %v3392 = vshrl.u32 %v3380, 16
      %v3393 = vpack.i.b16 %v3392, %v3391
      %v3396 = vpack.i.b16 %v3379, %v3345
      %v3397 = vshrl.u32 %v3345, 16
      %v3398 = vshrl.u32 %v3379, 16
      %v3399 = vpack.i.b16 %v3398, %v3397
      %v3402 = vpack.i.b16 %v3381, %v3347
      %v3403 = vshrl.u32 %v3347, 16
      %v3404 = vshrl.u32 %v3381, 16
      %v3405 = vpack.i.b16 %v3404, %v3403
      %v3407 = vsel %vm503, %v2942, 0
      %v3410 = vsel %vm1331, %v3384, 0
      %3412 = vmatprep.subr.bf16.mxu0 0
      %3413 = vmatpush1.bf16.msra.mxu0 %v3410
      %3414 = vmatprep.subr.bf16.mxu0 0
      %3415 = vmatpush1.bf16.msra.mxu0 0
      %3416 = vmatprep.subr.bf16.mxu0 0
      %3417 = vmatpush1.bf16.msra.mxu0 0
      %3418 = vmatprep.subr.bf16.mxu0 0
      %3419 = vmatpush1.bf16.msra.mxu0 0
      %3420 = vmatprep.subr.bf16.mxu0 0
      %3421 = vmatpush1.bf16.msra.mxu0 0
      %3422 = vmatprep.subr.bf16.mxu0 0
      %3423 = vmatpush1.bf16.msra.mxu0 0
      %3424 = vmatprep.subr.bf16.mxu0 0
      %3425 = vmatpush1.bf16.msra.mxu0 0
      %3426 = vmatprep.subr.bf16.mxu0 0
      %3427 = vmatpush1.bf16.msra.mxu0 0
      %3428 = vmatprep.subr.bf16.mxu0 0
      %3429 = vmatpush1.bf16.msra.mxu0 0
      %3430 = vmatprep.subr.bf16.mxu0 0
      %3431 = vmatpush1.bf16.msra.mxu0 0
      %3432 = vmatprep.subr.bf16.mxu0 0
      %3433 = vmatpush1.bf16.msra.mxu0 0
      %3434 = vmatprep.subr.bf16.mxu0 0
      %3435 = vmatpush1.bf16.msra.mxu0 0
      %3436 = vmatprep.subr.bf16.mxu0 0
      %3437 = vmatpush1.bf16.msra.mxu0 0
      %3438 = vmatprep.subr.bf16.mxu0 0
      %3439 = vmatpush1.bf16.msra.mxu0 0
      %3440 = vmatprep.subr.bf16.mxu0 0
      %3441 = vmatpush1.bf16.msra.mxu0 0
      %3442 = vmatprep.subr.bf16.mxu0 0
      %3443 = vmatpush1.bf16.msra.mxu0 0
      %3444 = vmatprep.mubr.bf16.mxu0 0
      %3445 = vmatmul.mubr.bf16.gmra.mrb[0].mxu0 %v3407
      %v3446 = vpop.f32.mrb[0].mxu0
      %v3447 = vadd.f32 0.0, %v3446
      %v3448 = vpop.f32.mrb[0].mxu0
      %v3449 = vpop.f32.mrb[0].mxu0
      %v3450 = vpop.f32.mrb[0].mxu0
      %3451 = vdwg.mxu0
      %v3453 = vsel %vm503, %v2943, 0
      %v3456 = vsel %vm1331, %v3387, 0
      %3458 = vmatprep.subr.bf16.mxu0 0
      %3459 = vmatpush1.bf16.msra.mxu0 %v3456
      %3460 = vmatprep.subr.bf16.mxu0 0
      %3461 = vmatpush1.bf16.msra.mxu0 0
      %3462 = vmatprep.subr.bf16.mxu0 0
      %3463 = vmatpush1.bf16.msra.mxu0 0
      %3464 = vmatprep.subr.bf16.mxu0 0
      %3465 = vmatpush1.bf16.msra.mxu0 0
      %3466 = vmatprep.subr.bf16.mxu0 0
      %3467 = vmatpush1.bf16.msra.mxu0 0
      %3468 = vmatprep.subr.bf16.mxu0 0
      %3469 = vmatpush1.bf16.msra.mxu0 0
      %3470 = vmatprep.subr.bf16.mxu0 0
      %3471 = vmatpush1.bf16.msra.mxu0 0
      %3472 = vmatprep.subr.bf16.mxu0 0
      %3473 = vmatpush1.bf16.msra.mxu0 0
      %3474 = vmatprep.subr.bf16.mxu0 0
      %3475 = vmatpush1.bf16.msra.mxu0 0
      %3476 = vmatprep.subr.bf16.mxu0 0
      %3477 = vmatpush1.bf16.msra.mxu0 0
      %3478 = vmatprep.subr.bf16.mxu0 0
      %3479 = vmatpush1.bf16.msra.mxu0 0
      %3480 = vmatprep.subr.bf16.mxu0 0
      %3481 = vmatpush1.bf16.msra.mxu0 0
      %3482 = vmatprep.subr.bf16.mxu0 0
      %3483 = vmatpush1.bf16.msra.mxu0 0
      %3484 = vmatprep.subr.bf16.mxu0 0
      %3485 = vmatpush1.bf16.msra.mxu0 0
      %3486 = vmatprep.subr.bf16.mxu0 0
      %3487 = vmatpush1.bf16.msra.mxu0 0
      %3488 = vmatprep.subr.bf16.mxu0 0
      %3489 = vmatpush1.bf16.msra.mxu0 0
      %3490 = vmatprep.mubr.bf16.mxu0 0
      %3491 = vmatmul.mubr.bf16.gmra.mrb[0].mxu0 %v3453
      %v3492 = vpop.f32.mrb[0].mxu0
      %v3493 = vadd.f32 0.0, %v3492
      %v3494 = vpop.f32.mrb[0].mxu0
      %v3495 = vpop.f32.mrb[0].mxu0
      %v3496 = vpop.f32.mrb[0].mxu0
      %3497 = vdwg.mxu0
      %v3499 = vsel %vm503, %v2944, 0
      %v3502 = vsel %vm1331, %v3390, 0
      %3504 = vmatprep.subr.bf16.mxu0 0
      %3505 = vmatpush1.bf16.msra.mxu0 %v3502
      %3506 = vmatprep.subr.bf16.mxu0 0
      %3507 = vmatpush1.bf16.msra.mxu0 0
      %3508 = vmatprep.subr.bf16.mxu0 0
      %3509 = vmatpush1.bf16.msra.mxu0 0
      %3510 = vmatprep.subr.bf16.mxu0 0
      %3511 = vmatpush1.bf16.msra.mxu0 0
      %3512 = vmatprep.subr.bf16.mxu0 0
      %3513 = vmatpush1.bf16.msra.mxu0 0
      %3514 = vmatprep.subr.bf16.mxu0 0
      %3515 = vmatpush1.bf16.msra.mxu0 0
      %3516 = vmatprep.subr.bf16.mxu0 0
      %3517 = vmatpush1.bf16.msra.mxu0 0
      %3518 = vmatprep.subr.bf16.mxu0 0
      %3519 = vmatpush1.bf16.msra.mxu0 0
      %3520 = vmatprep.subr.bf16.mxu0 0
      %3521 = vmatpush1.bf16.msra.mxu0 0
      %3522 = vmatprep.subr.bf16.mxu0 0
      %3523 = vmatpush1.bf16.msra.mxu0 0
      %3524 = vmatprep.subr.bf16.mxu0 0
      %3525 = vmatpush1.bf16.msra.mxu0 0
      %3526 = vmatprep.subr.bf16.mxu0 0
      %3527 = vmatpush1.bf16.msra.mxu0 0
      %3528 = vmatprep.subr.bf16.mxu0 0
      %3529 = vmatpush1.bf16.msra.mxu0 0
      %3530 = vmatprep.subr.bf16.mxu0 0
      %3531 = vmatpush1.bf16.msra.mxu0 0
      %3532 = vmatprep.subr.bf16.mxu0 0
      %3533 = vmatpush1.bf16.msra.mxu0 0
      %3534 = vmatprep.subr.bf16.mxu0 0
      %3535 = vmatpush1.bf16.msra.mxu0 0
      %3536 = vmatprep.mubr.bf16.mxu0 0
      %3537 = vmatmul.mubr.bf16.gmra.mrb[0].mxu0 %v3499
      %v3538 = vpop.f32.mrb[0].mxu0
      %v3539 = vadd.f32 0.0, %v3538
      %v3540 = vpop.f32.mrb[0].mxu0
      %v3541 = vpop.f32.mrb[0].mxu0
      %v3542 = vpop.f32.mrb[0].mxu0
      %3543 = vdwg.mxu0
      %v3545 = vsel %vm503, %v2945, 0
      %v3548 = vsel %vm1331, %v3393, 0
      %3550 = vmatprep.subr.bf16.mxu0 0
      %3551 = vmatpush1.bf16.msra.mxu0 %v3548
      %3552 = vmatprep.subr.bf16.mxu0 0
      %3553 = vmatpush1.bf16.msra.mxu0 0
      %3554 = vmatprep.subr.bf16.mxu0 0
      %3555 = vmatpush1.bf16.msra.mxu0 0
      %3556 = vmatprep.subr.bf16.mxu0 0
      %3557 = vmatpush1.bf16.msra.mxu0 0
      %3558 = vmatprep.subr.bf16.mxu0 0
      %3559 = vmatpush1.bf16.msra.mxu0 0
      %3560 = vmatprep.subr.bf16.mxu0 0
      %3561 = vmatpush1.bf16.msra.mxu0 0
      %3562 = vmatprep.subr.bf16.mxu0 0
      %3563 = vmatpush1.bf16.msra.mxu0 0
      %3564 = vmatprep.subr.bf16.mxu0 0
      %3565 = vmatpush1.bf16.msra.mxu0 0
      %3566 = vmatprep.subr.bf16.mxu0 0
      %3567 = vmatpush1.bf16.msra.mxu0 0
      %3568 = vmatprep.subr.bf16.mxu0 0
      %3569 = vmatpush1.bf16.msra.mxu0 0
      %3570 = vmatprep.subr.bf16.mxu0 0
      %3571 = vmatpush1.bf16.msra.mxu0 0
      %3572 = vmatprep.subr.bf16.mxu0 0
      %3573 = vmatpush1.bf16.msra.mxu0 0
      %3574 = vmatprep.subr.bf16.mxu0 0
      %3575 = vmatpush1.bf16.msra.mxu0 0
      %3576 = vmatprep.subr.bf16.mxu0 0
      %3577 = vmatpush1.bf16.msra.mxu0 0
      %3578 = vmatprep.subr.bf16.mxu0 0
      %3579 = vmatpush1.bf16.msra.mxu0 0
      %3580 = vmatprep.subr.bf16.mxu0 0
      %3581 = vmatpush1.bf16.msra.mxu0 0
      %3582 = vmatprep.mubr.bf16.mxu0 0
      %3583 = vmatmul.mubr.bf16.gmra.mrb[0].mxu0 %v3545
      %v3584 = vpop.f32.mrb[0].mxu0
      %v3585 = vadd.f32 0.0, %v3584
      %v3586 = vpop.f32.mrb[0].mxu0
      %v3587 = vpop.f32.mrb[0].mxu0
      %v3588 = vpop.f32.mrb[0].mxu0
      %3589 = vdwg.mxu0
      %v3591 = vsel %vm503, %v2946, 0
      %v3594 = vsel %vm1331, %v3396, 0
      %3596 = vmatprep.subr.bf16.mxu0 0
      %3597 = vmatpush1.bf16.msra.mxu0 %v3594
      %3598 = vmatprep.subr.bf16.mxu0 0
      %3599 = vmatpush1.bf16.msra.mxu0 0
      %3600 = vmatprep.subr.bf16.mxu0 0
      %3601 = vmatpush1.bf16.msra.mxu0 0
      %3602 = vmatprep.subr.bf16.mxu0 0
      %3603 = vmatpush1.bf16.msra.mxu0 0
      %3604 = vmatprep.subr.bf16.mxu0 0
      %3605 = vmatpush1.bf16.msra.mxu0 0
      %3606 = vmatprep.subr.bf16.mxu0 0
      %3607 = vmatpush1.bf16.msra.mxu0 0
      %3608 = vmatprep.subr.bf16.mxu0 0
      %3609 = vmatpush1.bf16.msra.mxu0 0
      %3610 = vmatprep.subr.bf16.mxu0 0
      %3611 = vmatpush1.bf16.msra.mxu0 0
      %3612 = vmatprep.subr.bf16.mxu0 0
      %3613 = vmatpush1.bf16.msra.mxu0 0
      %3614 = vmatprep.subr.bf16.mxu0 0
      %3615 = vmatpush1.bf16.msra.mxu0 0
      %3616 = vmatprep.subr.bf16.mxu0 0
      %3617 = vmatpush1.bf16.msra.mxu0 0
      %3618 = vmatprep.subr.bf16.mxu0 0
      %3619 = vmatpush1.bf16.msra.mxu0 0
      %3620 = vmatprep.subr.bf16.mxu0 0
      %3621 = vmatpush1.bf16.msra.mxu0 0
      %3622 = vmatprep.subr.bf16.mxu0 0
      %3623 = vmatpush1.bf16.msra.mxu0 0
      %3624 = vmatprep.subr.bf16.mxu0 0
      %3625 = vmatpush1.bf16.msra.mxu0 0
      %3626 = vmatprep.subr.bf16.mxu0 0
      %3627 = vmatpush1.bf16.msra.mxu0 0
      %3628 = vmatprep.mubr.bf16.mxu0 0
      %3629 = vmatmul.mubr.bf16.gmra.mrb[0].mxu0 %v3591
      %v3630 = vpop.f32.mrb[0].mxu0
      %v3631 = vadd.f32 0.0, %v3630
      %v3632 = vpop.f32.mrb[0].mxu0
      %v3633 = vpop.f32.mrb[0].mxu0
      %v3634 = vpop.f32.mrb[0].mxu0
      %3635 = vdwg.mxu0
      %v3637 = vsel %vm503, %v2947, 0
      %v3640 = vsel %vm1331, %v3399, 0
      %3642 = vmatprep.subr.bf16.mxu0 0
      %3643 = vmatpush1.bf16.msra.mxu0 %v3640
      %3644 = vmatprep.subr.bf16.mxu0 0
      %3645 = vmatpush1.bf16.msra.mxu0 0
      %3646 = vmatprep.subr.bf16.mxu0 0
      %3647 = vmatpush1.bf16.msra.mxu0 0
      %3648 = vmatprep.subr.bf16.mxu0 0
      %3649 = vmatpush1.bf16.msra.mxu0 0
      %3650 = vmatprep.subr.bf16.mxu0 0
      %3651 = vmatpush1.bf16.msra.mxu0 0
      %3652 = vmatprep.subr.bf16.mxu0 0
      %3653 = vmatpush1.bf16.msra.mxu0 0
      %3654 = vmatprep.subr.bf16.mxu0 0
      %3655 = vmatpush1.bf16.msra.mxu0 0
      %3656 = vmatprep.subr.bf16.mxu0 0
      %3657 = vmatpush1.bf16.msra.mxu0 0
      %3658 = vmatprep.subr.bf16.mxu0 0
      %3659 = vmatpush1.bf16.msra.mxu0 0
      %3660 = vmatprep.subr.bf16.mxu0 0
      %3661 = vmatpush1.bf16.msra.mxu0 0
      %3662 = vmatprep.subr.bf16.mxu0 0
      %3663 = vmatpush1.bf16.msra.mxu0 0
      %3664 = vmatprep.subr.bf16.mxu0 0
      %3665 = vmatpush1.bf16.msra.mxu0 0
      %3666 = vmatprep.subr.bf16.mxu0 0
      %3667 = vmatpush1.bf16.msra.mxu0 0
      %3668 = vmatprep.subr.bf16.mxu0 0
      %3669 = vmatpush1.bf16.msra.mxu0 0
      %3670 = vmatprep.subr.bf16.mxu0 0
      %3671 = vmatpush1.bf16.msra.mxu0 0
      %3672 = vmatprep.subr.bf16.mxu0 0
      %3673 = vmatpush1.bf16.msra.mxu0 0
      %3674 = vmatprep.mubr.bf16.mxu0 0
      %3675 = vmatmul.mubr.bf16.gmra.mrb[0].mxu0 %v3637
      %v3676 = vpop.f32.mrb[0].mxu0
      %v3677 = vadd.f32 0.0, %v3676
      %v3678 = vpop.f32.mrb[0].mxu0
      %v3679 = vpop.f32.mrb[0].mxu0
      %v3680 = vpop.f32.mrb[0].mxu0
      %3681 = vdwg.mxu0
      %v3683 = vsel %vm503, %v2948, 0
      %v3686 = vsel %vm1331, %v3402, 0
      %3688 = vmatprep.subr.bf16.mxu0 0
      %3689 = vmatpush1.bf16.msra.mxu0 %v3686
      %3690 = vmatprep.subr.bf16.mxu0 0
      %3691 = vmatpush1.bf16.msra.mxu0 0
      %3692 = vmatprep.subr.bf16.mxu0 0
      %3693 = vmatpush1.bf16.msra.mxu0 0
      %3694 = vmatprep.subr.bf16.mxu0 0
      %3695 = vmatpush1.bf16.msra.mxu0 0
      %3696 = vmatprep.subr.bf16.mxu0 0
      %3697 = vmatpush1.bf16.msra.mxu0 0
      %3698 = vmatprep.subr.bf16.mxu0 0
      %3699 = vmatpush1.bf16.msra.mxu0 0
      %3700 = vmatprep.subr.bf16.mxu0 0
      %3701 = vmatpush1.bf16.msra.mxu0 0
      %3702 = vmatprep.subr.bf16.mxu0 0
      %3703 = vmatpush1.bf16.msra.mxu0 0
      %3704 = vmatprep.subr.bf16.mxu0 0
      %3705 = vmatpush1.bf16.msra.mxu0 0
      %3706 = vmatprep.subr.bf16.mxu0 0
      %3707 = vmatpush1.bf16.msra.mxu0 0
      %3708 = vmatprep.subr.bf16.mxu0 0
      %3709 = vmatpush1.bf16.msra.mxu0 0
      %3710 = vmatprep.subr.bf16.mxu0 0
      %3711 = vmatpush1.bf16.msra.mxu0 0
      %3712 = vmatprep.subr.bf16.mxu0 0
      %3713 = vmatpush1.bf16.msra.mxu0 0
      %3714 = vmatprep.subr.bf16.mxu0 0
      %3715 = vmatpush1.bf16.msra.mxu0 0
      %3716 = vmatprep.subr.bf16.mxu0 0
      %3717 = vmatpush1.bf16.msra.mxu0 0
      %3718 = vmatprep.subr.bf16.mxu0 0
      %3719 = vmatpush1.bf16.msra.mxu0 0
      %3720 = vmatprep.mubr.bf16.mxu0 0
      %3721 = vmatmul.mubr.bf16.gmra.mrb[0].mxu0 %v3683
      %v3722 = vpop.f32.mrb[0].mxu0
      %v3723 = vadd.f32 0.0, %v3722
      %v3724 = vpop.f32.mrb[0].mxu0
      %v3725 = vpop.f32.mrb[0].mxu0
      %v3726 = vpop.f32.mrb[0].mxu0
      %3727 = vdwg.mxu0
      %v3729 = vsel %vm503, %v2949, 0
      %v3732 = vsel %vm1331, %v3405, 0
      %3734 = vmatprep.subr.bf16.mxu0 0
      %3735 = vmatpush1.bf16.msra.mxu0 %v3732
      %3736 = vmatprep.subr.bf16.mxu0 0
      %3737 = vmatpush1.bf16.msra.mxu0 0
      %3738 = vmatprep.subr.bf16.mxu0 0
      %3739 = vmatpush1.bf16.msra.mxu0 0
      %3740 = vmatprep.subr.bf16.mxu0 0
      %3741 = vmatpush1.bf16.msra.mxu0 0
      %3742 = vmatprep.subr.bf16.mxu0 0
      %3743 = vmatpush1.bf16.msra.mxu0 0
      %3744 = vmatprep.subr.bf16.mxu0 0
      %3745 = vmatpush1.bf16.msra.mxu0 0
      %3746 = vmatprep.subr.bf16.mxu0 0
      %3747 = vmatpush1.bf16.msra.mxu0 0
      %3748 = vmatprep.subr.bf16.mxu0 0
      %3749 = vmatpush1.bf16.msra.mxu0 0
      %3750 = vmatprep.subr.bf16.mxu0 0
      %3751 = vmatpush1.bf16.msra.mxu0 0
      %3752 = vmatprep.subr.bf16.mxu0 0
      %3753 = vmatpush1.bf16.msra.mxu0 0
      %3754 = vmatprep.subr.bf16.mxu0 0
      %3755 = vmatpush1.bf16.msra.mxu0 0
      %3756 = vmatprep.subr.bf16.mxu0 0
      %3757 = vmatpush1.bf16.msra.mxu0 0
      %3758 = vmatprep.subr.bf16.mxu0 0
      %3759 = vmatpush1.bf16.msra.mxu0 0
      %3760 = vmatprep.subr.bf16.mxu0 0
      %3761 = vmatpush1.bf16.msra.mxu0 0
      %3762 = vmatprep.subr.bf16.mxu0 0
      %3763 = vmatpush1.bf16.msra.mxu0 0
      %3764 = vmatprep.subr.bf16.mxu0 0
      %3765 = vmatpush1.bf16.msra.mxu0 0
      %3766 = vmatprep.mubr.bf16.mxu0 0
      %3767 = vmatmul.mubr.bf16.gmra.mrb[0].mxu0 %v3729
      %v3768 = vpop.f32.mrb[0].mxu0
      %v3769 = vadd.f32 0.0, %v3768
      %v3770 = vpop.f32.mrb[0].mxu0
      %v3771 = vpop.f32.mrb[0].mxu0
      %v3772 = vpop.f32.mrb[0].mxu0
      %3773 = vdwg.mxu0
      %3774 = vxpose.xlu0.b32.start [1/16] %v3447, 128
      %3775 = vxpose.xlu0.b32.cont [2/16] 0.0, 128
      %3776 = vxpose.xlu0.b32.cont [3/16] 0.0, 128
      %3777 = vxpose.xlu0.b32.cont [4/16] 0.0, 128
      %3778 = vxpose.xlu0.b32.cont [5/16] 0.0, 128
      %3779 = vxpose.xlu0.b32.cont [6/16] 0.0, 128
      %3780 = vxpose.xlu0.b32.cont [7/16] 0.0, 128
      %3781 = vxpose.xlu0.b32.cont [8/16] 0.0, 128
      %3782 = vxpose.xlu0.b32.cont [9/16] 0.0, 128
      %3783 = vxpose.xlu0.b32.cont [10/16] 0.0, 128
      %3784 = vxpose.xlu0.b32.cont [11/16] 0.0, 128
      %3785 = vxpose.xlu0.b32.cont [12/16] 0.0, 128
      %3786 = vxpose.xlu0.b32.cont [13/16] 0.0, 128
      %3787 = vxpose.xlu0.b32.cont [14/16] 0.0, 128
      %3788 = vxpose.xlu0.b32.cont [15/16] 0.0, 128
      %3789 = vxpose.xlu0.b32.end [16/16] 0.0, 128
      %v3790 = vpop.trf.xlu0
      %v3791 = vpop.trf.xlu0
      %v3792 = vpop.trf.xlu0
      %v3793 = vpop.trf.xlu0
      %v3794 = vpop.trf.xlu0
      %v3795 = vpop.trf.xlu0
      %v3796 = vpop.trf.xlu0
      %v3797 = vpop.trf.xlu0
      %v3798 = vpop.trf.xlu0
      %v3799 = vpop.trf.xlu0
      %v3800 = vpop.trf.xlu0
      %v3801 = vpop.trf.xlu0
      %v3802 = vpop.trf.xlu0
      %v3803 = vpop.trf.xlu0
      %v3804 = vpop.trf.xlu0
      %v3805 = vpop.trf.xlu0
      %3806 = vxpose.xlu0.b32.start [1/16] %v3493, 128
      %3807 = vxpose.xlu0.b32.cont [2/16] 0.0, 128
      %3808 = vxpose.xlu0.b32.cont [3/16] 0.0, 128
      %3809 = vxpose.xlu0.b32.cont [4/16] 0.0, 128
      %3810 = vxpose.xlu0.b32.cont [5/16] 0.0, 128
      %3811 = vxpose.xlu0.b32.cont [6/16] 0.0, 128
      %3812 = vxpose.xlu0.b32.cont [7/16] 0.0, 128
      %3813 = vxpose.xlu0.b32.cont [8/16] 0.0, 128
      %3814 = vxpose.xlu0.b32.cont [9/16] 0.0, 128
      %3815 = vxpose.xlu0.b32.cont [10/16] 0.0, 128
      %3816 = vxpose.xlu0.b32.cont [11/16] 0.0, 128
      %3817 = vxpose.xlu0.b32.cont [12/16] 0.0, 128
      %3818 = vxpose.xlu0.b32.cont [13/16] 0.0, 128
      %3819 = vxpose.xlu0.b32.cont [14/16] 0.0, 128
      %3820 = vxpose.xlu0.b32.cont [15/16] 0.0, 128
      %3821 = vxpose.xlu0.b32.end [16/16] 0.0, 128
      %v3822 = vpop.trf.xlu0
      %v3823 = vpop.trf.xlu0
      %v3824 = vpop.trf.xlu0
      %v3825 = vpop.trf.xlu0
      %v3826 = vpop.trf.xlu0
      %v3827 = vpop.trf.xlu0
      %v3828 = vpop.trf.xlu0
      %v3829 = vpop.trf.xlu0
      %v3830 = vpop.trf.xlu0
      %v3831 = vpop.trf.xlu0
      %v3832 = vpop.trf.xlu0
      %v3833 = vpop.trf.xlu0
      %v3834 = vpop.trf.xlu0
      %v3835 = vpop.trf.xlu0
      %v3836 = vpop.trf.xlu0
      %v3837 = vpop.trf.xlu0
      %3838 = vxpose.xlu0.b32.start [1/16] %v3539, 128
      %3839 = vxpose.xlu0.b32.cont [2/16] 0.0, 128
      %3840 = vxpose.xlu0.b32.cont [3/16] 0.0, 128
      %3841 = vxpose.xlu0.b32.cont [4/16] 0.0, 128
      %3842 = vxpose.xlu0.b32.cont [5/16] 0.0, 128
      %3843 = vxpose.xlu0.b32.cont [6/16] 0.0, 128
      %3844 = vxpose.xlu0.b32.cont [7/16] 0.0, 128
      %3845 = vxpose.xlu0.b32.cont [8/16] 0.0, 128
      %3846 = vxpose.xlu0.b32.cont [9/16] 0.0, 128
      %3847 = vxpose.xlu0.b32.cont [10/16] 0.0, 128
      %3848 = vxpose.xlu0.b32.cont [11/16] 0.0, 128
      %3849 = vxpose.xlu0.b32.cont [12/16] 0.0, 128
      %3850 = vxpose.xlu0.b32.cont [13/16] 0.0, 128
      %3851 = vxpose.xlu0.b32.cont [14/16] 0.0, 128
      %3852 = vxpose.xlu0.b32.cont [15/16] 0.0, 128
      %3853 = vxpose.xlu0.b32.end [16/16] 0.0, 128
      %v3854 = vpop.trf.xlu0
      %v3855 = vpop.trf.xlu0
      %v3856 = vpop.trf.xlu0
      %v3857 = vpop.trf.xlu0
      %v3858 = vpop.trf.xlu0
      %v3859 = vpop.trf.xlu0
      %v3860 = vpop.trf.xlu0
      %v3861 = vpop.trf.xlu0
      %v3862 = vpop.trf.xlu0
      %v3863 = vpop.trf.xlu0
      %v3864 = vpop.trf.xlu0
      %v3865 = vpop.trf.xlu0
      %v3866 = vpop.trf.xlu0
      %v3867 = vpop.trf.xlu0
      %v3868 = vpop.trf.xlu0
      %v3869 = vpop.trf.xlu0
      %3870 = vxpose.xlu0.b32.start [1/16] %v3585, 128
      %3871 = vxpose.xlu0.b32.cont [2/16] 0.0, 128
      %3872 = vxpose.xlu0.b32.cont [3/16] 0.0, 128
      %3873 = vxpose.xlu0.b32.cont [4/16] 0.0, 128
      %3874 = vxpose.xlu0.b32.cont [5/16] 0.0, 128
      %3875 = vxpose.xlu0.b32.cont [6/16] 0.0, 128
      %3876 = vxpose.xlu0.b32.cont [7/16] 0.0, 128
      %3877 = vxpose.xlu0.b32.cont [8/16] 0.0, 128
      %3878 = vxpose.xlu0.b32.cont [9/16] 0.0, 128
      %3879 = vxpose.xlu0.b32.cont [10/16] 0.0, 128
      %3880 = vxpose.xlu0.b32.cont [11/16] 0.0, 128
      %3881 = vxpose.xlu0.b32.cont [12/16] 0.0, 128
      %3882 = vxpose.xlu0.b32.cont [13/16] 0.0, 128
      %3883 = vxpose.xlu0.b32.cont [14/16] 0.0, 128
      %3884 = vxpose.xlu0.b32.cont [15/16] 0.0, 128
      %3885 = vxpose.xlu0.b32.end [16/16] 0.0, 128
      %v3886 = vpop.trf.xlu0
      %v3887 = vpop.trf.xlu0
      %v3888 = vpop.trf.xlu0
      %v3889 = vpop.trf.xlu0
      %v3890 = vpop.trf.xlu0
      %v3891 = vpop.trf.xlu0
      %v3892 = vpop.trf.xlu0
      %v3893 = vpop.trf.xlu0
      %v3894 = vpop.trf.xlu0
      %v3895 = vpop.trf.xlu0
      %v3896 = vpop.trf.xlu0
      %v3897 = vpop.trf.xlu0
      %v3898 = vpop.trf.xlu0
      %v3899 = vpop.trf.xlu0
      %v3900 = vpop.trf.xlu0
      %v3901 = vpop.trf.xlu0
      %3902 = vxpose.xlu0.b32.start [1/16] %v3631, 128
      %3903 = vxpose.xlu0.b32.cont [2/16] 0.0, 128
      %3904 = vxpose.xlu0.b32.cont [3/16] 0.0, 128
      %3905 = vxpose.xlu0.b32.cont [4/16] 0.0, 128
      %3906 = vxpose.xlu0.b32.cont [5/16] 0.0, 128
      %3907 = vxpose.xlu0.b32.cont [6/16] 0.0, 128
      %3908 = vxpose.xlu0.b32.cont [7/16] 0.0, 128
      %3909 = vxpose.xlu0.b32.cont [8/16] 0.0, 128
      %3910 = vxpose.xlu0.b32.cont [9/16] 0.0, 128
      %3911 = vxpose.xlu0.b32.cont [10/16] 0.0, 128
      %3912 = vxpose.xlu0.b32.cont [11/16] 0.0, 128
      %3913 = vxpose.xlu0.b32.cont [12/16] 0.0, 128
      %3914 = vxpose.xlu0.b32.cont [13/16] 0.0, 128
      %3915 = vxpose.xlu0.b32.cont [14/16] 0.0, 128
      %3916 = vxpose.xlu0.b32.cont [15/16] 0.0, 128
      %3917 = vxpose.xlu0.b32.end [16/16] 0.0, 128
      %v3918 = vpop.trf.xlu0
      %v3919 = vpop.trf.xlu0
      %v3920 = vpop.trf.xlu0
      %v3921 = vpop.trf.xlu0
      %v3922 = vpop.trf.xlu0
      %v3923 = vpop.trf.xlu0
      %v3924 = vpop.trf.xlu0
      %v3925 = vpop.trf.xlu0
      %v3926 = vpop.trf.xlu0
      %v3927 = vpop.trf.xlu0
      %v3928 = vpop.trf.xlu0
      %v3929 = vpop.trf.xlu0
      %v3930 = vpop.trf.xlu0
      %v3931 = vpop.trf.xlu0
      %v3932 = vpop.trf.xlu0
      %v3933 = vpop.trf.xlu0
      %3934 = vxpose.xlu0.b32.start [1/16] %v3677, 128
      %3935 = vxpose.xlu0.b32.cont [2/16] 0.0, 128
      %3936 = vxpose.xlu0.b32.cont [3/16] 0.0, 128
      %3937 = vxpose.xlu0.b32.cont [4/16] 0.0, 128
      %3938 = vxpose.xlu0.b32.cont [5/16] 0.0, 128
      %3939 = vxpose.xlu0.b32.cont [6/16] 0.0, 128
      %3940 = vxpose.xlu0.b32.cont [7/16] 0.0, 128
      %3941 = vxpose.xlu0.b32.cont [8/16] 0.0, 128
      %3942 = vxpose.xlu0.b32.cont [9/16] 0.0, 128
      %3943 = vxpose.xlu0.b32.cont [10/16] 0.0, 128
      %3944 = vxpose.xlu0.b32.cont [11/16] 0.0, 128
      %3945 = vxpose.xlu0.b32.cont [12/16] 0.0, 128
      %3946 = vxpose.xlu0.b32.cont [13/16] 0.0, 128
      %3947 = vxpose.xlu0.b32.cont [14/16] 0.0, 128
      %3948 = vxpose.xlu0.b32.cont [15/16] 0.0, 128
      %3949 = vxpose.xlu0.b32.end [16/16] 0.0, 128
      %v3950 = vpop.trf.xlu0
      %v3951 = vpop.trf.xlu0
      %v3952 = vpop.trf.xlu0
      %v3953 = vpop.trf.xlu0
      %v3954 = vpop.trf.xlu0
      %v3955 = vpop.trf.xlu0
      %v3956 = vpop.trf.xlu0
      %v3957 = vpop.trf.xlu0
      %v3958 = vpop.trf.xlu0
      %v3959 = vpop.trf.xlu0
      %v3960 = vpop.trf.xlu0
      %v3961 = vpop.trf.xlu0
      %v3962 = vpop.trf.xlu0
      %v3963 = vpop.trf.xlu0
      %v3964 = vpop.trf.xlu0
      %v3965 = vpop.trf.xlu0
      %3966 = vxpose.xlu0.b32.start [1/16] %v3723, 128
      %3967 = vxpose.xlu0.b32.cont [2/16] 0.0, 128
      %3968 = vxpose.xlu0.b32.cont [3/16] 0.0, 128
      %3969 = vxpose.xlu0.b32.cont [4/16] 0.0, 128
      %3970 = vxpose.xlu0.b32.cont [5/16] 0.0, 128
      %3971 = vxpose.xlu0.b32.cont [6/16] 0.0, 128
      %3972 = vxpose.xlu0.b32.cont [7/16] 0.0, 128
      %3973 = vxpose.xlu0.b32.cont [8/16] 0.0, 128
      %3974 = vxpose.xlu0.b32.cont [9/16] 0.0, 128
      %3975 = vxpose.xlu0.b32.cont [10/16] 0.0, 128
      %3976 = vxpose.xlu0.b32.cont [11/16] 0.0, 128
      %3977 = vxpose.xlu0.b32.cont [12/16] 0.0, 128
      %3978 = vxpose.xlu0.b32.cont [13/16] 0.0, 128
      %3979 = vxpose.xlu0.b32.cont [14/16] 0.0, 128
      %3980 = vxpose.xlu0.b32.cont [15/16] 0.0, 128
      %3981 = vxpose.xlu0.b32.end [16/16] 0.0, 128
      %v3982 = vpop.trf.xlu0
      %v3983 = vpop.trf.xlu0
      %v3984 = vpop.trf.xlu0
      %v3985 = vpop.trf.xlu0
      %v3986 = vpop.trf.xlu0
      %v3987 = vpop.trf.xlu0
      %v3988 = vpop.trf.xlu0
      %v3989 = vpop.trf.xlu0
      %v3990 = vpop.trf.xlu0
      %v3991 = vpop.trf.xlu0
      %v3992 = vpop.trf.xlu0
      %v3993 = vpop.trf.xlu0
      %v3994 = vpop.trf.xlu0
      %v3995 = vpop.trf.xlu0
      %v3996 = vpop.trf.xlu0
      %v3997 = vpop.trf.xlu0
      %3998 = vxpose.xlu0.b32.start [1/16] %v3769, 128
      %3999 = vxpose.xlu0.b32.cont [2/16] 0.0, 128
      %4000 = vxpose.xlu0.b32.cont [3/16] 0.0, 128
      %4001 = vxpose.xlu0.b32.cont [4/16] 0.0, 128
      %4002 = vxpose.xlu0.b32.cont [5/16] 0.0, 128
      %4003 = vxpose.xlu0.b32.cont [6/16] 0.0, 128
      %4004 = vxpose.xlu0.b32.cont [7/16] 0.0, 128
      %4005 = vxpose.xlu0.b32.cont [8/16] 0.0, 128
      %4006 = vxpose.xlu0.b32.cont [9/16] 0.0, 128
      %4007 = vxpose.xlu0.b32.cont [10/16] 0.0, 128
      %4008 = vxpose.xlu0.b32.cont [11/16] 0.0, 128
      %4009 = vxpose.xlu0.b32.cont [12/16] 0.0, 128
      %4010 = vxpose.xlu0.b32.cont [13/16] 0.0, 128
      %4011 = vxpose.xlu0.b32.cont [14/16] 0.0, 128
      %4012 = vxpose.xlu0.b32.cont [15/16] 0.0, 128
      %4013 = vxpose.xlu0.b32.end [16/16] 0.0, 128
      %v4014 = vpop.trf.xlu0
      %v4015 = vpop.trf.xlu0
      %v4016 = vpop.trf.xlu0
      %v4017 = vpop.trf.xlu0
      %v4018 = vpop.trf.xlu0
      %v4019 = vpop.trf.xlu0
      %v4020 = vpop.trf.xlu0
      %v4021 = vpop.trf.xlu0
      %v4022 = vpop.trf.xlu0
      %v4023 = vpop.trf.xlu0
      %v4024 = vpop.trf.xlu0
      %v4025 = vpop.trf.xlu0
      %v4026 = vpop.trf.xlu0
      %v4027 = vpop.trf.xlu0
      %v4028 = vpop.trf.xlu0
      %v4029 = vpop.trf.xlu0
      %v4030 = vcombine.low %v3790, %v3854
      %v4031 = vcombine.high %v3790, %v3854
      %v4033 = vunpack.c.l.s4 1983009808
      %v4034 = vunpack.c.0.s8 %v4033
      %v4035 = vlaneseq
      %v4036 = vshrl.u32 %v4035, 7
      %v4037 = vsub.s32 %v4034, %v4036
      %v4038 = vrot.slane %v4030, %v4037
      %v4040 = vunpack.c.l.s4 1983009808
      %v4041 = vunpack.c.0.s8 %v4040
      %v4042 = vlaneseq
      %v4043 = vshrl.u32 %v4042, 7
      %v4044 = vsub.s32 %v4041, %v4043
      %v4045 = vrot.slane %v4031, %v4044
      %v4046 = vcombine.low %v3822, %v3886
      %v4047 = vcombine.high %v3822, %v3886
      %v4049 = vunpack.c.l.s4 1983009808
      %v4050 = vunpack.c.0.s8 %v4049
      %v4051 = vlaneseq
      %v4052 = vshrl.u32 %v4051, 7
      %v4053 = vsub.s32 %v4050, %v4052
      %v4054 = vrot.slane %v4046, %v4053
      %v4056 = vunpack.c.l.s4 1983009808
      %v4057 = vunpack.c.0.s8 %v4056
      %v4058 = vlaneseq
      %v4059 = vshrl.u32 %v4058, 7
      %v4060 = vsub.s32 %v4057, %v4059
      %v4061 = vrot.slane %v4047, %v4060
      %v4062 = vcombine.low %v3918, %v3982
      %v4063 = vcombine.high %v3918, %v3982
      %v4065 = vunpack.c.l.s4 1983009808
      %v4066 = vunpack.c.0.s8 %v4065
      %v4067 = vlaneseq
      %v4068 = vshrl.u32 %v4067, 7
      %v4069 = vsub.s32 %v4066, %v4068
      %v4070 = vrot.slane %v4062, %v4069
      %v4072 = vunpack.c.l.s4 1983009808
      %v4073 = vunpack.c.0.s8 %v4072
      %v4074 = vlaneseq
      %v4075 = vshrl.u32 %v4074, 7
      %v4076 = vsub.s32 %v4073, %v4075
      %v4077 = vrot.slane %v4063, %v4076
      %v4078 = vcombine.low %v3950, %v4014
      %v4079 = vcombine.high %v3950, %v4014
      %v4081 = vunpack.c.l.s4 1983009808
      %v4082 = vunpack.c.0.s8 %v4081
      %v4083 = vlaneseq
      %v4084 = vshrl.u32 %v4083, 7
      %v4085 = vsub.s32 %v4082, %v4084
      %v4086 = vrot.slane %v4078, %v4085
      %v4088 = vunpack.c.l.s4 1983009808
      %v4089 = vunpack.c.0.s8 %v4088
      %v4090 = vlaneseq
      %v4091 = vshrl.u32 %v4090, 7
      %v4092 = vsub.s32 %v4089, %v4091
      %v4093 = vrot.slane %v4079, %v4092
      %v4094 = vcombine.low %v4038, %v4054
      %v4095 = vcombine.high %v4038, %v4054
      %v4097 = vunpack.c.l.s4 1934713408
      %v4098 = vunpack.c.0.s8 %v4097
      %v4099 = vlaneseq
      %v4100 = vshrl.u32 %v4099, 7
      %v4101 = vsub.s32 %v4098, %v4100
      %v4102 = vrot.slane %v4094, %v4101
      %v4104 = vunpack.c.l.s4 1934713408
      %v4105 = vunpack.c.0.s8 %v4104
      %v4106 = vlaneseq
      %v4107 = vshrl.u32 %v4106, 7
      %v4108 = vsub.s32 %v4105, %v4107
      %v4109 = vrot.slane %v4095, %v4108
      %v4110 = vcombine.low %v4045, %v4061
      %v4111 = vcombine.high %v4045, %v4061
      %v4113 = vunpack.c.l.s4 1934713408
      %v4114 = vunpack.c.0.s8 %v4113
      %v4115 = vlaneseq
      %v4116 = vshrl.u32 %v4115, 7
      %v4117 = vsub.s32 %v4114, %v4116
      %v4118 = vrot.slane %v4110, %v4117
      %v4120 = vunpack.c.l.s4 1934713408
      %v4121 = vunpack.c.0.s8 %v4120
      %v4122 = vlaneseq
      %v4123 = vshrl.u32 %v4122, 7
      %v4124 = vsub.s32 %v4121, %v4123
      %v4125 = vrot.slane %v4111, %v4124
      %v4126 = vcombine.low %v4070, %v4086
      %v4127 = vcombine.high %v4070, %v4086
      %v4129 = vunpack.c.l.s4 1934713408
      %v4130 = vunpack.c.0.s8 %v4129
      %v4131 = vlaneseq
      %v4132 = vshrl.u32 %v4131, 7
      %v4133 = vsub.s32 %v4130, %v4132
      %v4134 = vrot.slane %v4126, %v4133
      %v4136 = vunpack.c.l.s4 1934713408
      %v4137 = vunpack.c.0.s8 %v4136
      %v4138 = vlaneseq
      %v4139 = vshrl.u32 %v4138, 7
      %v4140 = vsub.s32 %v4137, %v4139
      %v4141 = vrot.slane %v4127, %v4140
      %v4142 = vcombine.low %v4077, %v4093
      %v4143 = vcombine.high %v4077, %v4093
      %v4145 = vunpack.c.l.s4 1934713408
      %v4146 = vunpack.c.0.s8 %v4145
      %v4147 = vlaneseq
      %v4148 = vshrl.u32 %v4147, 7
      %v4149 = vsub.s32 %v4146, %v4148
      %v4150 = vrot.slane %v4142, %v4149
      %v4152 = vunpack.c.l.s4 1934713408
      %v4153 = vunpack.c.0.s8 %v4152
      %v4154 = vlaneseq
      %v4155 = vshrl.u32 %v4154, 7
      %v4156 = vsub.s32 %v4153, %v4155
      %v4157 = vrot.slane %v4143, %v4156
      %v4158 = vcombine.low %v4102, %v4134
      %v4159 = vcombine.high %v4102, %v4134
      %v4160 = vcombine.low %v4109, %v4141
      %v4161 = vcombine.high %v4109, %v4141
      %v4162 = vcombine.low %v4118, %v4150
      %v4163 = vcombine.high %v4118, %v4150
      %v4164 = vcombine.low %v4125, %v4157
      %v4165 = vcombine.high %v4125, %v4157
      %v4166 = vpack.c.bf16 %v2649, %v2601
      %v4167 = vpack.c.bf16 %v2745, %v2697
      %v4168 = vpack.c.bf16 %v2841, %v2793
      %v4169 = vpack.c.bf16 %v2937, %v2889
      %v4170 = vld [vmem:[%s7] sm:$0xf]
      %v4172 = vsel %vm503, %v4166, 0
      %v4175 = vsel %vm503, %v4167, 0
      %v4178 = vsel %vm503, %v4168, 0
      %v4181 = vsel %vm503, %v4169, 0
      %v4184 = vsel %vm1331, %v4170, 0
      %4186 = vmatprep.subr.bf16.mxu0 0
      %4187 = vmatpush1.bf16.msra.mxu0 %v4184
      %4188 = vmatprep.subr.bf16.mxu0 0
      %4189 = vmatpush1.bf16.msra.mxu0 0
      %4190 = vmatprep.subr.bf16.mxu0 0
      %4191 = vmatpush1.bf16.msra.mxu0 0
      %4192 = vmatprep.subr.bf16.mxu0 0
      %4193 = vmatpush1.bf16.msra.mxu0 0
      %4194 = vmatprep.subr.bf16.mxu0 0
      %4195 = vmatpush1.bf16.msra.mxu0 0
      %4196 = vmatprep.subr.bf16.mxu0 0
      %4197 = vmatpush1.bf16.msra.mxu0 0
      %4198 = vmatprep.subr.bf16.mxu0 0
      %4199 = vmatpush1.bf16.msra.mxu0 0
      %4200 = vmatprep.subr.bf16.mxu0 0
      %4201 = vmatpush1.bf16.msra.mxu0 0
      %4202 = vmatprep.subr.bf16.mxu0 0
      %4203 = vmatpush1.bf16.msra.mxu0 0
      %4204 = vmatprep.subr.bf16.mxu0 0
      %4205 = vmatpush1.bf16.msra.mxu0 0
      %4206 = vmatprep.subr.bf16.mxu0 0
      %4207 = vmatpush1.bf16.msra.mxu0 0
      %4208 = vmatprep.subr.bf16.mxu0 0
      %4209 = vmatpush1.bf16.msra.mxu0 0
      %4210 = vmatprep.subr.bf16.mxu0 0
      %4211 = vmatpush1.bf16.msra.mxu0 0
      %4212 = vmatprep.subr.bf16.mxu0 0
      %4213 = vmatpush1.bf16.msra.mxu0 0
      %4214 = vmatprep.subr.bf16.mxu0 0
      %4215 = vmatpush1.bf16.msra.mxu0 0
      %4216 = vmatprep.subr.bf16.mxu0 0
      %4217 = vmatpush1.bf16.msra.mxu0 0
      %4218 = vmatprep.mubr.bf16.mxu0 0
      %4219 = vmatmul.mubr.bf16.gmra.mrb[0].mxu0 %v4172
      %v4220 = vpop.f32.mrb[0].mxu0
      %v4221 = vadd.f32 0.0, %v4220
      %v4222 = vpop.f32.mrb[0].mxu0
      %v4223 = vpop.f32.mrb[0].mxu0
      %v4224 = vadd.f32 0.0, %v4223
      %v4225 = vpop.f32.mrb[0].mxu0
      %4226 = vmatprep.mubr.bf16.mxu0 0
      %4227 = vmatmul.mubr.bf16.gmra.mrb[0].mxu0 %v4175
      %v4228 = vpop.f32.mrb[0].mxu0
      %v4229 = vadd.f32 0.0, %v4228
      %v4230 = vpop.f32.mrb[0].mxu0
      %v4231 = vpop.f32.mrb[0].mxu0
      %v4232 = vadd.f32 0.0, %v4231
      %v4233 = vpop.f32.mrb[0].mxu0
      %4234 = vmatprep.mubr.bf16.mxu0 0
      %4235 = vmatmul.mubr.bf16.gmra.mrb[0].mxu0 %v4178
      %v4236 = vpop.f32.mrb[0].mxu0
      %v4237 = vadd.f32 0.0, %v4236
      %v4238 = vpop.f32.mrb[0].mxu0
      %v4239 = vpop.f32.mrb[0].mxu0
      %v4240 = vadd.f32 0.0, %v4239
      %v4241 = vpop.f32.mrb[0].mxu0
      %4242 = vmatprep.mubr.bf16.mxu0 0
      %4243 = vmatmul.mubr.bf16.gmra.mrb[0].mxu0 %v4181
      %v4244 = vpop.f32.mrb[0].mxu0
      %v4245 = vadd.f32 0.0, %v4244
      %v4246 = vpop.f32.mrb[0].mxu0
      %v4247 = vpop.f32.mrb[0].mxu0
      %v4248 = vadd.f32 0.0, %v4247
      %v4249 = vpop.f32.mrb[0].mxu0
      %4250 = vdwg.mxu0
      %4251 = vrot.lane.b32.xlu0 %v463, 120
      %v4252 = vpop.permute.xlu0 %4251
      %4253 = vrot.lane.b32.xlu0 %v464, 120
      %v4254 = vpop.permute.xlu0 %4253
      %4255 = vrot.lane.b32.xlu0 %v465, 120
      %v4256 = vpop.permute.xlu0 %4255
      %4257 = vrot.lane.b32.xlu0 %v466, 120
      %v4258 = vpop.permute.xlu0 %4257
      %4259 = vrot.lane.b32.xlu0 %v463, 88
      %v4260 = vpop.permute.xlu0 %4259
      %4261 = vrot.lane.b32.xlu0 %v464, 88
      %v4262 = vpop.permute.xlu0 %4261
      %4263 = vrot.lane.b32.xlu0 %v465, 88
      %v4264 = vpop.permute.xlu0 %4263
      %4265 = vrot.lane.b32.xlu0 %v466, 88
      %v4266 = vpop.permute.xlu0 %4265
      %v4268 = vsel %vm503, %v4252, 0
      %v4271 = vsel %vm503, %v4254, 0
      %v4274 = vsel %vm503, %v4256, 0
      %v4277 = vsel %vm503, %v4258, 0
      %v4280 = vsel %vm503, %v4260, 0
      %v4283 = vsel %vm503, %v4262, 0
      %v4286 = vsel %vm503, %v4264, 0
      %v4289 = vsel %vm503, %v4266, 0
      %4291 = vmatprep.subr.bf16.mxu0 0
      %4292 = vmatpush1.bf16.xpose.msra.mxu0 %v4280
      %4293 = vmatprep.subr.bf16.mxu0 0
      %4294 = vmatpush1.bf16.xpose.msra.mxu0 %v4283
      %4295 = vmatprep.subr.bf16.mxu0 0
      %4296 = vmatpush1.bf16.xpose.msra.mxu0 %v4286
      %4297 = vmatprep.subr.bf16.mxu0 0
      %4298 = vmatpush1.bf16.xpose.msra.mxu0 %v4289
      %4299 = vmatprep.subr.bf16.mxu0 0
      %4300 = vmatpush1.bf16.xpose.msra.mxu0 0
      %4301 = vmatprep.subr.bf16.mxu0 0
      %4302 = vmatpush1.bf16.xpose.msra.mxu0 0
      %4303 = vmatprep.subr.bf16.mxu0 0
      %4304 = vmatpush1.bf16.xpose.msra.mxu0 0
      %4305 = vmatprep.subr.bf16.mxu0 0
      %4306 = vmatpush1.bf16.xpose.msra.mxu0 0
      %4307 = vmatprep.subr.bf16.mxu0 0
      %4308 = vmatpush1.bf16.xpose.msra.mxu0 0
      %4309 = vmatprep.subr.bf16.mxu0 0
      %4310 = vmatpush1.bf16.xpose.msra.mxu0 0
      %4311 = vmatprep.subr.bf16.mxu0 0
      %4312 = vmatpush1.bf16.xpose.msra.mxu0 0
      %4313 = vmatprep.subr.bf16.mxu0 0
      %4314 = vmatpush1.bf16.xpose.msra.mxu0 0
      %4315 = vmatprep.subr.bf16.mxu0 0
      %4316 = vmatpush1.bf16.xpose.msra.mxu0 0
      %4317 = vmatprep.subr.bf16.mxu0 0
      %4318 = vmatpush1.bf16.xpose.msra.mxu0 0
      %4319 = vmatprep.subr.bf16.mxu0 0
      %4320 = vmatpush1.bf16.xpose.msra.mxu0 0
      %4321 = vmatprep.subr.bf16.mxu0 0
      %4322 = vmatpush1.bf16.xpose.msra.mxu0 0
      %4323 = vmatprep.mubr.bf16.mxu0 0
      %4324 = vmatmul.mubr.bf16.gmra.mrb[0].mxu0 %v4268
      %v4325 = vpop.f32.mrb[0].mxu0
      %v4326 = vadd.f32 %v4221, %v4325
      %v4327 = vpop.f32.mrb[0].mxu0
      %v4328 = vpop.f32.mrb[0].mxu0
      %v4329 = vadd.f32 %v4224, %v4328
      %v4330 = vpop.f32.mrb[0].mxu0
      %4331 = vmatprep.mubr.bf16.mxu0 0
      %4332 = vmatmul.mubr.bf16.gmra.mrb[0].mxu0 %v4271
      %v4333 = vpop.f32.mrb[0].mxu0
      %v4334 = vadd.f32 %v4229, %v4333
      %v4335 = vpop.f32.mrb[0].mxu0
      %v4336 = vpop.f32.mrb[0].mxu0
      %v4337 = vadd.f32 %v4232, %v4336
      %v4338 = vpop.f32.mrb[0].mxu0
      %4339 = vmatprep.mubr.bf16.mxu0 0
      %4340 = vmatmul.mubr.bf16.gmra.mrb[0].mxu0 %v4274
      %v4341 = vpop.f32.mrb[0].mxu0
      %v4342 = vadd.f32 %v4237, %v4341
      %v4343 = vpop.f32.mrb[0].mxu0
      %v4344 = vpop.f32.mrb[0].mxu0
      %v4345 = vadd.f32 %v4240, %v4344
      %v4346 = vpop.f32.mrb[0].mxu0
      %4347 = vmatprep.mubr.bf16.mxu0 0
      %4348 = vmatmul.mubr.bf16.gmra.mrb[0].mxu0 %v4277
      %v4349 = vpop.f32.mrb[0].mxu0
      %v4350 = vadd.f32 %v4245, %v4349
      %v4351 = vpop.f32.mrb[0].mxu0
      %v4352 = vpop.f32.mrb[0].mxu0
      %v4353 = vadd.f32 %v4248, %v4352
      %v4354 = vpop.f32.mrb[0].mxu0
      %4355 = vdwg.mxu0
      %v4356 = vpack.c.bf16 %v4159, %v4158
      %v4357 = vpack.c.bf16 %v4161, %v4160
      %v4358 = vpack.c.bf16 %v4163, %v4162
      %v4359 = vpack.c.bf16 %v4165, %v4164
      %v4360 = vld [vmem:[%s8] sm:$0xf]
      %v4362 = vsel %vm503, %v4356, 0
      %v4365 = vsel %vm503, %v4357, 0
      %v4368 = vsel %vm503, %v4358, 0
      %v4371 = vsel %vm503, %v4359, 0
      %v4374 = vsel %vm1331, %v4360, 0
      %4376 = vmatprep.subr.bf16.mxu0 0
      %4377 = vmatpush1.bf16.msra.mxu0 %v4374
      %4378 = vmatprep.subr.bf16.mxu0 0
      %4379 = vmatpush1.bf16.msra.mxu0 0
      %4380 = vmatprep.subr.bf16.mxu0 0
      %4381 = vmatpush1.bf16.msra.mxu0 0
      %4382 = vmatprep.subr.bf16.mxu0 0
      %4383 = vmatpush1.bf16.msra.mxu0 0
      %4384 = vmatprep.subr.bf16.mxu0 0
      %4385 = vmatpush1.bf16.msra.mxu0 0
      %4386 = vmatprep.subr.bf16.mxu0 0
      %4387 = vmatpush1.bf16.msra.mxu0 0
      %4388 = vmatprep.subr.bf16.mxu0 0
      %4389 = vmatpush1.bf16.msra.mxu0 0
      %4390 = vmatprep.subr.bf16.mxu0 0
      %4391 = vmatpush1.bf16.msra.mxu0 0
      %4392 = vmatprep.subr.bf16.mxu0 0
      %4393 = vmatpush1.bf16.msra.mxu0 0
      %4394 = vmatprep.subr.bf16.mxu0 0
      %4395 = vmatpush1.bf16.msra.mxu0 0
      %4396 = vmatprep.subr.bf16.mxu0 0
      %4397 = vmatpush1.bf16.msra.mxu0 0
      %4398 = vmatprep.subr.bf16.mxu0 0
      %4399 = vmatpush1.bf16.msra.mxu0 0
      %4400 = vmatprep.subr.bf16.mxu0 0
      %4401 = vmatpush1.bf16.msra.mxu0 0
      %4402 = vmatprep.subr.bf16.mxu0 0
      %4403 = vmatpush1.bf16.msra.mxu0 0
      %4404 = vmatprep.subr.bf16.mxu0 0
      %4405 = vmatpush1.bf16.msra.mxu0 0
      %4406 = vmatprep.subr.bf16.mxu0 0
      %4407 = vmatpush1.bf16.msra.mxu0 0
      %4408 = vmatprep.mubr.bf16.mxu0 0
      %4409 = vmatmul.mubr.bf16.gmra.mrb[0].mxu0 %v4362
      %v4410 = vpop.f32.mrb[0].mxu0
      %v4411 = vadd.f32 0.0, %v4410
      %v4412 = vpop.f32.mrb[0].mxu0
      %v4413 = vpop.f32.mrb[0].mxu0
      %v4414 = vadd.f32 0.0, %v4413
      %v4415 = vpop.f32.mrb[0].mxu0
      %4416 = vmatprep.mubr.bf16.mxu0 0
      %4417 = vmatmul.mubr.bf16.gmra.mrb[0].mxu0 %v4365
      %v4418 = vpop.f32.mrb[0].mxu0
      %v4419 = vadd.f32 0.0, %v4418
      %v4420 = vpop.f32.mrb[0].mxu0
      %v4421 = vpop.f32.mrb[0].mxu0
      %v4422 = vadd.f32 0.0, %v4421
      %v4423 = vpop.f32.mrb[0].mxu0
      %4424 = vmatprep.mubr.bf16.mxu0 0
      %4425 = vmatmul.mubr.bf16.gmra.mrb[0].mxu0 %v4368
      %v4426 = vpop.f32.mrb[0].mxu0
      %v4427 = vadd.f32 0.0, %v4426
      %v4428 = vpop.f32.mrb[0].mxu0
      %v4429 = vpop.f32.mrb[0].mxu0
      %v4430 = vadd.f32 0.0, %v4429
      %v4431 = vpop.f32.mrb[0].mxu0
      %4432 = vmatprep.mubr.bf16.mxu0 0
      %4433 = vmatmul.mubr.bf16.gmra.mrb[0].mxu0 %v4371
      %v4434 = vpop.f32.mrb[0].mxu0
      %v4435 = vadd.f32 0.0, %v4434
      %v4436 = vpop.f32.mrb[0].mxu0
      %v4437 = vpop.f32.mrb[0].mxu0
      %v4438 = vadd.f32 0.0, %v4437
      %v4439 = vpop.f32.mrb[0].mxu0
      %4440 = vdwg.mxu0
      %v4441 = vadd.f32 %v4326, %v4411
      %v4442 = vadd.f32 %v4329, %v4414
      %v4443 = vadd.f32 %v4334, %v4419
      %v4444 = vadd.f32 %v4337, %v4422
      %v4445 = vadd.f32 %v4342, %v4427
      %v4446 = vadd.f32 %v4345, %v4430
      %v4447 = vadd.f32 %v4350, %v4435
      %v4448 = vadd.f32 %v4353, %v4438
      %v4449 = vsel %vm2364, %v4441, -inf
      %4450 = vmax.xlane.f32.xlu0 %v4449
      %v4451 = vpop.xlane.xlu0 %4450
      %v4452 = vsel %vm2364, %v4442, -inf
      %4453 = vmax.xlane.f32.xlu0 %v4452
      %v4454 = vpop.xlane.xlu0 %4453
      %v4455 = vsel %vm2364, %v4443, -inf
      %4456 = vmax.xlane.f32.xlu0 %v4455
      %v4457 = vpop.xlane.xlu0 %4456
      %v4458 = vsel %vm2364, %v4444, -inf
      %4459 = vmax.xlane.f32.xlu0 %v4458
      %v4460 = vpop.xlane.xlu0 %4459
      %v4461 = vsel %vm2364, %v4445, -inf
      %4462 = vmax.xlane.f32.xlu0 %v4461
      %v4463 = vpop.xlane.xlu0 %4462
      %v4464 = vsel %vm2364, %v4446, -inf
      %4465 = vmax.xlane.f32.xlu0 %v4464
      %v4466 = vpop.xlane.xlu0 %4465
      %v4467 = vsel %vm2364, %v4447, -inf
      %4468 = vmax.xlane.f32.xlu0 %v4467
      %v4469 = vpop.xlane.xlu0 %4468
      %v4470 = vsel %vm2364, %v4448, -inf
      %4471 = vmax.xlane.f32.xlu0 %v4470
      %v4472 = vpop.xlane.xlu0 %4471
      %v4473 = vsub.f32 %v4441, %v4451
      %v4474 = vsub.f32 %v4442, %v4454
      %v4475 = vsub.f32 %v4443, %v4457
      %v4476 = vsub.f32 %v4444, %v4460
      %v4477 = vsub.f32 %v4445, %v4463
      %v4478 = vsub.f32 %v4446, %v4466
      %v4479 = vsub.f32 %v4447, %v4469
      %v4480 = vsub.f32 %v4448, %v4472
      %v4481 = vmul.f32 %v4473, 1.442695
      %v4482 = vpow.pop %v4481
      %v4483 = vmul.f32 %v4474, 1.442695
      %v4484 = vpow.pop %v4483
      %v4485 = vmul.f32 %v4475, 1.442695
      %v4486 = vpow.pop %v4485
      %v4487 = vmul.f32 %v4476, 1.442695
      %v4488 = vpow.pop %v4487
      %v4489 = vmul.f32 %v4477, 1.442695
      %v4490 = vpow.pop %v4489
      %v4491 = vmul.f32 %v4478, 1.442695
      %v4492 = vpow.pop %v4491
      %v4493 = vmul.f32 %v4479, 1.442695
      %v4494 = vpow.pop %v4493
      %v4495 = vmul.f32 %v4480, 1.442695
      %v4496 = vpow.pop %v4495
      %v4497 = vsel %vm2364, %v4482, 0.0
      %4498 = vadd.xlane.f32.xlu0 %v4497
      %v4499 = vpop.xlane.xlu0 %4498
      %v4500 = vsel %vm2364, %v4484, 0.0
      %4501 = vadd.xlane.f32.xlu0 %v4500
      %v4502 = vpop.xlane.xlu0 %4501
      %v4503 = vsel %vm2364, %v4486, 0.0
      %4504 = vadd.xlane.f32.xlu0 %v4503
      %v4505 = vpop.xlane.xlu0 %4504
      %v4506 = vsel %vm2364, %v4488, 0.0
      %4507 = vadd.xlane.f32.xlu0 %v4506
      %v4508 = vpop.xlane.xlu0 %4507
      %v4509 = vsel %vm2364, %v4490, 0.0
      %4510 = vadd.xlane.f32.xlu0 %v4509
      %v4511 = vpop.xlane.xlu0 %4510
      %v4512 = vsel %vm2364, %v4492, 0.0
      %4513 = vadd.xlane.f32.xlu0 %v4512
      %v4514 = vpop.xlane.xlu0 %4513
      %v4515 = vsel %vm2364, %v4494, 0.0
      %4516 = vadd.xlane.f32.xlu0 %v4515
      %v4517 = vpop.xlane.xlu0 %4516
      %v4518 = vsel %vm2364, %v4496, 0.0
      %4519 = vadd.xlane.f32.xlu0 %v4518
      %v4520 = vpop.xlane.xlu0 %4519
      %v4521 = vrcp.pop %v4499
      %v4522 = vrcp.pop %v4502
      %v4523 = vrcp.pop %v4505
      %v4524 = vrcp.pop %v4508
      %v4525 = vrcp.pop %v4511
      %v4526 = vrcp.pop %v4514
      %v4527 = vrcp.pop %v4517
      %v4528 = vrcp.pop %v4520
      %v4529 = vmul.f32 %v4482, %v4521
      %v4530 = vmul.f32 %v4484, %v4522
      %v4531 = vmul.f32 %v4486, %v4523
      %v4532 = vmul.f32 %v4488, %v4524
      %v4533 = vmul.f32 %v4490, %v4525
      %v4534 = vmul.f32 %v4492, %v4526
      %v4535 = vmul.f32 %v4494, %v4527
      %v4536 = vmul.f32 %v4496, %v4528
      %v4537 = vpack.c.bf16 %v4530, %v4529
      %v4538 = vpack.c.bf16 %v4532, %v4531
      %v4539 = vpack.c.bf16 %v4534, %v4533
      %v4540 = vpack.c.bf16 %v4536, %v4535
      %4541 = vrot.lane.b32.xlu0 %v463, 56
      %v4542 = vpop.permute.xlu0 %4541
      %4543 = vrot.lane.b32.xlu0 %v464, 56
      %v4544 = vpop.permute.xlu0 %4543
      %4545 = vrot.lane.b32.xlu0 %v465, 56
      %v4546 = vpop.permute.xlu0 %4545
      %4547 = vrot.lane.b32.xlu0 %v466, 56
      %v4548 = vpop.permute.xlu0 %4547
      %v4554 = vsel %vm2364, %v4537, 0
      %v4557 = vsel %vm2364, %v4538, 0
      %v4560 = vsel %vm2364, %v4539, 0
      %v4563 = vsel %vm2364, %v4540, 0
      %4565 = vmatprep.subr.bf16.mxu0 0
      %4566 = vmatpush1.bf16.msra.mxu0 %v4542
      %4567 = vmatprep.subr.bf16.mxu0 0
      %4568 = vmatpush1.bf16.msra.mxu0 %v4544
      %4569 = vmatprep.subr.bf16.mxu0 0
      %4570 = vmatpush1.bf16.msra.mxu0 %v4546
      %4571 = vmatprep.subr.bf16.mxu0 0
      %4572 = vmatpush1.bf16.msra.mxu0 %v4548
      %4573 = vmatprep.subr.bf16.mxu0 0
      %4574 = vmatpush1.bf16.msra.mxu0 0
      %4575 = vmatprep.subr.bf16.mxu0 0
      %4576 = vmatpush1.bf16.msra.mxu0 0
      %4577 = vmatprep.subr.bf16.mxu0 0
      %4578 = vmatpush1.bf16.msra.mxu0 0
      %4579 = vmatprep.subr.bf16.mxu0 0
      %4580 = vmatpush1.bf16.msra.mxu0 0
      %4581 = vmatprep.subr.bf16.mxu0 0
      %4582 = vmatpush1.bf16.msra.mxu0 0
      %4583 = vmatprep.subr.bf16.mxu0 0
      %4584 = vmatpush1.bf16.msra.mxu0 0
      %4585 = vmatprep.subr.bf16.mxu0 0
      %4586 = vmatpush1.bf16.msra.mxu0 0
      %4587 = vmatprep.subr.bf16.mxu0 0
      %4588 = vmatpush1.bf16.msra.mxu0 0
      %4589 = vmatprep.subr.bf16.mxu0 0
      %4590 = vmatpush1.bf16.msra.mxu0 0
      %4591 = vmatprep.subr.bf16.mxu0 0
      %4592 = vmatpush1.bf16.msra.mxu0 0
      %4593 = vmatprep.subr.bf16.mxu0 0
      %4594 = vmatpush1.bf16.msra.mxu0 0
      %4595 = vmatprep.subr.bf16.mxu0 0
      %4596 = vmatpush1.bf16.msra.mxu0 0
      %4597 = vmatprep.mubr.bf16.mxu0 0
      %4598 = vmatmul.mubr.bf16.gmra.mrb[0].mxu0 %v4554
      %v4599 = vpop.f32.mrb[0].mxu0
      %v4600 = vadd.f32 0.0, %v4599
      %v4601 = vpop.f32.mrb[0].mxu0
      %v4602 = vpop.f32.mrb[0].mxu0
      %v4603 = vadd.f32 0.0, %v4602
      %v4604 = vpop.f32.mrb[0].mxu0
      %4605 = vmatprep.mubr.bf16.mxu0 0
      %4606 = vmatmul.mubr.bf16.gmra.mrb[0].mxu0 %v4557
      %v4607 = vpop.f32.mrb[0].mxu0
      %v4608 = vadd.f32 0.0, %v4607
      %v4609 = vpop.f32.mrb[0].mxu0
      %v4610 = vpop.f32.mrb[0].mxu0
      %v4611 = vadd.f32 0.0, %v4610
      %v4612 = vpop.f32.mrb[0].mxu0
      %4613 = vmatprep.mubr.bf16.mxu0 0
      %4614 = vmatmul.mubr.bf16.gmra.mrb[0].mxu0 %v4560
      %v4615 = vpop.f32.mrb[0].mxu0
      %v4616 = vadd.f32 0.0, %v4615
      %v4617 = vpop.f32.mrb[0].mxu0
      %v4618 = vpop.f32.mrb[0].mxu0
      %v4619 = vadd.f32 0.0, %v4618
      %v4620 = vpop.f32.mrb[0].mxu0
      %4621 = vmatprep.mubr.bf16.mxu0 0
      %4622 = vmatmul.mubr.bf16.gmra.mrb[0].mxu0 %v4563
      %v4623 = vpop.f32.mrb[0].mxu0
      %v4624 = vadd.f32 0.0, %v4623
      %v4625 = vpop.f32.mrb[0].mxu0
      %v4626 = vpop.f32.mrb[0].mxu0
      %v4627 = vadd.f32 0.0, %v4626
      %v4628 = vpop.f32.mrb[0].mxu0
      %4629 = vdwg.mxu0
      %v4630 = vpack.c.bf16 %v4603, %v4600
      %v4631 = vpack.c.bf16 %v4611, %v4608
      %v4632 = vpack.c.bf16 %v4619, %v4616
      %v4633 = vpack.c.bf16 %v4627, %v4624
      %v4634 = vld [vmem:[%s5] sm:$0xf]
      %v4635 = vld [vmem:[%s5 + $0x4] sm:$0xf]
      %v4636 = vld [vmem:[%s5 + $0x8] sm:$0xf]
      %v4637 = vld [vmem:[%s5 + $0xc] sm:$0xf]
      %v4638 = vld [vmem:[%s5 + $0x10] sm:$0xf]
      %v4639 = vld [vmem:[%s5 + $0x14] sm:$0xf]
      %v4640 = vld [vmem:[%s5 + $0x18] sm:$0xf]
      %v4641 = vld [vmem:[%s5 + $0x1c] sm:$0xf]
      %4642 = vrot.lane.b32.xlu0 %v479, 112
      %v4643 = vpop.permute.xlu0 %4642
      %v4645 = vsel %vm503, %v4643, 0
      %v4648 = vsel %vm503, %v4634, 0
      %4650 = vmatprep.subr.bf16.mxu0 0
      %4651 = vmatpush1.bf16.xpose.msra.mxu0 %v4648
      %4652 = vmatprep.subr.bf16.mxu0 0
      %4653 = vmatpush1.bf16.xpose.msra.mxu0 0
      %4654 = vmatprep.subr.bf16.mxu0 0
      %4655 = vmatpush1.bf16.xpose.msra.mxu0 0
      %4656 = vmatprep.subr.bf16.mxu0 0
      %4657 = vmatpush1.bf16.xpose.msra.mxu0 0
      %4658 = vmatprep.subr.bf16.mxu0 0
      %4659 = vmatpush1.bf16.xpose.msra.mxu0 0
      %4660 = vmatprep.subr.bf16.mxu0 0
      %4661 = vmatpush1.bf16.xpose.msra.mxu0 0
      %4662 = vmatprep.subr.bf16.mxu0 0
      %4663 = vmatpush1.bf16.xpose.msra.mxu0 0
      %4664 = vmatprep.subr.bf16.mxu0 0
      %4665 = vmatpush1.bf16.xpose.msra.mxu0 0
      %4666 = vmatprep.subr.bf16.mxu0 0
      %4667 = vmatpush1.bf16.xpose.msra.mxu0 0
      %4668 = vmatprep.subr.bf16.mxu0 0
      %4669 = vmatpush1.bf16.xpose.msra.mxu0 0
      %4670 = vmatprep.subr.bf16.mxu0 0
      %4671 = vmatpush1.bf16.xpose.msra.mxu0 0
      %4672 = vmatprep.subr.bf16.mxu0 0
      %4673 = vmatpush1.bf16.xpose.msra.mxu0 0
      %4674 = vmatprep.subr.bf16.mxu0 0
      %4675 = vmatpush1.bf16.xpose.msra.mxu0 0
      %4676 = vmatprep.subr.bf16.mxu0 0
      %4677 = vmatpush1.bf16.xpose.msra.mxu0 0
      %4678 = vmatprep.subr.bf16.mxu0 0
      %4679 = vmatpush1.bf16.xpose.msra.mxu0 0
      %4680 = vmatprep.subr.bf16.mxu0 0
      %4681 = vmatpush1.bf16.xpose.msra.mxu0 0
      %4682 = vmatprep.mubr.bf16.mxu0 0
      %4683 = vmatmul.mubr.bf16.gmra.mrb[0].mxu0 %v4645
      %v4684 = vpop.f32.mrb[0].mxu0
      %v4685 = vadd.f32 0.0, %v4684
      %v4686 = vpop.f32.mrb[0].mxu0
      %v4687 = vpop.f32.mrb[0].mxu0
      %v4688 = vpop.f32.mrb[0].mxu0
      %4689 = vdwg.mxu0
      %4690 = vrot.lane.b32.xlu0 %v480, 112
      %v4691 = vpop.permute.xlu0 %4690
      %v4693 = vsel %vm503, %v4691, 0
      %v4696 = vsel %vm503, %v4635, 0
      %4698 = vmatprep.subr.bf16.mxu0 0
      %4699 = vmatpush1.bf16.xpose.msra.mxu0 %v4696
      %4700 = vmatprep.subr.bf16.mxu0 0
      %4701 = vmatpush1.bf16.xpose.msra.mxu0 0
      %4702 = vmatprep.subr.bf16.mxu0 0
      %4703 = vmatpush1.bf16.xpose.msra.mxu0 0
      %4704 = vmatprep.subr.bf16.mxu0 0
      %4705 = vmatpush1.bf16.xpose.msra.mxu0 0
      %4706 = vmatprep.subr.bf16.mxu0 0
      %4707 = vmatpush1.bf16.xpose.msra.mxu0 0
      %4708 = vmatprep.subr.bf16.mxu0 0
      %4709 = vmatpush1.bf16.xpose.msra.mxu0 0
      %4710 = vmatprep.subr.bf16.mxu0 0
      %4711 = vmatpush1.bf16.xpose.msra.mxu0 0
      %4712 = vmatprep.subr.bf16.mxu0 0
      %4713 = vmatpush1.bf16.xpose.msra.mxu0 0
      %4714 = vmatprep.subr.bf16.mxu0 0
      %4715 = vmatpush1.bf16.xpose.msra.mxu0 0
      %4716 = vmatprep.subr.bf16.mxu0 0
      %4717 = vmatpush1.bf16.xpose.msra.mxu0 0
      %4718 = vmatprep.subr.bf16.mxu0 0
      %4719 = vmatpush1.bf16.xpose.msra.mxu0 0
      %4720 = vmatprep.subr.bf16.mxu0 0
      %4721 = vmatpush1.bf16.xpose.msra.mxu0 0
      %4722 = vmatprep.subr.bf16.mxu0 0
      %4723 = vmatpush1.bf16.xpose.msra.mxu0 0
      %4724 = vmatprep.subr.bf16.mxu0 0
      %4725 = vmatpush1.bf16.xpose.msra.mxu0 0
      %4726 = vmatprep.subr.bf16.mxu0 0
      %4727 = vmatpush1.bf16.xpose.msra.mxu0 0
      %4728 = vmatprep.subr.bf16.mxu0 0
      %4729 = vmatpush1.bf16.xpose.msra.mxu0 0
      %4730 = vmatprep.mubr.bf16.mxu0 0
      %4731 = vmatmul.mubr.bf16.gmra.mrb[0].mxu0 %v4693
      %v4732 = vpop.f32.mrb[0].mxu0
      %v4733 = vadd.f32 0.0, %v4732
      %v4734 = vpop.f32.mrb[0].mxu0
      %v4735 = vpop.f32.mrb[0].mxu0
      %v4736 = vpop.f32.mrb[0].mxu0
      %4737 = vdwg.mxu0
      %4738 = vrot.lane.b32.xlu0 %v481, 112
      %v4739 = vpop.permute.xlu0 %4738
      %v4741 = vsel %vm503, %v4739, 0
      %v4744 = vsel %vm503, %v4636, 0
      %4746 = vmatprep.subr.bf16.mxu0 0
      %4747 = vmatpush1.bf16.xpose.msra.mxu0 %v4744
      %4748 = vmatprep.subr.bf16.mxu0 0
      %4749 = vmatpush1.bf16.xpose.msra.mxu0 0
      %4750 = vmatprep.subr.bf16.mxu0 0
      %4751 = vmatpush1.bf16.xpose.msra.mxu0 0
      %4752 = vmatprep.subr.bf16.mxu0 0
      %4753 = vmatpush1.bf16.xpose.msra.mxu0 0
      %4754 = vmatprep.subr.bf16.mxu0 0
      %4755 = vmatpush1.bf16.xpose.msra.mxu0 0
      %4756 = vmatprep.subr.bf16.mxu0 0
      %4757 = vmatpush1.bf16.xpose.msra.mxu0 0
      %4758 = vmatprep.subr.bf16.mxu0 0
      %4759 = vmatpush1.bf16.xpose.msra.mxu0 0
      %4760 = vmatprep.subr.bf16.mxu0 0
      %4761 = vmatpush1.bf16.xpose.msra.mxu0 0
      %4762 = vmatprep.subr.bf16.mxu0 0
      %4763 = vmatpush1.bf16.xpose.msra.mxu0 0
      %4764 = vmatprep.subr.bf16.mxu0 0
      %4765 = vmatpush1.bf16.xpose.msra.mxu0 0
      %4766 = vmatprep.subr.bf16.mxu0 0
      %4767 = vmatpush1.bf16.xpose.msra.mxu0 0
      %4768 = vmatprep.subr.bf16.mxu0 0
      %4769 = vmatpush1.bf16.xpose.msra.mxu0 0
      %4770 = vmatprep.subr.bf16.mxu0 0
      %4771 = vmatpush1.bf16.xpose.msra.mxu0 0
      %4772 = vmatprep.subr.bf16.mxu0 0
      %4773 = vmatpush1.bf16.xpose.msra.mxu0 0
      %4774 = vmatprep.subr.bf16.mxu0 0
      %4775 = vmatpush1.bf16.xpose.msra.mxu0 0
      %4776 = vmatprep.subr.bf16.mxu0 0
      %4777 = vmatpush1.bf16.xpose.msra.mxu0 0
      %4778 = vmatprep.mubr.bf16.mxu0 0
      %4779 = vmatmul.mubr.bf16.gmra.mrb[0].mxu0 %v4741
      %v4780 = vpop.f32.mrb[0].mxu0
      %v4781 = vadd.f32 0.0, %v4780
      %v4782 = vpop.f32.mrb[0].mxu0
      %v4783 = vpop.f32.mrb[0].mxu0
      %v4784 = vpop.f32.mrb[0].mxu0
      %4785 = vdwg.mxu0
      %4786 = vrot.lane.b32.xlu0 %v482, 112
      %v4787 = vpop.permute.xlu0 %4786
      %v4789 = vsel %vm503, %v4787, 0
      %v4792 = vsel %vm503, %v4637, 0
      %4794 = vmatprep.subr.bf16.mxu0 0
      %4795 = vmatpush1.bf16.xpose.msra.mxu0 %v4792
      %4796 = vmatprep.subr.bf16.mxu0 0
      %4797 = vmatpush1.bf16.xpose.msra.mxu0 0
      %4798 = vmatprep.subr.bf16.mxu0 0
      %4799 = vmatpush1.bf16.xpose.msra.mxu0 0
      %4800 = vmatprep.subr.bf16.mxu0 0
      %4801 = vmatpush1.bf16.xpose.msra.mxu0 0
      %4802 = vmatprep.subr.bf16.mxu0 0
      %4803 = vmatpush1.bf16.xpose.msra.mxu0 0
      %4804 = vmatprep.subr.bf16.mxu0 0
      %4805 = vmatpush1.bf16.xpose.msra.mxu0 0
      %4806 = vmatprep.subr.bf16.mxu0 0
      %4807 = vmatpush1.bf16.xpose.msra.mxu0 0
      %4808 = vmatprep.subr.bf16.mxu0 0
      %4809 = vmatpush1.bf16.xpose.msra.mxu0 0
      %4810 = vmatprep.subr.bf16.mxu0 0
      %4811 = vmatpush1.bf16.xpose.msra.mxu0 0
      %4812 = vmatprep.subr.bf16.mxu0 0
      %4813 = vmatpush1.bf16.xpose.msra.mxu0 0
      %4814 = vmatprep.subr.bf16.mxu0 0
      %4815 = vmatpush1.bf16.xpose.msra.mxu0 0
      %4816 = vmatprep.subr.bf16.mxu0 0
      %4817 = vmatpush1.bf16.xpose.msra.mxu0 0
      %4818 = vmatprep.subr.bf16.mxu0 0
      %4819 = vmatpush1.bf16.xpose.msra.mxu0 0
      %4820 = vmatprep.subr.bf16.mxu0 0
      %4821 = vmatpush1.bf16.xpose.msra.mxu0 0
      %4822 = vmatprep.subr.bf16.mxu0 0
      %4823 = vmatpush1.bf16.xpose.msra.mxu0 0
      %4824 = vmatprep.subr.bf16.mxu0 0
      %4825 = vmatpush1.bf16.xpose.msra.mxu0 0
      %4826 = vmatprep.mubr.bf16.mxu0 0
      %4827 = vmatmul.mubr.bf16.gmra.mrb[0].mxu0 %v4789
      %v4828 = vpop.f32.mrb[0].mxu0
      %v4829 = vadd.f32 0.0, %v4828
      %v4830 = vpop.f32.mrb[0].mxu0
      %v4831 = vpop.f32.mrb[0].mxu0
      %v4832 = vpop.f32.mrb[0].mxu0
      %4833 = vdwg.mxu0
      %4834 = vrot.lane.b32.xlu0 %v483, 112
      %v4835 = vpop.permute.xlu0 %4834
      %v4837 = vsel %vm503, %v4835, 0
      %v4840 = vsel %vm503, %v4638, 0
      %4842 = vmatprep.subr.bf16.mxu0 0
      %4843 = vmatpush1.bf16.xpose.msra.mxu0 %v4840
      %4844 = vmatprep.subr.bf16.mxu0 0
      %4845 = vmatpush1.bf16.xpose.msra.mxu0 0
      %4846 = vmatprep.subr.bf16.mxu0 0
      %4847 = vmatpush1.bf16.xpose.msra.mxu0 0
      %4848 = vmatprep.subr.bf16.mxu0 0
      %4849 = vmatpush1.bf16.xpose.msra.mxu0 0
      %4850 = vmatprep.subr.bf16.mxu0 0
      %4851 = vmatpush1.bf16.xpose.msra.mxu0 0
      %4852 = vmatprep.subr.bf16.mxu0 0
      %4853 = vmatpush1.bf16.xpose.msra.mxu0 0
      %4854 = vmatprep.subr.bf16.mxu0 0
      %4855 = vmatpush1.bf16.xpose.msra.mxu0 0
      %4856 = vmatprep.subr.bf16.mxu0 0
      %4857 = vmatpush1.bf16.xpose.msra.mxu0 0
      %4858 = vmatprep.subr.bf16.mxu0 0
      %4859 = vmatpush1.bf16.xpose.msra.mxu0 0
      %4860 = vmatprep.subr.bf16.mxu0 0
      %4861 = vmatpush1.bf16.xpose.msra.mxu0 0
      %4862 = vmatprep.subr.bf16.mxu0 0
      %4863 = vmatpush1.bf16.xpose.msra.mxu0 0
      %4864 = vmatprep.subr.bf16.mxu0 0
      %4865 = vmatpush1.bf16.xpose.msra.mxu0 0
      %4866 = vmatprep.subr.bf16.mxu0 0
      %4867 = vmatpush1.bf16.xpose.msra.mxu0 0
      %4868 = vmatprep.subr.bf16.mxu0 0
      %4869 = vmatpush1.bf16.xpose.msra.mxu0 0
      %4870 = vmatprep.subr.bf16.mxu0 0
      %4871 = vmatpush1.bf16.xpose.msra.mxu0 0
      %4872 = vmatprep.subr.bf16.mxu0 0
      %4873 = vmatpush1.bf16.xpose.msra.mxu0 0
      %4874 = vmatprep.mubr.bf16.mxu0 0
      %4875 = vmatmul.mubr.bf16.gmra.mrb[0].mxu0 %v4837
      %v4876 = vpop.f32.mrb[0].mxu0
      %v4877 = vadd.f32 0.0, %v4876
      %v4878 = vpop.f32.mrb[0].mxu0
      %v4879 = vpop.f32.mrb[0].mxu0
      %v4880 = vpop.f32.mrb[0].mxu0
      %4881 = vdwg.mxu0
      %4882 = vrot.lane.b32.xlu0 %v484, 112
      %v4883 = vpop.permute.xlu0 %4882
      %v4885 = vsel %vm503, %v4883, 0
      %v4888 = vsel %vm503, %v4639, 0
      %4890 = vmatprep.subr.bf16.mxu0 0
      %4891 = vmatpush1.bf16.xpose.msra.mxu0 %v4888
      %4892 = vmatprep.subr.bf16.mxu0 0
      %4893 = vmatpush1.bf16.xpose.msra.mxu0 0
      %4894 = vmatprep.subr.bf16.mxu0 0
      %4895 = vmatpush1.bf16.xpose.msra.mxu0 0
      %4896 = vmatprep.subr.bf16.mxu0 0
      %4897 = vmatpush1.bf16.xpose.msra.mxu0 0
      %4898 = vmatprep.subr.bf16.mxu0 0
      %4899 = vmatpush1.bf16.xpose.msra.mxu0 0
      %4900 = vmatprep.subr.bf16.mxu0 0
      %4901 = vmatpush1.bf16.xpose.msra.mxu0 0
      %4902 = vmatprep.subr.bf16.mxu0 0
      %4903 = vmatpush1.bf16.xpose.msra.mxu0 0
      %4904 = vmatprep.subr.bf16.mxu0 0
      %4905 = vmatpush1.bf16.xpose.msra.mxu0 0
      %4906 = vmatprep.subr.bf16.mxu0 0
      %4907 = vmatpush1.bf16.xpose.msra.mxu0 0
      %4908 = vmatprep.subr.bf16.mxu0 0
      %4909 = vmatpush1.bf16.xpose.msra.mxu0 0
      %4910 = vmatprep.subr.bf16.mxu0 0
      %4911 = vmatpush1.bf16.xpose.msra.mxu0 0
      %4912 = vmatprep.subr.bf16.mxu0 0
      %4913 = vmatpush1.bf16.xpose.msra.mxu0 0
      %4914 = vmatprep.subr.bf16.mxu0 0
      %4915 = vmatpush1.bf16.xpose.msra.mxu0 0
      %4916 = vmatprep.subr.bf16.mxu0 0
      %4917 = vmatpush1.bf16.xpose.msra.mxu0 0
      %4918 = vmatprep.subr.bf16.mxu0 0
      %4919 = vmatpush1.bf16.xpose.msra.mxu0 0
      %4920 = vmatprep.subr.bf16.mxu0 0
      %4921 = vmatpush1.bf16.xpose.msra.mxu0 0
      %4922 = vmatprep.mubr.bf16.mxu0 0
      %4923 = vmatmul.mubr.bf16.gmra.mrb[0].mxu0 %v4885
      %v4924 = vpop.f32.mrb[0].mxu0
      %v4925 = vadd.f32 0.0, %v4924
      %v4926 = vpop.f32.mrb[0].mxu0
      %v4927 = vpop.f32.mrb[0].mxu0
      %v4928 = vpop.f32.mrb[0].mxu0
      %4929 = vdwg.mxu0
      %4930 = vrot.lane.b32.xlu0 %v485, 112
      %v4931 = vpop.permute.xlu0 %4930
      %v4933 = vsel %vm503, %v4931, 0
      %v4936 = vsel %vm503, %v4640, 0
      %4938 = vmatprep.subr.bf16.mxu0 0
      %4939 = vmatpush1.bf16.xpose.msra.mxu0 %v4936
      %4940 = vmatprep.subr.bf16.mxu0 0
      %4941 = vmatpush1.bf16.xpose.msra.mxu0 0
      %4942 = vmatprep.subr.bf16.mxu0 0
      %4943 = vmatpush1.bf16.xpose.msra.mxu0 0
      %4944 = vmatprep.subr.bf16.mxu0 0
      %4945 = vmatpush1.bf16.xpose.msra.mxu0 0
      %4946 = vmatprep.subr.bf16.mxu0 0
      %4947 = vmatpush1.bf16.xpose.msra.mxu0 0
      %4948 = vmatprep.subr.bf16.mxu0 0
      %4949 = vmatpush1.bf16.xpose.msra.mxu0 0
      %4950 = vmatprep.subr.bf16.mxu0 0
      %4951 = vmatpush1.bf16.xpose.msra.mxu0 0
      %4952 = vmatprep.subr.bf16.mxu0 0
      %4953 = vmatpush1.bf16.xpose.msra.mxu0 0
      %4954 = vmatprep.subr.bf16.mxu0 0
      %4955 = vmatpush1.bf16.xpose.msra.mxu0 0
      %4956 = vmatprep.subr.bf16.mxu0 0
      %4957 = vmatpush1.bf16.xpose.msra.mxu0 0
      %4958 = vmatprep.subr.bf16.mxu0 0
      %4959 = vmatpush1.bf16.xpose.msra.mxu0 0
      %4960 = vmatprep.subr.bf16.mxu0 0
      %4961 = vmatpush1.bf16.xpose.msra.mxu0 0
      %4962 = vmatprep.subr.bf16.mxu0 0
      %4963 = vmatpush1.bf16.xpose.msra.mxu0 0
      %4964 = vmatprep.subr.bf16.mxu0 0
      %4965 = vmatpush1.bf16.xpose.msra.mxu0 0
      %4966 = vmatprep.subr.bf16.mxu0 0
      %4967 = vmatpush1.bf16.xpose.msra.mxu0 0
      %4968 = vmatprep.subr.bf16.mxu0 0
      %4969 = vmatpush1.bf16.xpose.msra.mxu0 0
      %4970 = vmatprep.mubr.bf16.mxu0 0
      %4971 = vmatmul.mubr.bf16.gmra.mrb[0].mxu0 %v4933
      %v4972 = vpop.f32.mrb[0].mxu0
      %v4973 = vadd.f32 0.0, %v4972
      %v4974 = vpop.f32.mrb[0].mxu0
      %v4975 = vpop.f32.mrb[0].mxu0
      %v4976 = vpop.f32.mrb[0].mxu0
      %4977 = vdwg.mxu0
      %4978 = vrot.lane.b32.xlu0 %v486, 112
      %v4979 = vpop.permute.xlu0 %4978
      %v4981 = vsel %vm503, %v4979, 0
      %v4984 = vsel %vm503, %v4641, 0
      %4986 = vmatprep.subr.bf16.mxu0 0
      %4987 = vmatpush1.bf16.xpose.msra.mxu0 %v4984
      %4988 = vmatprep.subr.bf16.mxu0 0
      %4989 = vmatpush1.bf16.xpose.msra.mxu0 0
      %4990 = vmatprep.subr.bf16.mxu0 0
      %4991 = vmatpush1.bf16.xpose.msra.mxu0 0
      %4992 = vmatprep.subr.bf16.mxu0 0
      %4993 = vmatpush1.bf16.xpose.msra.mxu0 0
      %4994 = vmatprep.subr.bf16.mxu0 0
      %4995 = vmatpush1.bf16.xpose.msra.mxu0 0
      %4996 = vmatprep.subr.bf16.mxu0 0
      %4997 = vmatpush1.bf16.xpose.msra.mxu0 0
      %4998 = vmatprep.subr.bf16.mxu0 0
      %4999 = vmatpush1.bf16.xpose.msra.mxu0 0
      %5000 = vmatprep.subr.bf16.mxu0 0
      %5001 = vmatpush1.bf16.xpose.msra.mxu0 0
      %5002 = vmatprep.subr.bf16.mxu0 0
      %5003 = vmatpush1.bf16.xpose.msra.mxu0 0
      %5004 = vmatprep.subr.bf16.mxu0 0
      %5005 = vmatpush1.bf16.xpose.msra.mxu0 0
      %5006 = vmatprep.subr.bf16.mxu0 0
      %5007 = vmatpush1.bf16.xpose.msra.mxu0 0
      %5008 = vmatprep.subr.bf16.mxu0 0
      %5009 = vmatpush1.bf16.xpose.msra.mxu0 0
      %5010 = vmatprep.subr.bf16.mxu0 0
      %5011 = vmatpush1.bf16.xpose.msra.mxu0 0
      %5012 = vmatprep.subr.bf16.mxu0 0
      %5013 = vmatpush1.bf16.xpose.msra.mxu0 0
      %5014 = vmatprep.subr.bf16.mxu0 0
      %5015 = vmatpush1.bf16.xpose.msra.mxu0 0
      %5016 = vmatprep.subr.bf16.mxu0 0
      %5017 = vmatpush1.bf16.xpose.msra.mxu0 0
      %5018 = vmatprep.mubr.bf16.mxu0 0
      %5019 = vmatmul.mubr.bf16.gmra.mrb[0].mxu0 %v4981
      %v5020 = vpop.f32.mrb[0].mxu0
      %v5021 = vadd.f32 0.0, %v5020
      %v5022 = vpop.f32.mrb[0].mxu0
      %v5023 = vpop.f32.mrb[0].mxu0
      %v5024 = vpop.f32.mrb[0].mxu0
      %5025 = vdwg.mxu0
      %v5026 = vld [vmem:[%s6] sm:$0xf]
      %v5027 = vld [vmem:[%s6 + $0x4] sm:$0xf]
      %v5028 = vld [vmem:[%s6 + $0x8] sm:$0xf]
      %v5029 = vld [vmem:[%s6 + $0xc] sm:$0xf]
      %v5030 = vld [vmem:[%s6 + $0x10] sm:$0xf]
      %v5031 = vld [vmem:[%s6 + $0x14] sm:$0xf]
      %v5032 = vld [vmem:[%s6 + $0x18] sm:$0xf]
      %v5033 = vld [vmem:[%s6 + $0x1c] sm:$0xf]
      %5042 = vxpose.xlu0.c.b16.start [1/8] %v4643, 128
      %5043 = vxpose.xlu0.c.b16.cont [2/8] 0, 128
      %5044 = vxpose.xlu0.c.b16.cont [3/8] 0, 128
      %5045 = vxpose.xlu0.c.b16.cont [4/8] 0, 128
      %5046 = vxpose.xlu0.c.b16.cont [5/8] 0, 128
      %5047 = vxpose.xlu0.c.b16.cont [6/8] 0, 128
      %5048 = vxpose.xlu0.c.b16.cont [7/8] 0, 128
      %5049 = vxpose.xlu0.c.b16.end [8/8] 0, 128
      %v5050 = vpop.trf.xlu0
      %v5051 = vpop.trf.xlu0
      %v5052 = vpop.trf.xlu0
      %v5053 = vpop.trf.xlu0
      %v5054 = vpop.trf.xlu0
      %v5055 = vpop.trf.xlu0
      %v5056 = vpop.trf.xlu0
      %v5057 = vpop.trf.xlu0
      %5058 = vxpose.xlu0.c.b16.start [1/8] %v4691, 128
      %5059 = vxpose.xlu0.c.b16.cont [2/8] 0, 128
      %5060 = vxpose.xlu0.c.b16.cont [3/8] 0, 128
      %5061 = vxpose.xlu0.c.b16.cont [4/8] 0, 128
      %5062 = vxpose.xlu0.c.b16.cont [5/8] 0, 128
      %5063 = vxpose.xlu0.c.b16.cont [6/8] 0, 128
      %5064 = vxpose.xlu0.c.b16.cont [7/8] 0, 128
      %5065 = vxpose.xlu0.c.b16.end [8/8] 0, 128
      %v5066 = vpop.trf.xlu0
      %v5067 = vpop.trf.xlu0
      %v5068 = vpop.trf.xlu0
      %v5069 = vpop.trf.xlu0
      %v5070 = vpop.trf.xlu0
      %v5071 = vpop.trf.xlu0
      %v5072 = vpop.trf.xlu0
      %v5073 = vpop.trf.xlu0
      %5074 = vxpose.xlu0.c.b16.start [1/8] %v4739, 128
      %5075 = vxpose.xlu0.c.b16.cont [2/8] 0, 128
      %5076 = vxpose.xlu0.c.b16.cont [3/8] 0, 128
      %5077 = vxpose.xlu0.c.b16.cont [4/8] 0, 128
      %5078 = vxpose.xlu0.c.b16.cont [5/8] 0, 128
      %5079 = vxpose.xlu0.c.b16.cont [6/8] 0, 128
      %5080 = vxpose.xlu0.c.b16.cont [7/8] 0, 128
      %5081 = vxpose.xlu0.c.b16.end [8/8] 0, 128
      %v5082 = vpop.trf.xlu0
      %v5083 = vpop.trf.xlu0
      %v5084 = vpop.trf.xlu0
      %v5085 = vpop.trf.xlu0
      %v5086 = vpop.trf.xlu0
      %v5087 = vpop.trf.xlu0
      %v5088 = vpop.trf.xlu0
      %v5089 = vpop.trf.xlu0
      %5090 = vxpose.xlu0.c.b16.start [1/8] %v4787, 128
      %5091 = vxpose.xlu0.c.b16.cont [2/8] 0, 128
      %5092 = vxpose.xlu0.c.b16.cont [3/8] 0, 128
      %5093 = vxpose.xlu0.c.b16.cont [4/8] 0, 128
      %5094 = vxpose.xlu0.c.b16.cont [5/8] 0, 128
      %5095 = vxpose.xlu0.c.b16.cont [6/8] 0, 128
      %5096 = vxpose.xlu0.c.b16.cont [7/8] 0, 128
      %5097 = vxpose.xlu0.c.b16.end [8/8] 0, 128
      %v5098 = vpop.trf.xlu0
      %v5099 = vpop.trf.xlu0
      %v5100 = vpop.trf.xlu0
      %v5101 = vpop.trf.xlu0
      %v5102 = vpop.trf.xlu0
      %v5103 = vpop.trf.xlu0
      %v5104 = vpop.trf.xlu0
      %v5105 = vpop.trf.xlu0
      %5106 = vxpose.xlu0.c.b16.start [1/8] %v4835, 128
      %5107 = vxpose.xlu0.c.b16.cont [2/8] 0, 128
      %5108 = vxpose.xlu0.c.b16.cont [3/8] 0, 128
      %5109 = vxpose.xlu0.c.b16.cont [4/8] 0, 128
      %5110 = vxpose.xlu0.c.b16.cont [5/8] 0, 128
      %5111 = vxpose.xlu0.c.b16.cont [6/8] 0, 128
      %5112 = vxpose.xlu0.c.b16.cont [7/8] 0, 128
      %5113 = vxpose.xlu0.c.b16.end [8/8] 0, 128
      %v5114 = vpop.trf.xlu0
      %v5115 = vpop.trf.xlu0
      %v5116 = vpop.trf.xlu0
      %v5117 = vpop.trf.xlu0
      %v5118 = vpop.trf.xlu0
      %v5119 = vpop.trf.xlu0
      %v5120 = vpop.trf.xlu0
      %v5121 = vpop.trf.xlu0
      %5122 = vxpose.xlu0.c.b16.start [1/8] %v4883, 128
      %5123 = vxpose.xlu0.c.b16.cont [2/8] 0, 128
      %5124 = vxpose.xlu0.c.b16.cont [3/8] 0, 128
      %5125 = vxpose.xlu0.c.b16.cont [4/8] 0, 128
      %5126 = vxpose.xlu0.c.b16.cont [5/8] 0, 128
      %5127 = vxpose.xlu0.c.b16.cont [6/8] 0, 128
      %5128 = vxpose.xlu0.c.b16.cont [7/8] 0, 128
      %5129 = vxpose.xlu0.c.b16.end [8/8] 0, 128
      %v5130 = vpop.trf.xlu0
      %v5131 = vpop.trf.xlu0
      %v5132 = vpop.trf.xlu0
      %v5133 = vpop.trf.xlu0
      %v5134 = vpop.trf.xlu0
      %v5135 = vpop.trf.xlu0
      %v5136 = vpop.trf.xlu0
      %v5137 = vpop.trf.xlu0
      %5138 = vxpose.xlu0.c.b16.start [1/8] %v4931, 128
      %5139 = vxpose.xlu0.c.b16.cont [2/8] 0, 128
      %5140 = vxpose.xlu0.c.b16.cont [3/8] 0, 128
      %5141 = vxpose.xlu0.c.b16.cont [4/8] 0, 128
      %5142 = vxpose.xlu0.c.b16.cont [5/8] 0, 128
      %5143 = vxpose.xlu0.c.b16.cont [6/8] 0, 128
      %5144 = vxpose.xlu0.c.b16.cont [7/8] 0, 128
      %5145 = vxpose.xlu0.c.b16.end [8/8] 0, 128
      %v5146 = vpop.trf.xlu0
      %v5147 = vpop.trf.xlu0
      %v5148 = vpop.trf.xlu0
      %v5149 = vpop.trf.xlu0
      %v5150 = vpop.trf.xlu0
      %v5151 = vpop.trf.xlu0
      %v5152 = vpop.trf.xlu0
      %v5153 = vpop.trf.xlu0
      %5154 = vxpose.xlu0.c.b16.start [1/8] %v4979, 128
      %5155 = vxpose.xlu0.c.b16.cont [2/8] 0, 128
      %5156 = vxpose.xlu0.c.b16.cont [3/8] 0, 128
      %5157 = vxpose.xlu0.c.b16.cont [4/8] 0, 128
      %5158 = vxpose.xlu0.c.b16.cont [5/8] 0, 128
      %5159 = vxpose.xlu0.c.b16.cont [6/8] 0, 128
      %5160 = vxpose.xlu0.c.b16.cont [7/8] 0, 128
      %5161 = vxpose.xlu0.c.b16.end [8/8] 0, 128
      %v5162 = vpop.trf.xlu0
      %v5163 = vpop.trf.xlu0
      %v5164 = vpop.trf.xlu0
      %v5165 = vpop.trf.xlu0
      %v5166 = vpop.trf.xlu0
      %v5167 = vpop.trf.xlu0
      %v5168 = vpop.trf.xlu0
      %v5169 = vpop.trf.xlu0
      %v5170 = vcombine.low %v5050, %v5114
      %v5172 = vunpack.c.l.s4 1983009808
      %v5173 = vunpack.c.0.s8 %v5172
      %v5174 = vlaneseq
      %v5175 = vshrl.u32 %v5174, 7
      %v5176 = vsub.s32 %v5173, %v5175
      %v5177 = vrot.slane %v5170, %v5176
      %v5178 = vcombine.low %v5082, %v5146
      %v5180 = vunpack.c.l.s4 1983009808
      %v5181 = vunpack.c.0.s8 %v5180
      %v5182 = vlaneseq
      %v5183 = vshrl.u32 %v5182, 7
      %v5184 = vsub.s32 %v5181, %v5183
      %v5185 = vrot.slane %v5178, %v5184
      %v5186 = vcombine.low %v5177, %v5185
      %v5187 = vcombine.high %v5177, %v5185
      %v5189 = vunpack.c.l.s4 1934713408
      %v5190 = vunpack.c.0.s8 %v5189
      %v5191 = vlaneseq
      %v5192 = vshrl.u32 %v5191, 7
      %v5193 = vsub.s32 %v5190, %v5192
      %v5194 = vrot.slane %v5186, %v5193
      %v5196 = vunpack.c.l.s4 1934713408
      %v5197 = vunpack.c.0.s8 %v5196
      %v5198 = vlaneseq
      %v5199 = vshrl.u32 %v5198, 7
      %v5200 = vsub.s32 %v5197, %v5199
      %v5201 = vrot.slane %v5187, %v5200
      %v5202 = vcombine.high %v5194, 0
      %v5203 = vcombine.high %v5201, 0
      %v5204 = vcombine.low %v5066, %v5130
      %v5206 = vunpack.c.l.s4 1983009808
      %v5207 = vunpack.c.0.s8 %v5206
      %v5208 = vlaneseq
      %v5209 = vshrl.u32 %v5208, 7
      %v5210 = vsub.s32 %v5207, %v5209
      %v5211 = vrot.slane %v5204, %v5210
      %v5212 = vcombine.low %v5098, %v5162
      %v5214 = vunpack.c.l.s4 1983009808
      %v5215 = vunpack.c.0.s8 %v5214
      %v5216 = vlaneseq
      %v5217 = vshrl.u32 %v5216, 7
      %v5218 = vsub.s32 %v5215, %v5217
      %v5219 = vrot.slane %v5212, %v5218
      %v5220 = vcombine.low %v5211, %v5219
      %v5221 = vcombine.high %v5211, %v5219
      %v5223 = vunpack.c.l.s4 1934713408
      %v5224 = vunpack.c.0.s8 %v5223
      %v5225 = vlaneseq
      %v5226 = vshrl.u32 %v5225, 7
      %v5227 = vsub.s32 %v5224, %v5226
      %v5228 = vrot.slane %v5220, %v5227
      %v5230 = vunpack.c.l.s4 1934713408
      %v5231 = vunpack.c.0.s8 %v5230
      %v5232 = vlaneseq
      %v5233 = vshrl.u32 %v5232, 7
      %v5234 = vsub.s32 %v5231, %v5233
      %v5235 = vrot.slane %v5221, %v5234
      %v5236 = vcombine.high %v5228, 0
      %v5237 = vcombine.high %v5235, 0
      %v5240 = vpack.i.b16 %v5228, %v5194
      %v5242 = vshrl.u32 %v5194, 16
      %v5243 = vshrl.u32 %v5228, 16
      %v5244 = vpack.i.b16 %v5243, %v5242
      %v5248 = vpack.i.b16 %v5236, %v5202
      %v5250 = vshrl.u32 %v5202, 16
      %v5251 = vshrl.u32 %v5236, 16
      %v5252 = vpack.i.b16 %v5251, %v5250
      %v5256 = vpack.i.b16 %v5235, %v5201
      %v5258 = vshrl.u32 %v5201, 16
      %v5259 = vshrl.u32 %v5235, 16
      %v5260 = vpack.i.b16 %v5259, %v5258
      %v5264 = vpack.i.b16 %v5237, %v5203
      %v5266 = vshrl.u32 %v5203, 16
      %v5267 = vshrl.u32 %v5237, 16
      %v5268 = vpack.i.b16 %v5267, %v5266
      %5270 = vxpose.xlu0.c.b16.start [1/8] %v5240, 128
      %5271 = vxpose.xlu0.c.b16.cont [2/8] 0, 128
      %5272 = vxpose.xlu0.c.b16.cont [3/8] 0, 128
      %5273 = vxpose.xlu0.c.b16.cont [4/8] 0, 128
      %5274 = vxpose.xlu0.c.b16.cont [5/8] 0, 128
      %5275 = vxpose.xlu0.c.b16.cont [6/8] 0, 128
      %5276 = vxpose.xlu0.c.b16.cont [7/8] 0, 128
      %5277 = vxpose.xlu0.c.b16.end [8/8] 0, 128
      %v5278 = vpop.trf.xlu0
      %v5279 = vpop.trf.xlu0
      %v5280 = vpop.trf.xlu0
      %v5281 = vpop.trf.xlu0
      %v5282 = vpop.trf.xlu0
      %v5283 = vpop.trf.xlu0
      %v5284 = vpop.trf.xlu0
      %v5285 = vpop.trf.xlu0
      %5286 = vxpose.xlu0.c.b16.start [1/8] %v5244, 128
      %5287 = vxpose.xlu0.c.b16.cont [2/8] 0, 128
      %5288 = vxpose.xlu0.c.b16.cont [3/8] 0, 128
      %5289 = vxpose.xlu0.c.b16.cont [4/8] 0, 128
      %5290 = vxpose.xlu0.c.b16.cont [5/8] 0, 128
      %5291 = vxpose.xlu0.c.b16.cont [6/8] 0, 128
      %5292 = vxpose.xlu0.c.b16.cont [7/8] 0, 128
      %5293 = vxpose.xlu0.c.b16.end [8/8] 0, 128
      %v5294 = vpop.trf.xlu0
      %v5295 = vpop.trf.xlu0
      %v5296 = vpop.trf.xlu0
      %v5297 = vpop.trf.xlu0
      %v5298 = vpop.trf.xlu0
      %v5299 = vpop.trf.xlu0
      %v5300 = vpop.trf.xlu0
      %v5301 = vpop.trf.xlu0
      %5302 = vxpose.xlu0.c.b16.start [1/8] %v5248, 128
      %5303 = vxpose.xlu0.c.b16.cont [2/8] 0, 128
      %5304 = vxpose.xlu0.c.b16.cont [3/8] 0, 128
      %5305 = vxpose.xlu0.c.b16.cont [4/8] 0, 128
      %5306 = vxpose.xlu0.c.b16.cont [5/8] 0, 128
      %5307 = vxpose.xlu0.c.b16.cont [6/8] 0, 128
      %5308 = vxpose.xlu0.c.b16.cont [7/8] 0, 128
      %5309 = vxpose.xlu0.c.b16.end [8/8] 0, 128
      %v5310 = vpop.trf.xlu0
      %v5311 = vpop.trf.xlu0
      %v5312 = vpop.trf.xlu0
      %v5313 = vpop.trf.xlu0
      %v5314 = vpop.trf.xlu0
      %v5315 = vpop.trf.xlu0
      %v5316 = vpop.trf.xlu0
      %v5317 = vpop.trf.xlu0
      %5318 = vxpose.xlu0.c.b16.start [1/8] %v5252, 128
      %5319 = vxpose.xlu0.c.b16.cont [2/8] 0, 128
      %5320 = vxpose.xlu0.c.b16.cont [3/8] 0, 128
      %5321 = vxpose.xlu0.c.b16.cont [4/8] 0, 128
      %5322 = vxpose.xlu0.c.b16.cont [5/8] 0, 128
      %5323 = vxpose.xlu0.c.b16.cont [6/8] 0, 128
      %5324 = vxpose.xlu0.c.b16.cont [7/8] 0, 128
      %5325 = vxpose.xlu0.c.b16.end [8/8] 0, 128
      %v5326 = vpop.trf.xlu0
      %v5327 = vpop.trf.xlu0
      %v5328 = vpop.trf.xlu0
      %v5329 = vpop.trf.xlu0
      %v5330 = vpop.trf.xlu0
      %v5331 = vpop.trf.xlu0
      %v5332 = vpop.trf.xlu0
      %v5333 = vpop.trf.xlu0
      %5334 = vxpose.xlu0.c.b16.start [1/8] %v5256, 128
      %5335 = vxpose.xlu0.c.b16.cont [2/8] 0, 128
      %5336 = vxpose.xlu0.c.b16.cont [3/8] 0, 128
      %5337 = vxpose.xlu0.c.b16.cont [4/8] 0, 128
      %5338 = vxpose.xlu0.c.b16.cont [5/8] 0, 128
      %5339 = vxpose.xlu0.c.b16.cont [6/8] 0, 128
      %5340 = vxpose.xlu0.c.b16.cont [7/8] 0, 128
      %5341 = vxpose.xlu0.c.b16.end [8/8] 0, 128
      %v5342 = vpop.trf.xlu0
      %v5343 = vpop.trf.xlu0
      %v5344 = vpop.trf.xlu0
      %v5345 = vpop.trf.xlu0
      %v5346 = vpop.trf.xlu0
      %v5347 = vpop.trf.xlu0
      %v5348 = vpop.trf.xlu0
      %v5349 = vpop.trf.xlu0
      %5350 = vxpose.xlu0.c.b16.start [1/8] %v5260, 128
      %5351 = vxpose.xlu0.c.b16.cont [2/8] 0, 128
      %5352 = vxpose.xlu0.c.b16.cont [3/8] 0, 128
      %5353 = vxpose.xlu0.c.b16.cont [4/8] 0, 128
      %5354 = vxpose.xlu0.c.b16.cont [5/8] 0, 128
      %5355 = vxpose.xlu0.c.b16.cont [6/8] 0, 128
      %5356 = vxpose.xlu0.c.b16.cont [7/8] 0, 128
      %5357 = vxpose.xlu0.c.b16.end [8/8] 0, 128
      %v5358 = vpop.trf.xlu0
      %v5359 = vpop.trf.xlu0
      %v5360 = vpop.trf.xlu0
      %v5361 = vpop.trf.xlu0
      %v5362 = vpop.trf.xlu0
      %v5363 = vpop.trf.xlu0
      %v5364 = vpop.trf.xlu0
      %v5365 = vpop.trf.xlu0
      %5366 = vxpose.xlu0.c.b16.start [1/8] %v5264, 128
      %5367 = vxpose.xlu0.c.b16.cont [2/8] 0, 128
      %5368 = vxpose.xlu0.c.b16.cont [3/8] 0, 128
      %5369 = vxpose.xlu0.c.b16.cont [4/8] 0, 128
      %5370 = vxpose.xlu0.c.b16.cont [5/8] 0, 128
      %5371 = vxpose.xlu0.c.b16.cont [6/8] 0, 128
      %5372 = vxpose.xlu0.c.b16.cont [7/8] 0, 128
      %5373 = vxpose.xlu0.c.b16.end [8/8] 0, 128
      %v5374 = vpop.trf.xlu0
      %v5375 = vpop.trf.xlu0
      %v5376 = vpop.trf.xlu0
      %v5377 = vpop.trf.xlu0
      %v5378 = vpop.trf.xlu0
      %v5379 = vpop.trf.xlu0
      %v5380 = vpop.trf.xlu0
      %v5381 = vpop.trf.xlu0
      %5382 = vxpose.xlu0.c.b16.start [1/8] %v5268, 128
      %5383 = vxpose.xlu0.c.b16.cont [2/8] 0, 128
      %5384 = vxpose.xlu0.c.b16.cont [3/8] 0, 128
      %5385 = vxpose.xlu0.c.b16.cont [4/8] 0, 128
      %5386 = vxpose.xlu0.c.b16.cont [5/8] 0, 128
      %5387 = vxpose.xlu0.c.b16.cont [6/8] 0, 128
      %5388 = vxpose.xlu0.c.b16.cont [7/8] 0, 128
      %5389 = vxpose.xlu0.c.b16.end [8/8] 0, 128
      %v5390 = vpop.trf.xlu0
      %v5391 = vpop.trf.xlu0
      %v5392 = vpop.trf.xlu0
      %v5393 = vpop.trf.xlu0
      %v5394 = vpop.trf.xlu0
      %v5395 = vpop.trf.xlu0
      %v5396 = vpop.trf.xlu0
      %v5397 = vpop.trf.xlu0
      %v5398 = vcombine.low %v5278, %v5342
      %v5400 = vunpack.c.l.s4 1983009808
      %v5401 = vunpack.c.0.s8 %v5400
      %v5402 = vlaneseq
      %v5403 = vshrl.u32 %v5402, 7
      %v5404 = vsub.s32 %v5401, %v5403
      %v5405 = vrot.slane %v5398, %v5404
      %v5406 = vcombine.low %v5310, %v5374
      %v5408 = vunpack.c.l.s4 1983009808
      %v5409 = vunpack.c.0.s8 %v5408
      %v5410 = vlaneseq
      %v5411 = vshrl.u32 %v5410, 7
      %v5412 = vsub.s32 %v5409, %v5411
      %v5413 = vrot.slane %v5406, %v5412
      %v5414 = vcombine.low %v5405, %v5413
      %v5415 = vcombine.high %v5405, %v5413
      %v5417 = vunpack.c.l.s4 1934713408
      %v5418 = vunpack.c.0.s8 %v5417
      %v5419 = vlaneseq
      %v5420 = vshrl.u32 %v5419, 7
      %v5421 = vsub.s32 %v5418, %v5420
      %v5422 = vrot.slane %v5414, %v5421
      %v5424 = vunpack.c.l.s4 1934713408
      %v5425 = vunpack.c.0.s8 %v5424
      %v5426 = vlaneseq
      %v5427 = vshrl.u32 %v5426, 7
      %v5428 = vsub.s32 %v5425, %v5427
      %v5429 = vrot.slane %v5415, %v5428
      %v5430 = vcombine.high %v5422, 0
      %v5431 = vcombine.high %v5429, 0
      %v5432 = vcombine.low %v5294, %v5358
      %v5434 = vunpack.c.l.s4 1983009808
      %v5435 = vunpack.c.0.s8 %v5434
      %v5436 = vlaneseq
      %v5437 = vshrl.u32 %v5436, 7
      %v5438 = vsub.s32 %v5435, %v5437
      %v5439 = vrot.slane %v5432, %v5438
      %v5440 = vcombine.low %v5326, %v5390
      %v5442 = vunpack.c.l.s4 1983009808
      %v5443 = vunpack.c.0.s8 %v5442
      %v5444 = vlaneseq
      %v5445 = vshrl.u32 %v5444, 7
      %v5446 = vsub.s32 %v5443, %v5445
      %v5447 = vrot.slane %v5440, %v5446
      %v5448 = vcombine.low %v5439, %v5447
      %v5449 = vcombine.high %v5439, %v5447
      %v5451 = vunpack.c.l.s4 1934713408
      %v5452 = vunpack.c.0.s8 %v5451
      %v5453 = vlaneseq
      %v5454 = vshrl.u32 %v5453, 7
      %v5455 = vsub.s32 %v5452, %v5454
      %v5456 = vrot.slane %v5448, %v5455
      %v5458 = vunpack.c.l.s4 1934713408
      %v5459 = vunpack.c.0.s8 %v5458
      %v5460 = vlaneseq
      %v5461 = vshrl.u32 %v5460, 7
      %v5462 = vsub.s32 %v5459, %v5461
      %v5463 = vrot.slane %v5449, %v5462
      %v5464 = vcombine.high %v5456, 0
      %v5465 = vcombine.high %v5463, 0
      %v5468 = vpack.i.b16 %v5456, %v5422
      %v5469 = vshrl.u32 %v5422, 16
      %v5470 = vshrl.u32 %v5456, 16
      %v5471 = vpack.i.b16 %v5470, %v5469
      %v5474 = vpack.i.b16 %v5464, %v5430
      %v5475 = vshrl.u32 %v5430, 16
      %v5476 = vshrl.u32 %v5464, 16
      %v5477 = vpack.i.b16 %v5476, %v5475
      %v5480 = vpack.i.b16 %v5463, %v5429
      %v5481 = vshrl.u32 %v5429, 16
      %v5482 = vshrl.u32 %v5463, 16
      %v5483 = vpack.i.b16 %v5482, %v5481
      %v5486 = vpack.i.b16 %v5465, %v5431
      %v5487 = vshrl.u32 %v5431, 16
      %v5488 = vshrl.u32 %v5465, 16
      %v5489 = vpack.i.b16 %v5488, %v5487
      %v5491 = vsel %vm503, %v5026, 0
      %v5494 = vsel %vm1331, %v5468, 0
      %5496 = vmatprep.subr.bf16.mxu0 0
      %5497 = vmatpush1.bf16.msra.mxu0 %v5494
      %5498 = vmatprep.subr.bf16.mxu0 0
      %5499 = vmatpush1.bf16.msra.mxu0 0
      %5500 = vmatprep.subr.bf16.mxu0 0
      %5501 = vmatpush1.bf16.msra.mxu0 0
      %5502 = vmatprep.subr.bf16.mxu0 0
      %5503 = vmatpush1.bf16.msra.mxu0 0
      %5504 = vmatprep.subr.bf16.mxu0 0
      %5505 = vmatpush1.bf16.msra.mxu0 0
      %5506 = vmatprep.subr.bf16.mxu0 0
      %5507 = vmatpush1.bf16.msra.mxu0 0
      %5508 = vmatprep.subr.bf16.mxu0 0
      %5509 = vmatpush1.bf16.msra.mxu0 0
      %5510 = vmatprep.subr.bf16.mxu0 0
      %5511 = vmatpush1.bf16.msra.mxu0 0
      %5512 = vmatprep.subr.bf16.mxu0 0
      %5513 = vmatpush1.bf16.msra.mxu0 0
      %5514 = vmatprep.subr.bf16.mxu0 0
      %5515 = vmatpush1.bf16.msra.mxu0 0
      %5516 = vmatprep.subr.bf16.mxu0 0
      %5517 = vmatpush1.bf16.msra.mxu0 0
      %5518 = vmatprep.subr.bf16.mxu0 0
      %5519 = vmatpush1.bf16.msra.mxu0 0
      %5520 = vmatprep.subr.bf16.mxu0 0
      %5521 = vmatpush1.bf16.msra.mxu0 0
      %5522 = vmatprep.subr.bf16.mxu0 0
      %5523 = vmatpush1.bf16.msra.mxu0 0
      %5524 = vmatprep.subr.bf16.mxu0 0
      %5525 = vmatpush1.bf16.msra.mxu0 0
      %5526 = vmatprep.subr.bf16.mxu0 0
      %5527 = vmatpush1.bf16.msra.mxu0 0
      %5528 = vmatprep.mubr.bf16.mxu0 0
      %5529 = vmatmul.mubr.bf16.gmra.mrb[0].mxu0 %v5491
      %v5530 = vpop.f32.mrb[0].mxu0
      %v5531 = vadd.f32 0.0, %v5530
      %v5532 = vpop.f32.mrb[0].mxu0
      %v5533 = vpop.f32.mrb[0].mxu0
      %v5534 = vpop.f32.mrb[0].mxu0
      %5535 = vdwg.mxu0
      %v5537 = vsel %vm503, %v5027, 0
      %v5540 = vsel %vm1331, %v5471, 0
      %5542 = vmatprep.subr.bf16.mxu0 0
      %5543 = vmatpush1.bf16.msra.mxu0 %v5540
      %5544 = vmatprep.subr.bf16.mxu0 0
      %5545 = vmatpush1.bf16.msra.mxu0 0
      %5546 = vmatprep.subr.bf16.mxu0 0
      %5547 = vmatpush1.bf16.msra.mxu0 0
      %5548 = vmatprep.subr.bf16.mxu0 0
      %5549 = vmatpush1.bf16.msra.mxu0 0
      %5550 = vmatprep.subr.bf16.mxu0 0
      %5551 = vmatpush1.bf16.msra.mxu0 0
      %5552 = vmatprep.subr.bf16.mxu0 0
      %5553 = vmatpush1.bf16.msra.mxu0 0
      %5554 = vmatprep.subr.bf16.mxu0 0
      %5555 = vmatpush1.bf16.msra.mxu0 0
      %5556 = vmatprep.subr.bf16.mxu0 0
      %5557 = vmatpush1.bf16.msra.mxu0 0
      %5558 = vmatprep.subr.bf16.mxu0 0
      %5559 = vmatpush1.bf16.msra.mxu0 0
      %5560 = vmatprep.subr.bf16.mxu0 0
      %5561 = vmatpush1.bf16.msra.mxu0 0
      %5562 = vmatprep.subr.bf16.mxu0 0
      %5563 = vmatpush1.bf16.msra.mxu0 0
      %5564 = vmatprep.subr.bf16.mxu0 0
      %5565 = vmatpush1.bf16.msra.mxu0 0
      %5566 = vmatprep.subr.bf16.mxu0 0
      %5567 = vmatpush1.bf16.msra.mxu0 0
      %5568 = vmatprep.subr.bf16.mxu0 0
      %5569 = vmatpush1.bf16.msra.mxu0 0
      %5570 = vmatprep.subr.bf16.mxu0 0
      %5571 = vmatpush1.bf16.msra.mxu0 0
      %5572 = vmatprep.subr.bf16.mxu0 0
      %5573 = vmatpush1.bf16.msra.mxu0 0
      %5574 = vmatprep.mubr.bf16.mxu0 0
      %5575 = vmatmul.mubr.bf16.gmra.mrb[0].mxu0 %v5537
      %v5576 = vpop.f32.mrb[0].mxu0
      %v5577 = vadd.f32 0.0, %v5576
      %v5578 = vpop.f32.mrb[0].mxu0
      %v5579 = vpop.f32.mrb[0].mxu0
      %v5580 = vpop.f32.mrb[0].mxu0
      %5581 = vdwg.mxu0
      %v5583 = vsel %vm503, %v5028, 0
      %v5586 = vsel %vm1331, %v5474, 0
      %5588 = vmatprep.subr.bf16.mxu0 0
      %5589 = vmatpush1.bf16.msra.mxu0 %v5586
      %5590 = vmatprep.subr.bf16.mxu0 0
      %5591 = vmatpush1.bf16.msra.mxu0 0
      %5592 = vmatprep.subr.bf16.mxu0 0
      %5593 = vmatpush1.bf16.msra.mxu0 0
      %5594 = vmatprep.subr.bf16.mxu0 0
      %5595 = vmatpush1.bf16.msra.mxu0 0
      %5596 = vmatprep.subr.bf16.mxu0 0
      %5597 = vmatpush1.bf16.msra.mxu0 0
      %5598 = vmatprep.subr.bf16.mxu0 0
      %5599 = vmatpush1.bf16.msra.mxu0 0
      %5600 = vmatprep.subr.bf16.mxu0 0
      %5601 = vmatpush1.bf16.msra.mxu0 0
      %5602 = vmatprep.subr.bf16.mxu0 0
      %5603 = vmatpush1.bf16.msra.mxu0 0
      %5604 = vmatprep.subr.bf16.mxu0 0
      %5605 = vmatpush1.bf16.msra.mxu0 0
      %5606 = vmatprep.subr.bf16.mxu0 0
      %5607 = vmatpush1.bf16.msra.mxu0 0
      %5608 = vmatprep.subr.bf16.mxu0 0
      %5609 = vmatpush1.bf16.msra.mxu0 0
      %5610 = vmatprep.subr.bf16.mxu0 0
      %5611 = vmatpush1.bf16.msra.mxu0 0
      %5612 = vmatprep.subr.bf16.mxu0 0
      %5613 = vmatpush1.bf16.msra.mxu0 0
      %5614 = vmatprep.subr.bf16.mxu0 0
      %5615 = vmatpush1.bf16.msra.mxu0 0
      %5616 = vmatprep.subr.bf16.mxu0 0
      %5617 = vmatpush1.bf16.msra.mxu0 0
      %5618 = vmatprep.subr.bf16.mxu0 0
      %5619 = vmatpush1.bf16.msra.mxu0 0
      %5620 = vmatprep.mubr.bf16.mxu0 0
      %5621 = vmatmul.mubr.bf16.gmra.mrb[0].mxu0 %v5583
      %v5622 = vpop.f32.mrb[0].mxu0
      %v5623 = vadd.f32 0.0, %v5622
      %v5624 = vpop.f32.mrb[0].mxu0
      %v5625 = vpop.f32.mrb[0].mxu0
      %v5626 = vpop.f32.mrb[0].mxu0
      %5627 = vdwg.mxu0
      %v5629 = vsel %vm503, %v5029, 0
      %v5632 = vsel %vm1331, %v5477, 0
      %5634 = vmatprep.subr.bf16.mxu0 0
      %5635 = vmatpush1.bf16.msra.mxu0 %v5632
      %5636 = vmatprep.subr.bf16.mxu0 0
      %5637 = vmatpush1.bf16.msra.mxu0 0
      %5638 = vmatprep.subr.bf16.mxu0 0
      %5639 = vmatpush1.bf16.msra.mxu0 0
      %5640 = vmatprep.subr.bf16.mxu0 0
      %5641 = vmatpush1.bf16.msra.mxu0 0
      %5642 = vmatprep.subr.bf16.mxu0 0
      %5643 = vmatpush1.bf16.msra.mxu0 0
      %5644 = vmatprep.subr.bf16.mxu0 0
      %5645 = vmatpush1.bf16.msra.mxu0 0
      %5646 = vmatprep.subr.bf16.mxu0 0
      %5647 = vmatpush1.bf16.msra.mxu0 0
      %5648 = vmatprep.subr.bf16.mxu0 0
      %5649 = vmatpush1.bf16.msra.mxu0 0
      %5650 = vmatprep.subr.bf16.mxu0 0
      %5651 = vmatpush1.bf16.msra.mxu0 0
      %5652 = vmatprep.subr.bf16.mxu0 0
      %5653 = vmatpush1.bf16.msra.mxu0 0
      %5654 = vmatprep.subr.bf16.mxu0 0
      %5655 = vmatpush1.bf16.msra.mxu0 0
      %5656 = vmatprep.subr.bf16.mxu0 0
      %5657 = vmatpush1.bf16.msra.mxu0 0
      %5658 = vmatprep.subr.bf16.mxu0 0
      %5659 = vmatpush1.bf16.msra.mxu0 0
      %5660 = vmatprep.subr.bf16.mxu0 0
      %5661 = vmatpush1.bf16.msra.mxu0 0
      %5662 = vmatprep.subr.bf16.mxu0 0
      %5663 = vmatpush1.bf16.msra.mxu0 0
      %5664 = vmatprep.subr.bf16.mxu0 0
      %5665 = vmatpush1.bf16.msra.mxu0 0
      %5666 = vmatprep.mubr.bf16.mxu0 0
      %5667 = vmatmul.mubr.bf16.gmra.mrb[0].mxu0 %v5629
      %v5668 = vpop.f32.mrb[0].mxu0
      %v5669 = vadd.f32 0.0, %v5668
      %v5670 = vpop.f32.mrb[0].mxu0
      %v5671 = vpop.f32.mrb[0].mxu0
      %v5672 = vpop.f32.mrb[0].mxu0
      %5673 = vdwg.mxu0
      %v5675 = vsel %vm503, %v5030, 0
      %v5678 = vsel %vm1331, %v5480, 0
      %5680 = vmatprep.subr.bf16.mxu0 0
      %5681 = vmatpush1.bf16.msra.mxu0 %v5678
      %5682 = vmatprep.subr.bf16.mxu0 0
      %5683 = vmatpush1.bf16.msra.mxu0 0
      %5684 = vmatprep.subr.bf16.mxu0 0
      %5685 = vmatpush1.bf16.msra.mxu0 0
      %5686 = vmatprep.subr.bf16.mxu0 0
      %5687 = vmatpush1.bf16.msra.mxu0 0
      %5688 = vmatprep.subr.bf16.mxu0 0
      %5689 = vmatpush1.bf16.msra.mxu0 0
      %5690 = vmatprep.subr.bf16.mxu0 0
      %5691 = vmatpush1.bf16.msra.mxu0 0
      %5692 = vmatprep.subr.bf16.mxu0 0
      %5693 = vmatpush1.bf16.msra.mxu0 0
      %5694 = vmatprep.subr.bf16.mxu0 0
      %5695 = vmatpush1.bf16.msra.mxu0 0
      %5696 = vmatprep.subr.bf16.mxu0 0
      %5697 = vmatpush1.bf16.msra.mxu0 0
      %5698 = vmatprep.subr.bf16.mxu0 0
      %5699 = vmatpush1.bf16.msra.mxu0 0
      %5700 = vmatprep.subr.bf16.mxu0 0
      %5701 = vmatpush1.bf16.msra.mxu0 0
      %5702 = vmatprep.subr.bf16.mxu0 0
      %5703 = vmatpush1.bf16.msra.mxu0 0
      %5704 = vmatprep.subr.bf16.mxu0 0
      %5705 = vmatpush1.bf16.msra.mxu0 0
      %5706 = vmatprep.subr.bf16.mxu0 0
      %5707 = vmatpush1.bf16.msra.mxu0 0
      %5708 = vmatprep.subr.bf16.mxu0 0
      %5709 = vmatpush1.bf16.msra.mxu0 0
      %5710 = vmatprep.subr.bf16.mxu0 0
      %5711 = vmatpush1.bf16.msra.mxu0 0
      %5712 = vmatprep.mubr.bf16.mxu0 0
      %5713 = vmatmul.mubr.bf16.gmra.mrb[0].mxu0 %v5675
      %v5714 = vpop.f32.mrb[0].mxu0
      %v5715 = vadd.f32 0.0, %v5714
      %v5716 = vpop.f32.mrb[0].mxu0
      %v5717 = vpop.f32.mrb[0].mxu0
      %v5718 = vpop.f32.mrb[0].mxu0
      %5719 = vdwg.mxu0
      %v5721 = vsel %vm503, %v5031, 0
      %v5724 = vsel %vm1331, %v5483, 0
      %5726 = vmatprep.subr.bf16.mxu0 0
      %5727 = vmatpush1.bf16.msra.mxu0 %v5724
      %5728 = vmatprep.subr.bf16.mxu0 0
      %5729 = vmatpush1.bf16.msra.mxu0 0
      %5730 = vmatprep.subr.bf16.mxu0 0
      %5731 = vmatpush1.bf16.msra.mxu0 0
      %5732 = vmatprep.subr.bf16.mxu0 0
      %5733 = vmatpush1.bf16.msra.mxu0 0
      %5734 = vmatprep.subr.bf16.mxu0 0
      %5735 = vmatpush1.bf16.msra.mxu0 0
      %5736 = vmatprep.subr.bf16.mxu0 0
      %5737 = vmatpush1.bf16.msra.mxu0 0
      %5738 = vmatprep.subr.bf16.mxu0 0
      %5739 = vmatpush1.bf16.msra.mxu0 0
      %5740 = vmatprep.subr.bf16.mxu0 0
      %5741 = vmatpush1.bf16.msra.mxu0 0
      %5742 = vmatprep.subr.bf16.mxu0 0
      %5743 = vmatpush1.bf16.msra.mxu0 0
      %5744 = vmatprep.subr.bf16.mxu0 0
      %5745 = vmatpush1.bf16.msra.mxu0 0
      %5746 = vmatprep.subr.bf16.mxu0 0
      %5747 = vmatpush1.bf16.msra.mxu0 0
      %5748 = vmatprep.subr.bf16.mxu0 0
      %5749 = vmatpush1.bf16.msra.mxu0 0
      %5750 = vmatprep.subr.bf16.mxu0 0
      %5751 = vmatpush1.bf16.msra.mxu0 0
      %5752 = vmatprep.subr.bf16.mxu0 0
      %5753 = vmatpush1.bf16.msra.mxu0 0
      %5754 = vmatprep.subr.bf16.mxu0 0
      %5755 = vmatpush1.bf16.msra.mxu0 0
      %5756 = vmatprep.subr.bf16.mxu0 0
      %5757 = vmatpush1.bf16.msra.mxu0 0
      %5758 = vmatprep.mubr.bf16.mxu0 0
      %5759 = vmatmul.mubr.bf16.gmra.mrb[0].mxu0 %v5721
      %v5760 = vpop.f32.mrb[0].mxu0
      %v5761 = vadd.f32 0.0, %v5760
      %v5762 = vpop.f32.mrb[0].mxu0
      %v5763 = vpop.f32.mrb[0].mxu0
      %v5764 = vpop.f32.mrb[0].mxu0
      %5765 = vdwg.mxu0
      %v5767 = vsel %vm503, %v5032, 0
      %v5770 = vsel %vm1331, %v5486, 0
      %5772 = vmatprep.subr.bf16.mxu0 0
      %5773 = vmatpush1.bf16.msra.mxu0 %v5770
      %5774 = vmatprep.subr.bf16.mxu0 0
      %5775 = vmatpush1.bf16.msra.mxu0 0
      %5776 = vmatprep.subr.bf16.mxu0 0
      %5777 = vmatpush1.bf16.msra.mxu0 0
      %5778 = vmatprep.subr.bf16.mxu0 0
      %5779 = vmatpush1.bf16.msra.mxu0 0
      %5780 = vmatprep.subr.bf16.mxu0 0
      %5781 = vmatpush1.bf16.msra.mxu0 0
      %5782 = vmatprep.subr.bf16.mxu0 0
      %5783 = vmatpush1.bf16.msra.mxu0 0
      %5784 = vmatprep.subr.bf16.mxu0 0
      %5785 = vmatpush1.bf16.msra.mxu0 0
      %5786 = vmatprep.subr.bf16.mxu0 0
      %5787 = vmatpush1.bf16.msra.mxu0 0
      %5788 = vmatprep.subr.bf16.mxu0 0
      %5789 = vmatpush1.bf16.msra.mxu0 0
      %5790 = vmatprep.subr.bf16.mxu0 0
      %5791 = vmatpush1.bf16.msra.mxu0 0
      %5792 = vmatprep.subr.bf16.mxu0 0
      %5793 = vmatpush1.bf16.msra.mxu0 0
      %5794 = vmatprep.subr.bf16.mxu0 0
      %5795 = vmatpush1.bf16.msra.mxu0 0
      %5796 = vmatprep.subr.bf16.mxu0 0
      %5797 = vmatpush1.bf16.msra.mxu0 0
      %5798 = vmatprep.subr.bf16.mxu0 0
      %5799 = vmatpush1.bf16.msra.mxu0 0
      %5800 = vmatprep.subr.bf16.mxu0 0
      %5801 = vmatpush1.bf16.msra.mxu0 0
      %5802 = vmatprep.subr.bf16.mxu0 0
      %5803 = vmatpush1.bf16.msra.mxu0 0
      %5804 = vmatprep.mubr.bf16.mxu0 0
      %5805 = vmatmul.mubr.bf16.gmra.mrb[0].mxu0 %v5767
      %v5806 = vpop.f32.mrb[0].mxu0
      %v5807 = vadd.f32 0.0, %v5806
      %v5808 = vpop.f32.mrb[0].mxu0
      %v5809 = vpop.f32.mrb[0].mxu0
      %v5810 = vpop.f32.mrb[0].mxu0
      %5811 = vdwg.mxu0
      %v5813 = vsel %vm503, %v5033, 0
      %v5816 = vsel %vm1331, %v5489, 0
      %5818 = vmatprep.subr.bf16.mxu0 0
      %5819 = vmatpush1.bf16.msra.mxu0 %v5816
      %5820 = vmatprep.subr.bf16.mxu0 0
      %5821 = vmatpush1.bf16.msra.mxu0 0
      %5822 = vmatprep.subr.bf16.mxu0 0
      %5823 = vmatpush1.bf16.msra.mxu0 0
      %5824 = vmatprep.subr.bf16.mxu0 0
      %5825 = vmatpush1.bf16.msra.mxu0 0
      %5826 = vmatprep.subr.bf16.mxu0 0
      %5827 = vmatpush1.bf16.msra.mxu0 0
      %5828 = vmatprep.subr.bf16.mxu0 0
      %5829 = vmatpush1.bf16.msra.mxu0 0
      %5830 = vmatprep.subr.bf16.mxu0 0
      %5831 = vmatpush1.bf16.msra.mxu0 0
      %5832 = vmatprep.subr.bf16.mxu0 0
      %5833 = vmatpush1.bf16.msra.mxu0 0
      %5834 = vmatprep.subr.bf16.mxu0 0
      %5835 = vmatpush1.bf16.msra.mxu0 0
      %5836 = vmatprep.subr.bf16.mxu0 0
      %5837 = vmatpush1.bf16.msra.mxu0 0
      %5838 = vmatprep.subr.bf16.mxu0 0
      %5839 = vmatpush1.bf16.msra.mxu0 0
      %5840 = vmatprep.subr.bf16.mxu0 0
      %5841 = vmatpush1.bf16.msra.mxu0 0
      %5842 = vmatprep.subr.bf16.mxu0 0
      %5843 = vmatpush1.bf16.msra.mxu0 0
      %5844 = vmatprep.subr.bf16.mxu0 0
      %5845 = vmatpush1.bf16.msra.mxu0 0
      %5846 = vmatprep.subr.bf16.mxu0 0
      %5847 = vmatpush1.bf16.msra.mxu0 0
      %5848 = vmatprep.subr.bf16.mxu0 0
      %5849 = vmatpush1.bf16.msra.mxu0 0
      %5850 = vmatprep.mubr.bf16.mxu0 0
      %5851 = vmatmul.mubr.bf16.gmra.mrb[0].mxu0 %v5813
      %v5852 = vpop.f32.mrb[0].mxu0
      %v5853 = vadd.f32 0.0, %v5852
      %v5854 = vpop.f32.mrb[0].mxu0
      %v5855 = vpop.f32.mrb[0].mxu0
      %v5856 = vpop.f32.mrb[0].mxu0
      %5857 = vdwg.mxu0
      %5858 = vxpose.xlu0.b32.start [1/16] %v5531, 128
      %5859 = vxpose.xlu0.b32.cont [2/16] 0.0, 128
      %5860 = vxpose.xlu0.b32.cont [3/16] 0.0, 128
      %5861 = vxpose.xlu0.b32.cont [4/16] 0.0, 128
      %5862 = vxpose.xlu0.b32.cont [5/16] 0.0, 128
      %5863 = vxpose.xlu0.b32.cont [6/16] 0.0, 128
      %5864 = vxpose.xlu0.b32.cont [7/16] 0.0, 128
      %5865 = vxpose.xlu0.b32.cont [8/16] 0.0, 128
      %5866 = vxpose.xlu0.b32.cont [9/16] 0.0, 128
      %5867 = vxpose.xlu0.b32.cont [10/16] 0.0, 128
      %5868 = vxpose.xlu0.b32.cont [11/16] 0.0, 128
      %5869 = vxpose.xlu0.b32.cont [12/16] 0.0, 128
      %5870 = vxpose.xlu0.b32.cont [13/16] 0.0, 128
      %5871 = vxpose.xlu0.b32.cont [14/16] 0.0, 128
      %5872 = vxpose.xlu0.b32.cont [15/16] 0.0, 128
      %5873 = vxpose.xlu0.b32.end [16/16] 0.0, 128
      %v5874 = vpop.trf.xlu0
      %v5875 = vpop.trf.xlu0
      %v5876 = vpop.trf.xlu0
      %v5877 = vpop.trf.xlu0
      %v5878 = vpop.trf.xlu0
      %v5879 = vpop.trf.xlu0
      %v5880 = vpop.trf.xlu0
      %v5881 = vpop.trf.xlu0
      %v5882 = vpop.trf.xlu0
      %v5883 = vpop.trf.xlu0
      %v5884 = vpop.trf.xlu0
      %v5885 = vpop.trf.xlu0
      %v5886 = vpop.trf.xlu0
      %v5887 = vpop.trf.xlu0
      %v5888 = vpop.trf.xlu0
      %v5889 = vpop.trf.xlu0
      %5890 = vxpose.xlu0.b32.start [1/16] %v5577, 128
      %5891 = vxpose.xlu0.b32.cont [2/16] 0.0, 128
      %5892 = vxpose.xlu0.b32.cont [3/16] 0.0, 128
      %5893 = vxpose.xlu0.b32.cont [4/16] 0.0, 128
      %5894 = vxpose.xlu0.b32.cont [5/16] 0.0, 128
      %5895 = vxpose.xlu0.b32.cont [6/16] 0.0, 128
      %5896 = vxpose.xlu0.b32.cont [7/16] 0.0, 128
      %5897 = vxpose.xlu0.b32.cont [8/16] 0.0, 128
      %5898 = vxpose.xlu0.b32.cont [9/16] 0.0, 128
      %5899 = vxpose.xlu0.b32.cont [10/16] 0.0, 128
      %5900 = vxpose.xlu0.b32.cont [11/16] 0.0, 128
      %5901 = vxpose.xlu0.b32.cont [12/16] 0.0, 128
      %5902 = vxpose.xlu0.b32.cont [13/16] 0.0, 128
      %5903 = vxpose.xlu0.b32.cont [14/16] 0.0, 128
      %5904 = vxpose.xlu0.b32.cont [15/16] 0.0, 128
      %5905 = vxpose.xlu0.b32.end [16/16] 0.0, 128
      %v5906 = vpop.trf.xlu0
      %v5907 = vpop.trf.xlu0
      %v5908 = vpop.trf.xlu0
      %v5909 = vpop.trf.xlu0
      %v5910 = vpop.trf.xlu0
      %v5911 = vpop.trf.xlu0
      %v5912 = vpop.trf.xlu0
      %v5913 = vpop.trf.xlu0
      %v5914 = vpop.trf.xlu0
      %v5915 = vpop.trf.xlu0
      %v5916 = vpop.trf.xlu0
      %v5917 = vpop.trf.xlu0
      %v5918 = vpop.trf.xlu0
      %v5919 = vpop.trf.xlu0
      %v5920 = vpop.trf.xlu0
      %v5921 = vpop.trf.xlu0
      %5922 = vxpose.xlu0.b32.start [1/16] %v5623, 128
      %5923 = vxpose.xlu0.b32.cont [2/16] 0.0, 128
      %5924 = vxpose.xlu0.b32.cont [3/16] 0.0, 128
      %5925 = vxpose.xlu0.b32.cont [4/16] 0.0, 128
      %5926 = vxpose.xlu0.b32.cont [5/16] 0.0, 128
      %5927 = vxpose.xlu0.b32.cont [6/16] 0.0, 128
      %5928 = vxpose.xlu0.b32.cont [7/16] 0.0, 128
      %5929 = vxpose.xlu0.b32.cont [8/16] 0.0, 128
      %5930 = vxpose.xlu0.b32.cont [9/16] 0.0, 128
      %5931 = vxpose.xlu0.b32.cont [10/16] 0.0, 128
      %5932 = vxpose.xlu0.b32.cont [11/16] 0.0, 128
      %5933 = vxpose.xlu0.b32.cont [12/16] 0.0, 128
      %5934 = vxpose.xlu0.b32.cont [13/16] 0.0, 128
      %5935 = vxpose.xlu0.b32.cont [14/16] 0.0, 128
      %5936 = vxpose.xlu0.b32.cont [15/16] 0.0, 128
      %5937 = vxpose.xlu0.b32.end [16/16] 0.0, 128
      %v5938 = vpop.trf.xlu0
      %v5939 = vpop.trf.xlu0
      %v5940 = vpop.trf.xlu0
      %v5941 = vpop.trf.xlu0
      %v5942 = vpop.trf.xlu0
      %v5943 = vpop.trf.xlu0
      %v5944 = vpop.trf.xlu0
      %v5945 = vpop.trf.xlu0
      %v5946 = vpop.trf.xlu0
      %v5947 = vpop.trf.xlu0
      %v5948 = vpop.trf.xlu0
      %v5949 = vpop.trf.xlu0
      %v5950 = vpop.trf.xlu0
      %v5951 = vpop.trf.xlu0
      %v5952 = vpop.trf.xlu0
      %v5953 = vpop.trf.xlu0
      %5954 = vxpose.xlu0.b32.start [1/16] %v5669, 128
      %5955 = vxpose.xlu0.b32.cont [2/16] 0.0, 128
      %5956 = vxpose.xlu0.b32.cont [3/16] 0.0, 128
      %5957 = vxpose.xlu0.b32.cont [4/16] 0.0, 128
      %5958 = vxpose.xlu0.b32.cont [5/16] 0.0, 128
      %5959 = vxpose.xlu0.b32.cont [6/16] 0.0, 128
      %5960 = vxpose.xlu0.b32.cont [7/16] 0.0, 128
      %5961 = vxpose.xlu0.b32.cont [8/16] 0.0, 128
      %5962 = vxpose.xlu0.b32.cont [9/16] 0.0, 128
      %5963 = vxpose.xlu0.b32.cont [10/16] 0.0, 128
      %5964 = vxpose.xlu0.b32.cont [11/16] 0.0, 128
      %5965 = vxpose.xlu0.b32.cont [12/16] 0.0, 128
      %5966 = vxpose.xlu0.b32.cont [13/16] 0.0, 128
      %5967 = vxpose.xlu0.b32.cont [14/16] 0.0, 128
      %5968 = vxpose.xlu0.b32.cont [15/16] 0.0, 128
      %5969 = vxpose.xlu0.b32.end [16/16] 0.0, 128
      %v5970 = vpop.trf.xlu0
      %v5971 = vpop.trf.xlu0
      %v5972 = vpop.trf.xlu0
      %v5973 = vpop.trf.xlu0
      %v5974 = vpop.trf.xlu0
      %v5975 = vpop.trf.xlu0
      %v5976 = vpop.trf.xlu0
      %v5977 = vpop.trf.xlu0
      %v5978 = vpop.trf.xlu0
      %v5979 = vpop.trf.xlu0
      %v5980 = vpop.trf.xlu0
      %v5981 = vpop.trf.xlu0
      %v5982 = vpop.trf.xlu0
      %v5983 = vpop.trf.xlu0
      %v5984 = vpop.trf.xlu0
      %v5985 = vpop.trf.xlu0
      %5986 = vxpose.xlu0.b32.start [1/16] %v5715, 128
      %5987 = vxpose.xlu0.b32.cont [2/16] 0.0, 128
      %5988 = vxpose.xlu0.b32.cont [3/16] 0.0, 128
      %5989 = vxpose.xlu0.b32.cont [4/16] 0.0, 128
      %5990 = vxpose.xlu0.b32.cont [5/16] 0.0, 128
      %5991 = vxpose.xlu0.b32.cont [6/16] 0.0, 128
      %5992 = vxpose.xlu0.b32.cont [7/16] 0.0, 128
      %5993 = vxpose.xlu0.b32.cont [8/16] 0.0, 128
      %5994 = vxpose.xlu0.b32.cont [9/16] 0.0, 128
      %5995 = vxpose.xlu0.b32.cont [10/16] 0.0, 128
      %5996 = vxpose.xlu0.b32.cont [11/16] 0.0, 128
      %5997 = vxpose.xlu0.b32.cont [12/16] 0.0, 128
      %5998 = vxpose.xlu0.b32.cont [13/16] 0.0, 128
      %5999 = vxpose.xlu0.b32.cont [14/16] 0.0, 128
      %6000 = vxpose.xlu0.b32.cont [15/16] 0.0, 128
      %6001 = vxpose.xlu0.b32.end [16/16] 0.0, 128
      %v6002 = vpop.trf.xlu0
      %v6003 = vpop.trf.xlu0
      %v6004 = vpop.trf.xlu0
      %v6005 = vpop.trf.xlu0
      %v6006 = vpop.trf.xlu0
      %v6007 = vpop.trf.xlu0
      %v6008 = vpop.trf.xlu0
      %v6009 = vpop.trf.xlu0
      %v6010 = vpop.trf.xlu0
      %v6011 = vpop.trf.xlu0
      %v6012 = vpop.trf.xlu0
      %v6013 = vpop.trf.xlu0
      %v6014 = vpop.trf.xlu0
      %v6015 = vpop.trf.xlu0
      %v6016 = vpop.trf.xlu0
      %v6017 = vpop.trf.xlu0
      %6018 = vxpose.xlu0.b32.start [1/16] %v5761, 128
      %6019 = vxpose.xlu0.b32.cont [2/16] 0.0, 128
      %6020 = vxpose.xlu0.b32.cont [3/16] 0.0, 128
      %6021 = vxpose.xlu0.b32.cont [4/16] 0.0, 128
      %6022 = vxpose.xlu0.b32.cont [5/16] 0.0, 128
      %6023 = vxpose.xlu0.b32.cont [6/16] 0.0, 128
      %6024 = vxpose.xlu0.b32.cont [7/16] 0.0, 128
      %6025 = vxpose.xlu0.b32.cont [8/16] 0.0, 128
      %6026 = vxpose.xlu0.b32.cont [9/16] 0.0, 128
      %6027 = vxpose.xlu0.b32.cont [10/16] 0.0, 128
      %6028 = vxpose.xlu0.b32.cont [11/16] 0.0, 128
      %6029 = vxpose.xlu0.b32.cont [12/16] 0.0, 128
      %6030 = vxpose.xlu0.b32.cont [13/16] 0.0, 128
      %6031 = vxpose.xlu0.b32.cont [14/16] 0.0, 128
      %6032 = vxpose.xlu0.b32.cont [15/16] 0.0, 128
      %6033 = vxpose.xlu0.b32.end [16/16] 0.0, 128
      %v6034 = vpop.trf.xlu0
      %v6035 = vpop.trf.xlu0
      %v6036 = vpop.trf.xlu0
      %v6037 = vpop.trf.xlu0
      %v6038 = vpop.trf.xlu0
      %v6039 = vpop.trf.xlu0
      %v6040 = vpop.trf.xlu0
      %v6041 = vpop.trf.xlu0
      %v6042 = vpop.trf.xlu0
      %v6043 = vpop.trf.xlu0
      %v6044 = vpop.trf.xlu0
      %v6045 = vpop.trf.xlu0
      %v6046 = vpop.trf.xlu0
      %v6047 = vpop.trf.xlu0
      %v6048 = vpop.trf.xlu0
      %v6049 = vpop.trf.xlu0
      %6050 = vxpose.xlu0.b32.start [1/16] %v5807, 128
      %6051 = vxpose.xlu0.b32.cont [2/16] 0.0, 128
      %6052 = vxpose.xlu0.b32.cont [3/16] 0.0, 128
      %6053 = vxpose.xlu0.b32.cont [4/16] 0.0, 128
      %6054 = vxpose.xlu0.b32.cont [5/16] 0.0, 128
      %6055 = vxpose.xlu0.b32.cont [6/16] 0.0, 128
      %6056 = vxpose.xlu0.b32.cont [7/16] 0.0, 128
      %6057 = vxpose.xlu0.b32.cont [8/16] 0.0, 128
      %6058 = vxpose.xlu0.b32.cont [9/16] 0.0, 128
      %6059 = vxpose.xlu0.b32.cont [10/16] 0.0, 128
      %6060 = vxpose.xlu0.b32.cont [11/16] 0.0, 128
      %6061 = vxpose.xlu0.b32.cont [12/16] 0.0, 128
      %6062 = vxpose.xlu0.b32.cont [13/16] 0.0, 128
      %6063 = vxpose.xlu0.b32.cont [14/16] 0.0, 128
      %6064 = vxpose.xlu0.b32.cont [15/16] 0.0, 128
      %6065 = vxpose.xlu0.b32.end [16/16] 0.0, 128
      %v6066 = vpop.trf.xlu0
      %v6067 = vpop.trf.xlu0
      %v6068 = vpop.trf.xlu0
      %v6069 = vpop.trf.xlu0
      %v6070 = vpop.trf.xlu0
      %v6071 = vpop.trf.xlu0
      %v6072 = vpop.trf.xlu0
      %v6073 = vpop.trf.xlu0
      %v6074 = vpop.trf.xlu0
      %v6075 = vpop.trf.xlu0
      %v6076 = vpop.trf.xlu0
      %v6077 = vpop.trf.xlu0
      %v6078 = vpop.trf.xlu0
      %v6079 = vpop.trf.xlu0
      %v6080 = vpop.trf.xlu0
      %v6081 = vpop.trf.xlu0
      %6082 = vxpose.xlu0.b32.start [1/16] %v5853, 128
      %6083 = vxpose.xlu0.b32.cont [2/16] 0.0, 128
      %6084 = vxpose.xlu0.b32.cont [3/16] 0.0, 128
      %6085 = vxpose.xlu0.b32.cont [4/16] 0.0, 128
      %6086 = vxpose.xlu0.b32.cont [5/16] 0.0, 128
      %6087 = vxpose.xlu0.b32.cont [6/16] 0.0, 128
      %6088 = vxpose.xlu0.b32.cont [7/16] 0.0, 128
      %6089 = vxpose.xlu0.b32.cont [8/16] 0.0, 128
      %6090 = vxpose.xlu0.b32.cont [9/16] 0.0, 128
      %6091 = vxpose.xlu0.b32.cont [10/16] 0.0, 128
      %6092 = vxpose.xlu0.b32.cont [11/16] 0.0, 128
      %6093 = vxpose.xlu0.b32.cont [12/16] 0.0, 128
      %6094 = vxpose.xlu0.b32.cont [13/16] 0.0, 128
      %6095 = vxpose.xlu0.b32.cont [14/16] 0.0, 128
      %6096 = vxpose.xlu0.b32.cont [15/16] 0.0, 128
      %6097 = vxpose.xlu0.b32.end [16/16] 0.0, 128
      %v6098 = vpop.trf.xlu0
      %v6099 = vpop.trf.xlu0
      %v6100 = vpop.trf.xlu0
      %v6101 = vpop.trf.xlu0
      %v6102 = vpop.trf.xlu0
      %v6103 = vpop.trf.xlu0
      %v6104 = vpop.trf.xlu0
      %v6105 = vpop.trf.xlu0
      %v6106 = vpop.trf.xlu0
      %v6107 = vpop.trf.xlu0
      %v6108 = vpop.trf.xlu0
      %v6109 = vpop.trf.xlu0
      %v6110 = vpop.trf.xlu0
      %v6111 = vpop.trf.xlu0
      %v6112 = vpop.trf.xlu0
      %v6113 = vpop.trf.xlu0
      %v6114 = vcombine.low %v5874, %v5938
      %v6115 = vcombine.high %v5874, %v5938
      %v6117 = vunpack.c.l.s4 1983009808
      %v6118 = vunpack.c.0.s8 %v6117
      %v6119 = vlaneseq
      %v6120 = vshrl.u32 %v6119, 7
      %v6121 = vsub.s32 %v6118, %v6120
      %v6122 = vrot.slane %v6114, %v6121
      %v6124 = vunpack.c.l.s4 1983009808
      %v6125 = vunpack.c.0.s8 %v6124
      %v6126 = vlaneseq
      %v6127 = vshrl.u32 %v6126, 7
      %v6128 = vsub.s32 %v6125, %v6127
      %v6129 = vrot.slane %v6115, %v6128
      %v6130 = vcombine.low %v5906, %v5970
      %v6131 = vcombine.high %v5906, %v5970
      %v6133 = vunpack.c.l.s4 1983009808
      %v6134 = vunpack.c.0.s8 %v6133
      %v6135 = vlaneseq
      %v6136 = vshrl.u32 %v6135, 7
      %v6137 = vsub.s32 %v6134, %v6136
      %v6138 = vrot.slane %v6130, %v6137
      %v6140 = vunpack.c.l.s4 1983009808
      %v6141 = vunpack.c.0.s8 %v6140
      %v6142 = vlaneseq
      %v6143 = vshrl.u32 %v6142, 7
      %v6144 = vsub.s32 %v6141, %v6143
      %v6145 = vrot.slane %v6131, %v6144
      %v6146 = vcombine.low %v6002, %v6066
      %v6147 = vcombine.high %v6002, %v6066
      %v6149 = vunpack.c.l.s4 1983009808
      %v6150 = vunpack.c.0.s8 %v6149
      %v6151 = vlaneseq
      %v6152 = vshrl.u32 %v6151, 7
      %v6153 = vsub.s32 %v6150, %v6152
      %v6154 = vrot.slane %v6146, %v6153
      %v6156 = vunpack.c.l.s4 1983009808
      %v6157 = vunpack.c.0.s8 %v6156
      %v6158 = vlaneseq
      %v6159 = vshrl.u32 %v6158, 7
      %v6160 = vsub.s32 %v6157, %v6159
      %v6161 = vrot.slane %v6147, %v6160
      %v6162 = vcombine.low %v6034, %v6098
      %v6163 = vcombine.high %v6034, %v6098
      %v6165 = vunpack.c.l.s4 1983009808
      %v6166 = vunpack.c.0.s8 %v6165
      %v6167 = vlaneseq
      %v6168 = vshrl.u32 %v6167, 7
      %v6169 = vsub.s32 %v6166, %v6168
      %v6170 = vrot.slane %v6162, %v6169
      %v6172 = vunpack.c.l.s4 1983009808
      %v6173 = vunpack.c.0.s8 %v6172
      %v6174 = vlaneseq
      %v6175 = vshrl.u32 %v6174, 7
      %v6176 = vsub.s32 %v6173, %v6175
      %v6177 = vrot.slane %v6163, %v6176
      %v6178 = vcombine.low %v6122, %v6138
      %v6179 = vcombine.high %v6122, %v6138
      %v6181 = vunpack.c.l.s4 1934713408
      %v6182 = vunpack.c.0.s8 %v6181
      %v6183 = vlaneseq
      %v6184 = vshrl.u32 %v6183, 7
      %v6185 = vsub.s32 %v6182, %v6184
      %v6186 = vrot.slane %v6178, %v6185
      %v6188 = vunpack.c.l.s4 1934713408
      %v6189 = vunpack.c.0.s8 %v6188
      %v6190 = vlaneseq
      %v6191 = vshrl.u32 %v6190, 7
      %v6192 = vsub.s32 %v6189, %v6191
      %v6193 = vrot.slane %v6179, %v6192
      %v6194 = vcombine.low %v6129, %v6145
      %v6195 = vcombine.high %v6129, %v6145
      %v6197 = vunpack.c.l.s4 1934713408
      %v6198 = vunpack.c.0.s8 %v6197
      %v6199 = vlaneseq
      %v6200 = vshrl.u32 %v6199, 7
      %v6201 = vsub.s32 %v6198, %v6200
      %v6202 = vrot.slane %v6194, %v6201
      %v6204 = vunpack.c.l.s4 1934713408
      %v6205 = vunpack.c.0.s8 %v6204
      %v6206 = vlaneseq
      %v6207 = vshrl.u32 %v6206, 7
      %v6208 = vsub.s32 %v6205, %v6207
      %v6209 = vrot.slane %v6195, %v6208
      %v6210 = vcombine.low %v6154, %v6170
      %v6211 = vcombine.high %v6154, %v6170
      %v6213 = vunpack.c.l.s4 1934713408
      %v6214 = vunpack.c.0.s8 %v6213
      %v6215 = vlaneseq
      %v6216 = vshrl.u32 %v6215, 7
      %v6217 = vsub.s32 %v6214, %v6216
      %v6218 = vrot.slane %v6210, %v6217
      %v6220 = vunpack.c.l.s4 1934713408
      %v6221 = vunpack.c.0.s8 %v6220
      %v6222 = vlaneseq
      %v6223 = vshrl.u32 %v6222, 7
      %v6224 = vsub.s32 %v6221, %v6223
      %v6225 = vrot.slane %v6211, %v6224
      %v6226 = vcombine.low %v6161, %v6177
      %v6227 = vcombine.high %v6161, %v6177
      %v6229 = vunpack.c.l.s4 1934713408
      %v6230 = vunpack.c.0.s8 %v6229
      %v6231 = vlaneseq
      %v6232 = vshrl.u32 %v6231, 7
      %v6233 = vsub.s32 %v6230, %v6232
      %v6234 = vrot.slane %v6226, %v6233
      %v6236 = vunpack.c.l.s4 1934713408
      %v6237 = vunpack.c.0.s8 %v6236
      %v6238 = vlaneseq
      %v6239 = vshrl.u32 %v6238, 7
      %v6240 = vsub.s32 %v6237, %v6239
      %v6241 = vrot.slane %v6227, %v6240
      %v6242 = vcombine.low %v6186, %v6218
      %v6243 = vcombine.high %v6186, %v6218
      %v6244 = vcombine.low %v6193, %v6225
      %v6245 = vcombine.high %v6193, %v6225
      %v6246 = vcombine.low %v6202, %v6234
      %v6247 = vcombine.high %v6202, %v6234
      %v6248 = vcombine.low %v6209, %v6241
      %v6249 = vcombine.high %v6209, %v6241
      %v6250 = vpack.c.bf16 %v4733, %v4685
      %v6251 = vpack.c.bf16 %v4829, %v4781
      %v6252 = vpack.c.bf16 %v4925, %v4877
      %v6253 = vpack.c.bf16 %v5021, %v4973
      %v6254 = vld [vmem:[%s7] sm:$0xf]
      %v6256 = vsel %vm503, %v6250, 0
      %v6259 = vsel %vm503, %v6251, 0
      %v6262 = vsel %vm503, %v6252, 0
      %v6265 = vsel %vm503, %v6253, 0
      %v6268 = vsel %vm1331, %v6254, 0
      %6270 = vmatprep.subr.bf16.mxu0 0
      %6271 = vmatpush1.bf16.msra.mxu0 %v6268
      %6272 = vmatprep.subr.bf16.mxu0 0
      %6273 = vmatpush1.bf16.msra.mxu0 0
      %6274 = vmatprep.subr.bf16.mxu0 0
      %6275 = vmatpush1.bf16.msra.mxu0 0
      %6276 = vmatprep.subr.bf16.mxu0 0
      %6277 = vmatpush1.bf16.msra.mxu0 0
      %6278 = vmatprep.subr.bf16.mxu0 0
      %6279 = vmatpush1.bf16.msra.mxu0 0
      %6280 = vmatprep.subr.bf16.mxu0 0
      %6281 = vmatpush1.bf16.msra.mxu0 0
      %6282 = vmatprep.subr.bf16.mxu0 0
      %6283 = vmatpush1.bf16.msra.mxu0 0
      %6284 = vmatprep.subr.bf16.mxu0 0
      %6285 = vmatpush1.bf16.msra.mxu0 0
      %6286 = vmatprep.subr.bf16.mxu0 0
      %6287 = vmatpush1.bf16.msra.mxu0 0
      %6288 = vmatprep.subr.bf16.mxu0 0
      %6289 = vmatpush1.bf16.msra.mxu0 0
      %6290 = vmatprep.subr.bf16.mxu0 0
      %6291 = vmatpush1.bf16.msra.mxu0 0
      %6292 = vmatprep.subr.bf16.mxu0 0
      %6293 = vmatpush1.bf16.msra.mxu0 0
      %6294 = vmatprep.subr.bf16.mxu0 0
      %6295 = vmatpush1.bf16.msra.mxu0 0
      %6296 = vmatprep.subr.bf16.mxu0 0
      %6297 = vmatpush1.bf16.msra.mxu0 0
      %6298 = vmatprep.subr.bf16.mxu0 0
      %6299 = vmatpush1.bf16.msra.mxu0 0
      %6300 = vmatprep.subr.bf16.mxu0 0
      %6301 = vmatpush1.bf16.msra.mxu0 0
      %6302 = vmatprep.mubr.bf16.mxu0 0
      %6303 = vmatmul.mubr.bf16.gmra.mrb[0].mxu0 %v6256
      %v6304 = vpop.f32.mrb[0].mxu0
      %v6305 = vadd.f32 0.0, %v6304
      %v6306 = vpop.f32.mrb[0].mxu0
      %v6307 = vpop.f32.mrb[0].mxu0
      %v6308 = vadd.f32 0.0, %v6307
      %v6309 = vpop.f32.mrb[0].mxu0
      %6310 = vmatprep.mubr.bf16.mxu0 0
      %6311 = vmatmul.mubr.bf16.gmra.mrb[0].mxu0 %v6259
      %v6312 = vpop.f32.mrb[0].mxu0
      %v6313 = vadd.f32 0.0, %v6312
      %v6314 = vpop.f32.mrb[0].mxu0
      %v6315 = vpop.f32.mrb[0].mxu0
      %v6316 = vadd.f32 0.0, %v6315
      %v6317 = vpop.f32.mrb[0].mxu0
      %6318 = vmatprep.mubr.bf16.mxu0 0
      %6319 = vmatmul.mubr.bf16.gmra.mrb[0].mxu0 %v6262
      %v6320 = vpop.f32.mrb[0].mxu0
      %v6321 = vadd.f32 0.0, %v6320
      %v6322 = vpop.f32.mrb[0].mxu0
      %v6323 = vpop.f32.mrb[0].mxu0
      %v6324 = vadd.f32 0.0, %v6323
      %v6325 = vpop.f32.mrb[0].mxu0
      %6326 = vmatprep.mubr.bf16.mxu0 0
      %6327 = vmatmul.mubr.bf16.gmra.mrb[0].mxu0 %v6265
      %v6328 = vpop.f32.mrb[0].mxu0
      %v6329 = vadd.f32 0.0, %v6328
      %v6330 = vpop.f32.mrb[0].mxu0
      %v6331 = vpop.f32.mrb[0].mxu0
      %v6332 = vadd.f32 0.0, %v6331
      %v6333 = vpop.f32.mrb[0].mxu0
      %6334 = vdwg.mxu0
      %6335 = vrot.lane.b32.xlu0 %v463, 112
      %v6336 = vpop.permute.xlu0 %6335
      %6337 = vrot.lane.b32.xlu0 %v464, 112
      %v6338 = vpop.permute.xlu0 %6337
      %6339 = vrot.lane.b32.xlu0 %v465, 112
      %v6340 = vpop.permute.xlu0 %6339
      %6341 = vrot.lane.b32.xlu0 %v466, 112
      %v6342 = vpop.permute.xlu0 %6341
      %6343 = vrot.lane.b32.xlu0 %v463, 80
      %v6344 = vpop.permute.xlu0 %6343
      %6345 = vrot.lane.b32.xlu0 %v464, 80
      %v6346 = vpop.permute.xlu0 %6345
      %6347 = vrot.lane.b32.xlu0 %v465, 80
      %v6348 = vpop.permute.xlu0 %6347
      %6349 = vrot.lane.b32.xlu0 %v466, 80
      %v6350 = vpop.permute.xlu0 %6349
      %v6352 = vsel %vm503, %v6336, 0
      %v6355 = vsel %vm503, %v6338, 0
      %v6358 = vsel %vm503, %v6340, 0
      %v6361 = vsel %vm503, %v6342, 0
      %v6364 = vsel %vm503, %v6344, 0
      %v6367 = vsel %vm503, %v6346, 0
      %v6370 = vsel %vm503, %v6348, 0
      %v6373 = vsel %vm503, %v6350, 0
      %6375 = vmatprep.subr.bf16.mxu0 0
      %6376 = vmatpush1.bf16.xpose.msra.mxu0 %v6364
      %6377 = vmatprep.subr.bf16.mxu0 0
      %6378 = vmatpush1.bf16.xpose.msra.mxu0 %v6367
      %6379 = vmatprep.subr.bf16.mxu0 0
      %6380 = vmatpush1.bf16.xpose.msra.mxu0 %v6370
      %6381 = vmatprep.subr.bf16.mxu0 0
      %6382 = vmatpush1.bf16.xpose.msra.mxu0 %v6373
      %6383 = vmatprep.subr.bf16.mxu0 0
      %6384 = vmatpush1.bf16.xpose.msra.mxu0 0
      %6385 = vmatprep.subr.bf16.mxu0 0
      %6386 = vmatpush1.bf16.xpose.msra.mxu0 0
      %6387 = vmatprep.subr.bf16.mxu0 0
      %6388 = vmatpush1.bf16.xpose.msra.mxu0 0
      %6389 = vmatprep.subr.bf16.mxu0 0
      %6390 = vmatpush1.bf16.xpose.msra.mxu0 0
      %6391 = vmatprep.subr.bf16.mxu0 0
      %6392 = vmatpush1.bf16.xpose.msra.mxu0 0
      %6393 = vmatprep.subr.bf16.mxu0 0
      %6394 = vmatpush1.bf16.xpose.msra.mxu0 0
      %6395 = vmatprep.subr.bf16.mxu0 0
      %6396 = vmatpush1.bf16.xpose.msra.mxu0 0
      %6397 = vmatprep.subr.bf16.mxu0 0
      %6398 = vmatpush1.bf16.xpose.msra.mxu0 0
      %6399 = vmatprep.subr.bf16.mxu0 0
      %6400 = vmatpush1.bf16.xpose.msra.mxu0 0
      %6401 = vmatprep.subr.bf16.mxu0 0
      %6402 = vmatpush1.bf16.xpose.msra.mxu0 0
      %6403 = vmatprep.subr.bf16.mxu0 0
      %6404 = vmatpush1.bf16.xpose.msra.mxu0 0
      %6405 = vmatprep.subr.bf16.mxu0 0
      %6406 = vmatpush1.bf16.xpose.msra.mxu0 0
      %6407 = vmatprep.mubr.bf16.mxu0 0
      %6408 = vmatmul.mubr.bf16.gmra.mrb[0].mxu0 %v6352
      %v6409 = vpop.f32.mrb[0].mxu0
      %v6410 = vadd.f32 %v6305, %v6409
      %v6411 = vpop.f32.mrb[0].mxu0
      %v6412 = vpop.f32.mrb[0].mxu0
      %v6413 = vadd.f32 %v6308, %v6412
      %v6414 = vpop.f32.mrb[0].mxu0
      %6415 = vmatprep.mubr.bf16.mxu0 0
      %6416 = vmatmul.mubr.bf16.gmra.mrb[0].mxu0 %v6355
      %v6417 = vpop.f32.mrb[0].mxu0
      %v6418 = vadd.f32 %v6313, %v6417
      %v6419 = vpop.f32.mrb[0].mxu0
      %v6420 = vpop.f32.mrb[0].mxu0
      %v6421 = vadd.f32 %v6316, %v6420
      %v6422 = vpop.f32.mrb[0].mxu0
      %6423 = vmatprep.mubr.bf16.mxu0 0
      %6424 = vmatmul.mubr.bf16.gmra.mrb[0].mxu0 %v6358
      %v6425 = vpop.f32.mrb[0].mxu0
      %v6426 = vadd.f32 %v6321, %v6425
      %v6427 = vpop.f32.mrb[0].mxu0
      %v6428 = vpop.f32.mrb[0].mxu0
      %v6429 = vadd.f32 %v6324, %v6428
      %v6430 = vpop.f32.mrb[0].mxu0
      %6431 = vmatprep.mubr.bf16.mxu0 0
      %6432 = vmatmul.mubr.bf16.gmra.mrb[0].mxu0 %v6361
      %v6433 = vpop.f32.mrb[0].mxu0
      %v6434 = vadd.f32 %v6329, %v6433
      %v6435 = vpop.f32.mrb[0].mxu0
      %v6436 = vpop.f32.mrb[0].mxu0
      %v6437 = vadd.f32 %v6332, %v6436
      %v6438 = vpop.f32.mrb[0].mxu0
      %6439 = vdwg.mxu0
      %v6440 = vpack.c.bf16 %v6243, %v6242
      %v6441 = vpack.c.bf16 %v6245, %v6244
      %v6442 = vpack.c.bf16 %v6247, %v6246
      %v6443 = vpack.c.bf16 %v6249, %v6248
      %v6444 = vld [vmem:[%s8] sm:$0xf]
      %v6446 = vsel %vm503, %v6440, 0
      %v6449 = vsel %vm503, %v6441, 0
      %v6452 = vsel %vm503, %v6442, 0
      %v6455 = vsel %vm503, %v6443, 0
      %v6458 = vsel %vm1331, %v6444, 0
      %6460 = vmatprep.subr.bf16.mxu0 0
      %6461 = vmatpush1.bf16.msra.mxu0 %v6458
      %6462 = vmatprep.subr.bf16.mxu0 0
      %6463 = vmatpush1.bf16.msra.mxu0 0
      %6464 = vmatprep.subr.bf16.mxu0 0
      %6465 = vmatpush1.bf16.msra.mxu0 0
      %6466 = vmatprep.subr.bf16.mxu0 0
      %6467 = vmatpush1.bf16.msra.mxu0 0
      %6468 = vmatprep.subr.bf16.mxu0 0
      %6469 = vmatpush1.bf16.msra.mxu0 0
      %6470 = vmatprep.subr.bf16.mxu0 0
      %6471 = vmatpush1.bf16.msra.mxu0 0
      %6472 = vmatprep.subr.bf16.mxu0 0
      %6473 = vmatpush1.bf16.msra.mxu0 0
      %6474 = vmatprep.subr.bf16.mxu0 0
      %6475 = vmatpush1.bf16.msra.mxu0 0
      %6476 = vmatprep.subr.bf16.mxu0 0
      %6477 = vmatpush1.bf16.msra.mxu0 0
      %6478 = vmatprep.subr.bf16.mxu0 0
      %6479 = vmatpush1.bf16.msra.mxu0 0
      %6480 = vmatprep.subr.bf16.mxu0 0
      %6481 = vmatpush1.bf16.msra.mxu0 0
      %6482 = vmatprep.subr.bf16.mxu0 0
      %6483 = vmatpush1.bf16.msra.mxu0 0
      %6484 = vmatprep.subr.bf16.mxu0 0
      %6485 = vmatpush1.bf16.msra.mxu0 0
      %6486 = vmatprep.subr.bf16.mxu0 0
      %6487 = vmatpush1.bf16.msra.mxu0 0
      %6488 = vmatprep.subr.bf16.mxu0 0
      %6489 = vmatpush1.bf16.msra.mxu0 0
      %6490 = vmatprep.subr.bf16.mxu0 0
      %6491 = vmatpush1.bf16.msra.mxu0 0
      %6492 = vmatprep.mubr.bf16.mxu0 0
      %6493 = vmatmul.mubr.bf16.gmra.mrb[0].mxu0 %v6446
      %v6494 = vpop.f32.mrb[0].mxu0
      %v6495 = vadd.f32 0.0, %v6494
      %v6496 = vpop.f32.mrb[0].mxu0
      %v6497 = vpop.f32.mrb[0].mxu0
      %v6498 = vadd.f32 0.0, %v6497
      %v6499 = vpop.f32.mrb[0].mxu0
      %6500 = vmatprep.mubr.bf16.mxu0 0
      %6501 = vmatmul.mubr.bf16.gmra.mrb[0].mxu0 %v6449
      %v6502 = vpop.f32.mrb[0].mxu0
      %v6503 = vadd.f32 0.0, %v6502
      %v6504 = vpop.f32.mrb[0].mxu0
      %v6505 = vpop.f32.mrb[0].mxu0
      %v6506 = vadd.f32 0.0, %v6505
      %v6507 = vpop.f32.mrb[0].mxu0
      %6508 = vmatprep.mubr.bf16.mxu0 0
      %6509 = vmatmul.mubr.bf16.gmra.mrb[0].mxu0 %v6452
      %v6510 = vpop.f32.mrb[0].mxu0
      %v6511 = vadd.f32 0.0, %v6510
      %v6512 = vpop.f32.mrb[0].mxu0
      %v6513 = vpop.f32.mrb[0].mxu0
      %v6514 = vadd.f32 0.0, %v6513
      %v6515 = vpop.f32.mrb[0].mxu0
      %6516 = vmatprep.mubr.bf16.mxu0 0
      %6517 = vmatmul.mubr.bf16.gmra.mrb[0].mxu0 %v6455
      %v6518 = vpop.f32.mrb[0].mxu0
      %v6519 = vadd.f32 0.0, %v6518
      %v6520 = vpop.f32.mrb[0].mxu0
      %v6521 = vpop.f32.mrb[0].mxu0
      %v6522 = vadd.f32 0.0, %v6521
      %v6523 = vpop.f32.mrb[0].mxu0
      %6524 = vdwg.mxu0
      %v6525 = vadd.f32 %v6410, %v6495
      %v6526 = vadd.f32 %v6413, %v6498
      %v6527 = vadd.f32 %v6418, %v6503
      %v6528 = vadd.f32 %v6421, %v6506
      %v6529 = vadd.f32 %v6426, %v6511
      %v6530 = vadd.f32 %v6429, %v6514
      %v6531 = vadd.f32 %v6434, %v6519
      %v6532 = vadd.f32 %v6437, %v6522
      %v6533 = vsel %vm2364, %v6525, -inf
      %6534 = vmax.xlane.f32.xlu0 %v6533
      %v6535 = vpop.xlane.xlu0 %6534
      %v6536 = vsel %vm2364, %v6526, -inf
      %6537 = vmax.xlane.f32.xlu0 %v6536
      %v6538 = vpop.xlane.xlu0 %6537
      %v6539 = vsel %vm2364, %v6527, -inf
      %6540 = vmax.xlane.f32.xlu0 %v6539
      %v6541 = vpop.xlane.xlu0 %6540
      %v6542 = vsel %vm2364, %v6528, -inf
      %6543 = vmax.xlane.f32.xlu0 %v6542
      %v6544 = vpop.xlane.xlu0 %6543
      %v6545 = vsel %vm2364, %v6529, -inf
      %6546 = vmax.xlane.f32.xlu0 %v6545
      %v6547 = vpop.xlane.xlu0 %6546
      %v6548 = vsel %vm2364, %v6530, -inf
      %6549 = vmax.xlane.f32.xlu0 %v6548
      %v6550 = vpop.xlane.xlu0 %6549
      %v6551 = vsel %vm2364, %v6531, -inf
      %6552 = vmax.xlane.f32.xlu0 %v6551
      %v6553 = vpop.xlane.xlu0 %6552
      %v6554 = vsel %vm2364, %v6532, -inf
      %6555 = vmax.xlane.f32.xlu0 %v6554
      %v6556 = vpop.xlane.xlu0 %6555
      %v6557 = vsub.f32 %v6525, %v6535
      %v6558 = vsub.f32 %v6526, %v6538
      %v6559 = vsub.f32 %v6527, %v6541
      %v6560 = vsub.f32 %v6528, %v6544
      %v6561 = vsub.f32 %v6529, %v6547
      %v6562 = vsub.f32 %v6530, %v6550
      %v6563 = vsub.f32 %v6531, %v6553
      %v6564 = vsub.f32 %v6532, %v6556
      %v6565 = vmul.f32 %v6557, 1.442695
      %v6566 = vpow.pop %v6565
      %v6567 = vmul.f32 %v6558, 1.442695
      %v6568 = vpow.pop %v6567
      %v6569 = vmul.f32 %v6559, 1.442695
      %v6570 = vpow.pop %v6569
      %v6571 = vmul.f32 %v6560, 1.442695
      %v6572 = vpow.pop %v6571
      %v6573 = vmul.f32 %v6561, 1.442695
      %v6574 = vpow.pop %v6573
      %v6575 = vmul.f32 %v6562, 1.442695
      %v6576 = vpow.pop %v6575
      %v6577 = vmul.f32 %v6563, 1.442695
      %v6578 = vpow.pop %v6577
      %v6579 = vmul.f32 %v6564, 1.442695
      %v6580 = vpow.pop %v6579
      %v6581 = vsel %vm2364, %v6566, 0.0
      %6582 = vadd.xlane.f32.xlu0 %v6581
      %v6583 = vpop.xlane.xlu0 %6582
      %v6584 = vsel %vm2364, %v6568, 0.0
      %6585 = vadd.xlane.f32.xlu0 %v6584
      %v6586 = vpop.xlane.xlu0 %6585
      %v6587 = vsel %vm2364, %v6570, 0.0
      %6588 = vadd.xlane.f32.xlu0 %v6587
      %v6589 = vpop.xlane.xlu0 %6588
      %v6590 = vsel %vm2364, %v6572, 0.0
      %6591 = vadd.xlane.f32.xlu0 %v6590
      %v6592 = vpop.xlane.xlu0 %6591
      %v6593 = vsel %vm2364, %v6574, 0.0
      %6594 = vadd.xlane.f32.xlu0 %v6593
      %v6595 = vpop.xlane.xlu0 %6594
      %v6596 = vsel %vm2364, %v6576, 0.0
      %6597 = vadd.xlane.f32.xlu0 %v6596
      %v6598 = vpop.xlane.xlu0 %6597
      %v6599 = vsel %vm2364, %v6578, 0.0
      %6600 = vadd.xlane.f32.xlu0 %v6599
      %v6601 = vpop.xlane.xlu0 %6600
      %v6602 = vsel %vm2364, %v6580, 0.0
      %6603 = vadd.xlane.f32.xlu0 %v6602
      %v6604 = vpop.xlane.xlu0 %6603
      %v6605 = vrcp.pop %v6583
      %v6606 = vrcp.pop %v6586
      %v6607 = vrcp.pop %v6589
      %v6608 = vrcp.pop %v6592
      %v6609 = vrcp.pop %v6595
      %v6610 = vrcp.pop %v6598
      %v6611 = vrcp.pop %v6601
      %v6612 = vrcp.pop %v6604
      %v6613 = vmul.f32 %v6566, %v6605
      %v6614 = vmul.f32 %v6568, %v6606
      %v6615 = vmul.f32 %v6570, %v6607
      %v6616 = vmul.f32 %v6572, %v6608
      %v6617 = vmul.f32 %v6574, %v6609
      %v6618 = vmul.f32 %v6576, %v6610
      %v6619 = vmul.f32 %v6578, %v6611
      %v6620 = vmul.f32 %v6580, %v6612
      %v6621 = vpack.c.bf16 %v6614, %v6613
      %v6622 = vpack.c.bf16 %v6616, %v6615
      %v6623 = vpack.c.bf16 %v6618, %v6617
      %v6624 = vpack.c.bf16 %v6620, %v6619
      %6625 = vrot.lane.b32.xlu0 %v463, 48
      %v6626 = vpop.permute.xlu0 %6625
      %6627 = vrot.lane.b32.xlu0 %v464, 48
      %v6628 = vpop.permute.xlu0 %6627
      %6629 = vrot.lane.b32.xlu0 %v465, 48
      %v6630 = vpop.permute.xlu0 %6629
      %6631 = vrot.lane.b32.xlu0 %v466, 48
      %v6632 = vpop.permute.xlu0 %6631
      %v6638 = vsel %vm2364, %v6621, 0
      %v6641 = vsel %vm2364, %v6622, 0
      %v6644 = vsel %vm2364, %v6623, 0
      %v6647 = vsel %vm2364, %v6624, 0
      %6649 = vmatprep.subr.bf16.mxu0 0
      %6650 = vmatpush1.bf16.msra.mxu0 %v6626
      %6651 = vmatprep.subr.bf16.mxu0 0
      %6652 = vmatpush1.bf16.msra.mxu0 %v6628
      %6653 = vmatprep.subr.bf16.mxu0 0
      %6654 = vmatpush1.bf16.msra.mxu0 %v6630
      %6655 = vmatprep.subr.bf16.mxu0 0
      %6656 = vmatpush1.bf16.msra.mxu0 %v6632
      %6657 = vmatprep.subr.bf16.mxu0 0
      %6658 = vmatpush1.bf16.msra.mxu0 0
      %6659 = vmatprep.subr.bf16.mxu0 0
      %6660 = vmatpush1.bf16.msra.mxu0 0
      %6661 = vmatprep.subr.bf16.mxu0 0
      %6662 = vmatpush1.bf16.msra.mxu0 0
      %6663 = vmatprep.subr.bf16.mxu0 0
      %6664 = vmatpush1.bf16.msra.mxu0 0
      %6665 = vmatprep.subr.bf16.mxu0 0
      %6666 = vmatpush1.bf16.msra.mxu0 0
      %6667 = vmatprep.subr.bf16.mxu0 0
      %6668 = vmatpush1.bf16.msra.mxu0 0
      %6669 = vmatprep.subr.bf16.mxu0 0
      %6670 = vmatpush1.bf16.msra.mxu0 0
      %6671 = vmatprep.subr.bf16.mxu0 0
      %6672 = vmatpush1.bf16.msra.mxu0 0
      %6673 = vmatprep.subr.bf16.mxu0 0
      %6674 = vmatpush1.bf16.msra.mxu0 0
      %6675 = vmatprep.subr.bf16.mxu0 0
      %6676 = vmatpush1.bf16.msra.mxu0 0
      %6677 = vmatprep.subr.bf16.mxu0 0
      %6678 = vmatpush1.bf16.msra.mxu0 0
      %6679 = vmatprep.subr.bf16.mxu0 0
      %6680 = vmatpush1.bf16.msra.mxu0 0
      %6681 = vmatprep.mubr.bf16.mxu0 0
      %6682 = vmatmul.mubr.bf16.gmra.mrb[0].mxu0 %v6638
      %v6683 = vpop.f32.mrb[0].mxu0
      %v6684 = vadd.f32 0.0, %v6683
      %v6685 = vpop.f32.mrb[0].mxu0
      %v6686 = vpop.f32.mrb[0].mxu0
      %v6687 = vadd.f32 0.0, %v6686
      %v6688 = vpop.f32.mrb[0].mxu0
      %6689 = vmatprep.mubr.bf16.mxu0 0
      %6690 = vmatmul.mubr.bf16.gmra.mrb[0].mxu0 %v6641
      %v6691 = vpop.f32.mrb[0].mxu0
      %v6692 = vadd.f32 0.0, %v6691
      %v6693 = vpop.f32.mrb[0].mxu0
      %v6694 = vpop.f32.mrb[0].mxu0
      %v6695 = vadd.f32 0.0, %v6694
      %v6696 = vpop.f32.mrb[0].mxu0
      %6697 = vmatprep.mubr.bf16.mxu0 0
      %6698 = vmatmul.mubr.bf16.gmra.mrb[0].mxu0 %v6644
      %v6699 = vpop.f32.mrb[0].mxu0
      %v6700 = vadd.f32 0.0, %v6699
      %v6701 = vpop.f32.mrb[0].mxu0
      %v6702 = vpop.f32.mrb[0].mxu0
      %v6703 = vadd.f32 0.0, %v6702
      %v6704 = vpop.f32.mrb[0].mxu0
      %6705 = vmatprep.mubr.bf16.mxu0 0
      %6706 = vmatmul.mubr.bf16.gmra.mrb[0].mxu0 %v6647
      %v6707 = vpop.f32.mrb[0].mxu0
      %v6708 = vadd.f32 0.0, %v6707
      %v6709 = vpop.f32.mrb[0].mxu0
      %v6710 = vpop.f32.mrb[0].mxu0
      %v6711 = vadd.f32 0.0, %v6710
      %v6712 = vpop.f32.mrb[0].mxu0
      %6713 = vdwg.mxu0
      %v6714 = vpack.c.bf16 %v6687, %v6684
      %v6715 = vpack.c.bf16 %v6695, %v6692
      %v6716 = vpack.c.bf16 %v6703, %v6700
      %v6717 = vpack.c.bf16 %v6711, %v6708
      %v6718 = vld [vmem:[%s5] sm:$0xf]
      %v6719 = vld [vmem:[%s5 + $0x4] sm:$0xf]
      %v6720 = vld [vmem:[%s5 + $0x8] sm:$0xf]
      %v6721 = vld [vmem:[%s5 + $0xc] sm:$0xf]
      %v6722 = vld [vmem:[%s5 + $0x10] sm:$0xf]
      %v6723 = vld [vmem:[%s5 + $0x14] sm:$0xf]
      %v6724 = vld [vmem:[%s5 + $0x18] sm:$0xf]
      %v6725 = vld [vmem:[%s5 + $0x1c] sm:$0xf]
      %6726 = vrot.lane.b32.xlu0 %v479, 104
      %v6727 = vpop.permute.xlu0 %6726
      %v6729 = vsel %vm503, %v6727, 0
      %v6732 = vsel %vm503, %v6718, 0
      %6734 = vmatprep.subr.bf16.mxu0 0
      %6735 = vmatpush1.bf16.xpose.msra.mxu0 %v6732
      %6736 = vmatprep.subr.bf16.mxu0 0
      %6737 = vmatpush1.bf16.xpose.msra.mxu0 0
      %6738 = vmatprep.subr.bf16.mxu0 0
      %6739 = vmatpush1.bf16.xpose.msra.mxu0 0
      %6740 = vmatprep.subr.bf16.mxu0 0
      %6741 = vmatpush1.bf16.xpose.msra.mxu0 0
      %6742 = vmatprep.subr.bf16.mxu0 0
      %6743 = vmatpush1.bf16.xpose.msra.mxu0 0
      %6744 = vmatprep.subr.bf16.mxu0 0
      %6745 = vmatpush1.bf16.xpose.msra.mxu0 0
      %6746 = vmatprep.subr.bf16.mxu0 0
      %6747 = vmatpush1.bf16.xpose.msra.mxu0 0
      %6748 = vmatprep.subr.bf16.mxu0 0
      %6749 = vmatpush1.bf16.xpose.msra.mxu0 0
      %6750 = vmatprep.subr.bf16.mxu0 0
      %6751 = vmatpush1.bf16.xpose.msra.mxu0 0
      %6752 = vmatprep.subr.bf16.mxu0 0
      %6753 = vmatpush1.bf16.xpose.msra.mxu0 0
      %6754 = vmatprep.subr.bf16.mxu0 0
      %6755 = vmatpush1.bf16.xpose.msra.mxu0 0
      %6756 = vmatprep.subr.bf16.mxu0 0
      %6757 = vmatpush1.bf16.xpose.msra.mxu0 0
      %6758 = vmatprep.subr.bf16.mxu0 0
      %6759 = vmatpush1.bf16.xpose.msra.mxu0 0
      %6760 = vmatprep.subr.bf16.mxu0 0
      %6761 = vmatpush1.bf16.xpose.msra.mxu0 0
      %6762 = vmatprep.subr.bf16.mxu0 0
      %6763 = vmatpush1.bf16.xpose.msra.mxu0 0
      %6764 = vmatprep.subr.bf16.mxu0 0
      %6765 = vmatpush1.bf16.xpose.msra.mxu0 0
      %6766 = vmatprep.mubr.bf16.mxu0 0
      %6767 = vmatmul.mubr.bf16.gmra.mrb[0].mxu0 %v6729
      %v6768 = vpop.f32.mrb[0].mxu0
      %v6769 = vadd.f32 0.0, %v6768
      %v6770 = vpop.f32.mrb[0].mxu0
      %v6771 = vpop.f32.mrb[0].mxu0
      %v6772 = vpop.f32.mrb[0].mxu0
      %6773 = vdwg.mxu0
      %6774 = vrot.lane.b32.xlu0 %v480, 104
      %v6775 = vpop.permute.xlu0 %6774
      %v6777 = vsel %vm503, %v6775, 0
      %v6780 = vsel %vm503, %v6719, 0
      %6782 = vmatprep.subr.bf16.mxu0 0
      %6783 = vmatpush1.bf16.xpose.msra.mxu0 %v6780
      %6784 = vmatprep.subr.bf16.mxu0 0
      %6785 = vmatpush1.bf16.xpose.msra.mxu0 0
      %6786 = vmatprep.subr.bf16.mxu0 0
      %6787 = vmatpush1.bf16.xpose.msra.mxu0 0
      %6788 = vmatprep.subr.bf16.mxu0 0
      %6789 = vmatpush1.bf16.xpose.msra.mxu0 0
      %6790 = vmatprep.subr.bf16.mxu0 0
      %6791 = vmatpush1.bf16.xpose.msra.mxu0 0
      %6792 = vmatprep.subr.bf16.mxu0 0
      %6793 = vmatpush1.bf16.xpose.msra.mxu0 0
      %6794 = vmatprep.subr.bf16.mxu0 0
      %6795 = vmatpush1.bf16.xpose.msra.mxu0 0
      %6796 = vmatprep.subr.bf16.mxu0 0
      %6797 = vmatpush1.bf16.xpose.msra.mxu0 0
      %6798 = vmatprep.subr.bf16.mxu0 0
      %6799 = vmatpush1.bf16.xpose.msra.mxu0 0
      %6800 = vmatprep.subr.bf16.mxu0 0
      %6801 = vmatpush1.bf16.xpose.msra.mxu0 0
      %6802 = vmatprep.subr.bf16.mxu0 0
      %6803 = vmatpush1.bf16.xpose.msra.mxu0 0
      %6804 = vmatprep.subr.bf16.mxu0 0
      %6805 = vmatpush1.bf16.xpose.msra.mxu0 0
      %6806 = vmatprep.subr.bf16.mxu0 0
      %6807 = vmatpush1.bf16.xpose.msra.mxu0 0
      %6808 = vmatprep.subr.bf16.mxu0 0
      %6809 = vmatpush1.bf16.xpose.msra.mxu0 0
      %6810 = vmatprep.subr.bf16.mxu0 0
      %6811 = vmatpush1.bf16.xpose.msra.mxu0 0
      %6812 = vmatprep.subr.bf16.mxu0 0
      %6813 = vmatpush1.bf16.xpose.msra.mxu0 0
      %6814 = vmatprep.mubr.bf16.mxu0 0
      %6815 = vmatmul.mubr.bf16.gmra.mrb[0].mxu0 %v6777
      %v6816 = vpop.f32.mrb[0].mxu0
      %v6817 = vadd.f32 0.0, %v6816
      %v6818 = vpop.f32.mrb[0].mxu0
      %v6819 = vpop.f32.mrb[0].mxu0
      %v6820 = vpop.f32.mrb[0].mxu0
      %6821 = vdwg.mxu0
      %6822 = vrot.lane.b32.xlu0 %v481, 104
      %v6823 = vpop.permute.xlu0 %6822
      %v6825 = vsel %vm503, %v6823, 0
      %v6828 = vsel %vm503, %v6720, 0
      %6830 = vmatprep.subr.bf16.mxu0 0
      %6831 = vmatpush1.bf16.xpose.msra.mxu0 %v6828
      %6832 = vmatprep.subr.bf16.mxu0 0
      %6833 = vmatpush1.bf16.xpose.msra.mxu0 0
      %6834 = vmatprep.subr.bf16.mxu0 0
      %6835 = vmatpush1.bf16.xpose.msra.mxu0 0
      %6836 = vmatprep.subr.bf16.mxu0 0
      %6837 = vmatpush1.bf16.xpose.msra.mxu0 0
      %6838 = vmatprep.subr.bf16.mxu0 0
      %6839 = vmatpush1.bf16.xpose.msra.mxu0 0
      %6840 = vmatprep.subr.bf16.mxu0 0
      %6841 = vmatpush1.bf16.xpose.msra.mxu0 0
      %6842 = vmatprep.subr.bf16.mxu0 0
      %6843 = vmatpush1.bf16.xpose.msra.mxu0 0
      %6844 = vmatprep.subr.bf16.mxu0 0
      %6845 = vmatpush1.bf16.xpose.msra.mxu0 0
      %6846 = vmatprep.subr.bf16.mxu0 0
      %6847 = vmatpush1.bf16.xpose.msra.mxu0 0
      %6848 = vmatprep.subr.bf16.mxu0 0
      %6849 = vmatpush1.bf16.xpose.msra.mxu0 0
      %6850 = vmatprep.subr.bf16.mxu0 0
      %6851 = vmatpush1.bf16.xpose.msra.mxu0 0
      %6852 = vmatprep.subr.bf16.mxu0 0
      %6853 = vmatpush1.bf16.xpose.msra.mxu0 0
      %6854 = vmatprep.subr.bf16.mxu0 0
      %6855 = vmatpush1.bf16.xpose.msra.mxu0 0
      %6856 = vmatprep.subr.bf16.mxu0 0
      %6857 = vmatpush1.bf16.xpose.msra.mxu0 0
      %6858 = vmatprep.subr.bf16.mxu0 0
      %6859 = vmatpush1.bf16.xpose.msra.mxu0 0
      %6860 = vmatprep.subr.bf16.mxu0 0
      %6861 = vmatpush1.bf16.xpose.msra.mxu0 0
      %6862 = vmatprep.mubr.bf16.mxu0 0
      %6863 = vmatmul.mubr.bf16.gmra.mrb[0].mxu0 %v6825
      %v6864 = vpop.f32.mrb[0].mxu0
      %v6865 = vadd.f32 0.0, %v6864
      %v6866 = vpop.f32.mrb[0].mxu0
      %v6867 = vpop.f32.mrb[0].mxu0
      %v6868 = vpop.f32.mrb[0].mxu0
      %6869 = vdwg.mxu0
      %6870 = vrot.lane.b32.xlu0 %v482, 104
      %v6871 = vpop.permute.xlu0 %6870
      %v6873 = vsel %vm503, %v6871, 0
      %v6876 = vsel %vm503, %v6721, 0
      %6878 = vmatprep.subr.bf16.mxu0 0
      %6879 = vmatpush1.bf16.xpose.msra.mxu0 %v6876
      %6880 = vmatprep.subr.bf16.mxu0 0
      %6881 = vmatpush1.bf16.xpose.msra.mxu0 0
      %6882 = vmatprep.subr.bf16.mxu0 0
      %6883 = vmatpush1.bf16.xpose.msra.mxu0 0
      %6884 = vmatprep.subr.bf16.mxu0 0
      %6885 = vmatpush1.bf16.xpose.msra.mxu0 0
      %6886 = vmatprep.subr.bf16.mxu0 0
      %6887 = vmatpush1.bf16.xpose.msra.mxu0 0
      %6888 = vmatprep.subr.bf16.mxu0 0
      %6889 = vmatpush1.bf16.xpose.msra.mxu0 0
      %6890 = vmatprep.subr.bf16.mxu0 0
      %6891 = vmatpush1.bf16.xpose.msra.mxu0 0
      %6892 = vmatprep.subr.bf16.mxu0 0
      %6893 = vmatpush1.bf16.xpose.msra.mxu0 0
      %6894 = vmatprep.subr.bf16.mxu0 0
      %6895 = vmatpush1.bf16.xpose.msra.mxu0 0
      %6896 = vmatprep.subr.bf16.mxu0 0
      %6897 = vmatpush1.bf16.xpose.msra.mxu0 0
      %6898 = vmatprep.subr.bf16.mxu0 0
      %6899 = vmatpush1.bf16.xpose.msra.mxu0 0
      %6900 = vmatprep.subr.bf16.mxu0 0
      %6901 = vmatpush1.bf16.xpose.msra.mxu0 0
      %6902 = vmatprep.subr.bf16.mxu0 0
      %6903 = vmatpush1.bf16.xpose.msra.mxu0 0
      %6904 = vmatprep.subr.bf16.mxu0 0
      %6905 = vmatpush1.bf16.xpose.msra.mxu0 0
      %6906 = vmatprep.subr.bf16.mxu0 0
      %6907 = vmatpush1.bf16.xpose.msra.mxu0 0
      %6908 = vmatprep.subr.bf16.mxu0 0
      %6909 = vmatpush1.bf16.xpose.msra.mxu0 0
      %6910 = vmatprep.mubr.bf16.mxu0 0
      %6911 = vmatmul.mubr.bf16.gmra.mrb[0].mxu0 %v6873
      %v6912 = vpop.f32.mrb[0].mxu0
      %v6913 = vadd.f32 0.0, %v6912
      %v6914 = vpop.f32.mrb[0].mxu0
      %v6915 = vpop.f32.mrb[0].mxu0
      %v6916 = vpop.f32.mrb[0].mxu0
      %6917 = vdwg.mxu0
      %6918 = vrot.lane.b32.xlu0 %v483, 104
      %v6919 = vpop.permute.xlu0 %6918
      %v6921 = vsel %vm503, %v6919, 0
      %v6924 = vsel %vm503, %v6722, 0
      %6926 = vmatprep.subr.bf16.mxu0 0
      %6927 = vmatpush1.bf16.xpose.msra.mxu0 %v6924
      %6928 = vmatprep.subr.bf16.mxu0 0
      %6929 = vmatpush1.bf16.xpose.msra.mxu0 0
      %6930 = vmatprep.subr.bf16.mxu0 0
      %6931 = vmatpush1.bf16.xpose.msra.mxu0 0
      %6932 = vmatprep.subr.bf16.mxu0 0
      %6933 = vmatpush1.bf16.xpose.msra.mxu0 0
      %6934 = vmatprep.subr.bf16.mxu0 0
      %6935 = vmatpush1.bf16.xpose.msra.mxu0 0
      %6936 = vmatprep.subr.bf16.mxu0 0
      %6937 = vmatpush1.bf16.xpose.msra.mxu0 0
      %6938 = vmatprep.subr.bf16.mxu0 0
      %6939 = vmatpush1.bf16.xpose.msra.mxu0 0
      %6940 = vmatprep.subr.bf16.mxu0 0
      %6941 = vmatpush1.bf16.xpose.msra.mxu0 0
      %6942 = vmatprep.subr.bf16.mxu0 0
      %6943 = vmatpush1.bf16.xpose.msra.mxu0 0
      %6944 = vmatprep.subr.bf16.mxu0 0
      %6945 = vmatpush1.bf16.xpose.msra.mxu0 0
      %6946 = vmatprep.subr.bf16.mxu0 0
      %6947 = vmatpush1.bf16.xpose.msra.mxu0 0
      %6948 = vmatprep.subr.bf16.mxu0 0
      %6949 = vmatpush1.bf16.xpose.msra.mxu0 0
      %6950 = vmatprep.subr.bf16.mxu0 0
      %6951 = vmatpush1.bf16.xpose.msra.mxu0 0
      %6952 = vmatprep.subr.bf16.mxu0 0
      %6953 = vmatpush1.bf16.xpose.msra.mxu0 0
      %6954 = vmatprep.subr.bf16.mxu0 0
      %6955 = vmatpush1.bf16.xpose.msra.mxu0 0
      %6956 = vmatprep.subr.bf16.mxu0 0
      %6957 = vmatpush1.bf16.xpose.msra.mxu0 0
      %6958 = vmatprep.mubr.bf16.mxu0 0
      %6959 = vmatmul.mubr.bf16.gmra.mrb[0].mxu0 %v6921
      %v6960 = vpop.f32.mrb[0].mxu0
      %v6961 = vadd.f32 0.0, %v6960
      %v6962 = vpop.f32.mrb[0].mxu0
      %v6963 = vpop.f32.mrb[0].mxu0
      %v6964 = vpop.f32.mrb[0].mxu0
      %6965 = vdwg.mxu0
      %6966 = vrot.lane.b32.xlu0 %v484, 104
      %v6967 = vpop.permute.xlu0 %6966
      %v6969 = vsel %vm503, %v6967, 0
      %v6972 = vsel %vm503, %v6723, 0
      %6974 = vmatprep.subr.bf16.mxu0 0
      %6975 = vmatpush1.bf16.xpose.msra.mxu0 %v6972
      %6976 = vmatprep.subr.bf16.mxu0 0
      %6977 = vmatpush1.bf16.xpose.msra.mxu0 0
      %6978 = vmatprep.subr.bf16.mxu0 0
      %6979 = vmatpush1.bf16.xpose.msra.mxu0 0
      %6980 = vmatprep.subr.bf16.mxu0 0
      %6981 = vmatpush1.bf16.xpose.msra.mxu0 0
      %6982 = vmatprep.subr.bf16.mxu0 0
      %6983 = vmatpush1.bf16.xpose.msra.mxu0 0
      %6984 = vmatprep.subr.bf16.mxu0 0
      %6985 = vmatpush1.bf16.xpose.msra.mxu0 0
      %6986 = vmatprep.subr.bf16.mxu0 0
      %6987 = vmatpush1.bf16.xpose.msra.mxu0 0
      %6988 = vmatprep.subr.bf16.mxu0 0
      %6989 = vmatpush1.bf16.xpose.msra.mxu0 0
      %6990 = vmatprep.subr.bf16.mxu0 0
      %6991 = vmatpush1.bf16.xpose.msra.mxu0 0
      %6992 = vmatprep.subr.bf16.mxu0 0
      %6993 = vmatpush1.bf16.xpose.msra.mxu0 0
      %6994 = vmatprep.subr.bf16.mxu0 0
      %6995 = vmatpush1.bf16.xpose.msra.mxu0 0
      %6996 = vmatprep.subr.bf16.mxu0 0
      %6997 = vmatpush1.bf16.xpose.msra.mxu0 0
      %6998 = vmatprep.subr.bf16.mxu0 0
      %6999 = vmatpush1.bf16.xpose.msra.mxu0 0
      %7000 = vmatprep.subr.bf16.mxu0 0
      %7001 = vmatpush1.bf16.xpose.msra.mxu0 0
      %7002 = vmatprep.subr.bf16.mxu0 0
      %7003 = vmatpush1.bf16.xpose.msra.mxu0 0
      %7004 = vmatprep.subr.bf16.mxu0 0
      %7005 = vmatpush1.bf16.xpose.msra.mxu0 0
      %7006 = vmatprep.mubr.bf16.mxu0 0
      %7007 = vmatmul.mubr.bf16.gmra.mrb[0].mxu0 %v6969
      %v7008 = vpop.f32.mrb[0].mxu0
      %v7009 = vadd.f32 0.0, %v7008
      %v7010 = vpop.f32.mrb[0].mxu0
      %v7011 = vpop.f32.mrb[0].mxu0
      %v7012 = vpop.f32.mrb[0].mxu0
      %7013 = vdwg.mxu0
      %7014 = vrot.lane.b32.xlu0 %v485, 104
      %v7015 = vpop.permute.xlu0 %7014
      %v7017 = vsel %vm503, %v7015, 0
      %v7020 = vsel %vm503, %v6724, 0
      %7022 = vmatprep.subr.bf16.mxu0 0
      %7023 = vmatpush1.bf16.xpose.msra.mxu0 %v7020
      %7024 = vmatprep.subr.bf16.mxu0 0
      %7025 = vmatpush1.bf16.xpose.msra.mxu0 0
      %7026 = vmatprep.subr.bf16.mxu0 0
      %7027 = vmatpush1.bf16.xpose.msra.mxu0 0
      %7028 = vmatprep.subr.bf16.mxu0 0
      %7029 = vmatpush1.bf16.xpose.msra.mxu0 0
      %7030 = vmatprep.subr.bf16.mxu0 0
      %7031 = vmatpush1.bf16.xpose.msra.mxu0 0
      %7032 = vmatprep.subr.bf16.mxu0 0
      %7033 = vmatpush1.bf16.xpose.msra.mxu0 0
      %7034 = vmatprep.subr.bf16.mxu0 0
      %7035 = vmatpush1.bf16.xpose.msra.mxu0 0
      %7036 = vmatprep.subr.bf16.mxu0 0
      %7037 = vmatpush1.bf16.xpose.msra.mxu0 0
      %7038 = vmatprep.subr.bf16.mxu0 0
      %7039 = vmatpush1.bf16.xpose.msra.mxu0 0
      %7040 = vmatprep.subr.bf16.mxu0 0
      %7041 = vmatpush1.bf16.xpose.msra.mxu0 0
      %7042 = vmatprep.subr.bf16.mxu0 0
      %7043 = vmatpush1.bf16.xpose.msra.mxu0 0
      %7044 = vmatprep.subr.bf16.mxu0 0
      %7045 = vmatpush1.bf16.xpose.msra.mxu0 0
      %7046 = vmatprep.subr.bf16.mxu0 0
      %7047 = vmatpush1.bf16.xpose.msra.mxu0 0
      %7048 = vmatprep.subr.bf16.mxu0 0
      %7049 = vmatpush1.bf16.xpose.msra.mxu0 0
      %7050 = vmatprep.subr.bf16.mxu0 0
      %7051 = vmatpush1.bf16.xpose.msra.mxu0 0
      %7052 = vmatprep.subr.bf16.mxu0 0
      %7053 = vmatpush1.bf16.xpose.msra.mxu0 0
      %7054 = vmatprep.mubr.bf16.mxu0 0
      %7055 = vmatmul.mubr.bf16.gmra.mrb[0].mxu0 %v7017
      %v7056 = vpop.f32.mrb[0].mxu0
      %v7057 = vadd.f32 0.0, %v7056
      %v7058 = vpop.f32.mrb[0].mxu0
      %v7059 = vpop.f32.mrb[0].mxu0
      %v7060 = vpop.f32.mrb[0].mxu0
      %7061 = vdwg.mxu0
      %7062 = vrot.lane.b32.xlu0 %v486, 104
      %v7063 = vpop.permute.xlu0 %7062
      %v7065 = vsel %vm503, %v7063, 0
      %v7068 = vsel %vm503, %v6725, 0
      %7070 = vmatprep.subr.bf16.mxu0 0
      %7071 = vmatpush1.bf16.xpose.msra.mxu0 %v7068
      %7072 = vmatprep.subr.bf16.mxu0 0
      %7073 = vmatpush1.bf16.xpose.msra.mxu0 0
      %7074 = vmatprep.subr.bf16.mxu0 0
      %7075 = vmatpush1.bf16.xpose.msra.mxu0 0
      %7076 = vmatprep.subr.bf16.mxu0 0
      %7077 = vmatpush1.bf16.xpose.msra.mxu0 0
      %7078 = vmatprep.subr.bf16.mxu0 0
      %7079 = vmatpush1.bf16.xpose.msra.mxu0 0
      %7080 = vmatprep.subr.bf16.mxu0 0
      %7081 = vmatpush1.bf16.xpose.msra.mxu0 0
      %7082 = vmatprep.subr.bf16.mxu0 0
      %7083 = vmatpush1.bf16.xpose.msra.mxu0 0
      %7084 = vmatprep.subr.bf16.mxu0 0
      %7085 = vmatpush1.bf16.xpose.msra.mxu0 0
      %7086 = vmatprep.subr.bf16.mxu0 0
      %7087 = vmatpush1.bf16.xpose.msra.mxu0 0
      %7088 = vmatprep.subr.bf16.mxu0 0
      %7089 = vmatpush1.bf16.xpose.msra.mxu0 0
      %7090 = vmatprep.subr.bf16.mxu0 0
      %7091 = vmatpush1.bf16.xpose.msra.mxu0 0
      %7092 = vmatprep.subr.bf16.mxu0 0
      %7093 = vmatpush1.bf16.xpose.msra.mxu0 0
      %7094 = vmatprep.subr.bf16.mxu0 0
      %7095 = vmatpush1.bf16.xpose.msra.mxu0 0
      %7096 = vmatprep.subr.bf16.mxu0 0
      %7097 = vmatpush1.bf16.xpose.msra.mxu0 0
      %7098 = vmatprep.subr.bf16.mxu0 0
      %7099 = vmatpush1.bf16.xpose.msra.mxu0 0
      %7100 = vmatprep.subr.bf16.mxu0 0
      %7101 = vmatpush1.bf16.xpose.msra.mxu0 0
      %7102 = vmatprep.mubr.bf16.mxu0 0
      %7103 = vmatmul.mubr.bf16.gmra.mrb[0].mxu0 %v7065
      %v7104 = vpop.f32.mrb[0].mxu0
      %v7105 = vadd.f32 0.0, %v7104
      %v7106 = vpop.f32.mrb[0].mxu0
      %v7107 = vpop.f32.mrb[0].mxu0
      %v7108 = vpop.f32.mrb[0].mxu0
      %7109 = vdwg.mxu0
      %v7110 = vld [vmem:[%s6] sm:$0xf]
      %v7111 = vld [vmem:[%s6 + $0x4] sm:$0xf]
      %v7112 = vld [vmem:[%s6 + $0x8] sm:$0xf]
      %v7113 = vld [vmem:[%s6 + $0xc] sm:$0xf]
      %v7114 = vld [vmem:[%s6 + $0x10] sm:$0xf]
      %v7115 = vld [vmem:[%s6 + $0x14] sm:$0xf]
      %v7116 = vld [vmem:[%s6 + $0x18] sm:$0xf]
      %v7117 = vld [vmem:[%s6 + $0x1c] sm:$0xf]
      %7126 = vxpose.xlu0.c.b16.start [1/8] %v6727, 128
      %7127 = vxpose.xlu0.c.b16.cont [2/8] 0, 128
      %7128 = vxpose.xlu0.c.b16.cont [3/8] 0, 128
      %7129 = vxpose.xlu0.c.b16.cont [4/8] 0, 128
      %7130 = vxpose.xlu0.c.b16.cont [5/8] 0, 128
      %7131 = vxpose.xlu0.c.b16.cont [6/8] 0, 128
      %7132 = vxpose.xlu0.c.b16.cont [7/8] 0, 128
      %7133 = vxpose.xlu0.c.b16.end [8/8] 0, 128
      %v7134 = vpop.trf.xlu0
      %v7135 = vpop.trf.xlu0
      %v7136 = vpop.trf.xlu0
      %v7137 = vpop.trf.xlu0
      %v7138 = vpop.trf.xlu0
      %v7139 = vpop.trf.xlu0
      %v7140 = vpop.trf.xlu0
      %v7141 = vpop.trf.xlu0
      %7142 = vxpose.xlu0.c.b16.start [1/8] %v6775, 128
      %7143 = vxpose.xlu0.c.b16.cont [2/8] 0, 128
      %7144 = vxpose.xlu0.c.b16.cont [3/8] 0, 128
      %7145 = vxpose.xlu0.c.b16.cont [4/8] 0, 128
      %7146 = vxpose.xlu0.c.b16.cont [5/8] 0, 128
      %7147 = vxpose.xlu0.c.b16.cont [6/8] 0, 128
      %7148 = vxpose.xlu0.c.b16.cont [7/8] 0, 128
      %7149 = vxpose.xlu0.c.b16.end [8/8] 0, 128
      %v7150 = vpop.trf.xlu0
      %v7151 = vpop.trf.xlu0
      %v7152 = vpop.trf.xlu0
      %v7153 = vpop.trf.xlu0
      %v7154 = vpop.trf.xlu0
      %v7155 = vpop.trf.xlu0
      %v7156 = vpop.trf.xlu0
      %v7157 = vpop.trf.xlu0
      %7158 = vxpose.xlu0.c.b16.start [1/8] %v6823, 128
      %7159 = vxpose.xlu0.c.b16.cont [2/8] 0, 128
      %7160 = vxpose.xlu0.c.b16.cont [3/8] 0, 128
      %7161 = vxpose.xlu0.c.b16.cont [4/8] 0, 128
      %7162 = vxpose.xlu0.c.b16.cont [5/8] 0, 128
      %7163 = vxpose.xlu0.c.b16.cont [6/8] 0, 128
      %7164 = vxpose.xlu0.c.b16.cont [7/8] 0, 128
      %7165 = vxpose.xlu0.c.b16.end [8/8] 0, 128
      %v7166 = vpop.trf.xlu0
      %v7167 = vpop.trf.xlu0
      %v7168 = vpop.trf.xlu0
      %v7169 = vpop.trf.xlu0
      %v7170 = vpop.trf.xlu0
      %v7171 = vpop.trf.xlu0
      %v7172 = vpop.trf.xlu0
      %v7173 = vpop.trf.xlu0
      %7174 = vxpose.xlu0.c.b16.start [1/8] %v6871, 128
      %7175 = vxpose.xlu0.c.b16.cont [2/8] 0, 128
      %7176 = vxpose.xlu0.c.b16.cont [3/8] 0, 128
      %7177 = vxpose.xlu0.c.b16.cont [4/8] 0, 128
      %7178 = vxpose.xlu0.c.b16.cont [5/8] 0, 128
      %7179 = vxpose.xlu0.c.b16.cont [6/8] 0, 128
      %7180 = vxpose.xlu0.c.b16.cont [7/8] 0, 128
      %7181 = vxpose.xlu0.c.b16.end [8/8] 0, 128
      %v7182 = vpop.trf.xlu0
      %v7183 = vpop.trf.xlu0
      %v7184 = vpop.trf.xlu0
      %v7185 = vpop.trf.xlu0
      %v7186 = vpop.trf.xlu0
      %v7187 = vpop.trf.xlu0
      %v7188 = vpop.trf.xlu0
      %v7189 = vpop.trf.xlu0
      %7190 = vxpose.xlu0.c.b16.start [1/8] %v6919, 128
      %7191 = vxpose.xlu0.c.b16.cont [2/8] 0, 128
      %7192 = vxpose.xlu0.c.b16.cont [3/8] 0, 128
      %7193 = vxpose.xlu0.c.b16.cont [4/8] 0, 128
      %7194 = vxpose.xlu0.c.b16.cont [5/8] 0, 128
      %7195 = vxpose.xlu0.c.b16.cont [6/8] 0, 128
      %7196 = vxpose.xlu0.c.b16.cont [7/8] 0, 128
      %7197 = vxpose.xlu0.c.b16.end [8/8] 0, 128
      %v7198 = vpop.trf.xlu0
      %v7199 = vpop.trf.xlu0
      %v7200 = vpop.trf.xlu0
      %v7201 = vpop.trf.xlu0
      %v7202 = vpop.trf.xlu0
      %v7203 = vpop.trf.xlu0
      %v7204 = vpop.trf.xlu0
      %v7205 = vpop.trf.xlu0
      %7206 = vxpose.xlu0.c.b16.start [1/8] %v6967, 128
      %7207 = vxpose.xlu0.c.b16.cont [2/8] 0, 128
      %7208 = vxpose.xlu0.c.b16.cont [3/8] 0, 128
      %7209 = vxpose.xlu0.c.b16.cont [4/8] 0, 128
      %7210 = vxpose.xlu0.c.b16.cont [5/8] 0, 128
      %7211 = vxpose.xlu0.c.b16.cont [6/8] 0, 128
      %7212 = vxpose.xlu0.c.b16.cont [7/8] 0, 128
      %7213 = vxpose.xlu0.c.b16.end [8/8] 0, 128
      %v7214 = vpop.trf.xlu0
      %v7215 = vpop.trf.xlu0
      %v7216 = vpop.trf.xlu0
      %v7217 = vpop.trf.xlu0
      %v7218 = vpop.trf.xlu0
      %v7219 = vpop.trf.xlu0
      %v7220 = vpop.trf.xlu0
      %v7221 = vpop.trf.xlu0
      %7222 = vxpose.xlu0.c.b16.start [1/8] %v7015, 128
      %7223 = vxpose.xlu0.c.b16.cont [2/8] 0, 128
      %7224 = vxpose.xlu0.c.b16.cont [3/8] 0, 128
      %7225 = vxpose.xlu0.c.b16.cont [4/8] 0, 128
      %7226 = vxpose.xlu0.c.b16.cont [5/8] 0, 128
      %7227 = vxpose.xlu0.c.b16.cont [6/8] 0, 128
      %7228 = vxpose.xlu0.c.b16.cont [7/8] 0, 128
      %7229 = vxpose.xlu0.c.b16.end [8/8] 0, 128
      %v7230 = vpop.trf.xlu0
      %v7231 = vpop.trf.xlu0
      %v7232 = vpop.trf.xlu0
      %v7233 = vpop.trf.xlu0
      %v7234 = vpop.trf.xlu0
      %v7235 = vpop.trf.xlu0
      %v7236 = vpop.trf.xlu0
      %v7237 = vpop.trf.xlu0
      %7238 = vxpose.xlu0.c.b16.start [1/8] %v7063, 128
      %7239 = vxpose.xlu0.c.b16.cont [2/8] 0, 128
      %7240 = vxpose.xlu0.c.b16.cont [3/8] 0, 128
      %7241 = vxpose.xlu0.c.b16.cont [4/8] 0, 128
      %7242 = vxpose.xlu0.c.b16.cont [5/8] 0, 128
      %7243 = vxpose.xlu0.c.b16.cont [6/8] 0, 128
      %7244 = vxpose.xlu0.c.b16.cont [7/8] 0, 128
      %7245 = vxpose.xlu0.c.b16.end [8/8] 0, 128
      %v7246 = vpop.trf.xlu0
      %v7247 = vpop.trf.xlu0
      %v7248 = vpop.trf.xlu0
      %v7249 = vpop.trf.xlu0
      %v7250 = vpop.trf.xlu0
      %v7251 = vpop.trf.xlu0
      %v7252 = vpop.trf.xlu0
      %v7253 = vpop.trf.xlu0
      %v7254 = vcombine.low %v7134, %v7198
      %v7256 = vunpack.c.l.s4 1983009808
      %v7257 = vunpack.c.0.s8 %v7256
      %v7258 = vlaneseq
      %v7259 = vshrl.u32 %v7258, 7
      %v7260 = vsub.s32 %v7257, %v7259
      %v7261 = vrot.slane %v7254, %v7260
      %v7262 = vcombine.low %v7166, %v7230
      %v7264 = vunpack.c.l.s4 1983009808
      %v7265 = vunpack.c.0.s8 %v7264
      %v7266 = vlaneseq
      %v7267 = vshrl.u32 %v7266, 7
      %v7268 = vsub.s32 %v7265, %v7267
      %v7269 = vrot.slane %v7262, %v7268
      %v7270 = vcombine.low %v7261, %v7269
      %v7271 = vcombine.high %v7261, %v7269
      %v7273 = vunpack.c.l.s4 1934713408
      %v7274 = vunpack.c.0.s8 %v7273
      %v7275 = vlaneseq
      %v7276 = vshrl.u32 %v7275, 7
      %v7277 = vsub.s32 %v7274, %v7276
      %v7278 = vrot.slane %v7270, %v7277
      %v7280 = vunpack.c.l.s4 1934713408
      %v7281 = vunpack.c.0.s8 %v7280
      %v7282 = vlaneseq
      %v7283 = vshrl.u32 %v7282, 7
      %v7284 = vsub.s32 %v7281, %v7283
      %v7285 = vrot.slane %v7271, %v7284
      %v7286 = vcombine.high %v7278, 0
      %v7287 = vcombine.high %v7285, 0
      %v7288 = vcombine.low %v7150, %v7214
      %v7290 = vunpack.c.l.s4 1983009808
      %v7291 = vunpack.c.0.s8 %v7290
      %v7292 = vlaneseq
      %v7293 = vshrl.u32 %v7292, 7
      %v7294 = vsub.s32 %v7291, %v7293
      %v7295 = vrot.slane %v7288, %v7294
      %v7296 = vcombine.low %v7182, %v7246
      %v7298 = vunpack.c.l.s4 1983009808
      %v7299 = vunpack.c.0.s8 %v7298
      %v7300 = vlaneseq
      %v7301 = vshrl.u32 %v7300, 7
      %v7302 = vsub.s32 %v7299, %v7301
      %v7303 = vrot.slane %v7296, %v7302
      %v7304 = vcombine.low %v7295, %v7303
      %v7305 = vcombine.high %v7295, %v7303
      %v7307 = vunpack.c.l.s4 1934713408
      %v7308 = vunpack.c.0.s8 %v7307
      %v7309 = vlaneseq
      %v7310 = vshrl.u32 %v7309, 7
      %v7311 = vsub.s32 %v7308, %v7310
      %v7312 = vrot.slane %v7304, %v7311
      %v7314 = vunpack.c.l.s4 1934713408
      %v7315 = vunpack.c.0.s8 %v7314
      %v7316 = vlaneseq
      %v7317 = vshrl.u32 %v7316, 7
      %v7318 = vsub.s32 %v7315, %v7317
      %v7319 = vrot.slane %v7305, %v7318
      %v7320 = vcombine.high %v7312, 0
      %v7321 = vcombine.high %v7319, 0
      %v7324 = vpack.i.b16 %v7312, %v7278
      %v7326 = vshrl.u32 %v7278, 16
      %v7327 = vshrl.u32 %v7312, 16
      %v7328 = vpack.i.b16 %v7327, %v7326
      %v7332 = vpack.i.b16 %v7320, %v7286
      %v7334 = vshrl.u32 %v7286, 16
      %v7335 = vshrl.u32 %v7320, 16
      %v7336 = vpack.i.b16 %v7335, %v7334
      %v7340 = vpack.i.b16 %v7319, %v7285
      %v7342 = vshrl.u32 %v7285, 16
      %v7343 = vshrl.u32 %v7319, 16
      %v7344 = vpack.i.b16 %v7343, %v7342
      %v7348 = vpack.i.b16 %v7321, %v7287
      %v7350 = vshrl.u32 %v7287, 16
      %v7351 = vshrl.u32 %v7321, 16
      %v7352 = vpack.i.b16 %v7351, %v7350
      %7354 = vxpose.xlu0.c.b16.start [1/8] %v7324, 128
      %7355 = vxpose.xlu0.c.b16.cont [2/8] 0, 128
      %7356 = vxpose.xlu0.c.b16.cont [3/8] 0, 128
      %7357 = vxpose.xlu0.c.b16.cont [4/8] 0, 128
      %7358 = vxpose.xlu0.c.b16.cont [5/8] 0, 128
      %7359 = vxpose.xlu0.c.b16.cont [6/8] 0, 128
      %7360 = vxpose.xlu0.c.b16.cont [7/8] 0, 128
      %7361 = vxpose.xlu0.c.b16.end [8/8] 0, 128
      %v7362 = vpop.trf.xlu0
      %v7363 = vpop.trf.xlu0
      %v7364 = vpop.trf.xlu0
      %v7365 = vpop.trf.xlu0
      %v7366 = vpop.trf.xlu0
      %v7367 = vpop.trf.xlu0
      %v7368 = vpop.trf.xlu0
      %v7369 = vpop.trf.xlu0
      %7370 = vxpose.xlu0.c.b16.start [1/8] %v7328, 128
      %7371 = vxpose.xlu0.c.b16.cont [2/8] 0, 128
      %7372 = vxpose.xlu0.c.b16.cont [3/8] 0, 128
      %7373 = vxpose.xlu0.c.b16.cont [4/8] 0, 128
      %7374 = vxpose.xlu0.c.b16.cont [5/8] 0, 128
      %7375 = vxpose.xlu0.c.b16.cont [6/8] 0, 128
      %7376 = vxpose.xlu0.c.b16.cont [7/8] 0, 128
      %7377 = vxpose.xlu0.c.b16.end [8/8] 0, 128
      %v7378 = vpop.trf.xlu0
      %v7379 = vpop.trf.xlu0
      %v7380 = vpop.trf.xlu0
      %v7381 = vpop.trf.xlu0
      %v7382 = vpop.trf.xlu0
      %v7383 = vpop.trf.xlu0
      %v7384 = vpop.trf.xlu0
      %v7385 = vpop.trf.xlu0
      %7386 = vxpose.xlu0.c.b16.start [1/8] %v7332, 128
      %7387 = vxpose.xlu0.c.b16.cont [2/8] 0, 128
      %7388 = vxpose.xlu0.c.b16.cont [3/8] 0, 128
      %7389 = vxpose.xlu0.c.b16.cont [4/8] 0, 128
      %7390 = vxpose.xlu0.c.b16.cont [5/8] 0, 128
      %7391 = vxpose.xlu0.c.b16.cont [6/8] 0, 128
      %7392 = vxpose.xlu0.c.b16.cont [7/8] 0, 128
      %7393 = vxpose.xlu0.c.b16.end [8/8] 0, 128
      %v7394 = vpop.trf.xlu0
      %v7395 = vpop.trf.xlu0
      %v7396 = vpop.trf.xlu0
      %v7397 = vpop.trf.xlu0
      %v7398 = vpop.trf.xlu0
      %v7399 = vpop.trf.xlu0
      %v7400 = vpop.trf.xlu0
      %v7401 = vpop.trf.xlu0
      %7402 = vxpose.xlu0.c.b16.start [1/8] %v7336, 128
      %7403 = vxpose.xlu0.c.b16.cont [2/8] 0, 128
      %7404 = vxpose.xlu0.c.b16.cont [3/8] 0, 128
      %7405 = vxpose.xlu0.c.b16.cont [4/8] 0, 128
      %7406 = vxpose.xlu0.c.b16.cont [5/8] 0, 128
      %7407 = vxpose.xlu0.c.b16.cont [6/8] 0, 128
      %7408 = vxpose.xlu0.c.b16.cont [7/8] 0, 128
      %7409 = vxpose.xlu0.c.b16.end [8/8] 0, 128
      %v7410 = vpop.trf.xlu0
      %v7411 = vpop.trf.xlu0
      %v7412 = vpop.trf.xlu0
      %v7413 = vpop.trf.xlu0
      %v7414 = vpop.trf.xlu0
      %v7415 = vpop.trf.xlu0
      %v7416 = vpop.trf.xlu0
      %v7417 = vpop.trf.xlu0
      %7418 = vxpose.xlu0.c.b16.start [1/8] %v7340, 128
      %7419 = vxpose.xlu0.c.b16.cont [2/8] 0, 128
      %7420 = vxpose.xlu0.c.b16.cont [3/8] 0, 128
      %7421 = vxpose.xlu0.c.b16.cont [4/8] 0, 128
      %7422 = vxpose.xlu0.c.b16.cont [5/8] 0, 128
      %7423 = vxpose.xlu0.c.b16.cont [6/8] 0, 128
      %7424 = vxpose.xlu0.c.b16.cont [7/8] 0, 128
      %7425 = vxpose.xlu0.c.b16.end [8/8] 0, 128
      %v7426 = vpop.trf.xlu0
      %v7427 = vpop.trf.xlu0
      %v7428 = vpop.trf.xlu0
      %v7429 = vpop.trf.xlu0
      %v7430 = vpop.trf.xlu0
      %v7431 = vpop.trf.xlu0
      %v7432 = vpop.trf.xlu0
      %v7433 = vpop.trf.xlu0
      %7434 = vxpose.xlu0.c.b16.start [1/8] %v7344, 128
      %7435 = vxpose.xlu0.c.b16.cont [2/8] 0, 128
      %7436 = vxpose.xlu0.c.b16.cont [3/8] 0, 128
      %7437 = vxpose.xlu0.c.b16.cont [4/8] 0, 128
      %7438 = vxpose.xlu0.c.b16.cont [5/8] 0, 128
      %7439 = vxpose.xlu0.c.b16.cont [6/8] 0, 128
      %7440 = vxpose.xlu0.c.b16.cont [7/8] 0, 128
      %7441 = vxpose.xlu0.c.b16.end [8/8] 0, 128
      %v7442 = vpop.trf.xlu0
      %v7443 = vpop.trf.xlu0
      %v7444 = vpop.trf.xlu0
      %v7445 = vpop.trf.xlu0
      %v7446 = vpop.trf.xlu0
      %v7447 = vpop.trf.xlu0
      %v7448 = vpop.trf.xlu0
      %v7449 = vpop.trf.xlu0
      %7450 = vxpose.xlu0.c.b16.start [1/8] %v7348, 128
      %7451 = vxpose.xlu0.c.b16.cont [2/8] 0, 128
      %7452 = vxpose.xlu0.c.b16.cont [3/8] 0, 128
      %7453 = vxpose.xlu0.c.b16.cont [4/8] 0, 128
      %7454 = vxpose.xlu0.c.b16.cont [5/8] 0, 128
      %7455 = vxpose.xlu0.c.b16.cont [6/8] 0, 128
      %7456 = vxpose.xlu0.c.b16.cont [7/8] 0, 128
      %7457 = vxpose.xlu0.c.b16.end [8/8] 0, 128
      %v7458 = vpop.trf.xlu0
      %v7459 = vpop.trf.xlu0
      %v7460 = vpop.trf.xlu0
      %v7461 = vpop.trf.xlu0
      %v7462 = vpop.trf.xlu0
      %v7463 = vpop.trf.xlu0
      %v7464 = vpop.trf.xlu0
      %v7465 = vpop.trf.xlu0
      %7466 = vxpose.xlu0.c.b16.start [1/8] %v7352, 128
      %7467 = vxpose.xlu0.c.b16.cont [2/8] 0, 128
      %7468 = vxpose.xlu0.c.b16.cont [3/8] 0, 128
      %7469 = vxpose.xlu0.c.b16.cont [4/8] 0, 128
      %7470 = vxpose.xlu0.c.b16.cont [5/8] 0, 128
      %7471 = vxpose.xlu0.c.b16.cont [6/8] 0, 128
      %7472 = vxpose.xlu0.c.b16.cont [7/8] 0, 128
      %7473 = vxpose.xlu0.c.b16.end [8/8] 0, 128
      %v7474 = vpop.trf.xlu0
      %v7475 = vpop.trf.xlu0
      %v7476 = vpop.trf.xlu0
      %v7477 = vpop.trf.xlu0
      %v7478 = vpop.trf.xlu0
      %v7479 = vpop.trf.xlu0
      %v7480 = vpop.trf.xlu0
      %v7481 = vpop.trf.xlu0
      %v7482 = vcombine.low %v7362, %v7426
      %v7484 = vunpack.c.l.s4 1983009808
      %v7485 = vunpack.c.0.s8 %v7484
      %v7486 = vlaneseq
      %v7487 = vshrl.u32 %v7486, 7
      %v7488 = vsub.s32 %v7485, %v7487
      %v7489 = vrot.slane %v7482, %v7488
      %v7490 = vcombine.low %v7394, %v7458
      %v7492 = vunpack.c.l.s4 1983009808
      %v7493 = vunpack.c.0.s8 %v7492
      %v7494 = vlaneseq
      %v7495 = vshrl.u32 %v7494, 7
      %v7496 = vsub.s32 %v7493, %v7495
      %v7497 = vrot.slane %v7490, %v7496
      %v7498 = vcombine.low %v7489, %v7497
      %v7499 = vcombine.high %v7489, %v7497
      %v7501 = vunpack.c.l.s4 1934713408
      %v7502 = vunpack.c.0.s8 %v7501
      %v7503 = vlaneseq
      %v7504 = vshrl.u32 %v7503, 7
      %v7505 = vsub.s32 %v7502, %v7504
      %v7506 = vrot.slane %v7498, %v7505
      %v7508 = vunpack.c.l.s4 1934713408
      %v7509 = vunpack.c.0.s8 %v7508
      %v7510 = vlaneseq
      %v7511 = vshrl.u32 %v7510, 7
      %v7512 = vsub.s32 %v7509, %v7511
      %v7513 = vrot.slane %v7499, %v7512
      %v7514 = vcombine.high %v7506, 0
      %v7515 = vcombine.high %v7513, 0
      %v7516 = vcombine.low %v7378, %v7442
      %v7518 = vunpack.c.l.s4 1983009808
      %v7519 = vunpack.c.0.s8 %v7518
      %v7520 = vlaneseq
      %v7521 = vshrl.u32 %v7520, 7
      %v7522 = vsub.s32 %v7519, %v7521
      %v7523 = vrot.slane %v7516, %v7522
      %v7524 = vcombine.low %v7410, %v7474
      %v7526 = vunpack.c.l.s4 1983009808
      %v7527 = vunpack.c.0.s8 %v7526
      %v7528 = vlaneseq
      %v7529 = vshrl.u32 %v7528, 7
      %v7530 = vsub.s32 %v7527, %v7529
      %v7531 = vrot.slane %v7524, %v7530
      %v7532 = vcombine.low %v7523, %v7531
      %v7533 = vcombine.high %v7523, %v7531
      %v7535 = vunpack.c.l.s4 1934713408
      %v7536 = vunpack.c.0.s8 %v7535
      %v7537 = vlaneseq
      %v7538 = vshrl.u32 %v7537, 7
      %v7539 = vsub.s32 %v7536, %v7538
      %v7540 = vrot.slane %v7532, %v7539
      %v7542 = vunpack.c.l.s4 1934713408
      %v7543 = vunpack.c.0.s8 %v7542
      %v7544 = vlaneseq
      %v7545 = vshrl.u32 %v7544, 7
      %v7546 = vsub.s32 %v7543, %v7545
      %v7547 = vrot.slane %v7533, %v7546
      %v7548 = vcombine.high %v7540, 0
      %v7549 = vcombine.high %v7547, 0
      %v7552 = vpack.i.b16 %v7540, %v7506
      %v7553 = vshrl.u32 %v7506, 16
      %v7554 = vshrl.u32 %v7540, 16
      %v7555 = vpack.i.b16 %v7554, %v7553
      %v7558 = vpack.i.b16 %v7548, %v7514
      %v7559 = vshrl.u32 %v7514, 16
      %v7560 = vshrl.u32 %v7548, 16
      %v7561 = vpack.i.b16 %v7560, %v7559
      %v7564 = vpack.i.b16 %v7547, %v7513
      %v7565 = vshrl.u32 %v7513, 16
      %v7566 = vshrl.u32 %v7547, 16
      %v7567 = vpack.i.b16 %v7566, %v7565
      %v7570 = vpack.i.b16 %v7549, %v7515
      %v7571 = vshrl.u32 %v7515, 16
      %v7572 = vshrl.u32 %v7549, 16
      %v7573 = vpack.i.b16 %v7572, %v7571
      %v7575 = vsel %vm503, %v7110, 0
      %v7578 = vsel %vm1331, %v7552, 0
      %7580 = vmatprep.subr.bf16.mxu0 0
      %7581 = vmatpush1.bf16.msra.mxu0 %v7578
      %7582 = vmatprep.subr.bf16.mxu0 0
      %7583 = vmatpush1.bf16.msra.mxu0 0
      %7584 = vmatprep.subr.bf16.mxu0 0
      %7585 = vmatpush1.bf16.msra.mxu0 0
      %7586 = vmatprep.subr.bf16.mxu0 0
      %7587 = vmatpush1.bf16.msra.mxu0 0
      %7588 = vmatprep.subr.bf16.mxu0 0
      %7589 = vmatpush1.bf16.msra.mxu0 0
      %7590 = vmatprep.subr.bf16.mxu0 0
      %7591 = vmatpush1.bf16.msra.mxu0 0
      %7592 = vmatprep.subr.bf16.mxu0 0
      %7593 = vmatpush1.bf16.msra.mxu0 0
      %7594 = vmatprep.subr.bf16.mxu0 0
      %7595 = vmatpush1.bf16.msra.mxu0 0
      %7596 = vmatprep.subr.bf16.mxu0 0
      %7597 = vmatpush1.bf16.msra.mxu0 0
      %7598 = vmatprep.subr.bf16.mxu0 0
      %7599 = vmatpush1.bf16.msra.mxu0 0
      %7600 = vmatprep.subr.bf16.mxu0 0
      %7601 = vmatpush1.bf16.msra.mxu0 0
      %7602 = vmatprep.subr.bf16.mxu0 0
      %7603 = vmatpush1.bf16.msra.mxu0 0
      %7604 = vmatprep.subr.bf16.mxu0 0
      %7605 = vmatpush1.bf16.msra.mxu0 0
      %7606 = vmatprep.subr.bf16.mxu0 0
      %7607 = vmatpush1.bf16.msra.mxu0 0
      %7608 = vmatprep.subr.bf16.mxu0 0
      %7609 = vmatpush1.bf16.msra.mxu0 0
      %7610 = vmatprep.subr.bf16.mxu0 0
      %7611 = vmatpush1.bf16.msra.mxu0 0
      %7612 = vmatprep.mubr.bf16.mxu0 0
      %7613 = vmatmul.mubr.bf16.gmra.mrb[0].mxu0 %v7575
      %v7614 = vpop.f32.mrb[0].mxu0
      %v7615 = vadd.f32 0.0, %v7614
      %v7616 = vpop.f32.mrb[0].mxu0
      %v7617 = vpop.f32.mrb[0].mxu0
      %v7618 = vpop.f32.mrb[0].mxu0
      %7619 = vdwg.mxu0
      %v7621 = vsel %vm503, %v7111, 0
      %v7624 = vsel %vm1331, %v7555, 0
      %7626 = vmatprep.subr.bf16.mxu0 0
      %7627 = vmatpush1.bf16.msra.mxu0 %v7624
      %7628 = vmatprep.subr.bf16.mxu0 0
      %7629 = vmatpush1.bf16.msra.mxu0 0
      %7630 = vmatprep.subr.bf16.mxu0 0
      %7631 = vmatpush1.bf16.msra.mxu0 0
      %7632 = vmatprep.subr.bf16.mxu0 0
      %7633 = vmatpush1.bf16.msra.mxu0 0
      %7634 = vmatprep.subr.bf16.mxu0 0
      %7635 = vmatpush1.bf16.msra.mxu0 0
      %7636 = vmatprep.subr.bf16.mxu0 0
      %7637 = vmatpush1.bf16.msra.mxu0 0
      %7638 = vmatprep.subr.bf16.mxu0 0
      %7639 = vmatpush1.bf16.msra.mxu0 0
      %7640 = vmatprep.subr.bf16.mxu0 0
      %7641 = vmatpush1.bf16.msra.mxu0 0
      %7642 = vmatprep.subr.bf16.mxu0 0
      %7643 = vmatpush1.bf16.msra.mxu0 0
      %7644 = vmatprep.subr.bf16.mxu0 0
      %7645 = vmatpush1.bf16.msra.mxu0 0
      %7646 = vmatprep.subr.bf16.mxu0 0
      %7647 = vmatpush1.bf16.msra.mxu0 0
      %7648 = vmatprep.subr.bf16.mxu0 0
      %7649 = vmatpush1.bf16.msra.mxu0 0
      %7650 = vmatprep.subr.bf16.mxu0 0
      %7651 = vmatpush1.bf16.msra.mxu0 0
      %7652 = vmatprep.subr.bf16.mxu0 0
      %7653 = vmatpush1.bf16.msra.mxu0 0
      %7654 = vmatprep.subr.bf16.mxu0 0
      %7655 = vmatpush1.bf16.msra.mxu0 0
      %7656 = vmatprep.subr.bf16.mxu0 0
      %7657 = vmatpush1.bf16.msra.mxu0 0
      %7658 = vmatprep.mubr.bf16.mxu0 0
      %7659 = vmatmul.mubr.bf16.gmra.mrb[0].mxu0 %v7621
      %v7660 = vpop.f32.mrb[0].mxu0
      %v7661 = vadd.f32 0.0, %v7660
      %v7662 = vpop.f32.mrb[0].mxu0
      %v7663 = vpop.f32.mrb[0].mxu0
      %v7664 = vpop.f32.mrb[0].mxu0
      %7665 = vdwg.mxu0
      %v7667 = vsel %vm503, %v7112, 0
      %v7670 = vsel %vm1331, %v7558, 0
      %7672 = vmatprep.subr.bf16.mxu0 0
      %7673 = vmatpush1.bf16.msra.mxu0 %v7670
      %7674 = vmatprep.subr.bf16.mxu0 0
      %7675 = vmatpush1.bf16.msra.mxu0 0
      %7676 = vmatprep.subr.bf16.mxu0 0
      %7677 = vmatpush1.bf16.msra.mxu0 0
      %7678 = vmatprep.subr.bf16.mxu0 0
      %7679 = vmatpush1.bf16.msra.mxu0 0
      %7680 = vmatprep.subr.bf16.mxu0 0
      %7681 = vmatpush1.bf16.msra.mxu0 0
      %7682 = vmatprep.subr.bf16.mxu0 0
      %7683 = vmatpush1.bf16.msra.mxu0 0
      %7684 = vmatprep.subr.bf16.mxu0 0
      %7685 = vmatpush1.bf16.msra.mxu0 0
      %7686 = vmatprep.subr.bf16.mxu0 0
      %7687 = vmatpush1.bf16.msra.mxu0 0
      %7688 = vmatprep.subr.bf16.mxu0 0
      %7689 = vmatpush1.bf16.msra.mxu0 0
      %7690 = vmatprep.subr.bf16.mxu0 0
      %7691 = vmatpush1.bf16.msra.mxu0 0
      %7692 = vmatprep.subr.bf16.mxu0 0
      %7693 = vmatpush1.bf16.msra.mxu0 0
      %7694 = vmatprep.subr.bf16.mxu0 0
      %7695 = vmatpush1.bf16.msra.mxu0 0
      %7696 = vmatprep.subr.bf16.mxu0 0
      %7697 = vmatpush1.bf16.msra.mxu0 0
      %7698 = vmatprep.subr.bf16.mxu0 0
      %7699 = vmatpush1.bf16.msra.mxu0 0
      %7700 = vmatprep.subr.bf16.mxu0 0
      %7701 = vmatpush1.bf16.msra.mxu0 0
      %7702 = vmatprep.subr.bf16.mxu0 0
      %7703 = vmatpush1.bf16.msra.mxu0 0
      %7704 = vmatprep.mubr.bf16.mxu0 0
      %7705 = vmatmul.mubr.bf16.gmra.mrb[0].mxu0 %v7667
      %v7706 = vpop.f32.mrb[0].mxu0
      %v7707 = vadd.f32 0.0, %v7706
      %v7708 = vpop.f32.mrb[0].mxu0
      %v7709 = vpop.f32.mrb[0].mxu0
      %v7710 = vpop.f32.mrb[0].mxu0
      %7711 = vdwg.mxu0
      %v7713 = vsel %vm503, %v7113, 0
      %v7716 = vsel %vm1331, %v7561, 0
      %7718 = vmatprep.subr.bf16.mxu0 0
      %7719 = vmatpush1.bf16.msra.mxu0 %v7716
      %7720 = vmatprep.subr.bf16.mxu0 0
      %7721 = vmatpush1.bf16.msra.mxu0 0
      %7722 = vmatprep.subr.bf16.mxu0 0
      %7723 = vmatpush1.bf16.msra.mxu0 0
      %7724 = vmatprep.subr.bf16.mxu0 0
      %7725 = vmatpush1.bf16.msra.mxu0 0
      %7726 = vmatprep.subr.bf16.mxu0 0
      %7727 = vmatpush1.bf16.msra.mxu0 0
      %7728 = vmatprep.subr.bf16.mxu0 0
      %7729 = vmatpush1.bf16.msra.mxu0 0
      %7730 = vmatprep.subr.bf16.mxu0 0
      %7731 = vmatpush1.bf16.msra.mxu0 0
      %7732 = vmatprep.subr.bf16.mxu0 0
      %7733 = vmatpush1.bf16.msra.mxu0 0
      %7734 = vmatprep.subr.bf16.mxu0 0
      %7735 = vmatpush1.bf16.msra.mxu0 0
      %7736 = vmatprep.subr.bf16.mxu0 0
      %7737 = vmatpush1.bf16.msra.mxu0 0
      %7738 = vmatprep.subr.bf16.mxu0 0
      %7739 = vmatpush1.bf16.msra.mxu0 0
      %7740 = vmatprep.subr.bf16.mxu0 0
      %7741 = vmatpush1.bf16.msra.mxu0 0
      %7742 = vmatprep.subr.bf16.mxu0 0
      %7743 = vmatpush1.bf16.msra.mxu0 0
      %7744 = vmatprep.subr.bf16.mxu0 0
      %7745 = vmatpush1.bf16.msra.mxu0 0
      %7746 = vmatprep.subr.bf16.mxu0 0
      %7747 = vmatpush1.bf16.msra.mxu0 0
      %7748 = vmatprep.subr.bf16.mxu0 0
      %7749 = vmatpush1.bf16.msra.mxu0 0
      %7750 = vmatprep.mubr.bf16.mxu0 0
      %7751 = vmatmul.mubr.bf16.gmra.mrb[0].mxu0 %v7713
      %v7752 = vpop.f32.mrb[0].mxu0
      %v7753 = vadd.f32 0.0, %v7752
      %v7754 = vpop.f32.mrb[0].mxu0
      %v7755 = vpop.f32.mrb[0].mxu0
      %v7756 = vpop.f32.mrb[0].mxu0
      %7757 = vdwg.mxu0
      %v7759 = vsel %vm503, %v7114, 0
      %v7762 = vsel %vm1331, %v7564, 0
      %7764 = vmatprep.subr.bf16.mxu0 0
      %7765 = vmatpush1.bf16.msra.mxu0 %v7762
      %7766 = vmatprep.subr.bf16.mxu0 0
      %7767 = vmatpush1.bf16.msra.mxu0 0
      %7768 = vmatprep.subr.bf16.mxu0 0
      %7769 = vmatpush1.bf16.msra.mxu0 0
      %7770 = vmatprep.subr.bf16.mxu0 0
      %7771 = vmatpush1.bf16.msra.mxu0 0
      %7772 = vmatprep.subr.bf16.mxu0 0
      %7773 = vmatpush1.bf16.msra.mxu0 0
      %7774 = vmatprep.subr.bf16.mxu0 0
      %7775 = vmatpush1.bf16.msra.mxu0 0
      %7776 = vmatprep.subr.bf16.mxu0 0
      %7777 = vmatpush1.bf16.msra.mxu0 0
      %7778 = vmatprep.subr.bf16.mxu0 0
      %7779 = vmatpush1.bf16.msra.mxu0 0
      %7780 = vmatprep.subr.bf16.mxu0 0
      %7781 = vmatpush1.bf16.msra.mxu0 0
      %7782 = vmatprep.subr.bf16.mxu0 0
      %7783 = vmatpush1.bf16.msra.mxu0 0
      %7784 = vmatprep.subr.bf16.mxu0 0
      %7785 = vmatpush1.bf16.msra.mxu0 0
      %7786 = vmatprep.subr.bf16.mxu0 0
      %7787 = vmatpush1.bf16.msra.mxu0 0
      %7788 = vmatprep.subr.bf16.mxu0 0
      %7789 = vmatpush1.bf16.msra.mxu0 0
      %7790 = vmatprep.subr.bf16.mxu0 0
      %7791 = vmatpush1.bf16.msra.mxu0 0
      %7792 = vmatprep.subr.bf16.mxu0 0
      %7793 = vmatpush1.bf16.msra.mxu0 0
      %7794 = vmatprep.subr.bf16.mxu0 0
      %7795 = vmatpush1.bf16.msra.mxu0 0
      %7796 = vmatprep.mubr.bf16.mxu0 0
      %7797 = vmatmul.mubr.bf16.gmra.mrb[0].mxu0 %v7759
      %v7798 = vpop.f32.mrb[0].mxu0
      %v7799 = vadd.f32 0.0, %v7798
      %v7800 = vpop.f32.mrb[0].mxu0
      %v7801 = vpop.f32.mrb[0].mxu0
      %v7802 = vpop.f32.mrb[0].mxu0
      %7803 = vdwg.mxu0
      %v7805 = vsel %vm503, %v7115, 0
      %v7808 = vsel %vm1331, %v7567, 0
      %7810 = vmatprep.subr.bf16.mxu0 0
      %7811 = vmatpush1.bf16.msra.mxu0 %v7808
      %7812 = vmatprep.subr.bf16.mxu0 0
      %7813 = vmatpush1.bf16.msra.mxu0 0
      %7814 = vmatprep.subr.bf16.mxu0 0
      %7815 = vmatpush1.bf16.msra.mxu0 0
      %7816 = vmatprep.subr.bf16.mxu0 0
      %7817 = vmatpush1.bf16.msra.mxu0 0
      %7818 = vmatprep.subr.bf16.mxu0 0
      %7819 = vmatpush1.bf16.msra.mxu0 0
      %7820 = vmatprep.subr.bf16.mxu0 0
      %7821 = vmatpush1.bf16.msra.mxu0 0
      %7822 = vmatprep.subr.bf16.mxu0 0
      %7823 = vmatpush1.bf16.msra.mxu0 0
      %7824 = vmatprep.subr.bf16.mxu0 0
      %7825 = vmatpush1.bf16.msra.mxu0 0
      %7826 = vmatprep.subr.bf16.mxu0 0
      %7827 = vmatpush1.bf16.msra.mxu0 0
      %7828 = vmatprep.subr.bf16.mxu0 0
      %7829 = vmatpush1.bf16.msra.mxu0 0
      %7830 = vmatprep.subr.bf16.mxu0 0
      %7831 = vmatpush1.bf16.msra.mxu0 0
      %7832 = vmatprep.subr.bf16.mxu0 0
      %7833 = vmatpush1.bf16.msra.mxu0 0
      %7834 = vmatprep.subr.bf16.mxu0 0
      %7835 = vmatpush1.bf16.msra.mxu0 0
      %7836 = vmatprep.subr.bf16.mxu0 0
      %7837 = vmatpush1.bf16.msra.mxu0 0
      %7838 = vmatprep.subr.bf16.mxu0 0
      %7839 = vmatpush1.bf16.msra.mxu0 0
      %7840 = vmatprep.subr.bf16.mxu0 0
      %7841 = vmatpush1.bf16.msra.mxu0 0
      %7842 = vmatprep.mubr.bf16.mxu0 0
      %7843 = vmatmul.mubr.bf16.gmra.mrb[0].mxu0 %v7805
      %v7844 = vpop.f32.mrb[0].mxu0
      %v7845 = vadd.f32 0.0, %v7844
      %v7846 = vpop.f32.mrb[0].mxu0
      %v7847 = vpop.f32.mrb[0].mxu0
      %v7848 = vpop.f32.mrb[0].mxu0
      %7849 = vdwg.mxu0
      %v7851 = vsel %vm503, %v7116, 0
      %v7854 = vsel %vm1331, %v7570, 0
      %7856 = vmatprep.subr.bf16.mxu0 0
      %7857 = vmatpush1.bf16.msra.mxu0 %v7854
      %7858 = vmatprep.subr.bf16.mxu0 0
      %7859 = vmatpush1.bf16.msra.mxu0 0
      %7860 = vmatprep.subr.bf16.mxu0 0
      %7861 = vmatpush1.bf16.msra.mxu0 0
      %7862 = vmatprep.subr.bf16.mxu0 0
      %7863 = vmatpush1.bf16.msra.mxu0 0
      %7864 = vmatprep.subr.bf16.mxu0 0
      %7865 = vmatpush1.bf16.msra.mxu0 0
      %7866 = vmatprep.subr.bf16.mxu0 0
      %7867 = vmatpush1.bf16.msra.mxu0 0
      %7868 = vmatprep.subr.bf16.mxu0 0
      %7869 = vmatpush1.bf16.msra.mxu0 0
      %7870 = vmatprep.subr.bf16.mxu0 0
      %7871 = vmatpush1.bf16.msra.mxu0 0
      %7872 = vmatprep.subr.bf16.mxu0 0
      %7873 = vmatpush1.bf16.msra.mxu0 0
      %7874 = vmatprep.subr.bf16.mxu0 0
      %7875 = vmatpush1.bf16.msra.mxu0 0
      %7876 = vmatprep.subr.bf16.mxu0 0
      %7877 = vmatpush1.bf16.msra.mxu0 0
      %7878 = vmatprep.subr.bf16.mxu0 0
      %7879 = vmatpush1.bf16.msra.mxu0 0
      %7880 = vmatprep.subr.bf16.mxu0 0
      %7881 = vmatpush1.bf16.msra.mxu0 0
      %7882 = vmatprep.subr.bf16.mxu0 0
      %7883 = vmatpush1.bf16.msra.mxu0 0
      %7884 = vmatprep.subr.bf16.mxu0 0
      %7885 = vmatpush1.bf16.msra.mxu0 0
      %7886 = vmatprep.subr.bf16.mxu0 0
      %7887 = vmatpush1.bf16.msra.mxu0 0
      %7888 = vmatprep.mubr.bf16.mxu0 0
      %7889 = vmatmul.mubr.bf16.gmra.mrb[0].mxu0 %v7851
      %v7890 = vpop.f32.mrb[0].mxu0
      %v7891 = vadd.f32 0.0, %v7890
      %v7892 = vpop.f32.mrb[0].mxu0
      %v7893 = vpop.f32.mrb[0].mxu0
      %v7894 = vpop.f32.mrb[0].mxu0
      %7895 = vdwg.mxu0
      %v7897 = vsel %vm503, %v7117, 0
      %v7900 = vsel %vm1331, %v7573, 0
      %7902 = vmatprep.subr.bf16.mxu0 0
      %7903 = vmatpush1.bf16.msra.mxu0 %v7900
      %7904 = vmatprep.subr.bf16.mxu0 0
      %7905 = vmatpush1.bf16.msra.mxu0 0
      %7906 = vmatprep.subr.bf16.mxu0 0
      %7907 = vmatpush1.bf16.msra.mxu0 0
      %7908 = vmatprep.subr.bf16.mxu0 0
      %7909 = vmatpush1.bf16.msra.mxu0 0
      %7910 = vmatprep.subr.bf16.mxu0 0
      %7911 = vmatpush1.bf16.msra.mxu0 0
      %7912 = vmatprep.subr.bf16.mxu0 0
      %7913 = vmatpush1.bf16.msra.mxu0 0
      %7914 = vmatprep.subr.bf16.mxu0 0
      %7915 = vmatpush1.bf16.msra.mxu0 0
      %7916 = vmatprep.subr.bf16.mxu0 0
      %7917 = vmatpush1.bf16.msra.mxu0 0
      %7918 = vmatprep.subr.bf16.mxu0 0
      %7919 = vmatpush1.bf16.msra.mxu0 0
      %7920 = vmatprep.subr.bf16.mxu0 0
      %7921 = vmatpush1.bf16.msra.mxu0 0
      %7922 = vmatprep.subr.bf16.mxu0 0
      %7923 = vmatpush1.bf16.msra.mxu0 0
      %7924 = vmatprep.subr.bf16.mxu0 0
      %7925 = vmatpush1.bf16.msra.mxu0 0
      %7926 = vmatprep.subr.bf16.mxu0 0
      %7927 = vmatpush1.bf16.msra.mxu0 0
      %7928 = vmatprep.subr.bf16.mxu0 0
      %7929 = vmatpush1.bf16.msra.mxu0 0
      %7930 = vmatprep.subr.bf16.mxu0 0
      %7931 = vmatpush1.bf16.msra.mxu0 0
      %7932 = vmatprep.subr.bf16.mxu0 0
      %7933 = vmatpush1.bf16.msra.mxu0 0
      %7934 = vmatprep.mubr.bf16.mxu0 0
      %7935 = vmatmul.mubr.bf16.gmra.mrb[0].mxu0 %v7897
      %v7936 = vpop.f32.mrb[0].mxu0
      %v7937 = vadd.f32 0.0, %v7936
      %v7938 = vpop.f32.mrb[0].mxu0
      %v7939 = vpop.f32.mrb[0].mxu0
      %v7940 = vpop.f32.mrb[0].mxu0
      %7941 = vdwg.mxu0
      %7942 = vxpose.xlu0.b32.start [1/16] %v7615, 128
      %7943 = vxpose.xlu0.b32.cont [2/16] 0.0, 128
      %7944 = vxpose.xlu0.b32.cont [3/16] 0.0, 128
      %7945 = vxpose.xlu0.b32.cont [4/16] 0.0, 128
      %7946 = vxpose.xlu0.b32.cont [5/16] 0.0, 128
      %7947 = vxpose.xlu0.b32.cont [6/16] 0.0, 128
      %7948 = vxpose.xlu0.b32.cont [7/16] 0.0, 128
      %7949 = vxpose.xlu0.b32.cont [8/16] 0.0, 128
      %7950 = vxpose.xlu0.b32.cont [9/16] 0.0, 128
      %7951 = vxpose.xlu0.b32.cont [10/16] 0.0, 128
      %7952 = vxpose.xlu0.b32.cont [11/16] 0.0, 128
      %7953 = vxpose.xlu0.b32.cont [12/16] 0.0, 128
      %7954 = vxpose.xlu0.b32.cont [13/16] 0.0, 128
      %7955 = vxpose.xlu0.b32.cont [14/16] 0.0, 128
      %7956 = vxpose.xlu0.b32.cont [15/16] 0.0, 128
      %7957 = vxpose.xlu0.b32.end [16/16] 0.0, 128
      %v7958 = vpop.trf.xlu0
      %v7959 = vpop.trf.xlu0
      %v7960 = vpop.trf.xlu0
      %v7961 = vpop.trf.xlu0
      %v7962 = vpop.trf.xlu0
      %v7963 = vpop.trf.xlu0
      %v7964 = vpop.trf.xlu0
      %v7965 = vpop.trf.xlu0
      %v7966 = vpop.trf.xlu0
      %v7967 = vpop.trf.xlu0
      %v7968 = vpop.trf.xlu0
      %v7969 = vpop.trf.xlu0
      %v7970 = vpop.trf.xlu0
      %v7971 = vpop.trf.xlu0
      %v7972 = vpop.trf.xlu0
      %v7973 = vpop.trf.xlu0
      %7974 = vxpose.xlu0.b32.start [1/16] %v7661, 128
      %7975 = vxpose.xlu0.b32.cont [2/16] 0.0, 128
      %7976 = vxpose.xlu0.b32.cont [3/16] 0.0, 128
      %7977 = vxpose.xlu0.b32.cont [4/16] 0.0, 128
      %7978 = vxpose.xlu0.b32.cont [5/16] 0.0, 128
      %7979 = vxpose.xlu0.b32.cont [6/16] 0.0, 128
      %7980 = vxpose.xlu0.b32.cont [7/16] 0.0, 128
      %7981 = vxpose.xlu0.b32.cont [8/16] 0.0, 128
      %7982 = vxpose.xlu0.b32.cont [9/16] 0.0, 128
      %7983 = vxpose.xlu0.b32.cont [10/16] 0.0, 128
      %7984 = vxpose.xlu0.b32.cont [11/16] 0.0, 128
      %7985 = vxpose.xlu0.b32.cont [12/16] 0.0, 128
      %7986 = vxpose.xlu0.b32.cont [13/16] 0.0, 128
      %7987 = vxpose.xlu0.b32.cont [14/16] 0.0, 128
      %7988 = vxpose.xlu0.b32.cont [15/16] 0.0, 128
      %7989 = vxpose.xlu0.b32.end [16/16] 0.0, 128
      %v7990 = vpop.trf.xlu0
      %v7991 = vpop.trf.xlu0
      %v7992 = vpop.trf.xlu0
      %v7993 = vpop.trf.xlu0
      %v7994 = vpop.trf.xlu0
      %v7995 = vpop.trf.xlu0
      %v7996 = vpop.trf.xlu0
      %v7997 = vpop.trf.xlu0
      %v7998 = vpop.trf.xlu0
      %v7999 = vpop.trf.xlu0
      %v8000 = vpop.trf.xlu0
      %v8001 = vpop.trf.xlu0
      %v8002 = vpop.trf.xlu0
      %v8003 = vpop.trf.xlu0
      %v8004 = vpop.trf.xlu0
      %v8005 = vpop.trf.xlu0
      %8006 = vxpose.xlu0.b32.start [1/16] %v7707, 128
      %8007 = vxpose.xlu0.b32.cont [2/16] 0.0, 128
      %8008 = vxpose.xlu0.b32.cont [3/16] 0.0, 128
      %8009 = vxpose.xlu0.b32.cont [4/16] 0.0, 128
      %8010 = vxpose.xlu0.b32.cont [5/16] 0.0, 128
      %8011 = vxpose.xlu0.b32.cont [6/16] 0.0, 128
      %8012 = vxpose.xlu0.b32.cont [7/16] 0.0, 128
      %8013 = vxpose.xlu0.b32.cont [8/16] 0.0, 128
      %8014 = vxpose.xlu0.b32.cont [9/16] 0.0, 128
      %8015 = vxpose.xlu0.b32.cont [10/16] 0.0, 128
      %8016 = vxpose.xlu0.b32.cont [11/16] 0.0, 128
      %8017 = vxpose.xlu0.b32.cont [12/16] 0.0, 128
      %8018 = vxpose.xlu0.b32.cont [13/16] 0.0, 128
      %8019 = vxpose.xlu0.b32.cont [14/16] 0.0, 128
      %8020 = vxpose.xlu0.b32.cont [15/16] 0.0, 128
      %8021 = vxpose.xlu0.b32.end [16/16] 0.0, 128
      %v8022 = vpop.trf.xlu0
      %v8023 = vpop.trf.xlu0
      %v8024 = vpop.trf.xlu0
      %v8025 = vpop.trf.xlu0
      %v8026 = vpop.trf.xlu0
      %v8027 = vpop.trf.xlu0
      %v8028 = vpop.trf.xlu0
      %v8029 = vpop.trf.xlu0
      %v8030 = vpop.trf.xlu0
      %v8031 = vpop.trf.xlu0
      %v8032 = vpop.trf.xlu0
      %v8033 = vpop.trf.xlu0
      %v8034 = vpop.trf.xlu0
      %v8035 = vpop.trf.xlu0
      %v8036 = vpop.trf.xlu0
      %v8037 = vpop.trf.xlu0
      %8038 = vxpose.xlu0.b32.start [1/16] %v7753, 128
      %8039 = vxpose.xlu0.b32.cont [2/16] 0.0, 128
      %8040 = vxpose.xlu0.b32.cont [3/16] 0.0, 128
      %8041 = vxpose.xlu0.b32.cont [4/16] 0.0, 128
      %8042 = vxpose.xlu0.b32.cont [5/16] 0.0, 128
      %8043 = vxpose.xlu0.b32.cont [6/16] 0.0, 128
      %8044 = vxpose.xlu0.b32.cont [7/16] 0.0, 128
      %8045 = vxpose.xlu0.b32.cont [8/16] 0.0, 128
      %8046 = vxpose.xlu0.b32.cont [9/16] 0.0, 128
      %8047 = vxpose.xlu0.b32.cont [10/16] 0.0, 128
      %8048 = vxpose.xlu0.b32.cont [11/16] 0.0, 128
      %8049 = vxpose.xlu0.b32.cont [12/16] 0.0, 128
      %8050 = vxpose.xlu0.b32.cont [13/16] 0.0, 128
      %8051 = vxpose.xlu0.b32.cont [14/16] 0.0, 128
      %8052 = vxpose.xlu0.b32.cont [15/16] 0.0, 128
      %8053 = vxpose.xlu0.b32.end [16/16] 0.0, 128
      %v8054 = vpop.trf.xlu0
      %v8055 = vpop.trf.xlu0
      %v8056 = vpop.trf.xlu0
      %v8057 = vpop.trf.xlu0
      %v8058 = vpop.trf.xlu0
      %v8059 = vpop.trf.xlu0
      %v8060 = vpop.trf.xlu0
      %v8061 = vpop.trf.xlu0
      %v8062 = vpop.trf.xlu0
      %v8063 = vpop.trf.xlu0
      %v8064 = vpop.trf.xlu0
      %v8065 = vpop.trf.xlu0
      %v8066 = vpop.trf.xlu0
      %v8067 = vpop.trf.xlu0
      %v8068 = vpop.trf.xlu0
      %v8069 = vpop.trf.xlu0
      %8070 = vxpose.xlu0.b32.start [1/16] %v7799, 128
      %8071 = vxpose.xlu0.b32.cont [2/16] 0.0, 128
      %8072 = vxpose.xlu0.b32.cont [3/16] 0.0, 128
      %8073 = vxpose.xlu0.b32.cont [4/16] 0.0, 128
      %8074 = vxpose.xlu0.b32.cont [5/16] 0.0, 128
      %8075 = vxpose.xlu0.b32.cont [6/16] 0.0, 128
      %8076 = vxpose.xlu0.b32.cont [7/16] 0.0, 128
      %8077 = vxpose.xlu0.b32.cont [8/16] 0.0, 128
      %8078 = vxpose.xlu0.b32.cont [9/16] 0.0, 128
      %8079 = vxpose.xlu0.b32.cont [10/16] 0.0, 128
      %8080 = vxpose.xlu0.b32.cont [11/16] 0.0, 128
      %8081 = vxpose.xlu0.b32.cont [12/16] 0.0, 128
      %8082 = vxpose.xlu0.b32.cont [13/16] 0.0, 128
      %8083 = vxpose.xlu0.b32.cont [14/16] 0.0, 128
      %8084 = vxpose.xlu0.b32.cont [15/16] 0.0, 128
      %8085 = vxpose.xlu0.b32.end [16/16] 0.0, 128
      %v8086 = vpop.trf.xlu0
      %v8087 = vpop.trf.xlu0
      %v8088 = vpop.trf.xlu0
      %v8089 = vpop.trf.xlu0
      %v8090 = vpop.trf.xlu0
      %v8091 = vpop.trf.xlu0
      %v8092 = vpop.trf.xlu0
      %v8093 = vpop.trf.xlu0
      %v8094 = vpop.trf.xlu0
      %v8095 = vpop.trf.xlu0
      %v8096 = vpop.trf.xlu0
      %v8097 = vpop.trf.xlu0
      %v8098 = vpop.trf.xlu0
      %v8099 = vpop.trf.xlu0
      %v8100 = vpop.trf.xlu0
      %v8101 = vpop.trf.xlu0
      %8102 = vxpose.xlu0.b32.start [1/16] %v7845, 128
      %8103 = vxpose.xlu0.b32.cont [2/16] 0.0, 128
      %8104 = vxpose.xlu0.b32.cont [3/16] 0.0, 128
      %8105 = vxpose.xlu0.b32.cont [4/16] 0.0, 128
      %8106 = vxpose.xlu0.b32.cont [5/16] 0.0, 128
      %8107 = vxpose.xlu0.b32.cont [6/16] 0.0, 128
      %8108 = vxpose.xlu0.b32.cont [7/16] 0.0, 128
      %8109 = vxpose.xlu0.b32.cont [8/16] 0.0, 128
      %8110 = vxpose.xlu0.b32.cont [9/16] 0.0, 128
      %8111 = vxpose.xlu0.b32.cont [10/16] 0.0, 128
      %8112 = vxpose.xlu0.b32.cont [11/16] 0.0, 128
      %8113 = vxpose.xlu0.b32.cont [12/16] 0.0, 128
      %8114 = vxpose.xlu0.b32.cont [13/16] 0.0, 128
      %8115 = vxpose.xlu0.b32.cont [14/16] 0.0, 128
      %8116 = vxpose.xlu0.b32.cont [15/16] 0.0, 128
      %8117 = vxpose.xlu0.b32.end [16/16] 0.0, 128
      %v8118 = vpop.trf.xlu0
      %v8119 = vpop.trf.xlu0
      %v8120 = vpop.trf.xlu0
      %v8121 = vpop.trf.xlu0
      %v8122 = vpop.trf.xlu0
      %v8123 = vpop.trf.xlu0
      %v8124 = vpop.trf.xlu0
      %v8125 = vpop.trf.xlu0
      %v8126 = vpop.trf.xlu0
      %v8127 = vpop.trf.xlu0
      %v8128 = vpop.trf.xlu0
      %v8129 = vpop.trf.xlu0
      %v8130 = vpop.trf.xlu0
      %v8131 = vpop.trf.xlu0
      %v8132 = vpop.trf.xlu0
      %v8133 = vpop.trf.xlu0
      %8134 = vxpose.xlu0.b32.start [1/16] %v7891, 128
      %8135 = vxpose.xlu0.b32.cont [2/16] 0.0, 128
      %8136 = vxpose.xlu0.b32.cont [3/16] 0.0, 128
      %8137 = vxpose.xlu0.b32.cont [4/16] 0.0, 128
      %8138 = vxpose.xlu0.b32.cont [5/16] 0.0, 128
      %8139 = vxpose.xlu0.b32.cont [6/16] 0.0, 128
      %8140 = vxpose.xlu0.b32.cont [7/16] 0.0, 128
      %8141 = vxpose.xlu0.b32.cont [8/16] 0.0, 128
      %8142 = vxpose.xlu0.b32.cont [9/16] 0.0, 128
      %8143 = vxpose.xlu0.b32.cont [10/16] 0.0, 128
      %8144 = vxpose.xlu0.b32.cont [11/16] 0.0, 128
      %8145 = vxpose.xlu0.b32.cont [12/16] 0.0, 128
      %8146 = vxpose.xlu0.b32.cont [13/16] 0.0, 128
      %8147 = vxpose.xlu0.b32.cont [14/16] 0.0, 128
      %8148 = vxpose.xlu0.b32.cont [15/16] 0.0, 128
      %8149 = vxpose.xlu0.b32.end [16/16] 0.0, 128
      %v8150 = vpop.trf.xlu0
      %v8151 = vpop.trf.xlu0
      %v8152 = vpop.trf.xlu0
      %v8153 = vpop.trf.xlu0
      %v8154 = vpop.trf.xlu0
      %v8155 = vpop.trf.xlu0
      %v8156 = vpop.trf.xlu0
      %v8157 = vpop.trf.xlu0
      %v8158 = vpop.trf.xlu0
      %v8159 = vpop.trf.xlu0
      %v8160 = vpop.trf.xlu0
      %v8161 = vpop.trf.xlu0
      %v8162 = vpop.trf.xlu0
      %v8163 = vpop.trf.xlu0
      %v8164 = vpop.trf.xlu0
      %v8165 = vpop.trf.xlu0
      %8166 = vxpose.xlu0.b32.start [1/16] %v7937, 128
      %8167 = vxpose.xlu0.b32.cont [2/16] 0.0, 128
      %8168 = vxpose.xlu0.b32.cont [3/16] 0.0, 128
      %8169 = vxpose.xlu0.b32.cont [4/16] 0.0, 128
      %8170 = vxpose.xlu0.b32.cont [5/16] 0.0, 128
      %8171 = vxpose.xlu0.b32.cont [6/16] 0.0, 128
      %8172 = vxpose.xlu0.b32.cont [7/16] 0.0, 128
      %8173 = vxpose.xlu0.b32.cont [8/16] 0.0, 128
      %8174 = vxpose.xlu0.b32.cont [9/16] 0.0, 128
      %8175 = vxpose.xlu0.b32.cont [10/16] 0.0, 128
      %8176 = vxpose.xlu0.b32.cont [11/16] 0.0, 128
      %8177 = vxpose.xlu0.b32.cont [12/16] 0.0, 128
      %8178 = vxpose.xlu0.b32.cont [13/16] 0.0, 128
      %8179 = vxpose.xlu0.b32.cont [14/16] 0.0, 128
      %8180 = vxpose.xlu0.b32.cont [15/16] 0.0, 128
      %8181 = vxpose.xlu0.b32.end [16/16] 0.0, 128
      %v8182 = vpop.trf.xlu0
      %v8183 = vpop.trf.xlu0
      %v8184 = vpop.trf.xlu0
      %v8185 = vpop.trf.xlu0
      %v8186 = vpop.trf.xlu0
      %v8187 = vpop.trf.xlu0
      %v8188 = vpop.trf.xlu0
      %v8189 = vpop.trf.xlu0
      %v8190 = vpop.trf.xlu0
      %v8191 = vpop.trf.xlu0
      %v8192 = vpop.trf.xlu0
      %v8193 = vpop.trf.xlu0
      %v8194 = vpop.trf.xlu0
      %v8195 = vpop.trf.xlu0
      %v8196 = vpop.trf.xlu0
      %v8197 = vpop.trf.xlu0
      %v8198 = vcombine.low %v7958, %v8022
      %v8199 = vcombine.high %v7958, %v8022
      %v8201 = vunpack.c.l.s4 1983009808
      %v8202 = vunpack.c.0.s8 %v8201
      %v8203 = vlaneseq
      %v8204 = vshrl.u32 %v8203, 7
      %v8205 = vsub.s32 %v8202, %v8204
      %v8206 = vrot.slane %v8198, %v8205
      %v8208 = vunpack.c.l.s4 1983009808
      %v8209 = vunpack.c.0.s8 %v8208
      %v8210 = vlaneseq
      %v8211 = vshrl.u32 %v8210, 7
      %v8212 = vsub.s32 %v8209, %v8211
      %v8213 = vrot.slane %v8199, %v8212
      %v8214 = vcombine.low %v7990, %v8054
      %v8215 = vcombine.high %v7990, %v8054
      %v8217 = vunpack.c.l.s4 1983009808
      %v8218 = vunpack.c.0.s8 %v8217
      %v8219 = vlaneseq
      %v8220 = vshrl.u32 %v8219, 7
      %v8221 = vsub.s32 %v8218, %v8220
      %v8222 = vrot.slane %v8214, %v8221
      %v8224 = vunpack.c.l.s4 1983009808
      %v8225 = vunpack.c.0.s8 %v8224
      %v8226 = vlaneseq
      %v8227 = vshrl.u32 %v8226, 7
      %v8228 = vsub.s32 %v8225, %v8227
      %v8229 = vrot.slane %v8215, %v8228
      %v8230 = vcombine.low %v8086, %v8150
      %v8231 = vcombine.high %v8086, %v8150
      %v8233 = vunpack.c.l.s4 1983009808
      %v8234 = vunpack.c.0.s8 %v8233
      %v8235 = vlaneseq
      %v8236 = vshrl.u32 %v8235, 7
      %v8237 = vsub.s32 %v8234, %v8236
      %v8238 = vrot.slane %v8230, %v8237
      %v8240 = vunpack.c.l.s4 1983009808
      %v8241 = vunpack.c.0.s8 %v8240
      %v8242 = vlaneseq
      %v8243 = vshrl.u32 %v8242, 7
      %v8244 = vsub.s32 %v8241, %v8243
      %v8245 = vrot.slane %v8231, %v8244
      %v8246 = vcombine.low %v8118, %v8182
      %v8247 = vcombine.high %v8118, %v8182
      %v8249 = vunpack.c.l.s4 1983009808
      %v8250 = vunpack.c.0.s8 %v8249
      %v8251 = vlaneseq
      %v8252 = vshrl.u32 %v8251, 7
      %v8253 = vsub.s32 %v8250, %v8252
      %v8254 = vrot.slane %v8246, %v8253
      %v8256 = vunpack.c.l.s4 1983009808
      %v8257 = vunpack.c.0.s8 %v8256
      %v8258 = vlaneseq
      %v8259 = vshrl.u32 %v8258, 7
      %v8260 = vsub.s32 %v8257, %v8259
      %v8261 = vrot.slane %v8247, %v8260
      %v8262 = vcombine.low %v8206, %v8222
      %v8263 = vcombine.high %v8206, %v8222
      %v8265 = vunpack.c.l.s4 1934713408
      %v8266 = vunpack.c.0.s8 %v8265
      %v8267 = vlaneseq
      %v8268 = vshrl.u32 %v8267, 7
      %v8269 = vsub.s32 %v8266, %v8268
      %v8270 = vrot.slane %v8262, %v8269
      %v8272 = vunpack.c.l.s4 1934713408
      %v8273 = vunpack.c.0.s8 %v8272
      %v8274 = vlaneseq
      %v8275 = vshrl.u32 %v8274, 7
      %v8276 = vsub.s32 %v8273, %v8275
      %v8277 = vrot.slane %v8263, %v8276
      %v8278 = vcombine.low %v8213, %v8229
      %v8279 = vcombine.high %v8213, %v8229
      %v8281 = vunpack.c.l.s4 1934713408
      %v8282 = vunpack.c.0.s8 %v8281
      %v8283 = vlaneseq
      %v8284 = vshrl.u32 %v8283, 7
      %v8285 = vsub.s32 %v8282, %v8284
      %v8286 = vrot.slane %v8278, %v8285
      %v8288 = vunpack.c.l.s4 1934713408
      %v8289 = vunpack.c.0.s8 %v8288
      %v8290 = vlaneseq
      %v8291 = vshrl.u32 %v8290, 7
      %v8292 = vsub.s32 %v8289, %v8291
      %v8293 = vrot.slane %v8279, %v8292
      %v8294 = vcombine.low %v8238, %v8254
      %v8295 = vcombine.high %v8238, %v8254
      %v8297 = vunpack.c.l.s4 1934713408
      %v8298 = vunpack.c.0.s8 %v8297
      %v8299 = vlaneseq
      %v8300 = vshrl.u32 %v8299, 7
      %v8301 = vsub.s32 %v8298, %v8300
      %v8302 = vrot.slane %v8294, %v8301
      %v8304 = vunpack.c.l.s4 1934713408
      %v8305 = vunpack.c.0.s8 %v8304
      %v8306 = vlaneseq
      %v8307 = vshrl.u32 %v8306, 7
      %v8308 = vsub.s32 %v8305, %v8307
      %v8309 = vrot.slane %v8295, %v8308
      %v8310 = vcombine.low %v8245, %v8261
      %v8311 = vcombine.high %v8245, %v8261
      %v8313 = vunpack.c.l.s4 1934713408
      %v8314 = vunpack.c.0.s8 %v8313
      %v8315 = vlaneseq
      %v8316 = vshrl.u32 %v8315, 7
      %v8317 = vsub.s32 %v8314, %v8316
      %v8318 = vrot.slane %v8310, %v8317
      %v8320 = vunpack.c.l.s4 1934713408
      %v8321 = vunpack.c.0.s8 %v8320
      %v8322 = vlaneseq
      %v8323 = vshrl.u32 %v8322, 7
      %v8324 = vsub.s32 %v8321, %v8323
      %v8325 = vrot.slane %v8311, %v8324
      %v8326 = vcombine.low %v8270, %v8302
      %v8327 = vcombine.high %v8270, %v8302
      %v8328 = vcombine.low %v8277, %v8309
      %v8329 = vcombine.high %v8277, %v8309
      %v8330 = vcombine.low %v8286, %v8318
      %v8331 = vcombine.high %v8286, %v8318
      %v8332 = vcombine.low %v8293, %v8325
      %v8333 = vcombine.high %v8293, %v8325
      %v8334 = vpack.c.bf16 %v6817, %v6769
      %v8335 = vpack.c.bf16 %v6913, %v6865
      %v8336 = vpack.c.bf16 %v7009, %v6961
      %v8337 = vpack.c.bf16 %v7105, %v7057
      %v8338 = vld [vmem:[%s7] sm:$0xf]
      %v8340 = vsel %vm503, %v8334, 0
      %v8343 = vsel %vm503, %v8335, 0
      %v8346 = vsel %vm503, %v8336, 0
      %v8349 = vsel %vm503, %v8337, 0
      %v8352 = vsel %vm1331, %v8338, 0
      %8354 = vmatprep.subr.bf16.mxu0 0
      %8355 = vmatpush1.bf16.msra.mxu0 %v8352
      %8356 = vmatprep.subr.bf16.mxu0 0
      %8357 = vmatpush1.bf16.msra.mxu0 0
      %8358 = vmatprep.subr.bf16.mxu0 0
      %8359 = vmatpush1.bf16.msra.mxu0 0
      %8360 = vmatprep.subr.bf16.mxu0 0
      %8361 = vmatpush1.bf16.msra.mxu0 0
      %8362 = vmatprep.subr.bf16.mxu0 0
      %8363 = vmatpush1.bf16.msra.mxu0 0
      %8364 = vmatprep.subr.bf16.mxu0 0
      %8365 = vmatpush1.bf16.msra.mxu0 0
      %8366 = vmatprep.subr.bf16.mxu0 0
      %8367 = vmatpush1.bf16.msra.mxu0 0
      %8368 = vmatprep.subr.bf16.mxu0 0
      %8369 = vmatpush1.bf16.msra.mxu0 0
      %8370 = vmatprep.subr.bf16.mxu0 0
      %8371 = vmatpush1.bf16.msra.mxu0 0
      %8372 = vmatprep.subr.bf16.mxu0 0
      %8373 = vmatpush1.bf16.msra.mxu0 0
      %8374 = vmatprep.subr.bf16.mxu0 0
      %8375 = vmatpush1.bf16.msra.mxu0 0
      %8376 = vmatprep.subr.bf16.mxu0 0
      %8377 = vmatpush1.bf16.msra.mxu0 0
      %8378 = vmatprep.subr.bf16.mxu0 0
      %8379 = vmatpush1.bf16.msra.mxu0 0
      %8380 = vmatprep.subr.bf16.mxu0 0
      %8381 = vmatpush1.bf16.msra.mxu0 0
      %8382 = vmatprep.subr.bf16.mxu0 0
      %8383 = vmatpush1.bf16.msra.mxu0 0
      %8384 = vmatprep.subr.bf16.mxu0 0
      %8385 = vmatpush1.bf16.msra.mxu0 0
      %8386 = vmatprep.mubr.bf16.mxu0 0
      %8387 = vmatmul.mubr.bf16.gmra.mrb[0].mxu0 %v8340
      %v8388 = vpop.f32.mrb[0].mxu0
      %v8389 = vadd.f32 0.0, %v8388
      %v8390 = vpop.f32.mrb[0].mxu0
      %v8391 = vpop.f32.mrb[0].mxu0
      %v8392 = vadd.f32 0.0, %v8391
      %v8393 = vpop.f32.mrb[0].mxu0
      %8394 = vmatprep.mubr.bf16.mxu0 0
      %8395 = vmatmul.mubr.bf16.gmra.mrb[0].mxu0 %v8343
      %v8396 = vpop.f32.mrb[0].mxu0
      %v8397 = vadd.f32 0.0, %v8396
      %v8398 = vpop.f32.mrb[0].mxu0
      %v8399 = vpop.f32.mrb[0].mxu0
      %v8400 = vadd.f32 0.0, %v8399
      %v8401 = vpop.f32.mrb[0].mxu0
      %8402 = vmatprep.mubr.bf16.mxu0 0
      %8403 = vmatmul.mubr.bf16.gmra.mrb[0].mxu0 %v8346
      %v8404 = vpop.f32.mrb[0].mxu0
      %v8405 = vadd.f32 0.0, %v8404
      %v8406 = vpop.f32.mrb[0].mxu0
      %v8407 = vpop.f32.mrb[0].mxu0
      %v8408 = vadd.f32 0.0, %v8407
      %v8409 = vpop.f32.mrb[0].mxu0
      %8410 = vmatprep.mubr.bf16.mxu0 0
      %8411 = vmatmul.mubr.bf16.gmra.mrb[0].mxu0 %v8349
      %v8412 = vpop.f32.mrb[0].mxu0
      %v8413 = vadd.f32 0.0, %v8412
      %v8414 = vpop.f32.mrb[0].mxu0
      %v8415 = vpop.f32.mrb[0].mxu0
      %v8416 = vadd.f32 0.0, %v8415
      %v8417 = vpop.f32.mrb[0].mxu0
      %8418 = vdwg.mxu0
      %8419 = vrot.lane.b32.xlu0 %v463, 104
      %v8420 = vpop.permute.xlu0 %8419
      %8421 = vrot.lane.b32.xlu0 %v464, 104
      %v8422 = vpop.permute.xlu0 %8421
      %8423 = vrot.lane.b32.xlu0 %v465, 104
      %v8424 = vpop.permute.xlu0 %8423
      %8425 = vrot.lane.b32.xlu0 %v466, 104
      %v8426 = vpop.permute.xlu0 %8425
      %8427 = vrot.lane.b32.xlu0 %v463, 72
      %v8428 = vpop.permute.xlu0 %8427
      %8429 = vrot.lane.b32.xlu0 %v464, 72
      %v8430 = vpop.permute.xlu0 %8429
      %8431 = vrot.lane.b32.xlu0 %v465, 72
      %v8432 = vpop.permute.xlu0 %8431
      %8433 = vrot.lane.b32.xlu0 %v466, 72
      %v8434 = vpop.permute.xlu0 %8433
      %v8436 = vsel %vm503, %v8420, 0
      %v8439 = vsel %vm503, %v8422, 0
      %v8442 = vsel %vm503, %v8424, 0
      %v8445 = vsel %vm503, %v8426, 0
      %v8448 = vsel %vm503, %v8428, 0
      %v8451 = vsel %vm503, %v8430, 0
      %v8454 = vsel %vm503, %v8432, 0
      %v8457 = vsel %vm503, %v8434, 0
      %8459 = vmatprep.subr.bf16.mxu0 0
      %8460 = vmatpush1.bf16.xpose.msra.mxu0 %v8448
      %8461 = vmatprep.subr.bf16.mxu0 0
      %8462 = vmatpush1.bf16.xpose.msra.mxu0 %v8451
      %8463 = vmatprep.subr.bf16.mxu0 0
      %8464 = vmatpush1.bf16.xpose.msra.mxu0 %v8454
      %8465 = vmatprep.subr.bf16.mxu0 0
      %8466 = vmatpush1.bf16.xpose.msra.mxu0 %v8457
      %8467 = vmatprep.subr.bf16.mxu0 0
      %8468 = vmatpush1.bf16.xpose.msra.mxu0 0
      %8469 = vmatprep.subr.bf16.mxu0 0
      %8470 = vmatpush1.bf16.xpose.msra.mxu0 0
      %8471 = vmatprep.subr.bf16.mxu0 0
      %8472 = vmatpush1.bf16.xpose.msra.mxu0 0
      %8473 = vmatprep.subr.bf16.mxu0 0
      %8474 = vmatpush1.bf16.xpose.msra.mxu0 0
      %8475 = vmatprep.subr.bf16.mxu0 0
      %8476 = vmatpush1.bf16.xpose.msra.mxu0 0
      %8477 = vmatprep.subr.bf16.mxu0 0
      %8478 = vmatpush1.bf16.xpose.msra.mxu0 0
      %8479 = vmatprep.subr.bf16.mxu0 0
      %8480 = vmatpush1.bf16.xpose.msra.mxu0 0
      %8481 = vmatprep.subr.bf16.mxu0 0
      %8482 = vmatpush1.bf16.xpose.msra.mxu0 0
      %8483 = vmatprep.subr.bf16.mxu0 0
      %8484 = vmatpush1.bf16.xpose.msra.mxu0 0
      %8485 = vmatprep.subr.bf16.mxu0 0
      %8486 = vmatpush1.bf16.xpose.msra.mxu0 0
      %8487 = vmatprep.subr.bf16.mxu0 0
      %8488 = vmatpush1.bf16.xpose.msra.mxu0 0
      %8489 = vmatprep.subr.bf16.mxu0 0
      %8490 = vmatpush1.bf16.xpose.msra.mxu0 0
      %8491 = vmatprep.mubr.bf16.mxu0 0
      %8492 = vmatmul.mubr.bf16.gmra.mrb[0].mxu0 %v8436
      %v8493 = vpop.f32.mrb[0].mxu0
      %v8494 = vadd.f32 %v8389, %v8493
      %v8495 = vpop.f32.mrb[0].mxu0
      %v8496 = vpop.f32.mrb[0].mxu0
      %v8497 = vadd.f32 %v8392, %v8496
      %v8498 = vpop.f32.mrb[0].mxu0
      %8499 = vmatprep.mubr.bf16.mxu0 0
      %8500 = vmatmul.mubr.bf16.gmra.mrb[0].mxu0 %v8439
      %v8501 = vpop.f32.mrb[0].mxu0
      %v8502 = vadd.f32 %v8397, %v8501
      %v8503 = vpop.f32.mrb[0].mxu0
      %v8504 = vpop.f32.mrb[0].mxu0
      %v8505 = vadd.f32 %v8400, %v8504
      %v8506 = vpop.f32.mrb[0].mxu0
      %8507 = vmatprep.mubr.bf16.mxu0 0
      %8508 = vmatmul.mubr.bf16.gmra.mrb[0].mxu0 %v8442
      %v8509 = vpop.f32.mrb[0].mxu0
      %v8510 = vadd.f32 %v8405, %v8509
      %v8511 = vpop.f32.mrb[0].mxu0
      %v8512 = vpop.f32.mrb[0].mxu0
      %v8513 = vadd.f32 %v8408, %v8512
      %v8514 = vpop.f32.mrb[0].mxu0
      %8515 = vmatprep.mubr.bf16.mxu0 0
      %8516 = vmatmul.mubr.bf16.gmra.mrb[0].mxu0 %v8445
      %v8517 = vpop.f32.mrb[0].mxu0
      %v8518 = vadd.f32 %v8413, %v8517
      %v8519 = vpop.f32.mrb[0].mxu0
      %v8520 = vpop.f32.mrb[0].mxu0
      %v8521 = vadd.f32 %v8416, %v8520
      %v8522 = vpop.f32.mrb[0].mxu0
      %8523 = vdwg.mxu0
      %v8524 = vpack.c.bf16 %v8327, %v8326
      %v8525 = vpack.c.bf16 %v8329, %v8328
      %v8526 = vpack.c.bf16 %v8331, %v8330
      %v8527 = vpack.c.bf16 %v8333, %v8332
      %v8528 = vld [vmem:[%s8] sm:$0xf]
      %v8530 = vsel %vm503, %v8524, 0
      %v8533 = vsel %vm503, %v8525, 0
      %v8536 = vsel %vm503, %v8526, 0
      %v8539 = vsel %vm503, %v8527, 0
      %v8542 = vsel %vm1331, %v8528, 0
      %8544 = vmatprep.subr.bf16.mxu0 0
      %8545 = vmatpush1.bf16.msra.mxu0 %v8542
      %8546 = vmatprep.subr.bf16.mxu0 0
      %8547 = vmatpush1.bf16.msra.mxu0 0
      %8548 = vmatprep.subr.bf16.mxu0 0
      %8549 = vmatpush1.bf16.msra.mxu0 0
      %8550 = vmatprep.subr.bf16.mxu0 0
      %8551 = vmatpush1.bf16.msra.mxu0 0
      %8552 = vmatprep.subr.bf16.mxu0 0
      %8553 = vmatpush1.bf16.msra.mxu0 0
      %8554 = vmatprep.subr.bf16.mxu0 0
      %8555 = vmatpush1.bf16.msra.mxu0 0
      %8556 = vmatprep.subr.bf16.mxu0 0
      %8557 = vmatpush1.bf16.msra.mxu0 0
      %8558 = vmatprep.subr.bf16.mxu0 0
      %8559 = vmatpush1.bf16.msra.mxu0 0
      %8560 = vmatprep.subr.bf16.mxu0 0
      %8561 = vmatpush1.bf16.msra.mxu0 0
      %8562 = vmatprep.subr.bf16.mxu0 0
      %8563 = vmatpush1.bf16.msra.mxu0 0
      %8564 = vmatprep.subr.bf16.mxu0 0
      %8565 = vmatpush1.bf16.msra.mxu0 0
      %8566 = vmatprep.subr.bf16.mxu0 0
      %8567 = vmatpush1.bf16.msra.mxu0 0
      %8568 = vmatprep.subr.bf16.mxu0 0
      %8569 = vmatpush1.bf16.msra.mxu0 0
      %8570 = vmatprep.subr.bf16.mxu0 0
      %8571 = vmatpush1.bf16.msra.mxu0 0
      %8572 = vmatprep.subr.bf16.mxu0 0
      %8573 = vmatpush1.bf16.msra.mxu0 0
      %8574 = vmatprep.subr.bf16.mxu0 0
      %8575 = vmatpush1.bf16.msra.mxu0 0
      %8576 = vmatprep.mubr.bf16.mxu0 0
      %8577 = vmatmul.mubr.bf16.gmra.mrb[0].mxu0 %v8530
      %v8578 = vpop.f32.mrb[0].mxu0
      %v8579 = vadd.f32 0.0, %v8578
      %v8580 = vpop.f32.mrb[0].mxu0
      %v8581 = vpop.f32.mrb[0].mxu0
      %v8582 = vadd.f32 0.0, %v8581
      %v8583 = vpop.f32.mrb[0].mxu0
      %8584 = vmatprep.mubr.bf16.mxu0 0
      %8585 = vmatmul.mubr.bf16.gmra.mrb[0].mxu0 %v8533
      %v8586 = vpop.f32.mrb[0].mxu0
      %v8587 = vadd.f32 0.0, %v8586
      %v8588 = vpop.f32.mrb[0].mxu0
      %v8589 = vpop.f32.mrb[0].mxu0
      %v8590 = vadd.f32 0.0, %v8589
      %v8591 = vpop.f32.mrb[0].mxu0
      %8592 = vmatprep.mubr.bf16.mxu0 0
      %8593 = vmatmul.mubr.bf16.gmra.mrb[0].mxu0 %v8536
      %v8594 = vpop.f32.mrb[0].mxu0
      %v8595 = vadd.f32 0.0, %v8594
      %v8596 = vpop.f32.mrb[0].mxu0
      %v8597 = vpop.f32.mrb[0].mxu0
      %v8598 = vadd.f32 0.0, %v8597
      %v8599 = vpop.f32.mrb[0].mxu0
      %8600 = vmatprep.mubr.bf16.mxu0 0
      %8601 = vmatmul.mubr.bf16.gmra.mrb[0].mxu0 %v8539
      %v8602 = vpop.f32.mrb[0].mxu0
      %v8603 = vadd.f32 0.0, %v8602
      %v8604 = vpop.f32.mrb[0].mxu0
      %v8605 = vpop.f32.mrb[0].mxu0
      %v8606 = vadd.f32 0.0, %v8605
      %v8607 = vpop.f32.mrb[0].mxu0
      %8608 = vdwg.mxu0
      %v8609 = vadd.f32 %v8494, %v8579
      %v8610 = vadd.f32 %v8497, %v8582
      %v8611 = vadd.f32 %v8502, %v8587
      %v8612 = vadd.f32 %v8505, %v8590
      %v8613 = vadd.f32 %v8510, %v8595
      %v8614 = vadd.f32 %v8513, %v8598
      %v8615 = vadd.f32 %v8518, %v8603
      %v8616 = vadd.f32 %v8521, %v8606
      %v8617 = vsel %vm2364, %v8609, -inf
      %8618 = vmax.xlane.f32.xlu0 %v8617
      %v8619 = vpop.xlane.xlu0 %8618
      %v8620 = vsel %vm2364, %v8610, -inf
      %8621 = vmax.xlane.f32.xlu0 %v8620
      %v8622 = vpop.xlane.xlu0 %8621
      %v8623 = vsel %vm2364, %v8611, -inf
      %8624 = vmax.xlane.f32.xlu0 %v8623
      %v8625 = vpop.xlane.xlu0 %8624
      %v8626 = vsel %vm2364, %v8612, -inf
      %8627 = vmax.xlane.f32.xlu0 %v8626
      %v8628 = vpop.xlane.xlu0 %8627
      %v8629 = vsel %vm2364, %v8613, -inf
      %8630 = vmax.xlane.f32.xlu0 %v8629
      %v8631 = vpop.xlane.xlu0 %8630
      %v8632 = vsel %vm2364, %v8614, -inf
      %8633 = vmax.xlane.f32.xlu0 %v8632
      %v8634 = vpop.xlane.xlu0 %8633
      %v8635 = vsel %vm2364, %v8615, -inf
      %8636 = vmax.xlane.f32.xlu0 %v8635
      %v8637 = vpop.xlane.xlu0 %8636
      %v8638 = vsel %vm2364, %v8616, -inf
      %8639 = vmax.xlane.f32.xlu0 %v8638
      %v8640 = vpop.xlane.xlu0 %8639
      %v8641 = vsub.f32 %v8609, %v8619
      %v8642 = vsub.f32 %v8610, %v8622
      %v8643 = vsub.f32 %v8611, %v8625
      %v8644 = vsub.f32 %v8612, %v8628
      %v8645 = vsub.f32 %v8613, %v8631
      %v8646 = vsub.f32 %v8614, %v8634
      %v8647 = vsub.f32 %v8615, %v8637
      %v8648 = vsub.f32 %v8616, %v8640
      %v8649 = vmul.f32 %v8641, 1.442695
      %v8650 = vpow.pop %v8649
      %v8651 = vmul.f32 %v8642, 1.442695
      %v8652 = vpow.pop %v8651
      %v8653 = vmul.f32 %v8643, 1.442695
      %v8654 = vpow.pop %v8653
      %v8655 = vmul.f32 %v8644, 1.442695
      %v8656 = vpow.pop %v8655
      %v8657 = vmul.f32 %v8645, 1.442695
      %v8658 = vpow.pop %v8657
      %v8659 = vmul.f32 %v8646, 1.442695
      %v8660 = vpow.pop %v8659
      %v8661 = vmul.f32 %v8647, 1.442695
      %v8662 = vpow.pop %v8661
      %v8663 = vmul.f32 %v8648, 1.442695
      %v8664 = vpow.pop %v8663
      %v8665 = vsel %vm2364, %v8650, 0.0
      %8666 = vadd.xlane.f32.xlu0 %v8665
      %v8667 = vpop.xlane.xlu0 %8666
      %v8668 = vsel %vm2364, %v8652, 0.0
      %8669 = vadd.xlane.f32.xlu0 %v8668
      %v8670 = vpop.xlane.xlu0 %8669
      %v8671 = vsel %vm2364, %v8654, 0.0
      %8672 = vadd.xlane.f32.xlu0 %v8671
      %v8673 = vpop.xlane.xlu0 %8672
      %v8674 = vsel %vm2364, %v8656, 0.0
      %8675 = vadd.xlane.f32.xlu0 %v8674
      %v8676 = vpop.xlane.xlu0 %8675
      %v8677 = vsel %vm2364, %v8658, 0.0
      %8678 = vadd.xlane.f32.xlu0 %v8677
      %v8679 = vpop.xlane.xlu0 %8678
      %v8680 = vsel %vm2364, %v8660, 0.0
      %8681 = vadd.xlane.f32.xlu0 %v8680
      %v8682 = vpop.xlane.xlu0 %8681
      %v8683 = vsel %vm2364, %v8662, 0.0
      %8684 = vadd.xlane.f32.xlu0 %v8683
      %v8685 = vpop.xlane.xlu0 %8684
      %v8686 = vsel %vm2364, %v8664, 0.0
      %8687 = vadd.xlane.f32.xlu0 %v8686
      %v8688 = vpop.xlane.xlu0 %8687
      %v8689 = vrcp.pop %v8667
      %v8690 = vrcp.pop %v8670
      %v8691 = vrcp.pop %v8673
      %v8692 = vrcp.pop %v8676
      %v8693 = vrcp.pop %v8679
      %v8694 = vrcp.pop %v8682
      %v8695 = vrcp.pop %v8685
      %v8696 = vrcp.pop %v8688
      %v8697 = vmul.f32 %v8650, %v8689
      %v8698 = vmul.f32 %v8652, %v8690
      %v8699 = vmul.f32 %v8654, %v8691
      %v8700 = vmul.f32 %v8656, %v8692
      %v8701 = vmul.f32 %v8658, %v8693
      %v8702 = vmul.f32 %v8660, %v8694
      %v8703 = vmul.f32 %v8662, %v8695
      %v8704 = vmul.f32 %v8664, %v8696
      %v8705 = vpack.c.bf16 %v8698, %v8697
      %v8706 = vpack.c.bf16 %v8700, %v8699
      %v8707 = vpack.c.bf16 %v8702, %v8701
      %v8708 = vpack.c.bf16 %v8704, %v8703
      %8709 = vrot.lane.b32.xlu0 %v463, 40
      %v8710 = vpop.permute.xlu0 %8709
      %8711 = vrot.lane.b32.xlu0 %v464, 40
      %v8712 = vpop.permute.xlu0 %8711
      %8713 = vrot.lane.b32.xlu0 %v465, 40
      %v8714 = vpop.permute.xlu0 %8713
      %8715 = vrot.lane.b32.xlu0 %v466, 40
      %v8716 = vpop.permute.xlu0 %8715
      %v8722 = vsel %vm2364, %v8705, 0
      %v8725 = vsel %vm2364, %v8706, 0
      %v8728 = vsel %vm2364, %v8707, 0
      %v8731 = vsel %vm2364, %v8708, 0
      %8733 = vmatprep.subr.bf16.mxu0 0
      %8734 = vmatpush1.bf16.msra.mxu0 %v8710
      %8735 = vmatprep.subr.bf16.mxu0 0
      %8736 = vmatpush1.bf16.msra.mxu0 %v8712
      %8737 = vmatprep.subr.bf16.mxu0 0
      %8738 = vmatpush1.bf16.msra.mxu0 %v8714
      %8739 = vmatprep.subr.bf16.mxu0 0
      %8740 = vmatpush1.bf16.msra.mxu0 %v8716
      %8741 = vmatprep.subr.bf16.mxu0 0
      %8742 = vmatpush1.bf16.msra.mxu0 0
      %8743 = vmatprep.subr.bf16.mxu0 0
      %8744 = vmatpush1.bf16.msra.mxu0 0
      %8745 = vmatprep.subr.bf16.mxu0 0
      %8746 = vmatpush1.bf16.msra.mxu0 0
      %8747 = vmatprep.subr.bf16.mxu0 0
      %8748 = vmatpush1.bf16.msra.mxu0 0
      %8749 = vmatprep.subr.bf16.mxu0 0
      %8750 = vmatpush1.bf16.msra.mxu0 0
      %8751 = vmatprep.subr.bf16.mxu0 0
      %8752 = vmatpush1.bf16.msra.mxu0 0
      %8753 = vmatprep.subr.bf16.mxu0 0
      %8754 = vmatpush1.bf16.msra.mxu0 0
      %8755 = vmatprep.subr.bf16.mxu0 0
      %8756 = vmatpush1.bf16.msra.mxu0 0
      %8757 = vmatprep.subr.bf16.mxu0 0
      %8758 = vmatpush1.bf16.msra.mxu0 0
      %8759 = vmatprep.subr.bf16.mxu0 0
      %8760 = vmatpush1.bf16.msra.mxu0 0
      %8761 = vmatprep.subr.bf16.mxu0 0
      %8762 = vmatpush1.bf16.msra.mxu0 0
      %8763 = vmatprep.subr.bf16.mxu0 0
      %8764 = vmatpush1.bf16.msra.mxu0 0
      %8765 = vmatprep.mubr.bf16.mxu0 0
      %8766 = vmatmul.mubr.bf16.gmra.mrb[0].mxu0 %v8722
      %v8767 = vpop.f32.mrb[0].mxu0
      %v8768 = vadd.f32 0.0, %v8767
      %v8769 = vpop.f32.mrb[0].mxu0
      %v8770 = vpop.f32.mrb[0].mxu0
      %v8771 = vadd.f32 0.0, %v8770
      %v8772 = vpop.f32.mrb[0].mxu0
      %8773 = vmatprep.mubr.bf16.mxu0 0
      %8774 = vmatmul.mubr.bf16.gmra.mrb[0].mxu0 %v8725
      %v8775 = vpop.f32.mrb[0].mxu0
      %v8776 = vadd.f32 0.0, %v8775
      %v8777 = vpop.f32.mrb[0].mxu0
      %v8778 = vpop.f32.mrb[0].mxu0
      %v8779 = vadd.f32 0.0, %v8778
      %v8780 = vpop.f32.mrb[0].mxu0
      %8781 = vmatprep.mubr.bf16.mxu0 0
      %8782 = vmatmul.mubr.bf16.gmra.mrb[0].mxu0 %v8728
      %v8783 = vpop.f32.mrb[0].mxu0
      %v8784 = vadd.f32 0.0, %v8783
      %v8785 = vpop.f32.mrb[0].mxu0
      %v8786 = vpop.f32.mrb[0].mxu0
      %v8787 = vadd.f32 0.0, %v8786
      %v8788 = vpop.f32.mrb[0].mxu0
      %8789 = vmatprep.mubr.bf16.mxu0 0
      %8790 = vmatmul.mubr.bf16.gmra.mrb[0].mxu0 %v8731
      %v8791 = vpop.f32.mrb[0].mxu0
      %v8792 = vadd.f32 0.0, %v8791
      %v8793 = vpop.f32.mrb[0].mxu0
      %v8794 = vpop.f32.mrb[0].mxu0
      %v8795 = vadd.f32 0.0, %v8794
      %v8796 = vpop.f32.mrb[0].mxu0
      %8797 = vdwg.mxu0
      %v8798 = vpack.c.bf16 %v8771, %v8768
      %v8799 = vpack.c.bf16 %v8779, %v8776
      %v8800 = vpack.c.bf16 %v8787, %v8784
      %v8801 = vpack.c.bf16 %v8795, %v8792
      %8806 = vrot.lane.b32.xlu0 %v4630, 8
      %v8807 = vpop.permute.xlu0 %8806
      %8808 = vrot.lane.b32.xlu0 %v4631, 8
      %v8809 = vpop.permute.xlu0 %8808
      %8810 = vrot.lane.b32.xlu0 %v4632, 8
      %v8811 = vpop.permute.xlu0 %8810
      %8812 = vrot.lane.b32.xlu0 %v4633, 8
      %v8813 = vpop.permute.xlu0 %8812
      %8818 = vrot.lane.b32.xlu0 %v6714, 16
      %v8819 = vpop.permute.xlu0 %8818
      %8820 = vrot.lane.b32.xlu0 %v6715, 16
      %v8821 = vpop.permute.xlu0 %8820
      %8822 = vrot.lane.b32.xlu0 %v6716, 16
      %v8823 = vpop.permute.xlu0 %8822
      %8824 = vrot.lane.b32.xlu0 %v6717, 16
      %v8825 = vpop.permute.xlu0 %8824
      %8830 = vrot.lane.b32.xlu0 %v8798, 24
      %v8831 = vpop.permute.xlu0 %8830
      %8832 = vrot.lane.b32.xlu0 %v8799, 24
      %v8833 = vpop.permute.xlu0 %8832
      %8834 = vrot.lane.b32.xlu0 %v8800, 24
      %v8835 = vpop.permute.xlu0 %8834
      %8836 = vrot.lane.b32.xlu0 %v8801, 24
      %v8837 = vpop.permute.xlu0 %8836
      %v8840 = vsel %vm503, %v2546, %v8807
      %v8843 = vsel %vm503, %v2547, %v8809
      %v8846 = vsel %vm503, %v2548, %v8811
      %v8849 = vsel %vm503, %v2549, %v8813
      %vm8850 = vcmask 130048
      %v8852 = vsel %vm8850, %v8840, %v8819
      %v8854 = vsel %vm8850, %v8843, %v8821
      %v8856 = vsel %vm8850, %v8846, %v8823
      %v8858 = vsel %vm8850, %v8849, %v8825
      %vm8859 = vcmask 195584
      %v8861 = vsel %vm8859, %v8852, %v8831
      %v8863 = vsel %vm8859, %v8854, %v8833
      %v8865 = vsel %vm8859, %v8856, %v8835
      %v8867 = vsel %vm8859, %v8858, %v8837
      %v8868 = vld [vmem:[%s3] sm:$0xf]
      %v8869 = vld [vmem:[%s3 + $0x4] sm:$0xf]
      %v8870 = vld [vmem:[%s3 + $0x8] sm:$0xf]
      %v8871 = vld [vmem:[%s3 + $0xc] sm:$0xf]
      %v8872 = vld [vmem:[%s4] sm:$0x1]
      %v8874 = vlaneseq
      %v8875 = vshrl.u32 %v8874, 7
      %v8876 = vsub.s32 0, %v8875
      %v8877 = vrot.slane %v8872, %v8876
      %v8883 = vunpack.c.l.b16 %v8868
      %v8884 = vunpack.c.l.b16 %v8869
      %v8885 = vunpack.c.l.b16 %v8870
      %v8886 = vunpack.c.l.b16 %v8871
      %v8887 = vpack.c.b16 %v8884, %v8883
      %v8888 = vpack.c.b16 %v8886, %v8885
      %v8891 = vsel %vm385, %v8861, 0
      %v8893 = vsel %vm385, %v8863, 0
      %v8895 = vsel %vm385, %v8865, 0
      %v8897 = vsel %vm385, %v8867, 0
      %8899 = vmatprep.subr.bf16.mxu0 0
      %8900 = vmatpush1.bf16.msra.mxu0 %v8887
      %8901 = vmatprep.subr.bf16.mxu0 0
      %8902 = vmatpush1.bf16.msra.mxu0 %v8888
      %8903 = vmatprep.subr.bf16.mxu0 0
      %8904 = vmatpush1.bf16.msra.mxu0 0
      %8905 = vmatprep.subr.bf16.mxu0 0
      %8906 = vmatpush1.bf16.msra.mxu0 0
      %8907 = vmatprep.subr.bf16.mxu0 0
      %8908 = vmatpush1.bf16.msra.mxu0 0
      %8909 = vmatprep.subr.bf16.mxu0 0
      %8910 = vmatpush1.bf16.msra.mxu0 0
      %8911 = vmatprep.subr.bf16.mxu0 0
      %8912 = vmatpush1.bf16.msra.mxu0 0
      %8913 = vmatprep.subr.bf16.mxu0 0
      %8914 = vmatpush1.bf16.msra.mxu0 0
      %8915 = vmatprep.subr.bf16.mxu0 0
      %8916 = vmatpush1.bf16.msra.mxu0 0
      %8917 = vmatprep.subr.bf16.mxu0 0
      %8918 = vmatpush1.bf16.msra.mxu0 0
      %8919 = vmatprep.subr.bf16.mxu0 0
      %8920 = vmatpush1.bf16.msra.mxu0 0
      %8921 = vmatprep.subr.bf16.mxu0 0
      %8922 = vmatpush1.bf16.msra.mxu0 0
      %8923 = vmatprep.subr.bf16.mxu0 0
      %8924 = vmatpush1.bf16.msra.mxu0 0
      %8925 = vmatprep.subr.bf16.mxu0 0
      %8926 = vmatpush1.bf16.msra.mxu0 0
      %8927 = vmatprep.subr.bf16.mxu0 0
      %8928 = vmatpush1.bf16.msra.mxu0 0
      %8929 = vmatprep.subr.bf16.mxu0 0
      %8930 = vmatpush1.bf16.msra.mxu0 0
      %8931 = vmatprep.mubr.bf16.mxu0 0
      %8932 = vmatmul.mubr.bf16.gmra.mrb[0].mxu0 %v8891
      %v8933 = vpop.f32.mrb[0].mxu0
      %v8934 = vadd.f32 %v8877, %v8933
      %v8935 = vpop.f32.mrb[0].mxu0
      %v8936 = vpop.f32.mrb[0].mxu0
      %v8937 = vadd.f32 %v8877, %v8936
      %v8938 = vpop.f32.mrb[0].mxu0
      %8939 = vmatprep.mubr.bf16.mxu0 0
      %8940 = vmatmul.mubr.bf16.gmra.mrb[0].mxu0 %v8893
      %v8941 = vpop.f32.mrb[0].mxu0
      %v8942 = vadd.f32 %v8877, %v8941
      %v8943 = vpop.f32.mrb[0].mxu0
      %v8944 = vpop.f32.mrb[0].mxu0
      %v8945 = vadd.f32 %v8877, %v8944
      %v8946 = vpop.f32.mrb[0].mxu0
      %8947 = vmatprep.mubr.bf16.mxu0 0
      %8948 = vmatmul.mubr.bf16.gmra.mrb[0].mxu0 %v8895
      %v8949 = vpop.f32.mrb[0].mxu0
      %v8950 = vadd.f32 %v8877, %v8949
      %v8951 = vpop.f32.mrb[0].mxu0
      %v8952 = vpop.f32.mrb[0].mxu0
      %v8953 = vadd.f32 %v8877, %v8952
      %v8954 = vpop.f32.mrb[0].mxu0
      %8955 = vmatprep.mubr.bf16.mxu0 0
      %8956 = vmatmul.mubr.bf16.gmra.mrb[0].mxu0 %v8897
      %v8957 = vpop.f32.mrb[0].mxu0
      %v8958 = vadd.f32 %v8877, %v8957
      %v8959 = vpop.f32.mrb[0].mxu0
      %v8960 = vpop.f32.mrb[0].mxu0
      %v8961 = vadd.f32 %v8877, %v8960
      %v8962 = vpop.f32.mrb[0].mxu0
      %8963 = vdwg.mxu0
      %8964 = vst.msk [vmem:[%s332] sm:$0xff] %vm385, %v8934
      %8965 = vst.msk [vmem:[%s332 + $0x8] sm:$0xff] %vm385, %v8937
      %8966 = vst.msk [vmem:[%s332 + $0x10] sm:$0xff] %vm385, %v8942
      %8967 = vst.msk [vmem:[%s332 + $0x18] sm:$0xff] %vm385, %v8945
      %8968 = vst.msk [vmem:[%s332 + $0x20] sm:$0xff] %vm385, %v8950
      %8969 = vst.msk [vmem:[%s332 + $0x28] sm:$0xff] %vm385, %v8953
      %8970 = vst.msk [vmem:[%s332 + $0x30] sm:$0xff] %vm385, %v8958
      %8971 = vst.msk [vmem:[%s332 + $0x38] sm:$0xff] %vm385, %v8961
      %p8972 = scmp.lt.s32.totalorder %s20, 1
      %s8973 = scalar_select %p8972, %s20, 1
      %s8974 = smul.addr %s8973, 8
      %s8975 = smul.addr %s8974, 8
      %s8976 = scalar_lea.vmem %s9, %s8975
      // Predicated region
      $region57: #{tpu_custom_call.1} parent=55 // pred_check
        %p8977 = pneg %p232
      $region58: #{tpu_custom_call.1} parent=55 // pred_check_branch
        %8979 = sbr.rel (%p8977) target = $region60
      $region59: #{tpu_custom_call.1} parent=55 // pred_region
        _
      $region60: #{tpu_custom_call.1} parent=55 // pred_fallthru
        _
    $region56: #{tpu_custom_call.1} parent=5 // pred_fallthru
      _
    %p8980 = scmp.le.s32.totalorder 2, %s15
    // Predicated region
    $region61: #{tpu_custom_call.1} parent=5 // pred_check
      %p8981 = pneg %p8980
    $region62: #{tpu_custom_call.1} parent=5 // pred_check_branch
      %8983 = sbr.rel (%p8981) target = $region64
    $region63: #{tpu_custom_call.1} parent=5 // pred_region
      %s8984 = ssub.s32 %s15, 2
      // Predicated region
      $region65: #{tpu_custom_call.1} parent=63 // pred_check
        %p8985 = pneg %p238
      $region66: #{tpu_custom_call.1} parent=63 // pred_check_branch
        %8987 = sbr.rel (%p8985) target = $region68
      $region67: #{tpu_custom_call.1} parent=63 // pred_region
        %p8988 = scmp.lt.s32.totalorder %s21, 1
        %s8989 = scalar_select %p8988, %s21, 1
        %s8990 = smul.addr %s8989, 8
        %s8991 = smul.addr %s8990, 8
        %s8992 = scalar_lea.vmem %s9, %s8991
      $region68: #{tpu_custom_call.1} parent=63 // pred_fallthru
        _
    $region64: #{tpu_custom_call.1} parent=5 // pred_fallthru
      _
  $region6: #{tpu_custom_call.1} parent=0 // loop_footer
    %s19 = sadd.s32 1, %s15
  $region7: #{tpu_custom_call.1} parent=0 // loop_footer_branch
    %14 = sbr.rel target = $region3
  $region8: #{tpu_custom_call.1} parent=0 // loop_exit
    _

</llo_original>
